<compile_context>
chip_gen: v7x
topology: tpu7x:2x2x1
jax: 0.10.0
libtpu: 0.0.40
codegen_flags: <defaults>
</compile_context>

<pallas_src>
from functools import partial

import numpy as np

import jax
import jax.numpy as jnp
from jax import lax
from jax.experimental import pallas as pl
from jax.experimental.pallas import tpu as pltpu


_SUB = 128     # compaction sub-tile (one [128,128] selection matmul)
_TILE = 512    # edges per grid step (= 4 sub-tiles); amortizes per-step overhead


def _ec_cut_compact_kernel(bases_ref,   # SMEM [E_pad//SUB] i32  per-sub-tile output row base
                           slab_ref,    # VMEM [TILE, cols] f32  fused per-edge rows (tile t)
                           out_ref,     # VMEM [E_pad, cols] f32 compacted rows (resident)
                           *, thld, n_edges, tile, score_col):
    t = pl.program_id(0)
    sub = _SUB
    subs_per_tile = tile // sub

    # Loop-invariant iotas / strict-lower-triangular mask, hoisted out of the
    # unrolled sub-tile loop (JAX does not CSE broadcast_in_dim).
    col_i = lax.broadcasted_iota(jnp.int32, (sub, sub), 1)            # [S,S]: m
    row_i = lax.broadcasted_iota(jnp.int32, (sub, 1), 0)              # [S,1]: i
    col_f = col_i.astype(jnp.float32)
    strict_lower = (col_i < row_i).astype(jnp.float32)                # L[i,m]=1 iff m<i
    tile_row0 = t * tile

    for s in range(subs_per_tile):                                    # static, unrolled
        blk = slab_ref[pl.ds(s * sub, sub), :]                        # [S, cols] f32
        score = blk[:, score_col:score_col + 1]                       # [S, 1]
        grow = tile_row0 + s * sub + row_i                            # [S, 1] global edge id
        # Pad rows (>= n_edges) are always dropped regardless of thld sign.
        keep = (score > jnp.float32(thld)) & (grow < n_edges)         # [S, 1] bool
        kf = keep.astype(jnp.float32)

        # Exclusive prefix-sum of the keep mask (exact small ints, f32 MXU acc):
        #   excl[i] = sum_{m < i} keep[m]
        excl = jnp.dot(strict_lower, kf,
                       preferred_element_type=jnp.float32)            # [S, 1]

        # Transposed one-hot selection: source edge i -> compacted slot excl[i].
        s_t = jnp.where((col_f == excl) & keep, 1.0, 0.0)             # [S, S] f32

        # HIGHEST precision: 0/1 selection times f32 data must be exact
        # (edge_attr floats and 16-bit id halves pass through unchanged).
        compact = lax.dot_general(
            s_t, blk, (((0,), (0,)), ((), ())),
            preferred_element_type=jnp.float32,
            precision=lax.Precision.HIGHEST)                          # [S, cols]

        # Kept rows land at [base, base+count); the dead zero-tail is
        # overwritten by the next (sequential) sub-tile / grid step, and rows
        # >= num_edges are masked in the wrapper (no in-kernel memset needed).
        base = bases_ref[t * subs_per_tile + s]
        out_ref[pl.ds(base, sub), :] = compact


@partial(jax.jit, static_argnames=("thld",))
def ec_cut_refine_pallas(ec_score, edge_index, edge_attr, *, thld):
    """ec_score: [E] f32, edge_index: [2, E] int, edge_attr: [E, F].

    Returns (edge_index_out [2,E] i32, edge_attr_out [E,F], ec_score_out [E],
    num_edges i32).  Entries at positions >= num_edges are padding
    (-1 for edge_index, 0 for float outputs).
    """
    E = ec_score.shape[0]
    F = edge_attr.shape[1]

    tile, sub = _TILE, _SUB
    cols = F + 5                                   # attr | score | src_lo src_hi dst_lo dst_hi
    E_pad = ((E + tile - 1) // tile) * tile
    n_tiles = E_pad // tile
    n_sub = E_pad // sub
    score_col = F

    score_f = ec_score.astype(jnp.float32)
    ei = edge_index.astype(jnp.int32)
    # Node ids as exact 16-bit halves -> f32 (bulletproof through the MXU).
    id_cols = jnp.stack(
        [ei[0] & 0xFFFF, ei[0] >> 16, ei[1] & 0xFFFF, ei[1] >> 16], axis=1
    ).astype(jnp.float32)                                              # [E, 4]

    # Single-pass, narrow (no 128-lane padding) fused slab build.
    rows = jnp.concatenate(
        [edge_attr.astype(jnp.float32), score_f[:, None], id_cols], axis=1)  # [E, cols]
    slab = jnp.pad(rows, ((0, E_pad - E), (0, 0)))                            # [E_pad, cols]

    # Per-128-row output base offsets (tiny, data-dependent -> scalar prefetch).
    keep = (score_f > thld).astype(jnp.int32)
    keep_pad = jnp.pad(keep, (0, E_pad - E))
    per_sub = keep_pad.reshape(n_sub, sub).sum(axis=1)
    bases = (jnp.cumsum(per_sub) - per_sub).astype(jnp.int32)                 # exclusive
    num_edges = per_sub.sum().astype(jnp.int32)

    # Generation-aware VMEM budget (v7x: 64 MiB phys, v5e/v6e: 128 MiB).
    try:
        vmem_cap = int(getattr(pltpu.get_tpu_info(), "vmem_capacity_bytes", 64 << 20))
    except Exception:
        vmem_cap = 64 << 20
    resident = E_pad * cols * 4
    dbuf = 2 * tile * cols * 4
    vmem_limit = int(min(max(resident + dbuf + (4 << 20), 8 << 20),
                         (vmem_cap * 3) // 4))
    # TODO(synk): when the resident [E_pad, cols] output exceeds ~half of the
    # per-generation VMEM, switch out_specs to memory_space=pl.ANY and store
    # compacted sub-tiles with manual pltpu.make_async_copy at the dynamic
    # bases (and, on v7x, split the grid across both TensorCores).

    out_slab = pl.pallas_call(
        partial(_ec_cut_compact_kernel, thld=float(thld), n_edges=E,
                tile=tile, score_col=score_col),
        out_shape=jax.ShapeDtypeStruct((E_pad, cols), jnp.float32),
        grid_spec=pltpu.PrefetchScalarGridSpec(
            num_scalar_prefetch=1,
            grid=(n_tiles,),
            in_specs=[pl.BlockSpec((tile, cols), lambda t, bases_r: (t, 0))],
            out_specs=pl.BlockSpec((E_pad, cols), lambda t, bases_r: (0, 0)),
        ),
        compiler_params=pltpu.CompilerParams(
            dimension_semantics=("arbitrary",),
            vmem_limit_bytes=vmem_limit,
        ),
    )(bases, slab)

    # Padding is defined here (no in-kernel memset): everything >= num_edges
    # is masked, so uninitialized tail rows of the resident output are never
    # observed.
    valid = jnp.arange(E, dtype=jnp.int32) < num_edges
    attr_out = jnp.where(valid[:, None], out_slab[:E, :F], 0.0).astype(edge_attr.dtype)
    score_out = jnp.where(valid, out_slab[:E, score_col], 0.0).astype(ec_score.dtype)
    id_f = jnp.where(valid[:, None], out_slab[:E, F + 1:F + 5], 0.0)
    idc = jnp.round(id_f).astype(jnp.int32)
    src_o = idc[:, 0] | (idc[:, 1] << 16)
    dst_o = idc[:, 2] | (idc[:, 3] << 16)
    ei_out = jnp.where(valid[None, :], jnp.stack([src_o, dst_o], axis=0), -1)  # [2, E]
    return ei_out, attr_out, score_out, num_edges


class ECCutRefine:
    """JAX/Pallas mirror of gnn_tracking ECCutRefine (no learnable params)."""

    def __init__(self, thld: float, name: str = "ec_score"):
        self.thld = thld
        self.name = name

    def __call__(self, data: dict) -> dict:
        ei, attr, score, n = ec_cut_refine_pallas(
            data[self.name], data["edge_index"], data["edge_attr"], thld=self.thld
        )
        out = dict(data)                       # node attrs (e.g. x) pass through
        out["edge_index"] = ei
        out["edge_attr"] = attr
        out[self.name] = score
        out["num_edges"] = n                   # static-shape compaction count
        return out


def _check(data, out, thld):
    score_np = np.asarray(data["ec_score"])
    mask = score_np > thld
    k = int(mask.sum())
    exp_ei = np.asarray(data["edge_index"])[:, mask]
    exp_attr = np.asarray(data["edge_attr"])[mask]
    exp_score = score_np[mask]

    assert int(out["num_edges"]) == k
    assert np.array_equal(np.asarray(out["edge_index"])[:, :k], exp_ei)
    assert np.allclose(np.asarray(out["edge_attr"])[:k], exp_attr)
    assert np.allclose(np.asarray(out["ec_score"])[:k], exp_score)
    # padding checks
    assert np.all(np.asarray(out["edge_index"])[:, k:] == -1)
    assert np.allclose(np.asarray(out["ec_score"])[k:], 0.0)
    assert np.array_equal(np.asarray(out["x"]), np.asarray(data["x"]))


if __name__ == "__main__":
    key = jax.random.PRNGKey(0)

    # --- case 1: tiny graph (single tile) -------------------------------------
    k1, k2, k3, k4, key = jax.random.split(key, 5)
    N_NODES, E, F_EDGE, F_NODE = 32, 64, 8, 6
    THLD1 = 0.5
    data1 = {
        "x": jax.random.normal(k1, (N_NODES, F_NODE), dtype=jnp.float32),
        "edge_index": jax.random.randint(k2, (2, E), 0, N_NODES, dtype=jnp.int32),
        "edge_attr": jax.random.normal(k3, (E, F_EDGE), dtype=jnp.float32),
        "ec_score": jax.random.uniform(k4, (E,), dtype=jnp.float32),
    }
    out1 = ECCutRefine(thld=THLD1, name="ec_score")(data1)
    jax.block_until_ready(out1)
    _check(data1, out1, THLD1)

    # --- case 2: multi-tile graph, large node ids (exercises exact id pass-
    # through and unaligned dynamic output bases) ------------------------------
    k1, k2, k3, k4, key = jax.random.split(key, 5)
    N_NODES, E, F_EDGE, F_NODE = 200_000, 1337, 6, 4
    THLD2 = 0.35
    data2 = {
        "x": jax.random.normal(k1, (64, F_NODE), dtype=jnp.float32),
        "edge_index": jax.random.randint(k2, (2, E), 0, N_NODES, dtype=jnp.int32),
        "edge_attr": jax.random.normal(k3, (E, F_EDGE), dtype=jnp.float32),
        "ec_score": jax.random.uniform(k4, (E,), dtype=jnp.float32),
    }
    out2 = ECCutRefine(thld=THLD2, name="ec_score")(data2)
    jax.block_until_ready(out2)
    _check(data2, out2, THLD2)

    print("KERNEL_OK")
</pallas_src>

<mosaic_0001>
module attributes {stable_mosaic.version = 11 : i64} {
  func.func @_ec_cut_compact_kernel(%arg0: i32, %arg1: memref<4xi32, #tpu.memory_space<smem>>, %arg2: memref<512x13xf32, #tpu.memory_space<vmem>>, %arg3: memref<512x13xf32, #tpu.memory_space<vmem>>) attributes {dimension_semantics = [#tpu.dimension_semantics<arbitrary>], iteration_bounds = array<i64: 1>, scalar_prefetch = 1 : i64, scratch_operands = 0 : i64, tpu.core_type = #tpu.core_type<tc>, window_params = [{transform_indices = @transform_0, window_bounds = array<i64: 512, 13>}, {pipeline_mode = #tpu.pipeline_mode<synchronous>, transform_indices = @transform_1, window_bounds = array<i64: 512, 13>}]} {
    %0 = tpu.iota {dimensions = array<i32: 1>} : vector<128x128xi32>
    %1 = tpu.iota {dimensions = array<i32: 0>} : vector<128x1xi32>
    %2 = arith.sitofp %0 : vector<128x128xi32> to vector<128x128xf32>
    %3 = vector.broadcast %1 : vector<128x1xi32> to vector<128x128xi32>
    %4 = arith.cmpi slt, %0, %3 : vector<128x128xi32>
    %5 = arith.extui %4 : vector<128x128xi1> to vector<128x128xi32>
    %6 = arith.sitofp %5 : vector<128x128xi32> to vector<128x128xf32>
    %c512_i32 = arith.constant 512 : i32
    %7 = arith.muli %arg0, %c512_i32 : i32
    %c0 = arith.constant 0 : index
    %c0_0 = arith.constant 0 : index
    %8 = vector.load %arg2[%c0, %c0_0] : memref<512x13xf32, #tpu.memory_space<vmem>>, vector<128x13xf32>
    %9 = vector.extract_strided_slice %8 {offsets = [0, 8], sizes = [128, 1], strides = [1, 1]} : vector<128x13xf32> to vector<128x1xf32>
    %c0_i32 = arith.constant 0 : i32
    %10 = arith.addi %7, %c0_i32 : i32
    %11 = vector.broadcast %10 : i32 to vector<128x1xi32>
    %12 = arith.addi %11, %1 : vector<128x1xi32>
    %cst = arith.constant 5.000000e-01 : f32
    %13 = vector.broadcast %cst : f32 to vector<128x1xf32>
    %14 = arith.cmpf ogt, %9, %13 : vector<128x1xf32>
    %c64_i32 = arith.constant 64 : i32
    %15 = vector.broadcast %c64_i32 : i32 to vector<128x1xi32>
    %16 = arith.cmpi slt, %12, %15 : vector<128x1xi32>
    %17 = arith.andi %14, %16 : vector<128x1xi1>
    %18 = arith.extui %17 : vector<128x1xi1> to vector<128x1xi32>
    %19 = arith.sitofp %18 : vector<128x1xi32> to vector<128x1xf32>
    %cst_1 = arith.constant dense<0.000000e+00> : vector<128x1xf32>
    %20 = tpu.matmul %6, %19, %cst_1 {dimension_numbers = #tpu.dot_dimension_numbers<[1], [0], [0], [1], [0, 0, 1, 1], [], []>} : vector<128x128xf32>, vector<128x1xf32>, vector<128x1xf32> -> vector<128x1xf32>
    %21 = vector.broadcast %20 : vector<128x1xf32> to vector<128x128xf32>
    %22 = arith.cmpf oeq, %2, %21 : vector<128x128xf32>
    %23 = vector.broadcast %17 : vector<128x1xi1> to vector<128x128xi1>
    %24 = arith.andi %22, %23 : vector<128x128xi1>
    %cst_2 = arith.constant 1.000000e+00 : f32
    %cst_3 = arith.constant 0.000000e+00 : f32
    %25 = vector.broadcast %cst_2 : f32 to vector<128x128xf32>
    %26 = vector.broadcast %cst_3 : f32 to vector<128x128xf32>
    %27 = arith.select %24, %25, %26 : vector<128x128xi1>, vector<128x128xf32>
    %cst_4 = arith.constant dense<0.000000e+00> : vector<128x13xf32>
    %28 = tpu.matmul %27, %8, %cst_4 {dimension_numbers = #tpu.dot_dimension_numbers<[0], [0], [1], [1], [0, 1, 1, 1], [], []>, precision = #tpu.contract_precision<fp32>} : vector<128x128xf32>, vector<128x13xf32>, vector<128x13xf32> -> vector<128x13xf32>
    %c4_i32 = arith.constant 4 : i32
    %29 = arith.muli %arg0, %c4_i32 : i32
    %c0_i32_5 = arith.constant 0 : i32
    %30 = arith.addi %29, %c0_i32_5 : i32
    %31 = arith.index_cast %30 : i32 to index
    %32 = memref.load %arg1[%31] : memref<4xi32, #tpu.memory_space<smem>>
    %33 = arith.index_cast %32 : i32 to index
    %c0_6 = arith.constant 0 : index
    %34 = vector.load %arg3[%33, %c0_6] : memref<512x13xf32, #tpu.memory_space<vmem>>, vector<128x13xf32>
    tpu.vector_store %arg3[%33, %c0_6], %28 {strides = array<i32>} : memref<512x13xf32, #tpu.memory_space<vmem>>, vector<128x13xf32>,
    %c128 = arith.constant 128 : index
    %c0_7 = arith.constant 0 : index
    %35 = vector.load %arg2[%c128, %c0_7] : memref<512x13xf32, #tpu.memory_space<vmem>>, vector<128x13xf32>
    %36 = vector.extract_strided_slice %35 {offsets = [0, 8], sizes = [128, 1], strides = [1, 1]} : vector<128x13xf32> to vector<128x1xf32>
    %c128_i32 = arith.constant 128 : i32
    %37 = arith.addi %7, %c128_i32 : i32
    %38 = vector.broadcast %37 : i32 to vector<128x1xi32>
    %39 = arith.addi %38, %1 : vector<128x1xi32>
    %cst_8 = arith.constant 5.000000e-01 : f32
    %40 = vector.broadcast %cst_8 : f32 to vector<128x1xf32>
    %41 = arith.cmpf ogt, %36, %40 : vector<128x1xf32>
    %c64_i32_9 = arith.constant 64 : i32
    %42 = vector.broadcast %c64_i32_9 : i32 to vector<128x1xi32>
    %43 = arith.cmpi slt, %39, %42 : vector<128x1xi32>
    %44 = arith.andi %41, %43 : vector<128x1xi1>
    %45 = arith.extui %44 : vector<128x1xi1> to vector<128x1xi32>
    %46 = arith.sitofp %45 : vector<128x1xi32> to vector<128x1xf32>
    %cst_10 = arith.constant dense<0.000000e+00> : vector<128x1xf32>
    %47 = tpu.matmul %6, %46, %cst_10 {dimension_numbers = #tpu.dot_dimension_numbers<[1], [0], [0], [1], [0, 0, 1, 1], [], []>} : vector<128x128xf32>, vector<128x1xf32>, vector<128x1xf32> -> vector<128x1xf32>
    %48 = vector.broadcast %47 : vector<128x1xf32> to vector<128x128xf32>
    %49 = arith.cmpf oeq, %2, %48 : vector<128x128xf32>
    %50 = vector.broadcast %44 : vector<128x1xi1> to vector<128x128xi1>
    %51 = arith.andi %49, %50 : vector<128x128xi1>
    %cst_11 = arith.constant 1.000000e+00 : f32
    %cst_12 = arith.constant 0.000000e+00 : f32
    %52 = vector.broadcast %cst_11 : f32 to vector<128x128xf32>
    %53 = vector.broadcast %cst_12 : f32 to vector<128x128xf32>
    %54 = arith.select %51, %52, %53 : vector<128x128xi1>, vector<128x128xf32>
    %cst_13 = arith.constant dense<0.000000e+00> : vector<128x13xf32>
    %55 = tpu.matmul %54, %35, %cst_13 {dimension_numbers = #tpu.dot_dimension_numbers<[0], [0], [1], [1], [0, 1, 1, 1], [], []>, precision = #tpu.contract_precision<fp32>} : vector<128x128xf32>, vector<128x13xf32>, vector<128x13xf32> -> vector<128x13xf32>
    %c4_i32_14 = arith.constant 4 : i32
    %56 = arith.muli %arg0, %c4_i32_14 : i32
    %c1_i32 = arith.constant 1 : i32
    %57 = arith.addi %56, %c1_i32 : i32
    %58 = arith.index_cast %57 : i32 to index
    %59 = memref.load %arg1[%58] : memref<4xi32, #tpu.memory_space<smem>>
    %60 = arith.index_cast %59 : i32 to index
    %c0_15 = arith.constant 0 : index
    %61 = vector.load %arg3[%60, %c0_15] : memref<512x13xf32, #tpu.memory_space<vmem>>, vector<128x13xf32>
    tpu.vector_store %arg3[%60, %c0_15], %55 {strides = array<i32>} : memref<512x13xf32, #tpu.memory_space<vmem>>, vector<128x13xf32>,
    %c256 = arith.constant 256 : index
    %c0_16 = arith.constant 0 : index
    %62 = vector.load %arg2[%c256, %c0_16] : memref<512x13xf32, #tpu.memory_space<vmem>>, vector<128x13xf32>
    %63 = vector.extract_strided_slice %62 {offsets = [0, 8], sizes = [128, 1], strides = [1, 1]} : vector<128x13xf32> to vector<128x1xf32>
    %c256_i32 = arith.constant 256 : i32
    %64 = arith.addi %7, %c256_i32 : i32
    %65 = vector.broadcast %64 : i32 to vector<128x1xi32>
    %66 = arith.addi %65, %1 : vector<128x1xi32>
    %cst_17 = arith.constant 5.000000e-01 : f32
    %67 = vector.broadcast %cst_17 : f32 to vector<128x1xf32>
    %68 = arith.cmpf ogt, %63, %67 : vector<128x1xf32>
    %c64_i32_18 = arith.constant 64 : i32
    %69 = vector.broadcast %c64_i32_18 : i32 to vector<128x1xi32>
    %70 = arith.cmpi slt, %66, %69 : vector<128x1xi32>
    %71 = arith.andi %68, %70 : vector<128x1xi1>
    %72 = arith.extui %71 : vector<128x1xi1> to vector<128x1xi32>
    %73 = arith.sitofp %72 : vector<128x1xi32> to vector<128x1xf32>
    %cst_19 = arith.constant dense<0.000000e+00> : vector<128x1xf32>
    %74 = tpu.matmul %6, %73, %cst_19 {dimension_numbers = #tpu.dot_dimension_numbers<[1], [0], [0], [1], [0, 0, 1, 1], [], []>} : vector<128x128xf32>, vector<128x1xf32>, vector<128x1xf32> -> vector<128x1xf32>
    %75 = vector.broadcast %74 : vector<128x1xf32> to vector<128x128xf32>
    %76 = arith.cmpf oeq, %2, %75 : vector<128x128xf32>
    %77 = vector.broadcast %71 : vector<128x1xi1> to vector<128x128xi1>
    %78 = arith.andi %76, %77 : vector<128x128xi1>
    %cst_20 = arith.constant 1.000000e+00 : f32
    %cst_21 = arith.constant 0.000000e+00 : f32
    %79 = vector.broadcast %cst_20 : f32 to vector<128x128xf32>
    %80 = vector.broadcast %cst_21 : f32 to vector<128x128xf32>
    %81 = arith.select %78, %79, %80 : vector<128x128xi1>, vector<128x128xf32>
    %cst_22 = arith.constant dense<0.000000e+00> : vector<128x13xf32>
    %82 = tpu.matmul %81, %62, %cst_22 {dimension_numbers = #tpu.dot_dimension_numbers<[0], [0], [1], [1], [0, 1, 1, 1], [], []>, precision = #tpu.contract_precision<fp32>} : vector<128x128xf32>, vector<128x13xf32>, vector<128x13xf32> -> vector<128x13xf32>
    %c4_i32_23 = arith.constant 4 : i32
    %83 = arith.muli %arg0, %c4_i32_23 : i32
    %c2_i32 = arith.constant 2 : i32
    %84 = arith.addi %83, %c2_i32 : i32
    %85 = arith.index_cast %84 : i32 to index
    %86 = memref.load %arg1[%85] : memref<4xi32, #tpu.memory_space<smem>>
    %87 = arith.index_cast %86 : i32 to index
    %c0_24 = arith.constant 0 : index
    %88 = vector.load %arg3[%87, %c0_24] : memref<512x13xf32, #tpu.memory_space<vmem>>, vector<128x13xf32>
    tpu.vector_store %arg3[%87, %c0_24], %82 {strides = array<i32>} : memref<512x13xf32, #tpu.memory_space<vmem>>, vector<128x13xf32>,
    %c384 = arith.constant 384 : index
    %c0_25 = arith.constant 0 : index
    %89 = vector.load %arg2[%c384, %c0_25] : memref<512x13xf32, #tpu.memory_space<vmem>>, vector<128x13xf32>
    %90 = vector.extract_strided_slice %89 {offsets = [0, 8], sizes = [128, 1], strides = [1, 1]} : vector<128x13xf32> to vector<128x1xf32>
    %c384_i32 = arith.constant 384 : i32
    %91 = arith.addi %7, %c384_i32 : i32
    %92 = vector.broadcast %91 : i32 to vector<128x1xi32>
    %93 = arith.addi %92, %1 : vector<128x1xi32>
    %cst_26 = arith.constant 5.000000e-01 : f32
    %94 = vector.broadcast %cst_26 : f32 to vector<128x1xf32>
    %95 = arith.cmpf ogt, %90, %94 : vector<128x1xf32>
    %c64_i32_27 = arith.constant 64 : i32
    %96 = vector.broadcast %c64_i32_27 : i32 to vector<128x1xi32>
    %97 = arith.cmpi slt, %93, %96 : vector<128x1xi32>
    %98 = arith.andi %95, %97 : vector<128x1xi1>
    %99 = arith.extui %98 : vector<128x1xi1> to vector<128x1xi32>
    %100 = arith.sitofp %99 : vector<128x1xi32> to vector<128x1xf32>
    %cst_28 = arith.constant dense<0.000000e+00> : vector<128x1xf32>
    %101 = tpu.matmul %6, %100, %cst_28 {dimension_numbers = #tpu.dot_dimension_numbers<[1], [0], [0], [1], [0, 0, 1, 1], [], []>} : vector<128x128xf32>, vector<128x1xf32>, vector<128x1xf32> -> vector<128x1xf32>
    %102 = vector.broadcast %101 : vector<128x1xf32> to vector<128x128xf32>
    %103 = arith.cmpf oeq, %2, %102 : vector<128x128xf32>
    %104 = vector.broadcast %98 : vector<128x1xi1> to vector<128x128xi1>
    %105 = arith.andi %103, %104 : vector<128x128xi1>
    %cst_29 = arith.constant 1.000000e+00 : f32
    %cst_30 = arith.constant 0.000000e+00 : f32
    %106 = vector.broadcast %cst_29 : f32 to vector<128x128xf32>
    %107 = vector.broadcast %cst_30 : f32 to vector<128x128xf32>
    %108 = arith.select %105, %106, %107 : vector<128x128xi1>, vector<128x128xf32>
    %cst_31 = arith.constant dense<0.000000e+00> : vector<128x13xf32>
    %109 = tpu.matmul %108, %89, %cst_31 {dimension_numbers = #tpu.dot_dimension_numbers<[0], [0], [1], [1], [0, 1, 1, 1], [], []>, precision = #tpu.contract_precision<fp32>} : vector<128x128xf32>, vector<128x13xf32>, vector<128x13xf32> -> vector<128x13xf32>
    %c4_i32_32 = arith.constant 4 : i32
    %110 = arith.muli %arg0, %c4_i32_32 : i32
    %c3_i32 = arith.constant 3 : i32
    %111 = arith.addi %110, %c3_i32 : i32
    %112 = arith.index_cast %111 : i32 to index
    %113 = memref.load %arg1[%112] : memref<4xi32, #tpu.memory_space<smem>>
    %114 = arith.index_cast %113 : i32 to index
    %c0_33 = arith.constant 0 : index
    %115 = vector.load %arg3[%114, %c0_33] : memref<512x13xf32, #tpu.memory_space<vmem>>, vector<128x13xf32>
    tpu.vector_store %arg3[%114, %c0_33], %109 {strides = array<i32>} : memref<512x13xf32, #tpu.memory_space<vmem>>, vector<128x13xf32>,
    return
  }
  func.func @transform_0(%arg0: i32, %arg1: memref<4xi32, #tpu.memory_space<smem>>) -> (i32, i32) {
    %c0_i32 = arith.constant 0 : i32
    %c0_i32_0 = arith.constant 0 : i32
    return %arg0, %c0_i32 : i32, i32
  }
  func.func @transform_1(%arg0: i32, %arg1: memref<4xi32, #tpu.memory_space<smem>>) -> (i32, i32) {
    %c0_i32 = arith.constant 0 : i32
    %c0_i32_0 = arith.constant 0 : i32
    %c0_i32_1 = arith.constant 0 : i32
    return %c0_i32, %c0_i32_0 : i32, i32
  }
}

</mosaic_0001>

<llo_original>
// kernel: ec_cut_refine_pallas.1
$region0: #{ec_cut_refine_pallas.1}
  #allocation0 [shape = 'u32[]', space=smem, size = 0x4, offset = 0x4, fixed_abs, tag = 'smem constant byte address 0x4 - core index']
  #allocation1 [shape = 'u32[144,128]{1,0:T(1,128)}', space=vmem, size = 0x12000, scoped, tag = 'internal scratch']
  #allocation2 [shape = 's32[1]{0}', space=sflag, size = 0x4, scoped, tag = 'scoped memory for ec_cut_refine_pallas.1']
  #allocation3 [shape = 'u8[512]{0}', space=smem, size = 0x200, scoped, tag = 'prefetched SMEM operand 0']
  %s0 = inlined_call_operand.vmem [shape: s32[4], index: 0, kind: input, shape index: {}]
  %s1 = inlined_call_operand.vmem [shape: f32[512,13], index: 1, kind: input, shape index: {}]
  %s2 = inlined_call_operand.vmem [shape: f32[512,13], index: 2, kind: output, shape index: {}]
  %s3 = sld [smem:[#allocation0]]
  $region14: #{ec_cut_refine_pallas.1} parent=0
    _
  %s5 = ssub.s32 1, %s3
  %s6 = scalar_select 0, %s5, %s3
  %s7 = sshll.u32 %s0, 4
  %s8 = int_to_ptr.vmem [resolvable:$true] %s7
  %10 = dma.vmem_to_smem %s8, 16, [#allocation3], [#allocation2]
  %11 = dma.done [#allocation2], 16
  %12 = sfence
  // Predicated region
  $region2: #{ec_cut_refine_pallas.1} parent=0 // pred_check
    _
  $region3: #{ec_cut_refine_pallas.1} parent=0 // pred_check_branch
    %14 = sbr.rel (0) target = $region5
  $region4: #{ec_cut_refine_pallas.1} parent=0 // pred_region
    _
  $region5: #{ec_cut_refine_pallas.1} parent=0 // pred_fallthru
    _
  %v15 = vlaneseq
  %v16 = vand.u32 %v15, 127
  %v17 = vlaneseq
  %v18 = vshrl.u32 %v17, 7
  %v19 = vadd.s32 %v18, 8
  %v20 = vadd.s32 %v18, 16
  %v21 = vadd.s32 %v18, 24
  %v22 = vadd.s32 %v18, 32
  %v23 = vadd.s32 %v18, 40
  %v24 = vadd.s32 %v18, 48
  %v25 = vadd.s32 %v18, 56
  %v26 = vadd.s32 %v18, 64
  %v27 = vadd.s32 %v18, 72
  %v28 = vadd.s32 %v18, 80
  %v29 = vadd.s32 %v18, 88
  %v30 = vadd.s32 %v18, 96
  %v31 = vadd.s32 %v18, 104
  %v32 = vadd.s32 %v18, 112
  %v33 = vadd.s32 %v18, 120
  %v34 = vcvt.s32.f32 %v16
  %vm35 = vcmp.lt.s32.totalorder %v16, %v18
  %vm36 = vcmp.lt.s32.totalorder %v16, %v19
  %vm37 = vcmp.lt.s32.totalorder %v16, %v20
  %vm38 = vcmp.lt.s32.totalorder %v16, %v21
  %vm39 = vcmp.lt.s32.totalorder %v16, %v22
  %vm40 = vcmp.lt.s32.totalorder %v16, %v23
  %vm41 = vcmp.lt.s32.totalorder %v16, %v24
  %vm42 = vcmp.lt.s32.totalorder %v16, %v25
  %vm43 = vcmp.lt.s32.totalorder %v16, %v26
  %vm44 = vcmp.lt.s32.totalorder %v16, %v27
  %vm45 = vcmp.lt.s32.totalorder %v16, %v28
  %vm46 = vcmp.lt.s32.totalorder %v16, %v29
  %vm47 = vcmp.lt.s32.totalorder %v16, %v30
  %vm48 = vcmp.lt.s32.totalorder %v16, %v31
  %vm49 = vcmp.lt.s32.totalorder %v16, %v32
  %vm50 = vcmp.lt.s32.totalorder %v16, %v33
  %v51 = vsel %vm35, 1, 0
  %v52 = vsel %vm36, 1, 0
  %v53 = vsel %vm37, 1, 0
  %v54 = vsel %vm38, 1, 0
  %v55 = vsel %vm39, 1, 0
  %v56 = vsel %vm40, 1, 0
  %v57 = vsel %vm41, 1, 0
  %v58 = vsel %vm42, 1, 0
  %v59 = vsel %vm43, 1, 0
  %v60 = vsel %vm44, 1, 0
  %v61 = vsel %vm45, 1, 0
  %v62 = vsel %vm46, 1, 0
  %v63 = vsel %vm47, 1, 0
  %v64 = vsel %vm48, 1, 0
  %v65 = vsel %vm49, 1, 0
  %v66 = vsel %vm50, 1, 0
  %v67 = vcvt.s32.f32 %v51
  %v68 = vcvt.s32.f32 %v52
  %v69 = vcvt.s32.f32 %v53
  %v70 = vcvt.s32.f32 %v54
  %v71 = vcvt.s32.f32 %v55
  %v72 = vcvt.s32.f32 %v56
  %v73 = vcvt.s32.f32 %v57
  %v74 = vcvt.s32.f32 %v58
  %v75 = vcvt.s32.f32 %v59
  %v76 = vcvt.s32.f32 %v60
  %v77 = vcvt.s32.f32 %v61
  %v78 = vcvt.s32.f32 %v62
  %v79 = vcvt.s32.f32 %v63
  %v80 = vcvt.s32.f32 %v64
  %v81 = vcvt.s32.f32 %v65
  %v82 = vcvt.s32.f32 %v66
  %s83 = smul.u32 0, 512
  %v84 = vld [vmem:[%s1] sm:$0xff]
  %v85 = vld [vmem:[%s1 + $0x8] sm:$0xff]
  %v86 = vld [vmem:[%s1 + $0x10] sm:$0xff]
  %v87 = vld [vmem:[%s1 + $0x18] sm:$0xff]
  %v88 = vld [vmem:[%s1 + $0x20] sm:$0xff]
  %v89 = vld [vmem:[%s1 + $0x28] sm:$0xff]
  %v90 = vld [vmem:[%s1 + $0x30] sm:$0xff]
  %v91 = vld [vmem:[%s1 + $0x38] sm:$0xff]
  %v92 = vld [vmem:[%s1 + $0x40] sm:$0xff]
  %v93 = vld [vmem:[%s1 + $0x48] sm:$0xff]
  %v94 = vld [vmem:[%s1 + $0x50] sm:$0xff]
  %v95 = vld [vmem:[%s1 + $0x58] sm:$0xff]
  %v96 = vld [vmem:[%s1 + $0x60] sm:$0xff]
  %v97 = vld [vmem:[%s1 + $0x68] sm:$0xff]
  %v98 = vld [vmem:[%s1 + $0x70] sm:$0xff]
  %v99 = vld [vmem:[%s1 + $0x78] sm:$0xff]
  %v100 = vstv %s83
  %v101 = vadd.s32 %v100, %v18
  %v102 = vadd.s32 %v100, %v19
  %v103 = vadd.s32 %v100, %v20
  %v104 = vadd.s32 %v100, %v21
  %v105 = vadd.s32 %v100, %v22
  %v106 = vadd.s32 %v100, %v23
  %v107 = vadd.s32 %v100, %v24
  %v108 = vadd.s32 %v100, %v25
  %v109 = vadd.s32 %v100, %v26
  %v110 = vadd.s32 %v100, %v27
  %v111 = vadd.s32 %v100, %v28
  %v112 = vadd.s32 %v100, %v29
  %v113 = vadd.s32 %v100, %v30
  %v114 = vadd.s32 %v100, %v31
  %v115 = vadd.s32 %v100, %v32
  %v116 = vadd.s32 %v100, %v33
  %vm117 = vcmp.gt.f32.partialorder %v84, 0.5
  %vm118 = vcmp.gt.f32.partialorder %v85, 0.5
  %vm119 = vcmp.gt.f32.partialorder %v86, 0.5
  %vm120 = vcmp.gt.f32.partialorder %v87, 0.5
  %vm121 = vcmp.gt.f32.partialorder %v88, 0.5
  %vm122 = vcmp.gt.f32.partialorder %v89, 0.5
  %vm123 = vcmp.gt.f32.partialorder %v90, 0.5
  %vm124 = vcmp.gt.f32.partialorder %v91, 0.5
  %vm125 = vcmp.gt.f32.partialorder %v92, 0.5
  %vm126 = vcmp.gt.f32.partialorder %v93, 0.5
  %vm127 = vcmp.gt.f32.partialorder %v94, 0.5
  %vm128 = vcmp.gt.f32.partialorder %v95, 0.5
  %vm129 = vcmp.gt.f32.partialorder %v96, 0.5
  %vm130 = vcmp.gt.f32.partialorder %v97, 0.5
  %vm131 = vcmp.gt.f32.partialorder %v98, 0.5
  %vm132 = vcmp.gt.f32.partialorder %v99, 0.5
  %vm133 = vcmp.lt.s32.totalorder %v101, 64
  %vm134 = vcmp.lt.s32.totalorder %v102, 64
  %vm135 = vcmp.lt.s32.totalorder %v103, 64
  %vm136 = vcmp.lt.s32.totalorder %v104, 64
  %vm137 = vcmp.lt.s32.totalorder %v105, 64
  %vm138 = vcmp.lt.s32.totalorder %v106, 64
  %vm139 = vcmp.lt.s32.totalorder %v107, 64
  %vm140 = vcmp.lt.s32.totalorder %v108, 64
  %vm141 = vcmp.lt.s32.totalorder %v109, 64
  %vm142 = vcmp.lt.s32.totalorder %v110, 64
  %vm143 = vcmp.lt.s32.totalorder %v111, 64
  %vm144 = vcmp.lt.s32.totalorder %v112, 64
  %vm145 = vcmp.lt.s32.totalorder %v113, 64
  %vm146 = vcmp.lt.s32.totalorder %v114, 64
  %vm147 = vcmp.lt.s32.totalorder %v115, 64
  %vm148 = vcmp.lt.s32.totalorder %v116, 64
  %vm149 = vmand %vm117, %vm133
  %vm150 = vmand %vm118, %vm134
  %vm151 = vmand %vm119, %vm135
  %vm152 = vmand %vm120, %vm136
  %vm153 = vmand %vm121, %vm137
  %vm154 = vmand %vm122, %vm138
  %vm155 = vmand %vm123, %vm139
  %vm156 = vmand %vm124, %vm140
  %vm157 = vmand %vm125, %vm141
  %vm158 = vmand %vm126, %vm142
  %vm159 = vmand %vm127, %vm143
  %vm160 = vmand %vm128, %vm144
  %vm161 = vmand %vm129, %vm145
  %vm162 = vmand %vm130, %vm146
  %vm163 = vmand %vm131, %vm147
  %vm164 = vmand %vm132, %vm148
  %v165 = vsel %vm149, 1, 0
  %v166 = vsel %vm150, 1, 0
  %v167 = vsel %vm151, 1, 0
  %v168 = vsel %vm152, 1, 0
  %v169 = vsel %vm153, 1, 0
  %v170 = vsel %vm154, 1, 0
  %v171 = vsel %vm155, 1, 0
  %v172 = vsel %vm156, 1, 0
  %v173 = vsel %vm157, 1, 0
  %v174 = vsel %vm158, 1, 0
  %v175 = vsel %vm159, 1, 0
  %v176 = vsel %vm160, 1, 0
  %v177 = vsel %vm161, 1, 0
  %v178 = vsel %vm162, 1, 0
  %v179 = vsel %vm163, 1, 0
  %v180 = vsel %vm164, 1, 0
  %v181 = vcvt.s32.f32 %v165
  %v182 = vcvt.s32.f32 %v166
  %v183 = vcvt.s32.f32 %v167
  %v184 = vcvt.s32.f32 %v168
  %v185 = vcvt.s32.f32 %v169
  %v186 = vcvt.s32.f32 %v170
  %v187 = vcvt.s32.f32 %v171
  %v188 = vcvt.s32.f32 %v172
  %v189 = vcvt.s32.f32 %v173
  %v190 = vcvt.s32.f32 %v174
  %v191 = vcvt.s32.f32 %v175
  %v192 = vcvt.s32.f32 %v176
  %v193 = vcvt.s32.f32 %v177
  %v194 = vcvt.s32.f32 %v178
  %v195 = vcvt.s32.f32 %v179
  %v196 = vcvt.s32.f32 %v180
  %213 = vrot.lane.b32.xlu0 %v181, 120
  %v214 = vpop.permute.xlu0 %213
  %215 = vrot.lane.b32.xlu0 %v182, 120
  %v216 = vpop.permute.xlu0 %215
  %217 = vrot.lane.b32.xlu0 %v183, 120
  %v218 = vpop.permute.xlu0 %217
  %219 = vrot.lane.b32.xlu0 %v184, 120
  %v220 = vpop.permute.xlu0 %219
  %221 = vrot.lane.b32.xlu0 %v185, 120
  %v222 = vpop.permute.xlu0 %221
  %223 = vrot.lane.b32.xlu0 %v186, 120
  %v224 = vpop.permute.xlu0 %223
  %225 = vrot.lane.b32.xlu0 %v187, 120
  %v226 = vpop.permute.xlu0 %225
  %227 = vrot.lane.b32.xlu0 %v188, 120
  %v228 = vpop.permute.xlu0 %227
  %229 = vrot.lane.b32.xlu0 %v189, 120
  %v230 = vpop.permute.xlu0 %229
  %231 = vrot.lane.b32.xlu0 %v190, 120
  %v232 = vpop.permute.xlu0 %231
  %233 = vrot.lane.b32.xlu0 %v191, 120
  %v234 = vpop.permute.xlu0 %233
  %235 = vrot.lane.b32.xlu0 %v192, 120
  %v236 = vpop.permute.xlu0 %235
  %237 = vrot.lane.b32.xlu0 %v193, 120
  %v238 = vpop.permute.xlu0 %237
  %239 = vrot.lane.b32.xlu0 %v194, 120
  %v240 = vpop.permute.xlu0 %239
  %241 = vrot.lane.b32.xlu0 %v195, 120
  %v242 = vpop.permute.xlu0 %241
  %243 = vrot.lane.b32.xlu0 %v196, 120
  %v244 = vpop.permute.xlu0 %243
  %261 = vmatprep.subr.mxu0 0.0
  %262 = vmatpush1.msra.mxu0 %v214
  %263 = vmatprep.subr.mxu0 0.0
  %264 = vmatpush1.msra.mxu0 %v216
  %265 = vmatprep.subr.mxu0 0.0
  %266 = vmatpush1.msra.mxu0 %v218
  %267 = vmatprep.subr.mxu0 0.0
  %268 = vmatpush1.msra.mxu0 %v220
  %269 = vmatprep.subr.mxu0 0.0
  %270 = vmatpush1.msra.mxu0 %v222
  %271 = vmatprep.subr.mxu0 0.0
  %272 = vmatpush1.msra.mxu0 %v224
  %273 = vmatprep.subr.mxu0 0.0
  %274 = vmatpush1.msra.mxu0 %v226
  %275 = vmatprep.subr.mxu0 0.0
  %276 = vmatpush1.msra.mxu0 %v228
  %277 = vmatprep.subr.mxu0 0.0
  %278 = vmatpush1.msra.mxu0 %v230
  %279 = vmatprep.subr.mxu0 0.0
  %280 = vmatpush1.msra.mxu0 %v232
  %281 = vmatprep.subr.mxu0 0.0
  %282 = vmatpush1.msra.mxu0 %v234
  %283 = vmatprep.subr.mxu0 0.0
  %284 = vmatpush1.msra.mxu0 %v236
  %285 = vmatprep.subr.mxu0 0.0
  %286 = vmatpush1.msra.mxu0 %v238
  %287 = vmatprep.subr.mxu0 0.0
  %288 = vmatpush1.msra.mxu0 %v240
  %289 = vmatprep.subr.mxu0 0.0
  %290 = vmatpush1.msra.mxu0 %v242
  %291 = vmatprep.subr.mxu0 0.0
  %292 = vmatpush1.msra.mxu0 %v244
  %293 = vmatprep.subr.mxu0 0.0
  %294 = vmatpush1.msra.mxu0 0.0
  %295 = vmatprep.subr.mxu0 0.0
  %296 = vmatpush1.msra.mxu0 0.0
  %297 = vmatprep.subr.mxu0 0.0
  %298 = vmatpush1.msra.mxu0 0.0
  %299 = vmatprep.subr.mxu0 0.0
  %300 = vmatpush1.msra.mxu0 0.0
  %301 = vmatprep.subr.mxu0 0.0
  %302 = vmatpush1.msra.mxu0 0.0
  %303 = vmatprep.subr.mxu0 0.0
  %304 = vmatpush1.msra.mxu0 0.0
  %305 = vmatprep.subr.mxu0 0.0
  %306 = vmatpush1.msra.mxu0 0.0
  %307 = vmatprep.subr.mxu0 0.0
  %308 = vmatpush1.msra.mxu0 0.0
  %309 = vmatprep.subr.mxu0 0.0
  %310 = vmatpush1.msra.mxu0 0.0
  %311 = vmatprep.subr.mxu0 0.0
  %312 = vmatpush1.msra.mxu0 0.0
  %313 = vmatprep.subr.mxu0 0.0
  %314 = vmatpush1.msra.mxu0 0.0
  %315 = vmatprep.subr.mxu0 0.0
  %316 = vmatpush1.msra.mxu0 0.0
  %317 = vmatprep.subr.mxu0 0.0
  %318 = vmatpush1.msra.mxu0 0.0
  %319 = vmatprep.subr.mxu0 0.0
  %320 = vmatpush1.msra.mxu0 0.0
  %321 = vmatprep.subr.mxu0 0.0
  %322 = vmatpush1.msra.mxu0 0.0
  %323 = vmatprep.subr.mxu0 0.0
  %324 = vmatpush1.msra.mxu0 0.0
  %325 = vmatprep.mubr.f32.mxu0 0.0
  %326 = vmatmul.mubr.f32.gmra.mrb[0].mxu0 %v67
  %v327 = vpop.f32.mrb[0].mxu0
  %v328 = vadd.f32 0.0, %v327
  %v329 = vpop.f32.mrb[0].mxu0
  %330 = vmatprep.mubr.f32.mxu0 0.0
  %331 = vmatmul.mubr.f32.gmra.mrb[0].mxu0 %v68
  %v332 = vpop.f32.mrb[0].mxu0
  %v333 = vadd.f32 0.0, %v332
  %v334 = vpop.f32.mrb[0].mxu0
  %335 = vmatprep.mubr.f32.mxu0 0.0
  %336 = vmatmul.mubr.f32.gmra.mrb[0].mxu0 %v69
  %v337 = vpop.f32.mrb[0].mxu0
  %v338 = vadd.f32 0.0, %v337
  %v339 = vpop.f32.mrb[0].mxu0
  %340 = vmatprep.mubr.f32.mxu0 0.0
  %341 = vmatmul.mubr.f32.gmra.mrb[0].mxu0 %v70
  %v342 = vpop.f32.mrb[0].mxu0
  %v343 = vadd.f32 0.0, %v342
  %v344 = vpop.f32.mrb[0].mxu0
  %345 = vmatprep.mubr.f32.mxu0 0.0
  %346 = vmatmul.mubr.f32.gmra.mrb[0].mxu0 %v71
  %v347 = vpop.f32.mrb[0].mxu0
  %v348 = vadd.f32 0.0, %v347
  %v349 = vpop.f32.mrb[0].mxu0
  %350 = vmatprep.mubr.f32.mxu0 0.0
  %351 = vmatmul.mubr.f32.gmra.mrb[0].mxu0 %v72
  %v352 = vpop.f32.mrb[0].mxu0
  %v353 = vadd.f32 0.0, %v352
  %v354 = vpop.f32.mrb[0].mxu0
  %355 = vmatprep.mubr.f32.mxu0 0.0
  %356 = vmatmul.mubr.f32.gmra.mrb[0].mxu0 %v73
  %v357 = vpop.f32.mrb[0].mxu0
  %v358 = vadd.f32 0.0, %v357
  %v359 = vpop.f32.mrb[0].mxu0
  %360 = vmatprep.mubr.f32.mxu0 0.0
  %361 = vmatmul.mubr.f32.gmra.mrb[0].mxu0 %v74
  %v362 = vpop.f32.mrb[0].mxu0
  %v363 = vadd.f32 0.0, %v362
  %v364 = vpop.f32.mrb[0].mxu0
  %365 = vmatprep.mubr.f32.mxu0 0.0
  %366 = vmatmul.mubr.f32.gmra.mrb[0].mxu0 %v75
  %v367 = vpop.f32.mrb[0].mxu0
  %v368 = vadd.f32 0.0, %v367
  %v369 = vpop.f32.mrb[0].mxu0
  %370 = vmatprep.mubr.f32.mxu0 0.0
  %371 = vmatmul.mubr.f32.gmra.mrb[0].mxu0 %v76
  %v372 = vpop.f32.mrb[0].mxu0
  %v373 = vadd.f32 0.0, %v372
  %v374 = vpop.f32.mrb[0].mxu0
  %375 = vmatprep.mubr.f32.mxu0 0.0
  %376 = vmatmul.mubr.f32.gmra.mrb[0].mxu0 %v77
  %v377 = vpop.f32.mrb[0].mxu0
  %v378 = vadd.f32 0.0, %v377
  %v379 = vpop.f32.mrb[0].mxu0
  %380 = vmatprep.mubr.f32.mxu0 0.0
  %381 = vmatmul.mubr.f32.gmra.mrb[0].mxu0 %v78
  %v382 = vpop.f32.mrb[0].mxu0
  %v383 = vadd.f32 0.0, %v382
  %v384 = vpop.f32.mrb[0].mxu0
  %385 = vmatprep.mubr.f32.mxu0 0.0
  %386 = vmatmul.mubr.f32.gmra.mrb[0].mxu0 %v79
  %v387 = vpop.f32.mrb[0].mxu0
  %v388 = vadd.f32 0.0, %v387
  %v389 = vpop.f32.mrb[0].mxu0
  %390 = vmatprep.mubr.f32.mxu0 0.0
  %391 = vmatmul.mubr.f32.gmra.mrb[0].mxu0 %v80
  %v392 = vpop.f32.mrb[0].mxu0
  %v393 = vadd.f32 0.0, %v392
  %v394 = vpop.f32.mrb[0].mxu0
  %395 = vmatprep.mubr.f32.mxu0 0.0
  %396 = vmatmul.mubr.f32.gmra.mrb[0].mxu0 %v81
  %v397 = vpop.f32.mrb[0].mxu0
  %v398 = vadd.f32 0.0, %v397
  %v399 = vpop.f32.mrb[0].mxu0
  %400 = vmatprep.mubr.f32.mxu0 0.0
  %401 = vmatmul.mubr.f32.gmra.mrb[0].mxu0 %v82
  %v402 = vpop.f32.mrb[0].mxu0
  %v403 = vadd.f32 0.0, %v402
  %v404 = vpop.f32.mrb[0].mxu0
  %405 = vdwg.mxu0
  %407 = vset.pattern.permute.xlu0 0
  %408 = vperm.xlu0 %407, %v328
  %v409 = vpop.permute.xlu0 %408
  %412 = vset.pattern.permute.xlu0 0
  %413 = vperm.xlu0 %412, %v333
  %v414 = vpop.permute.xlu0 %413
  %417 = vset.pattern.permute.xlu0 0
  %418 = vperm.xlu0 %417, %v338
  %v419 = vpop.permute.xlu0 %418
  %422 = vset.pattern.permute.xlu0 0
  %423 = vperm.xlu0 %422, %v343
  %v424 = vpop.permute.xlu0 %423
  %427 = vset.pattern.permute.xlu0 0
  %428 = vperm.xlu0 %427, %v348
  %v429 = vpop.permute.xlu0 %428
  %432 = vset.pattern.permute.xlu0 0
  %433 = vperm.xlu0 %432, %v353
  %v434 = vpop.permute.xlu0 %433
  %437 = vset.pattern.permute.xlu0 0
  %438 = vperm.xlu0 %437, %v358
  %v439 = vpop.permute.xlu0 %438
  %442 = vset.pattern.permute.xlu0 0
  %443 = vperm.xlu0 %442, %v363
  %v444 = vpop.permute.xlu0 %443
  %447 = vset.pattern.permute.xlu0 0
  %448 = vperm.xlu0 %447, %v368
  %v449 = vpop.permute.xlu0 %448
  %452 = vset.pattern.permute.xlu0 0
  %453 = vperm.xlu0 %452, %v373
  %v454 = vpop.permute.xlu0 %453
  %457 = vset.pattern.permute.xlu0 0
  %458 = vperm.xlu0 %457, %v378
  %v459 = vpop.permute.xlu0 %458
  %462 = vset.pattern.permute.xlu0 0
  %463 = vperm.xlu0 %462, %v383
  %v464 = vpop.permute.xlu0 %463
  %467 = vset.pattern.permute.xlu0 0
  %468 = vperm.xlu0 %467, %v388
  %v469 = vpop.permute.xlu0 %468
  %472 = vset.pattern.permute.xlu0 0
  %473 = vperm.xlu0 %472, %v393
  %v474 = vpop.permute.xlu0 %473
  %477 = vset.pattern.permute.xlu0 0
  %478 = vperm.xlu0 %477, %v398
  %v479 = vpop.permute.xlu0 %478
  %482 = vset.pattern.permute.xlu0 0
  %483 = vperm.xlu0 %482, %v403
  %v484 = vpop.permute.xlu0 %483
  %vm486 = vcmp.eq.f32.partialorder %v34, %v409
  %vm487 = vcmp.eq.f32.partialorder %v34, %v414
  %vm488 = vcmp.eq.f32.partialorder %v34, %v419
  %vm489 = vcmp.eq.f32.partialorder %v34, %v424
  %vm490 = vcmp.eq.f32.partialorder %v34, %v429
  %vm491 = vcmp.eq.f32.partialorder %v34, %v434
  %vm492 = vcmp.eq.f32.partialorder %v34, %v439
  %vm493 = vcmp.eq.f32.partialorder %v34, %v444
  %vm494 = vcmp.eq.f32.partialorder %v34, %v449
  %vm495 = vcmp.eq.f32.partialorder %v34, %v454
  %vm496 = vcmp.eq.f32.partialorder %v34, %v459
  %vm497 = vcmp.eq.f32.partialorder %v34, %v464
  %vm498 = vcmp.eq.f32.partialorder %v34, %v469
  %vm499 = vcmp.eq.f32.partialorder %v34, %v474
  %vm500 = vcmp.eq.f32.partialorder %v34, %v479
  %vm501 = vcmp.eq.f32.partialorder %v34, %v484
  %502 = vset.pattern.permute.xlu0 8
  %503 = vperm.xlu0 %502, %v165
  %v504 = vpop.permute.xlu0 %503
  %505 = vset.pattern.permute.xlu0 8
  %506 = vperm.xlu0 %505, %v166
  %v507 = vpop.permute.xlu0 %506
  %508 = vset.pattern.permute.xlu0 8
  %509 = vperm.xlu0 %508, %v167
  %v510 = vpop.permute.xlu0 %509
  %511 = vset.pattern.permute.xlu0 8
  %512 = vperm.xlu0 %511, %v168
  %v513 = vpop.permute.xlu0 %512
  %514 = vset.pattern.permute.xlu0 8
  %515 = vperm.xlu0 %514, %v169
  %v516 = vpop.permute.xlu0 %515
  %517 = vset.pattern.permute.xlu0 8
  %518 = vperm.xlu0 %517, %v170
  %v519 = vpop.permute.xlu0 %518
  %520 = vset.pattern.permute.xlu0 8
  %521 = vperm.xlu0 %520, %v171
  %v522 = vpop.permute.xlu0 %521
  %523 = vset.pattern.permute.xlu0 8
  %524 = vperm.xlu0 %523, %v172
  %v525 = vpop.permute.xlu0 %524
  %526 = vset.pattern.permute.xlu0 8
  %527 = vperm.xlu0 %526, %v173
  %v528 = vpop.permute.xlu0 %527
  %529 = vset.pattern.permute.xlu0 8
  %530 = vperm.xlu0 %529, %v174
  %v531 = vpop.permute.xlu0 %530
  %532 = vset.pattern.permute.xlu0 8
  %533 = vperm.xlu0 %532, %v175
  %v534 = vpop.permute.xlu0 %533
  %535 = vset.pattern.permute.xlu0 8
  %536 = vperm.xlu0 %535, %v176
  %v537 = vpop.permute.xlu0 %536
  %538 = vset.pattern.permute.xlu0 8
  %539 = vperm.xlu0 %538, %v177
  %v540 = vpop.permute.xlu0 %539
  %541 = vset.pattern.permute.xlu0 8
  %542 = vperm.xlu0 %541, %v178
  %v543 = vpop.permute.xlu0 %542
  %544 = vset.pattern.permute.xlu0 8
  %545 = vperm.xlu0 %544, %v179
  %v546 = vpop.permute.xlu0 %545
  %547 = vset.pattern.permute.xlu0 8
  %548 = vperm.xlu0 %547, %v180
  %v549 = vpop.permute.xlu0 %548
  %vm550 = vcmp.eq.s32.totalorder %v504, 1
  %vm551 = vcmp.eq.s32.totalorder %v507, 1
  %vm552 = vcmp.eq.s32.totalorder %v510, 1
  %vm553 = vcmp.eq.s32.totalorder %v513, 1
  %vm554 = vcmp.eq.s32.totalorder %v516, 1
  %vm555 = vcmp.eq.s32.totalorder %v519, 1
  %vm556 = vcmp.eq.s32.totalorder %v522, 1
  %vm557 = vcmp.eq.s32.totalorder %v525, 1
  %vm558 = vcmp.eq.s32.totalorder %v528, 1
  %vm559 = vcmp.eq.s32.totalorder %v531, 1
  %vm560 = vcmp.eq.s32.totalorder %v534, 1
  %vm561 = vcmp.eq.s32.totalorder %v537, 1
  %vm562 = vcmp.eq.s32.totalorder %v540, 1
  %vm563 = vcmp.eq.s32.totalorder %v543, 1
  %vm564 = vcmp.eq.s32.totalorder %v546, 1
  %vm565 = vcmp.eq.s32.totalorder %v549, 1
  %vm566 = vmand %vm486, %vm550
  %vm567 = vmand %vm487, %vm551
  %vm568 = vmand %vm488, %vm552
  %vm569 = vmand %vm489, %vm553
  %vm570 = vmand %vm490, %vm554
  %vm571 = vmand %vm491, %vm555
  %vm572 = vmand %vm492, %vm556
  %vm573 = vmand %vm493, %vm557
  %vm574 = vmand %vm494, %vm558
  %vm575 = vmand %vm495, %vm559
  %vm576 = vmand %vm496, %vm560
  %vm577 = vmand %vm497, %vm561
  %vm578 = vmand %vm498, %vm562
  %vm579 = vmand %vm499, %vm563
  %vm580 = vmand %vm500, %vm564
  %vm581 = vmand %vm501, %vm565
  %v582 = vsel %vm566, 1.0, 0.0
  %v583 = vsel %vm567, 1.0, 0.0
  %v584 = vsel %vm568, 1.0, 0.0
  %v585 = vsel %vm569, 1.0, 0.0
  %v586 = vsel %vm570, 1.0, 0.0
  %v587 = vsel %vm571, 1.0, 0.0
  %v588 = vsel %vm572, 1.0, 0.0
  %v589 = vsel %vm573, 1.0, 0.0
  %v590 = vsel %vm574, 1.0, 0.0
  %v591 = vsel %vm575, 1.0, 0.0
  %v592 = vsel %vm576, 1.0, 0.0
  %v593 = vsel %vm577, 1.0, 0.0
  %v594 = vsel %vm578, 1.0, 0.0
  %v595 = vsel %vm579, 1.0, 0.0
  %v596 = vsel %vm580, 1.0, 0.0
  %v597 = vsel %vm581, 1.0, 0.0
  %598 = vxpose.xlu0.b32.start [1/16] %v582, 128
  %599 = vxpose.xlu0.b32.cont [2/16] %v583, 128
  %600 = vxpose.xlu0.b32.cont [3/16] %v584, 128
  %601 = vxpose.xlu0.b32.cont [4/16] %v585, 128
  %602 = vxpose.xlu0.b32.cont [5/16] %v586, 128
  %603 = vxpose.xlu0.b32.cont [6/16] %v587, 128
  %604 = vxpose.xlu0.b32.cont [7/16] %v588, 128
  %605 = vxpose.xlu0.b32.cont [8/16] %v589, 128
  %606 = vxpose.xlu0.b32.cont [9/16] %v590, 128
  %607 = vxpose.xlu0.b32.cont [10/16] %v591, 128
  %608 = vxpose.xlu0.b32.cont [11/16] %v592, 128
  %609 = vxpose.xlu0.b32.cont [12/16] %v593, 128
  %610 = vxpose.xlu0.b32.cont [13/16] %v594, 128
  %611 = vxpose.xlu0.b32.cont [14/16] %v595, 128
  %612 = vxpose.xlu0.b32.cont [15/16] %v596, 128
  %613 = vxpose.xlu0.b32.end [16/16] %v597, 128
  %v614 = vpop.trf.xlu0
  %v615 = vpop.trf.xlu0
  %v616 = vpop.trf.xlu0
  %v617 = vpop.trf.xlu0
  %v618 = vpop.trf.xlu0
  %v619 = vpop.trf.xlu0
  %v620 = vpop.trf.xlu0
  %v621 = vpop.trf.xlu0
  %v622 = vpop.trf.xlu0
  %v623 = vpop.trf.xlu0
  %v624 = vpop.trf.xlu0
  %v625 = vpop.trf.xlu0
  %v626 = vpop.trf.xlu0
  %v627 = vpop.trf.xlu0
  %v628 = vpop.trf.xlu0
  %v629 = vpop.trf.xlu0
  %630 = vmatprep.subr.mxu0 0.0
  %v631 = vand.u32 %v84, 4294901760
  %632 = vmatpush1.msra.mxu0 %v631
  %633 = vmatprep.subr.mxu0 0.0
  %v634 = vand.u32 %v85, 4294901760
  %635 = vmatpush1.msra.mxu0 %v634
  %636 = vmatprep.subr.mxu0 0.0
  %v637 = vand.u32 %v86, 4294901760
  %638 = vmatpush1.msra.mxu0 %v637
  %639 = vmatprep.subr.mxu0 0.0
  %v640 = vand.u32 %v87, 4294901760
  %641 = vmatpush1.msra.mxu0 %v640
  %642 = vmatprep.subr.mxu0 0.0
  %v643 = vand.u32 %v88, 4294901760
  %644 = vmatpush1.msra.mxu0 %v643
  %645 = vmatprep.subr.mxu0 0.0
  %v646 = vand.u32 %v89, 4294901760
  %647 = vmatpush1.msra.mxu0 %v646
  %648 = vmatprep.subr.mxu0 0.0
  %v649 = vand.u32 %v90, 4294901760
  %650 = vmatpush1.msra.mxu0 %v649
  %651 = vmatprep.subr.mxu0 0.0
  %v652 = vand.u32 %v91, 4294901760
  %653 = vmatpush1.msra.mxu0 %v652
  %654 = vmatprep.subr.mxu0 0.0
  %v655 = vand.u32 %v92, 4294901760
  %656 = vmatpush1.msra.mxu0 %v655
  %657 = vmatprep.subr.mxu0 0.0
  %v658 = vand.u32 %v93, 4294901760
  %659 = vmatpush1.msra.mxu0 %v658
  %660 = vmatprep.subr.mxu0 0.0
  %v661 = vand.u32 %v94, 4294901760
  %662 = vmatpush1.msra.mxu0 %v661
  %663 = vmatprep.subr.mxu0 0.0
  %v664 = vand.u32 %v95, 4294901760
  %665 = vmatpush1.msra.mxu0 %v664
  %666 = vmatprep.subr.mxu0 0.0
  %v667 = vand.u32 %v96, 4294901760
  %668 = vmatpush1.msra.mxu0 %v667
  %669 = vmatprep.subr.mxu0 0.0
  %v670 = vand.u32 %v97, 4294901760
  %671 = vmatpush1.msra.mxu0 %v670
  %672 = vmatprep.subr.mxu0 0.0
  %v673 = vand.u32 %v98, 4294901760
  %674 = vmatpush1.msra.mxu0 %v673
  %675 = vmatprep.subr.mxu0 0.0
  %v676 = vand.u32 %v99, 4294901760
  %677 = vmatpush1.msra.mxu0 %v676
  %678 = vmatprep.subr.mxu0 0.0
  %679 = vmatpush1.msra.mxu0 0.0
  %680 = vmatprep.subr.mxu0 0.0
  %681 = vmatpush1.msra.mxu0 0.0
  %682 = vmatprep.subr.mxu0 0.0
  %683 = vmatpush1.msra.mxu0 0.0
  %684 = vmatprep.subr.mxu0 0.0
  %685 = vmatpush1.msra.mxu0 0.0
  %686 = vmatprep.subr.mxu0 0.0
  %687 = vmatpush1.msra.mxu0 0.0
  %688 = vmatprep.subr.mxu0 0.0
  %689 = vmatpush1.msra.mxu0 0.0
  %690 = vmatprep.subr.mxu0 0.0
  %691 = vmatpush1.msra.mxu0 0.0
  %692 = vmatprep.subr.mxu0 0.0
  %693 = vmatpush1.msra.mxu0 0.0
  %694 = vmatprep.subr.mxu0 0.0
  %695 = vmatpush1.msra.mxu0 0.0
  %696 = vmatprep.subr.mxu0 0.0
  %697 = vmatpush1.msra.mxu0 0.0
  %698 = vmatprep.subr.mxu0 0.0
  %699 = vmatpush1.msra.mxu0 0.0
  %700 = vmatprep.subr.mxu0 0.0
  %701 = vmatpush1.msra.mxu0 0.0
  %702 = vmatprep.subr.mxu0 0.0
  %703 = vmatpush1.msra.mxu0 0.0
  %704 = vmatprep.subr.mxu0 0.0
  %705 = vmatpush1.msra.mxu0 0.0
  %706 = vmatprep.subr.mxu0 0.0
  %707 = vmatpush1.msra.mxu0 0.0
  %708 = vmatprep.subr.mxu0 0.0
  %709 = vmatpush1.msra.mxu0 0.0
  %710 = vmatprep.mubr.f32.mxu0 0.0
  %v711 = vand.u32 %v614, 4294901760
  %v712 = vsub.f32 %v614, %v711
  %v713 = vand.u32 %v712, 4294901760
  %v714 = vsub.f32 %v712, %v713
  %v715 = vand.u32 %v714, 4294901760
  %716 = vmatmul.mubr.f32.gmra.mrb[0].mxu0 %v715
  %v717 = vpop.f32.mrb[0].mxu0
  %v718 = vadd.f32 0.0, %v717
  %v719 = vpop.f32.mrb[0].mxu0
  %720 = vmatprep.mubr.f32.mxu0 0.0
  %v721 = vand.u32 %v615, 4294901760
  %v722 = vsub.f32 %v615, %v721
  %v723 = vand.u32 %v722, 4294901760
  %v724 = vsub.f32 %v722, %v723
  %v725 = vand.u32 %v724, 4294901760
  %726 = vmatmul.mubr.f32.gmra.mrb[0].mxu0 %v725
  %v727 = vpop.f32.mrb[0].mxu0
  %v728 = vadd.f32 0.0, %v727
  %v729 = vpop.f32.mrb[0].mxu0
  %730 = vmatprep.mubr.f32.mxu0 0.0
  %v731 = vand.u32 %v616, 4294901760
  %v732 = vsub.f32 %v616, %v731
  %v733 = vand.u32 %v732, 4294901760
  %v734 = vsub.f32 %v732, %v733
  %v735 = vand.u32 %v734, 4294901760
  %736 = vmatmul.mubr.f32.gmra.mrb[0].mxu0 %v735
  %v737 = vpop.f32.mrb[0].mxu0
  %v738 = vadd.f32 0.0, %v737
  %v739 = vpop.f32.mrb[0].mxu0
  %740 = vmatprep.mubr.f32.mxu0 0.0
  %v741 = vand.u32 %v617, 4294901760
  %v742 = vsub.f32 %v617, %v741
  %v743 = vand.u32 %v742, 4294901760
  %v744 = vsub.f32 %v742, %v743
  %v745 = vand.u32 %v744, 4294901760
  %746 = vmatmul.mubr.f32.gmra.mrb[0].mxu0 %v745
  %v747 = vpop.f32.mrb[0].mxu0
  %v748 = vadd.f32 0.0, %v747
  %v749 = vpop.f32.mrb[0].mxu0
  %750 = vmatprep.mubr.f32.mxu0 0.0
  %v751 = vand.u32 %v618, 4294901760
  %v752 = vsub.f32 %v618, %v751
  %v753 = vand.u32 %v752, 4294901760
  %v754 = vsub.f32 %v752, %v753
  %v755 = vand.u32 %v754, 4294901760
  %756 = vmatmul.mubr.f32.gmra.mrb[0].mxu0 %v755
  %v757 = vpop.f32.mrb[0].mxu0
  %v758 = vadd.f32 0.0, %v757
  %v759 = vpop.f32.mrb[0].mxu0
  %760 = vmatprep.mubr.f32.mxu0 0.0
  %v761 = vand.u32 %v619, 4294901760
  %v762 = vsub.f32 %v619, %v761
  %v763 = vand.u32 %v762, 4294901760
  %v764 = vsub.f32 %v762, %v763
  %v765 = vand.u32 %v764, 4294901760
  %766 = vmatmul.mubr.f32.gmra.mrb[0].mxu0 %v765
  %v767 = vpop.f32.mrb[0].mxu0
  %v768 = vadd.f32 0.0, %v767
  %v769 = vpop.f32.mrb[0].mxu0
  %770 = vmatprep.mubr.f32.mxu0 0.0
  %v771 = vand.u32 %v620, 4294901760
  %v772 = vsub.f32 %v620, %v771
  %v773 = vand.u32 %v772, 4294901760
  %v774 = vsub.f32 %v772, %v773
  %v775 = vand.u32 %v774, 4294901760
  %776 = vmatmul.mubr.f32.gmra.mrb[0].mxu0 %v775
  %v777 = vpop.f32.mrb[0].mxu0
  %v778 = vadd.f32 0.0, %v777
  %v779 = vpop.f32.mrb[0].mxu0
  %780 = vmatprep.mubr.f32.mxu0 0.0
  %v781 = vand.u32 %v621, 4294901760
  %v782 = vsub.f32 %v621, %v781
  %v783 = vand.u32 %v782, 4294901760
  %v784 = vsub.f32 %v782, %v783
  %v785 = vand.u32 %v784, 4294901760
  %786 = vmatmul.mubr.f32.gmra.mrb[0].mxu0 %v785
  %v787 = vpop.f32.mrb[0].mxu0
  %v788 = vadd.f32 0.0, %v787
  %v789 = vpop.f32.mrb[0].mxu0
  %790 = vmatprep.mubr.f32.mxu0 0.0
  %v791 = vand.u32 %v622, 4294901760
  %v792 = vsub.f32 %v622, %v791
  %v793 = vand.u32 %v792, 4294901760
  %v794 = vsub.f32 %v792, %v793
  %v795 = vand.u32 %v794, 4294901760
  %796 = vmatmul.mubr.f32.gmra.mrb[0].mxu0 %v795
  %v797 = vpop.f32.mrb[0].mxu0
  %v798 = vadd.f32 0.0, %v797
  %v799 = vpop.f32.mrb[0].mxu0
  %800 = vmatprep.mubr.f32.mxu0 0.0
  %v801 = vand.u32 %v623, 4294901760
  %v802 = vsub.f32 %v623, %v801
  %v803 = vand.u32 %v802, 4294901760
  %v804 = vsub.f32 %v802, %v803
  %v805 = vand.u32 %v804, 4294901760
  %806 = vmatmul.mubr.f32.gmra.mrb[0].mxu0 %v805
  %v807 = vpop.f32.mrb[0].mxu0
  %v808 = vadd.f32 0.0, %v807
  %v809 = vpop.f32.mrb[0].mxu0
  %810 = vmatprep.mubr.f32.mxu0 0.0
  %v811 = vand.u32 %v624, 4294901760
  %v812 = vsub.f32 %v624, %v811
  %v813 = vand.u32 %v812, 4294901760
  %v814 = vsub.f32 %v812, %v813
  %v815 = vand.u32 %v814, 4294901760
  %816 = vmatmul.mubr.f32.gmra.mrb[0].mxu0 %v815
  %v817 = vpop.f32.mrb[0].mxu0
  %v818 = vadd.f32 0.0, %v817
  %v819 = vpop.f32.mrb[0].mxu0
  %820 = vmatprep.mubr.f32.mxu0 0.0
  %v821 = vand.u32 %v625, 4294901760
  %v822 = vsub.f32 %v625, %v821
  %v823 = vand.u32 %v822, 4294901760
  %v824 = vsub.f32 %v822, %v823
  %v825 = vand.u32 %v824, 4294901760
  %826 = vmatmul.mubr.f32.gmra.mrb[0].mxu0 %v825
  %v827 = vpop.f32.mrb[0].mxu0
  %v828 = vadd.f32 0.0, %v827
  %v829 = vpop.f32.mrb[0].mxu0
  %830 = vmatprep.mubr.f32.mxu0 0.0
  %v831 = vand.u32 %v626, 4294901760
  %v832 = vsub.f32 %v626, %v831
  %v833 = vand.u32 %v832, 4294901760
  %v834 = vsub.f32 %v832, %v833
  %v835 = vand.u32 %v834, 4294901760
  %836 = vmatmul.mubr.f32.gmra.mrb[0].mxu0 %v835
  %v837 = vpop.f32.mrb[0].mxu0
  %v838 = vadd.f32 0.0, %v837
  %v839 = vpop.f32.mrb[0].mxu0
  %840 = vmatprep.mubr.f32.mxu0 0.0
  %v841 = vand.u32 %v627, 4294901760
  %v842 = vsub.f32 %v627, %v841
  %v843 = vand.u32 %v842, 4294901760
  %v844 = vsub.f32 %v842, %v843
  %v845 = vand.u32 %v844, 4294901760
  %846 = vmatmul.mubr.f32.gmra.mrb[0].mxu0 %v845
  %v847 = vpop.f32.mrb[0].mxu0
  %v848 = vadd.f32 0.0, %v847
  %v849 = vpop.f32.mrb[0].mxu0
  %850 = vmatprep.mubr.f32.mxu0 0.0
  %v851 = vand.u32 %v628, 4294901760
  %v852 = vsub.f32 %v628, %v851
  %v853 = vand.u32 %v852, 4294901760
  %v854 = vsub.f32 %v852, %v853
  %v855 = vand.u32 %v854, 4294901760
  %856 = vmatmul.mubr.f32.gmra.mrb[0].mxu0 %v855
  %v857 = vpop.f32.mrb[0].mxu0
  %v858 = vadd.f32 0.0, %v857
  %v859 = vpop.f32.mrb[0].mxu0
  %860 = vmatprep.mubr.f32.mxu0 0.0
  %v861 = vand.u32 %v629, 4294901760
  %v862 = vsub.f32 %v629, %v861
  %v863 = vand.u32 %v862, 4294901760
  %v864 = vsub.f32 %v862, %v863
  %v865 = vand.u32 %v864, 4294901760
  %866 = vmatmul.mubr.f32.gmra.mrb[0].mxu0 %v865
  %v867 = vpop.f32.mrb[0].mxu0
  %v868 = vadd.f32 0.0, %v867
  %v869 = vpop.f32.mrb[0].mxu0
  %870 = vdwg.mxu0
  %871 = vmatprep.subr.mxu0 0.0
  %v872 = vand.u32 %v84, 4294901760
  %v873 = vsub.f32 %v84, %v872
  %v874 = vand.u32 %v873, 4294901760
  %v875 = vsub.f32 %v873, %v874
  %v876 = vand.u32 %v875, 4294901760
  %877 = vmatpush1.msra.mxu0 %v876
  %878 = vmatprep.subr.mxu0 0.0
  %v879 = vand.u32 %v85, 4294901760
  %v880 = vsub.f32 %v85, %v879
  %v881 = vand.u32 %v880, 4294901760
  %v882 = vsub.f32 %v880, %v881
  %v883 = vand.u32 %v882, 4294901760
  %884 = vmatpush1.msra.mxu0 %v883
  %885 = vmatprep.subr.mxu0 0.0
  %v886 = vand.u32 %v86, 4294901760
  %v887 = vsub.f32 %v86, %v886
  %v888 = vand.u32 %v887, 4294901760
  %v889 = vsub.f32 %v887, %v888
  %v890 = vand.u32 %v889, 4294901760
  %891 = vmatpush1.msra.mxu0 %v890
  %892 = vmatprep.subr.mxu0 0.0
  %v893 = vand.u32 %v87, 4294901760
  %v894 = vsub.f32 %v87, %v893
  %v895 = vand.u32 %v894, 4294901760
  %v896 = vsub.f32 %v894, %v895
  %v897 = vand.u32 %v896, 4294901760
  %898 = vmatpush1.msra.mxu0 %v897
  %899 = vmatprep.subr.mxu0 0.0
  %v900 = vand.u32 %v88, 4294901760
  %v901 = vsub.f32 %v88, %v900
  %v902 = vand.u32 %v901, 4294901760
  %v903 = vsub.f32 %v901, %v902
  %v904 = vand.u32 %v903, 4294901760
  %905 = vmatpush1.msra.mxu0 %v904
  %906 = vmatprep.subr.mxu0 0.0
  %v907 = vand.u32 %v89, 4294901760
  %v908 = vsub.f32 %v89, %v907
  %v909 = vand.u32 %v908, 4294901760
  %v910 = vsub.f32 %v908, %v909
  %v911 = vand.u32 %v910, 4294901760
  %912 = vmatpush1.msra.mxu0 %v911
  %913 = vmatprep.subr.mxu0 0.0
  %v914 = vand.u32 %v90, 4294901760
  %v915 = vsub.f32 %v90, %v914
  %v916 = vand.u32 %v915, 4294901760
  %v917 = vsub.f32 %v915, %v916
  %v918 = vand.u32 %v917, 4294901760
  %919 = vmatpush1.msra.mxu0 %v918
  %920 = vmatprep.subr.mxu0 0.0
  %v921 = vand.u32 %v91, 4294901760
  %v922 = vsub.f32 %v91, %v921
  %v923 = vand.u32 %v922, 4294901760
  %v924 = vsub.f32 %v922, %v923
  %v925 = vand.u32 %v924, 4294901760
  %926 = vmatpush1.msra.mxu0 %v925
  %927 = vmatprep.subr.mxu0 0.0
  %v928 = vand.u32 %v92, 4294901760
  %v929 = vsub.f32 %v92, %v928
  %v930 = vand.u32 %v929, 4294901760
  %v931 = vsub.f32 %v929, %v930
  %v932 = vand.u32 %v931, 4294901760
  %933 = vmatpush1.msra.mxu0 %v932
  %934 = vmatprep.subr.mxu0 0.0
  %v935 = vand.u32 %v93, 4294901760
  %v936 = vsub.f32 %v93, %v935
  %v937 = vand.u32 %v936, 4294901760
  %v938 = vsub.f32 %v936, %v937
  %v939 = vand.u32 %v938, 4294901760
  %940 = vmatpush1.msra.mxu0 %v939
  %941 = vmatprep.subr.mxu0 0.0
  %v942 = vand.u32 %v94, 4294901760
  %v943 = vsub.f32 %v94, %v942
  %v944 = vand.u32 %v943, 4294901760
  %v945 = vsub.f32 %v943, %v944
  %v946 = vand.u32 %v945, 4294901760
  %947 = vmatpush1.msra.mxu0 %v946
  %948 = vmatprep.subr.mxu0 0.0
  %v949 = vand.u32 %v95, 4294901760
  %v950 = vsub.f32 %v95, %v949
  %v951 = vand.u32 %v950, 4294901760
  %v952 = vsub.f32 %v950, %v951
  %v953 = vand.u32 %v952, 4294901760
  %954 = vmatpush1.msra.mxu0 %v953
  %955 = vmatprep.subr.mxu0 0.0
  %v956 = vand.u32 %v96, 4294901760
  %v957 = vsub.f32 %v96, %v956
  %v958 = vand.u32 %v957, 4294901760
  %v959 = vsub.f32 %v957, %v958
  %v960 = vand.u32 %v959, 4294901760
  %961 = vmatpush1.msra.mxu0 %v960
  %962 = vmatprep.subr.mxu0 0.0
  %v963 = vand.u32 %v97, 4294901760
  %v964 = vsub.f32 %v97, %v963
  %v965 = vand.u32 %v964, 4294901760
  %v966 = vsub.f32 %v964, %v965
  %v967 = vand.u32 %v966, 4294901760
  %968 = vmatpush1.msra.mxu0 %v967
  %969 = vmatprep.subr.mxu0 0.0
  %v970 = vand.u32 %v98, 4294901760
  %v971 = vsub.f32 %v98, %v970
  %v972 = vand.u32 %v971, 4294901760
  %v973 = vsub.f32 %v971, %v972
  %v974 = vand.u32 %v973, 4294901760
  %975 = vmatpush1.msra.mxu0 %v974
  %976 = vmatprep.subr.mxu0 0.0
  %v977 = vand.u32 %v99, 4294901760
  %v978 = vsub.f32 %v99, %v977
  %v979 = vand.u32 %v978, 4294901760
  %v980 = vsub.f32 %v978, %v979
  %v981 = vand.u32 %v980, 4294901760
  %982 = vmatpush1.msra.mxu0 %v981
  %983 = vmatprep.subr.mxu0 0.0
  %984 = vmatpush1.msra.mxu0 0.0
  %985 = vmatprep.subr.mxu0 0.0
  %986 = vmatpush1.msra.mxu0 0.0
  %987 = vmatprep.subr.mxu0 0.0
  %988 = vmatpush1.msra.mxu0 0.0
  %989 = vmatprep.subr.mxu0 0.0
  %990 = vmatpush1.msra.mxu0 0.0
  %991 = vmatprep.subr.mxu0 0.0
  %992 = vmatpush1.msra.mxu0 0.0
  %993 = vmatprep.subr.mxu0 0.0
  %994 = vmatpush1.msra.mxu0 0.0
  %995 = vmatprep.subr.mxu0 0.0
  %996 = vmatpush1.msra.mxu0 0.0
  %997 = vmatprep.subr.mxu0 0.0
  %998 = vmatpush1.msra.mxu0 0.0
  %999 = vmatprep.subr.mxu0 0.0
  %1000 = vmatpush1.msra.mxu0 0.0
  %1001 = vmatprep.subr.mxu0 0.0
  %1002 = vmatpush1.msra.mxu0 0.0
  %1003 = vmatprep.subr.mxu0 0.0
  %1004 = vmatpush1.msra.mxu0 0.0
  %1005 = vmatprep.subr.mxu0 0.0
  %1006 = vmatpush1.msra.mxu0 0.0
  %1007 = vmatprep.subr.mxu0 0.0
  %1008 = vmatpush1.msra.mxu0 0.0
  %1009 = vmatprep.subr.mxu0 0.0
  %1010 = vmatpush1.msra.mxu0 0.0
  %1011 = vmatprep.subr.mxu0 0.0
  %1012 = vmatpush1.msra.mxu0 0.0
  %1013 = vmatprep.subr.mxu0 0.0
  %1014 = vmatpush1.msra.mxu0 0.0
  %1015 = vmatprep.mubr.f32.mxu0 0.0
  %v1016 = vand.u32 %v614, 4294901760
  %1017 = vmatmul.mubr.f32.gmra.mrb[0].mxu0 %v1016
  %v1018 = vpop.f32.mrb[0].mxu0
  %v1019 = vadd.f32 %v718, %v1018
  %v1020 = vpop.f32.mrb[0].mxu0
  %1021 = vmatprep.mubr.f32.mxu0 0.0
  %v1022 = vand.u32 %v615, 4294901760
  %1023 = vmatmul.mubr.f32.gmra.mrb[0].mxu0 %v1022
  %v1024 = vpop.f32.mrb[0].mxu0
  %v1025 = vadd.f32 %v728, %v1024
  %v1026 = vpop.f32.mrb[0].mxu0
  %1027 = vmatprep.mubr.f32.mxu0 0.0
  %v1028 = vand.u32 %v616, 4294901760
  %1029 = vmatmul.mubr.f32.gmra.mrb[0].mxu0 %v1028
  %v1030 = vpop.f32.mrb[0].mxu0
  %v1031 = vadd.f32 %v738, %v1030
  %v1032 = vpop.f32.mrb[0].mxu0
  %1033 = vmatprep.mubr.f32.mxu0 0.0
  %v1034 = vand.u32 %v617, 4294901760
  %1035 = vmatmul.mubr.f32.gmra.mrb[0].mxu0 %v1034
  %v1036 = vpop.f32.mrb[0].mxu0
  %v1037 = vadd.f32 %v748, %v1036
  %v1038 = vpop.f32.mrb[0].mxu0
  %1039 = vmatprep.mubr.f32.mxu0 0.0
  %v1040 = vand.u32 %v618, 4294901760
  %1041 = vmatmul.mubr.f32.gmra.mrb[0].mxu0 %v1040
  %v1042 = vpop.f32.mrb[0].mxu0
  %v1043 = vadd.f32 %v758, %v1042
  %v1044 = vpop.f32.mrb[0].mxu0
  %1045 = vmatprep.mubr.f32.mxu0 0.0
  %v1046 = vand.u32 %v619, 4294901760
  %1047 = vmatmul.mubr.f32.gmra.mrb[0].mxu0 %v1046
  %v1048 = vpop.f32.mrb[0].mxu0
  %v1049 = vadd.f32 %v768, %v1048
  %v1050 = vpop.f32.mrb[0].mxu0
  %1051 = vmatprep.mubr.f32.mxu0 0.0
  %v1052 = vand.u32 %v620, 4294901760
  %1053 = vmatmul.mubr.f32.gmra.mrb[0].mxu0 %v1052
  %v1054 = vpop.f32.mrb[0].mxu0
  %v1055 = vadd.f32 %v778, %v1054
  %v1056 = vpop.f32.mrb[0].mxu0
  %1057 = vmatprep.mubr.f32.mxu0 0.0
  %v1058 = vand.u32 %v621, 4294901760
  %1059 = vmatmul.mubr.f32.gmra.mrb[0].mxu0 %v1058
  %v1060 = vpop.f32.mrb[0].mxu0
  %v1061 = vadd.f32 %v788, %v1060
  %v1062 = vpop.f32.mrb[0].mxu0
  %1063 = vmatprep.mubr.f32.mxu0 0.0
  %v1064 = vand.u32 %v622, 4294901760
  %1065 = vmatmul.mubr.f32.gmra.mrb[0].mxu0 %v1064
  %v1066 = vpop.f32.mrb[0].mxu0
  %v1067 = vadd.f32 %v798, %v1066
  %v1068 = vpop.f32.mrb[0].mxu0
  %1069 = vmatprep.mubr.f32.mxu0 0.0
  %v1070 = vand.u32 %v623, 4294901760
  %1071 = vmatmul.mubr.f32.gmra.mrb[0].mxu0 %v1070
  %v1072 = vpop.f32.mrb[0].mxu0
  %v1073 = vadd.f32 %v808, %v1072
  %v1074 = vpop.f32.mrb[0].mxu0
  %1075 = vmatprep.mubr.f32.mxu0 0.0
  %v1076 = vand.u32 %v624, 4294901760
  %1077 = vmatmul.mubr.f32.gmra.mrb[0].mxu0 %v1076
  %v1078 = vpop.f32.mrb[0].mxu0
  %v1079 = vadd.f32 %v818, %v1078
  %v1080 = vpop.f32.mrb[0].mxu0
  %1081 = vmatprep.mubr.f32.mxu0 0.0
  %v1082 = vand.u32 %v625, 4294901760
  %1083 = vmatmul.mubr.f32.gmra.mrb[0].mxu0 %v1082
  %v1084 = vpop.f32.mrb[0].mxu0
  %v1085 = vadd.f32 %v828, %v1084
  %v1086 = vpop.f32.mrb[0].mxu0
  %1087 = vmatprep.mubr.f32.mxu0 0.0
  %v1088 = vand.u32 %v626, 4294901760
  %1089 = vmatmul.mubr.f32.gmra.mrb[0].mxu0 %v1088
  %v1090 = vpop.f32.mrb[0].mxu0
  %v1091 = vadd.f32 %v838, %v1090
  %v1092 = vpop.f32.mrb[0].mxu0
  %1093 = vmatprep.mubr.f32.mxu0 0.0
  %v1094 = vand.u32 %v627, 4294901760
  %1095 = vmatmul.mubr.f32.gmra.mrb[0].mxu0 %v1094
  %v1096 = vpop.f32.mrb[0].mxu0
  %v1097 = vadd.f32 %v848, %v1096
  %v1098 = vpop.f32.mrb[0].mxu0
  %1099 = vmatprep.mubr.f32.mxu0 0.0
  %v1100 = vand.u32 %v628, 4294901760
  %1101 = vmatmul.mubr.f32.gmra.mrb[0].mxu0 %v1100
  %v1102 = vpop.f32.mrb[0].mxu0
  %v1103 = vadd.f32 %v858, %v1102
  %v1104 = vpop.f32.mrb[0].mxu0
  %1105 = vmatprep.mubr.f32.mxu0 0.0
  %v1106 = vand.u32 %v629, 4294901760
  %1107 = vmatmul.mubr.f32.gmra.mrb[0].mxu0 %v1106
  %v1108 = vpop.f32.mrb[0].mxu0
  %v1109 = vadd.f32 %v868, %v1108
  %v1110 = vpop.f32.mrb[0].mxu0
  %1111 = vdwg.mxu0
  %1112 = vmatprep.subr.mxu0 0.0
  %v1113 = vand.u32 %v84, 4294901760
  %v1114 = vsub.f32 %v84, %v1113
  %1115 = vmatpush1.msra.mxu0 %v1114
  %1116 = vmatprep.subr.mxu0 0.0
  %v1117 = vand.u32 %v85, 4294901760
  %v1118 = vsub.f32 %v85, %v1117
  %1119 = vmatpush1.msra.mxu0 %v1118
  %1120 = vmatprep.subr.mxu0 0.0
  %v1121 = vand.u32 %v86, 4294901760
  %v1122 = vsub.f32 %v86, %v1121
  %1123 = vmatpush1.msra.mxu0 %v1122
  %1124 = vmatprep.subr.mxu0 0.0
  %v1125 = vand.u32 %v87, 4294901760
  %v1126 = vsub.f32 %v87, %v1125
  %1127 = vmatpush1.msra.mxu0 %v1126
  %1128 = vmatprep.subr.mxu0 0.0
  %v1129 = vand.u32 %v88, 4294901760
  %v1130 = vsub.f32 %v88, %v1129
  %1131 = vmatpush1.msra.mxu0 %v1130
  %1132 = vmatprep.subr.mxu0 0.0
  %v1133 = vand.u32 %v89, 4294901760
  %v1134 = vsub.f32 %v89, %v1133
  %1135 = vmatpush1.msra.mxu0 %v1134
  %1136 = vmatprep.subr.mxu0 0.0
  %v1137 = vand.u32 %v90, 4294901760
  %v1138 = vsub.f32 %v90, %v1137
  %1139 = vmatpush1.msra.mxu0 %v1138
  %1140 = vmatprep.subr.mxu0 0.0
  %v1141 = vand.u32 %v91, 4294901760
  %v1142 = vsub.f32 %v91, %v1141
  %1143 = vmatpush1.msra.mxu0 %v1142
  %1144 = vmatprep.subr.mxu0 0.0
  %v1145 = vand.u32 %v92, 4294901760
  %v1146 = vsub.f32 %v92, %v1145
  %1147 = vmatpush1.msra.mxu0 %v1146
  %1148 = vmatprep.subr.mxu0 0.0
  %v1149 = vand.u32 %v93, 4294901760
  %v1150 = vsub.f32 %v93, %v1149
  %1151 = vmatpush1.msra.mxu0 %v1150
  %1152 = vmatprep.subr.mxu0 0.0
  %v1153 = vand.u32 %v94, 4294901760
  %v1154 = vsub.f32 %v94, %v1153
  %1155 = vmatpush1.msra.mxu0 %v1154
  %1156 = vmatprep.subr.mxu0 0.0
  %v1157 = vand.u32 %v95, 4294901760
  %v1158 = vsub.f32 %v95, %v1157
  %1159 = vmatpush1.msra.mxu0 %v1158
  %1160 = vmatprep.subr.mxu0 0.0
  %v1161 = vand.u32 %v96, 4294901760
  %v1162 = vsub.f32 %v96, %v1161
  %1163 = vmatpush1.msra.mxu0 %v1162
  %1164 = vmatprep.subr.mxu0 0.0
  %v1165 = vand.u32 %v97, 4294901760
  %v1166 = vsub.f32 %v97, %v1165
  %1167 = vmatpush1.msra.mxu0 %v1166
  %1168 = vmatprep.subr.mxu0 0.0
  %v1169 = vand.u32 %v98, 4294901760
  %v1170 = vsub.f32 %v98, %v1169
  %1171 = vmatpush1.msra.mxu0 %v1170
  %1172 = vmatprep.subr.mxu0 0.0
  %v1173 = vand.u32 %v99, 4294901760
  %v1174 = vsub.f32 %v99, %v1173
  %1175 = vmatpush1.msra.mxu0 %v1174
  %1176 = vmatprep.subr.mxu0 0.0
  %1177 = vmatpush1.msra.mxu0 0.0
  %1178 = vmatprep.subr.mxu0 0.0
  %1179 = vmatpush1.msra.mxu0 0.0
  %1180 = vmatprep.subr.mxu0 0.0
  %1181 = vmatpush1.msra.mxu0 0.0
  %1182 = vmatprep.subr.mxu0 0.0
  %1183 = vmatpush1.msra.mxu0 0.0
  %1184 = vmatprep.subr.mxu0 0.0
  %1185 = vmatpush1.msra.mxu0 0.0
  %1186 = vmatprep.subr.mxu0 0.0
  %1187 = vmatpush1.msra.mxu0 0.0
  %1188 = vmatprep.subr.mxu0 0.0
  %1189 = vmatpush1.msra.mxu0 0.0
  %1190 = vmatprep.subr.mxu0 0.0
  %1191 = vmatpush1.msra.mxu0 0.0
  %1192 = vmatprep.subr.mxu0 0.0
  %1193 = vmatpush1.msra.mxu0 0.0
  %1194 = vmatprep.subr.mxu0 0.0
  %1195 = vmatpush1.msra.mxu0 0.0
  %1196 = vmatprep.subr.mxu0 0.0
  %1197 = vmatpush1.msra.mxu0 0.0
  %1198 = vmatprep.subr.mxu0 0.0
  %1199 = vmatpush1.msra.mxu0 0.0
  %1200 = vmatprep.subr.mxu0 0.0
  %1201 = vmatpush1.msra.mxu0 0.0
  %1202 = vmatprep.subr.mxu0 0.0
  %1203 = vmatpush1.msra.mxu0 0.0
  %1204 = vmatprep.subr.mxu0 0.0
  %1205 = vmatpush1.msra.mxu0 0.0
  %1206 = vmatprep.subr.mxu0 0.0
  %1207 = vmatpush1.msra.mxu0 0.0
  %1208 = vmatprep.mubr.f32.mxu0 0.0
  %v1209 = vand.u32 %v614, 4294901760
  %v1210 = vsub.f32 %v614, %v1209
  %1211 = vmatmul.mubr.f32.gmra.mrb[0].mxu0 %v1210
  %v1212 = vpop.f32.mrb[0].mxu0
  %v1213 = vadd.f32 %v1019, %v1212
  %v1214 = vpop.f32.mrb[0].mxu0
  %1215 = vmatprep.mubr.f32.mxu0 0.0
  %v1216 = vand.u32 %v615, 4294901760
  %v1217 = vsub.f32 %v615, %v1216
  %1218 = vmatmul.mubr.f32.gmra.mrb[0].mxu0 %v1217
  %v1219 = vpop.f32.mrb[0].mxu0
  %v1220 = vadd.f32 %v1025, %v1219
  %v1221 = vpop.f32.mrb[0].mxu0
  %1222 = vmatprep.mubr.f32.mxu0 0.0
  %v1223 = vand.u32 %v616, 4294901760
  %v1224 = vsub.f32 %v616, %v1223
  %1225 = vmatmul.mubr.f32.gmra.mrb[0].mxu0 %v1224
  %v1226 = vpop.f32.mrb[0].mxu0
  %v1227 = vadd.f32 %v1031, %v1226
  %v1228 = vpop.f32.mrb[0].mxu0
  %1229 = vmatprep.mubr.f32.mxu0 0.0
  %v1230 = vand.u32 %v617, 4294901760
  %v1231 = vsub.f32 %v617, %v1230
  %1232 = vmatmul.mubr.f32.gmra.mrb[0].mxu0 %v1231
  %v1233 = vpop.f32.mrb[0].mxu0
  %v1234 = vadd.f32 %v1037, %v1233
  %v1235 = vpop.f32.mrb[0].mxu0
  %1236 = vmatprep.mubr.f32.mxu0 0.0
  %v1237 = vand.u32 %v618, 4294901760
  %v1238 = vsub.f32 %v618, %v1237
  %1239 = vmatmul.mubr.f32.gmra.mrb[0].mxu0 %v1238
  %v1240 = vpop.f32.mrb[0].mxu0
  %v1241 = vadd.f32 %v1043, %v1240
  %v1242 = vpop.f32.mrb[0].mxu0
  %1243 = vmatprep.mubr.f32.mxu0 0.0
  %v1244 = vand.u32 %v619, 4294901760
  %v1245 = vsub.f32 %v619, %v1244
  %1246 = vmatmul.mubr.f32.gmra.mrb[0].mxu0 %v1245
  %v1247 = vpop.f32.mrb[0].mxu0
  %v1248 = vadd.f32 %v1049, %v1247
  %v1249 = vpop.f32.mrb[0].mxu0
  %1250 = vmatprep.mubr.f32.mxu0 0.0
  %v1251 = vand.u32 %v620, 4294901760
  %v1252 = vsub.f32 %v620, %v1251
  %1253 = vmatmul.mubr.f32.gmra.mrb[0].mxu0 %v1252
  %v1254 = vpop.f32.mrb[0].mxu0
  %v1255 = vadd.f32 %v1055, %v1254
  %v1256 = vpop.f32.mrb[0].mxu0
  %1257 = vmatprep.mubr.f32.mxu0 0.0
  %v1258 = vand.u32 %v621, 4294901760
  %v1259 = vsub.f32 %v621, %v1258
  %1260 = vmatmul.mubr.f32.gmra.mrb[0].mxu0 %v1259
  %v1261 = vpop.f32.mrb[0].mxu0
  %v1262 = vadd.f32 %v1061, %v1261
  %v1263 = vpop.f32.mrb[0].mxu0
  %1264 = vmatprep.mubr.f32.mxu0 0.0
  %v1265 = vand.u32 %v622, 4294901760
  %v1266 = vsub.f32 %v622, %v1265
  %1267 = vmatmul.mubr.f32.gmra.mrb[0].mxu0 %v1266
  %v1268 = vpop.f32.mrb[0].mxu0
  %v1269 = vadd.f32 %v1067, %v1268
  %v1270 = vpop.f32.mrb[0].mxu0
  %1271 = vmatprep.mubr.f32.mxu0 0.0
  %v1272 = vand.u32 %v623, 4294901760
  %v1273 = vsub.f32 %v623, %v1272
  %1274 = vmatmul.mubr.f32.gmra.mrb[0].mxu0 %v1273
  %v1275 = vpop.f32.mrb[0].mxu0
  %v1276 = vadd.f32 %v1073, %v1275
  %v1277 = vpop.f32.mrb[0].mxu0
  %1278 = vmatprep.mubr.f32.mxu0 0.0
  %v1279 = vand.u32 %v624, 4294901760
  %v1280 = vsub.f32 %v624, %v1279
  %1281 = vmatmul.mubr.f32.gmra.mrb[0].mxu0 %v1280
  %v1282 = vpop.f32.mrb[0].mxu0
  %v1283 = vadd.f32 %v1079, %v1282
  %v1284 = vpop.f32.mrb[0].mxu0
  %1285 = vmatprep.mubr.f32.mxu0 0.0
  %v1286 = vand.u32 %v625, 4294901760
  %v1287 = vsub.f32 %v625, %v1286
  %1288 = vmatmul.mubr.f32.gmra.mrb[0].mxu0 %v1287
  %v1289 = vpop.f32.mrb[0].mxu0
  %v1290 = vadd.f32 %v1085, %v1289
  %v1291 = vpop.f32.mrb[0].mxu0
  %1292 = vmatprep.mubr.f32.mxu0 0.0
  %v1293 = vand.u32 %v626, 4294901760
  %v1294 = vsub.f32 %v626, %v1293
  %1295 = vmatmul.mubr.f32.gmra.mrb[0].mxu0 %v1294
  %v1296 = vpop.f32.mrb[0].mxu0
  %v1297 = vadd.f32 %v1091, %v1296
  %v1298 = vpop.f32.mrb[0].mxu0
  %1299 = vmatprep.mubr.f32.mxu0 0.0
  %v1300 = vand.u32 %v627, 4294901760
  %v1301 = vsub.f32 %v627, %v1300
  %1302 = vmatmul.mubr.f32.gmra.mrb[0].mxu0 %v1301
  %v1303 = vpop.f32.mrb[0].mxu0
  %v1304 = vadd.f32 %v1097, %v1303
  %v1305 = vpop.f32.mrb[0].mxu0
  %1306 = vmatprep.mubr.f32.mxu0 0.0
  %v1307 = vand.u32 %v628, 4294901760
  %v1308 = vsub.f32 %v628, %v1307
  %1309 = vmatmul.mubr.f32.gmra.mrb[0].mxu0 %v1308
  %v1310 = vpop.f32.mrb[0].mxu0
  %v1311 = vadd.f32 %v1103, %v1310
  %v1312 = vpop.f32.mrb[0].mxu0
  %1313 = vmatprep.mubr.f32.mxu0 0.0
  %v1314 = vand.u32 %v629, 4294901760
  %v1315 = vsub.f32 %v629, %v1314
  %1316 = vmatmul.mubr.f32.gmra.mrb[0].mxu0 %v1315
  %v1317 = vpop.f32.mrb[0].mxu0
  %v1318 = vadd.f32 %v1109, %v1317
  %v1319 = vpop.f32.mrb[0].mxu0
  %1320 = vdwg.mxu0
  %1321 = vmatprep.subr.mxu0 0.0
  %v1322 = vand.u32 %v84, 4294901760
  %1323 = vmatpush1.msra.mxu0 %v1322
  %1324 = vmatprep.subr.mxu0 0.0
  %v1325 = vand.u32 %v85, 4294901760
  %1326 = vmatpush1.msra.mxu0 %v1325
  %1327 = vmatprep.subr.mxu0 0.0
  %v1328 = vand.u32 %v86, 4294901760
  %1329 = vmatpush1.msra.mxu0 %v1328
  %1330 = vmatprep.subr.mxu0 0.0
  %v1331 = vand.u32 %v87, 4294901760
  %1332 = vmatpush1.msra.mxu0 %v1331
  %1333 = vmatprep.subr.mxu0 0.0
  %v1334 = vand.u32 %v88, 4294901760
  %1335 = vmatpush1.msra.mxu0 %v1334
  %1336 = vmatprep.subr.mxu0 0.0
  %v1337 = vand.u32 %v89, 4294901760
  %1338 = vmatpush1.msra.mxu0 %v1337
  %1339 = vmatprep.subr.mxu0 0.0
  %v1340 = vand.u32 %v90, 4294901760
  %1341 = vmatpush1.msra.mxu0 %v1340
  %1342 = vmatprep.subr.mxu0 0.0
  %v1343 = vand.u32 %v91, 4294901760
  %1344 = vmatpush1.msra.mxu0 %v1343
  %1345 = vmatprep.subr.mxu0 0.0
  %v1346 = vand.u32 %v92, 4294901760
  %1347 = vmatpush1.msra.mxu0 %v1346
  %1348 = vmatprep.subr.mxu0 0.0
  %v1349 = vand.u32 %v93, 4294901760
  %1350 = vmatpush1.msra.mxu0 %v1349
  %1351 = vmatprep.subr.mxu0 0.0
  %v1352 = vand.u32 %v94, 4294901760
  %1353 = vmatpush1.msra.mxu0 %v1352
  %1354 = vmatprep.subr.mxu0 0.0
  %v1355 = vand.u32 %v95, 4294901760
  %1356 = vmatpush1.msra.mxu0 %v1355
  %1357 = vmatprep.subr.mxu0 0.0
  %v1358 = vand.u32 %v96, 4294901760
  %1359 = vmatpush1.msra.mxu0 %v1358
  %1360 = vmatprep.subr.mxu0 0.0
  %v1361 = vand.u32 %v97, 4294901760
  %1362 = vmatpush1.msra.mxu0 %v1361
  %1363 = vmatprep.subr.mxu0 0.0
  %v1364 = vand.u32 %v98, 4294901760
  %1365 = vmatpush1.msra.mxu0 %v1364
  %1366 = vmatprep.subr.mxu0 0.0
  %v1367 = vand.u32 %v99, 4294901760
  %1368 = vmatpush1.msra.mxu0 %v1367
  %1369 = vmatprep.subr.mxu0 0.0
  %1370 = vmatpush1.msra.mxu0 0.0
  %1371 = vmatprep.subr.mxu0 0.0
  %1372 = vmatpush1.msra.mxu0 0.0
  %1373 = vmatprep.subr.mxu0 0.0
  %1374 = vmatpush1.msra.mxu0 0.0
  %1375 = vmatprep.subr.mxu0 0.0
  %1376 = vmatpush1.msra.mxu0 0.0
  %1377 = vmatprep.subr.mxu0 0.0
  %1378 = vmatpush1.msra.mxu0 0.0
  %1379 = vmatprep.subr.mxu0 0.0
  %1380 = vmatpush1.msra.mxu0 0.0
  %1381 = vmatprep.subr.mxu0 0.0
  %1382 = vmatpush1.msra.mxu0 0.0
  %1383 = vmatprep.subr.mxu0 0.0
  %1384 = vmatpush1.msra.mxu0 0.0
  %1385 = vmatprep.subr.mxu0 0.0
  %1386 = vmatpush1.msra.mxu0 0.0
  %1387 = vmatprep.subr.mxu0 0.0
  %1388 = vmatpush1.msra.mxu0 0.0
  %1389 = vmatprep.subr.mxu0 0.0
  %1390 = vmatpush1.msra.mxu0 0.0
  %1391 = vmatprep.subr.mxu0 0.0
  %1392 = vmatpush1.msra.mxu0 0.0
  %1393 = vmatprep.subr.mxu0 0.0
  %1394 = vmatpush1.msra.mxu0 0.0
  %1395 = vmatprep.subr.mxu0 0.0
  %1396 = vmatpush1.msra.mxu0 0.0
  %1397 = vmatprep.subr.mxu0 0.0
  %1398 = vmatpush1.msra.mxu0 0.0
  %1399 = vmatprep.subr.mxu0 0.0
  %1400 = vmatpush1.msra.mxu0 0.0
  %1401 = vmatprep.mubr.f32.mxu0 0.0
  %v1402 = vand.u32 %v614, 4294901760
  %v1403 = vsub.f32 %v614, %v1402
  %v1404 = vand.u32 %v1403, 4294901760
  %1405 = vmatmul.mubr.f32.gmra.mrb[0].mxu0 %v1404
  %v1406 = vpop.f32.mrb[0].mxu0
  %v1407 = vadd.f32 %v1213, %v1406
  %v1408 = vpop.f32.mrb[0].mxu0
  %1409 = vmatprep.mubr.f32.mxu0 0.0
  %v1410 = vand.u32 %v615, 4294901760
  %v1411 = vsub.f32 %v615, %v1410
  %v1412 = vand.u32 %v1411, 4294901760
  %1413 = vmatmul.mubr.f32.gmra.mrb[0].mxu0 %v1412
  %v1414 = vpop.f32.mrb[0].mxu0
  %v1415 = vadd.f32 %v1220, %v1414
  %v1416 = vpop.f32.mrb[0].mxu0
  %1417 = vmatprep.mubr.f32.mxu0 0.0
  %v1418 = vand.u32 %v616, 4294901760
  %v1419 = vsub.f32 %v616, %v1418
  %v1420 = vand.u32 %v1419, 4294901760
  %1421 = vmatmul.mubr.f32.gmra.mrb[0].mxu0 %v1420
  %v1422 = vpop.f32.mrb[0].mxu0
  %v1423 = vadd.f32 %v1227, %v1422
  %v1424 = vpop.f32.mrb[0].mxu0
  %1425 = vmatprep.mubr.f32.mxu0 0.0
  %v1426 = vand.u32 %v617, 4294901760
  %v1427 = vsub.f32 %v617, %v1426
  %v1428 = vand.u32 %v1427, 4294901760
  %1429 = vmatmul.mubr.f32.gmra.mrb[0].mxu0 %v1428
  %v1430 = vpop.f32.mrb[0].mxu0
  %v1431 = vadd.f32 %v1234, %v1430
  %v1432 = vpop.f32.mrb[0].mxu0
  %1433 = vmatprep.mubr.f32.mxu0 0.0
  %v1434 = vand.u32 %v618, 4294901760
  %v1435 = vsub.f32 %v618, %v1434
  %v1436 = vand.u32 %v1435, 4294901760
  %1437 = vmatmul.mubr.f32.gmra.mrb[0].mxu0 %v1436
  %v1438 = vpop.f32.mrb[0].mxu0
  %v1439 = vadd.f32 %v1241, %v1438
  %v1440 = vpop.f32.mrb[0].mxu0
  %1441 = vmatprep.mubr.f32.mxu0 0.0
  %v1442 = vand.u32 %v619, 4294901760
  %v1443 = vsub.f32 %v619, %v1442
  %v1444 = vand.u32 %v1443, 4294901760
  %1445 = vmatmul.mubr.f32.gmra.mrb[0].mxu0 %v1444
  %v1446 = vpop.f32.mrb[0].mxu0
  %v1447 = vadd.f32 %v1248, %v1446
  %v1448 = vpop.f32.mrb[0].mxu0
  %1449 = vmatprep.mubr.f32.mxu0 0.0
  %v1450 = vand.u32 %v620, 4294901760
  %v1451 = vsub.f32 %v620, %v1450
  %v1452 = vand.u32 %v1451, 4294901760
  %1453 = vmatmul.mubr.f32.gmra.mrb[0].mxu0 %v1452
  %v1454 = vpop.f32.mrb[0].mxu0
  %v1455 = vadd.f32 %v1255, %v1454
  %v1456 = vpop.f32.mrb[0].mxu0
  %1457 = vmatprep.mubr.f32.mxu0 0.0
  %v1458 = vand.u32 %v621, 4294901760
  %v1459 = vsub.f32 %v621, %v1458
  %v1460 = vand.u32 %v1459, 4294901760
  %1461 = vmatmul.mubr.f32.gmra.mrb[0].mxu0 %v1460
  %v1462 = vpop.f32.mrb[0].mxu0
  %v1463 = vadd.f32 %v1262, %v1462
  %v1464 = vpop.f32.mrb[0].mxu0
  %1465 = vmatprep.mubr.f32.mxu0 0.0
  %v1466 = vand.u32 %v622, 4294901760
  %v1467 = vsub.f32 %v622, %v1466
  %v1468 = vand.u32 %v1467, 4294901760
  %1469 = vmatmul.mubr.f32.gmra.mrb[0].mxu0 %v1468
  %v1470 = vpop.f32.mrb[0].mxu0
  %v1471 = vadd.f32 %v1269, %v1470
  %v1472 = vpop.f32.mrb[0].mxu0
  %1473 = vmatprep.mubr.f32.mxu0 0.0
  %v1474 = vand.u32 %v623, 4294901760
  %v1475 = vsub.f32 %v623, %v1474
  %v1476 = vand.u32 %v1475, 4294901760
  %1477 = vmatmul.mubr.f32.gmra.mrb[0].mxu0 %v1476
  %v1478 = vpop.f32.mrb[0].mxu0
  %v1479 = vadd.f32 %v1276, %v1478
  %v1480 = vpop.f32.mrb[0].mxu0
  %1481 = vmatprep.mubr.f32.mxu0 0.0
  %v1482 = vand.u32 %v624, 4294901760
  %v1483 = vsub.f32 %v624, %v1482
  %v1484 = vand.u32 %v1483, 4294901760
  %1485 = vmatmul.mubr.f32.gmra.mrb[0].mxu0 %v1484
  %v1486 = vpop.f32.mrb[0].mxu0
  %v1487 = vadd.f32 %v1283, %v1486
  %v1488 = vpop.f32.mrb[0].mxu0
  %1489 = vmatprep.mubr.f32.mxu0 0.0
  %v1490 = vand.u32 %v625, 4294901760
  %v1491 = vsub.f32 %v625, %v1490
  %v1492 = vand.u32 %v1491, 4294901760
  %1493 = vmatmul.mubr.f32.gmra.mrb[0].mxu0 %v1492
  %v1494 = vpop.f32.mrb[0].mxu0
  %v1495 = vadd.f32 %v1290, %v1494
  %v1496 = vpop.f32.mrb[0].mxu0
  %1497 = vmatprep.mubr.f32.mxu0 0.0
  %v1498 = vand.u32 %v626, 4294901760
  %v1499 = vsub.f32 %v626, %v1498
  %v1500 = vand.u32 %v1499, 4294901760
  %1501 = vmatmul.mubr.f32.gmra.mrb[0].mxu0 %v1500
  %v1502 = vpop.f32.mrb[0].mxu0
  %v1503 = vadd.f32 %v1297, %v1502
  %v1504 = vpop.f32.mrb[0].mxu0
  %1505 = vmatprep.mubr.f32.mxu0 0.0
  %v1506 = vand.u32 %v627, 4294901760
  %v1507 = vsub.f32 %v627, %v1506
  %v1508 = vand.u32 %v1507, 4294901760
  %1509 = vmatmul.mubr.f32.gmra.mrb[0].mxu0 %v1508
  %v1510 = vpop.f32.mrb[0].mxu0
  %v1511 = vadd.f32 %v1304, %v1510
  %v1512 = vpop.f32.mrb[0].mxu0
  %1513 = vmatprep.mubr.f32.mxu0 0.0
  %v1514 = vand.u32 %v628, 4294901760
  %v1515 = vsub.f32 %v628, %v1514
  %v1516 = vand.u32 %v1515, 4294901760
  %1517 = vmatmul.mubr.f32.gmra.mrb[0].mxu0 %v1516
  %v1518 = vpop.f32.mrb[0].mxu0
  %v1519 = vadd.f32 %v1311, %v1518
  %v1520 = vpop.f32.mrb[0].mxu0
  %1521 = vmatprep.mubr.f32.mxu0 0.0
  %v1522 = vand.u32 %v629, 4294901760
  %v1523 = vsub.f32 %v629, %v1522
  %v1524 = vand.u32 %v1523, 4294901760
  %1525 = vmatmul.mubr.f32.gmra.mrb[0].mxu0 %v1524
  %v1526 = vpop.f32.mrb[0].mxu0
  %v1527 = vadd.f32 %v1318, %v1526
  %v1528 = vpop.f32.mrb[0].mxu0
  %1529 = vdwg.mxu0
  %1530 = vmatprep.subr.mxu0 0.0
  %v1531 = vand.u32 %v84, 4294901760
  %v1532 = vsub.f32 %v84, %v1531
  %v1533 = vand.u32 %v1532, 4294901760
  %1534 = vmatpush1.msra.mxu0 %v1533
  %1535 = vmatprep.subr.mxu0 0.0
  %v1536 = vand.u32 %v85, 4294901760
  %v1537 = vsub.f32 %v85, %v1536
  %v1538 = vand.u32 %v1537, 4294901760
  %1539 = vmatpush1.msra.mxu0 %v1538
  %1540 = vmatprep.subr.mxu0 0.0
  %v1541 = vand.u32 %v86, 4294901760
  %v1542 = vsub.f32 %v86, %v1541
  %v1543 = vand.u32 %v1542, 4294901760
  %1544 = vmatpush1.msra.mxu0 %v1543
  %1545 = vmatprep.subr.mxu0 0.0
  %v1546 = vand.u32 %v87, 4294901760
  %v1547 = vsub.f32 %v87, %v1546
  %v1548 = vand.u32 %v1547, 4294901760
  %1549 = vmatpush1.msra.mxu0 %v1548
  %1550 = vmatprep.subr.mxu0 0.0
  %v1551 = vand.u32 %v88, 4294901760
  %v1552 = vsub.f32 %v88, %v1551
  %v1553 = vand.u32 %v1552, 4294901760
  %1554 = vmatpush1.msra.mxu0 %v1553
  %1555 = vmatprep.subr.mxu0 0.0
  %v1556 = vand.u32 %v89, 4294901760
  %v1557 = vsub.f32 %v89, %v1556
  %v1558 = vand.u32 %v1557, 4294901760
  %1559 = vmatpush1.msra.mxu0 %v1558
  %1560 = vmatprep.subr.mxu0 0.0
  %v1561 = vand.u32 %v90, 4294901760
  %v1562 = vsub.f32 %v90, %v1561
  %v1563 = vand.u32 %v1562, 4294901760
  %1564 = vmatpush1.msra.mxu0 %v1563
  %1565 = vmatprep.subr.mxu0 0.0
  %v1566 = vand.u32 %v91, 4294901760
  %v1567 = vsub.f32 %v91, %v1566
  %v1568 = vand.u32 %v1567, 4294901760
  %1569 = vmatpush1.msra.mxu0 %v1568
  %1570 = vmatprep.subr.mxu0 0.0
  %v1571 = vand.u32 %v92, 4294901760
  %v1572 = vsub.f32 %v92, %v1571
  %v1573 = vand.u32 %v1572, 4294901760
  %1574 = vmatpush1.msra.mxu0 %v1573
  %1575 = vmatprep.subr.mxu0 0.0
  %v1576 = vand.u32 %v93, 4294901760
  %v1577 = vsub.f32 %v93, %v1576
  %v1578 = vand.u32 %v1577, 4294901760
  %1579 = vmatpush1.msra.mxu0 %v1578
  %1580 = vmatprep.subr.mxu0 0.0
  %v1581 = vand.u32 %v94, 4294901760
  %v1582 = vsub.f32 %v94, %v1581
  %v1583 = vand.u32 %v1582, 4294901760
  %1584 = vmatpush1.msra.mxu0 %v1583
  %1585 = vmatprep.subr.mxu0 0.0
  %v1586 = vand.u32 %v95, 4294901760
  %v1587 = vsub.f32 %v95, %v1586
  %v1588 = vand.u32 %v1587, 4294901760
  %1589 = vmatpush1.msra.mxu0 %v1588
  %1590 = vmatprep.subr.mxu0 0.0
  %v1591 = vand.u32 %v96, 4294901760
  %v1592 = vsub.f32 %v96, %v1591
  %v1593 = vand.u32 %v1592, 4294901760
  %1594 = vmatpush1.msra.mxu0 %v1593
  %1595 = vmatprep.subr.mxu0 0.0
  %v1596 = vand.u32 %v97, 4294901760
  %v1597 = vsub.f32 %v97, %v1596
  %v1598 = vand.u32 %v1597, 4294901760
  %1599 = vmatpush1.msra.mxu0 %v1598
  %1600 = vmatprep.subr.mxu0 0.0
  %v1601 = vand.u32 %v98, 4294901760
  %v1602 = vsub.f32 %v98, %v1601
  %v1603 = vand.u32 %v1602, 4294901760
  %1604 = vmatpush1.msra.mxu0 %v1603
  %1605 = vmatprep.subr.mxu0 0.0
  %v1606 = vand.u32 %v99, 4294901760
  %v1607 = vsub.f32 %v99, %v1606
  %v1608 = vand.u32 %v1607, 4294901760
  %1609 = vmatpush1.msra.mxu0 %v1608
  %1610 = vmatprep.subr.mxu0 0.0
  %1611 = vmatpush1.msra.mxu0 0.0
  %1612 = vmatprep.subr.mxu0 0.0
  %1613 = vmatpush1.msra.mxu0 0.0
  %1614 = vmatprep.subr.mxu0 0.0
  %1615 = vmatpush1.msra.mxu0 0.0
  %1616 = vmatprep.subr.mxu0 0.0
  %1617 = vmatpush1.msra.mxu0 0.0
  %1618 = vmatprep.subr.mxu0 0.0
  %1619 = vmatpush1.msra.mxu0 0.0
  %1620 = vmatprep.subr.mxu0 0.0
  %1621 = vmatpush1.msra.mxu0 0.0
  %1622 = vmatprep.subr.mxu0 0.0
  %1623 = vmatpush1.msra.mxu0 0.0
  %1624 = vmatprep.subr.mxu0 0.0
  %1625 = vmatpush1.msra.mxu0 0.0
  %1626 = vmatprep.subr.mxu0 0.0
  %1627 = vmatpush1.msra.mxu0 0.0
  %1628 = vmatprep.subr.mxu0 0.0
  %1629 = vmatpush1.msra.mxu0 0.0
  %1630 = vmatprep.subr.mxu0 0.0
  %1631 = vmatpush1.msra.mxu0 0.0
  %1632 = vmatprep.subr.mxu0 0.0
  %1633 = vmatpush1.msra.mxu0 0.0
  %1634 = vmatprep.subr.mxu0 0.0
  %1635 = vmatpush1.msra.mxu0 0.0
  %1636 = vmatprep.subr.mxu0 0.0
  %1637 = vmatpush1.msra.mxu0 0.0
  %1638 = vmatprep.subr.mxu0 0.0
  %1639 = vmatpush1.msra.mxu0 0.0
  %1640 = vmatprep.subr.mxu0 0.0
  %1641 = vmatpush1.msra.mxu0 0.0
  %1642 = vmatprep.mubr.f32.mxu0 0.0
  %v1643 = vand.u32 %v614, 4294901760
  %1644 = vmatmul.mubr.f32.gmra.mrb[0].mxu0 %v1643
  %v1645 = vpop.f32.mrb[0].mxu0
  %v1646 = vadd.f32 %v1407, %v1645
  %v1647 = vpop.f32.mrb[0].mxu0
  %1648 = vmatprep.mubr.f32.mxu0 0.0
  %v1649 = vand.u32 %v615, 4294901760
  %1650 = vmatmul.mubr.f32.gmra.mrb[0].mxu0 %v1649
  %v1651 = vpop.f32.mrb[0].mxu0
  %v1652 = vadd.f32 %v1415, %v1651
  %v1653 = vpop.f32.mrb[0].mxu0
  %1654 = vmatprep.mubr.f32.mxu0 0.0
  %v1655 = vand.u32 %v616, 4294901760
  %1656 = vmatmul.mubr.f32.gmra.mrb[0].mxu0 %v1655
  %v1657 = vpop.f32.mrb[0].mxu0
  %v1658 = vadd.f32 %v1423, %v1657
  %v1659 = vpop.f32.mrb[0].mxu0
  %1660 = vmatprep.mubr.f32.mxu0 0.0
  %v1661 = vand.u32 %v617, 4294901760
  %1662 = vmatmul.mubr.f32.gmra.mrb[0].mxu0 %v1661
  %v1663 = vpop.f32.mrb[0].mxu0
  %v1664 = vadd.f32 %v1431, %v1663
  %v1665 = vpop.f32.mrb[0].mxu0
  %1666 = vmatprep.mubr.f32.mxu0 0.0
  %v1667 = vand.u32 %v618, 4294901760
  %1668 = vmatmul.mubr.f32.gmra.mrb[0].mxu0 %v1667
  %v1669 = vpop.f32.mrb[0].mxu0
  %v1670 = vadd.f32 %v1439, %v1669
  %v1671 = vpop.f32.mrb[0].mxu0
  %1672 = vmatprep.mubr.f32.mxu0 0.0
  %v1673 = vand.u32 %v619, 4294901760
  %1674 = vmatmul.mubr.f32.gmra.mrb[0].mxu0 %v1673
  %v1675 = vpop.f32.mrb[0].mxu0
  %v1676 = vadd.f32 %v1447, %v1675
  %v1677 = vpop.f32.mrb[0].mxu0
  %1678 = vmatprep.mubr.f32.mxu0 0.0
  %v1679 = vand.u32 %v620, 4294901760
  %1680 = vmatmul.mubr.f32.gmra.mrb[0].mxu0 %v1679
  %v1681 = vpop.f32.mrb[0].mxu0
  %v1682 = vadd.f32 %v1455, %v1681
  %v1683 = vpop.f32.mrb[0].mxu0
  %1684 = vmatprep.mubr.f32.mxu0 0.0
  %v1685 = vand.u32 %v621, 4294901760
  %1686 = vmatmul.mubr.f32.gmra.mrb[0].mxu0 %v1685
  %v1687 = vpop.f32.mrb[0].mxu0
  %v1688 = vadd.f32 %v1463, %v1687
  %v1689 = vpop.f32.mrb[0].mxu0
  %1690 = vmatprep.mubr.f32.mxu0 0.0
  %v1691 = vand.u32 %v622, 4294901760
  %1692 = vmatmul.mubr.f32.gmra.mrb[0].mxu0 %v1691
  %v1693 = vpop.f32.mrb[0].mxu0
  %v1694 = vadd.f32 %v1471, %v1693
  %v1695 = vpop.f32.mrb[0].mxu0
  %1696 = vmatprep.mubr.f32.mxu0 0.0
  %v1697 = vand.u32 %v623, 4294901760
  %1698 = vmatmul.mubr.f32.gmra.mrb[0].mxu0 %v1697
  %v1699 = vpop.f32.mrb[0].mxu0
  %v1700 = vadd.f32 %v1479, %v1699
  %v1701 = vpop.f32.mrb[0].mxu0
  %1702 = vmatprep.mubr.f32.mxu0 0.0
  %v1703 = vand.u32 %v624, 4294901760
  %1704 = vmatmul.mubr.f32.gmra.mrb[0].mxu0 %v1703
  %v1705 = vpop.f32.mrb[0].mxu0
  %v1706 = vadd.f32 %v1487, %v1705
  %v1707 = vpop.f32.mrb[0].mxu0
  %1708 = vmatprep.mubr.f32.mxu0 0.0
  %v1709 = vand.u32 %v625, 4294901760
  %1710 = vmatmul.mubr.f32.gmra.mrb[0].mxu0 %v1709
  %v1711 = vpop.f32.mrb[0].mxu0
  %v1712 = vadd.f32 %v1495, %v1711
  %v1713 = vpop.f32.mrb[0].mxu0
  %1714 = vmatprep.mubr.f32.mxu0 0.0
  %v1715 = vand.u32 %v626, 4294901760
  %1716 = vmatmul.mubr.f32.gmra.mrb[0].mxu0 %v1715
  %v1717 = vpop.f32.mrb[0].mxu0
  %v1718 = vadd.f32 %v1503, %v1717
  %v1719 = vpop.f32.mrb[0].mxu0
  %1720 = vmatprep.mubr.f32.mxu0 0.0
  %v1721 = vand.u32 %v627, 4294901760
  %1722 = vmatmul.mubr.f32.gmra.mrb[0].mxu0 %v1721
  %v1723 = vpop.f32.mrb[0].mxu0
  %v1724 = vadd.f32 %v1511, %v1723
  %v1725 = vpop.f32.mrb[0].mxu0
  %1726 = vmatprep.mubr.f32.mxu0 0.0
  %v1727 = vand.u32 %v628, 4294901760
  %1728 = vmatmul.mubr.f32.gmra.mrb[0].mxu0 %v1727
  %v1729 = vpop.f32.mrb[0].mxu0
  %v1730 = vadd.f32 %v1519, %v1729
  %v1731 = vpop.f32.mrb[0].mxu0
  %1732 = vmatprep.mubr.f32.mxu0 0.0
  %v1733 = vand.u32 %v629, 4294901760
  %1734 = vmatmul.mubr.f32.gmra.mrb[0].mxu0 %v1733
  %v1735 = vpop.f32.mrb[0].mxu0
  %v1736 = vadd.f32 %v1527, %v1735
  %v1737 = vpop.f32.mrb[0].mxu0
  %1738 = vdwg.mxu0
  %1739 = vmatprep.subr.mxu0 0.0
  %v1740 = vand.u32 %v84, 4294901760
  %1741 = vmatpush1.msra.mxu0 %v1740
  %1742 = vmatprep.subr.mxu0 0.0
  %v1743 = vand.u32 %v85, 4294901760
  %1744 = vmatpush1.msra.mxu0 %v1743
  %1745 = vmatprep.subr.mxu0 0.0
  %v1746 = vand.u32 %v86, 4294901760
  %1747 = vmatpush1.msra.mxu0 %v1746
  %1748 = vmatprep.subr.mxu0 0.0
  %v1749 = vand.u32 %v87, 4294901760
  %1750 = vmatpush1.msra.mxu0 %v1749
  %1751 = vmatprep.subr.mxu0 0.0
  %v1752 = vand.u32 %v88, 4294901760
  %1753 = vmatpush1.msra.mxu0 %v1752
  %1754 = vmatprep.subr.mxu0 0.0
  %v1755 = vand.u32 %v89, 4294901760
  %1756 = vmatpush1.msra.mxu0 %v1755
  %1757 = vmatprep.subr.mxu0 0.0
  %v1758 = vand.u32 %v90, 4294901760
  %1759 = vmatpush1.msra.mxu0 %v1758
  %1760 = vmatprep.subr.mxu0 0.0
  %v1761 = vand.u32 %v91, 4294901760
  %1762 = vmatpush1.msra.mxu0 %v1761
  %1763 = vmatprep.subr.mxu0 0.0
  %v1764 = vand.u32 %v92, 4294901760
  %1765 = vmatpush1.msra.mxu0 %v1764
  %1766 = vmatprep.subr.mxu0 0.0
  %v1767 = vand.u32 %v93, 4294901760
  %1768 = vmatpush1.msra.mxu0 %v1767
  %1769 = vmatprep.subr.mxu0 0.0
  %v1770 = vand.u32 %v94, 4294901760
  %1771 = vmatpush1.msra.mxu0 %v1770
  %1772 = vmatprep.subr.mxu0 0.0
  %v1773 = vand.u32 %v95, 4294901760
  %1774 = vmatpush1.msra.mxu0 %v1773
  %1775 = vmatprep.subr.mxu0 0.0
  %v1776 = vand.u32 %v96, 4294901760
  %1777 = vmatpush1.msra.mxu0 %v1776
  %1778 = vmatprep.subr.mxu0 0.0
  %v1779 = vand.u32 %v97, 4294901760
  %1780 = vmatpush1.msra.mxu0 %v1779
  %1781 = vmatprep.subr.mxu0 0.0
  %v1782 = vand.u32 %v98, 4294901760
  %1783 = vmatpush1.msra.mxu0 %v1782
  %1784 = vmatprep.subr.mxu0 0.0
  %v1785 = vand.u32 %v99, 4294901760
  %1786 = vmatpush1.msra.mxu0 %v1785
  %1787 = vmatprep.subr.mxu0 0.0
  %1788 = vmatpush1.msra.mxu0 0.0
  %1789 = vmatprep.subr.mxu0 0.0
  %1790 = vmatpush1.msra.mxu0 0.0
  %1791 = vmatprep.subr.mxu0 0.0
  %1792 = vmatpush1.msra.mxu0 0.0
  %1793 = vmatprep.subr.mxu0 0.0
  %1794 = vmatpush1.msra.mxu0 0.0
  %1795 = vmatprep.subr.mxu0 0.0
  %1796 = vmatpush1.msra.mxu0 0.0
  %1797 = vmatprep.subr.mxu0 0.0
  %1798 = vmatpush1.msra.mxu0 0.0
  %1799 = vmatprep.subr.mxu0 0.0
  %1800 = vmatpush1.msra.mxu0 0.0
  %1801 = vmatprep.subr.mxu0 0.0
  %1802 = vmatpush1.msra.mxu0 0.0
  %1803 = vmatprep.subr.mxu0 0.0
  %1804 = vmatpush1.msra.mxu0 0.0
  %1805 = vmatprep.subr.mxu0 0.0
  %1806 = vmatpush1.msra.mxu0 0.0
  %1807 = vmatprep.subr.mxu0 0.0
  %1808 = vmatpush1.msra.mxu0 0.0
  %1809 = vmatprep.subr.mxu0 0.0
  %1810 = vmatpush1.msra.mxu0 0.0
  %1811 = vmatprep.subr.mxu0 0.0
  %1812 = vmatpush1.msra.mxu0 0.0
  %1813 = vmatprep.subr.mxu0 0.0
  %1814 = vmatpush1.msra.mxu0 0.0
  %1815 = vmatprep.subr.mxu0 0.0
  %1816 = vmatpush1.msra.mxu0 0.0
  %1817 = vmatprep.subr.mxu0 0.0
  %1818 = vmatpush1.msra.mxu0 0.0
  %1819 = vmatprep.mubr.f32.mxu0 0.0
  %v1820 = vand.u32 %v614, 4294901760
  %1821 = vmatmul.mubr.f32.gmra.mrb[0].mxu0 %v1820
  %v1822 = vpop.f32.mrb[0].mxu0
  %v1823 = vadd.f32 %v1646, %v1822
  %v1824 = vpop.f32.mrb[0].mxu0
  %1825 = vmatprep.mubr.f32.mxu0 0.0
  %v1826 = vand.u32 %v615, 4294901760
  %1827 = vmatmul.mubr.f32.gmra.mrb[0].mxu0 %v1826
  %v1828 = vpop.f32.mrb[0].mxu0
  %v1829 = vadd.f32 %v1652, %v1828
  %v1830 = vpop.f32.mrb[0].mxu0
  %1831 = vmatprep.mubr.f32.mxu0 0.0
  %v1832 = vand.u32 %v616, 4294901760
  %1833 = vmatmul.mubr.f32.gmra.mrb[0].mxu0 %v1832
  %v1834 = vpop.f32.mrb[0].mxu0
  %v1835 = vadd.f32 %v1658, %v1834
  %v1836 = vpop.f32.mrb[0].mxu0
  %1837 = vmatprep.mubr.f32.mxu0 0.0
  %v1838 = vand.u32 %v617, 4294901760
  %1839 = vmatmul.mubr.f32.gmra.mrb[0].mxu0 %v1838
  %v1840 = vpop.f32.mrb[0].mxu0
  %v1841 = vadd.f32 %v1664, %v1840
  %v1842 = vpop.f32.mrb[0].mxu0
  %1843 = vmatprep.mubr.f32.mxu0 0.0
  %v1844 = vand.u32 %v618, 4294901760
  %1845 = vmatmul.mubr.f32.gmra.mrb[0].mxu0 %v1844
  %v1846 = vpop.f32.mrb[0].mxu0
  %v1847 = vadd.f32 %v1670, %v1846
  %v1848 = vpop.f32.mrb[0].mxu0
  %1849 = vmatprep.mubr.f32.mxu0 0.0
  %v1850 = vand.u32 %v619, 4294901760
  %1851 = vmatmul.mubr.f32.gmra.mrb[0].mxu0 %v1850
  %v1852 = vpop.f32.mrb[0].mxu0
  %v1853 = vadd.f32 %v1676, %v1852
  %v1854 = vpop.f32.mrb[0].mxu0
  %1855 = vmatprep.mubr.f32.mxu0 0.0
  %v1856 = vand.u32 %v620, 4294901760
  %1857 = vmatmul.mubr.f32.gmra.mrb[0].mxu0 %v1856
  %v1858 = vpop.f32.mrb[0].mxu0
  %v1859 = vadd.f32 %v1682, %v1858
  %v1860 = vpop.f32.mrb[0].mxu0
  %1861 = vmatprep.mubr.f32.mxu0 0.0
  %v1862 = vand.u32 %v621, 4294901760
  %1863 = vmatmul.mubr.f32.gmra.mrb[0].mxu0 %v1862
  %v1864 = vpop.f32.mrb[0].mxu0
  %v1865 = vadd.f32 %v1688, %v1864
  %v1866 = vpop.f32.mrb[0].mxu0
  %1867 = vmatprep.mubr.f32.mxu0 0.0
  %v1868 = vand.u32 %v622, 4294901760
  %1869 = vmatmul.mubr.f32.gmra.mrb[0].mxu0 %v1868
  %v1870 = vpop.f32.mrb[0].mxu0
  %v1871 = vadd.f32 %v1694, %v1870
  %v1872 = vpop.f32.mrb[0].mxu0
  %1873 = vmatprep.mubr.f32.mxu0 0.0
  %v1874 = vand.u32 %v623, 4294901760
  %1875 = vmatmul.mubr.f32.gmra.mrb[0].mxu0 %v1874
  %v1876 = vpop.f32.mrb[0].mxu0
  %v1877 = vadd.f32 %v1700, %v1876
  %v1878 = vpop.f32.mrb[0].mxu0
  %1879 = vmatprep.mubr.f32.mxu0 0.0
  %v1880 = vand.u32 %v624, 4294901760
  %1881 = vmatmul.mubr.f32.gmra.mrb[0].mxu0 %v1880
  %v1882 = vpop.f32.mrb[0].mxu0
  %v1883 = vadd.f32 %v1706, %v1882
  %v1884 = vpop.f32.mrb[0].mxu0
  %1885 = vmatprep.mubr.f32.mxu0 0.0
  %v1886 = vand.u32 %v625, 4294901760
  %1887 = vmatmul.mubr.f32.gmra.mrb[0].mxu0 %v1886
  %v1888 = vpop.f32.mrb[0].mxu0
  %v1889 = vadd.f32 %v1712, %v1888
  %v1890 = vpop.f32.mrb[0].mxu0
  %1891 = vmatprep.mubr.f32.mxu0 0.0
  %v1892 = vand.u32 %v626, 4294901760
  %1893 = vmatmul.mubr.f32.gmra.mrb[0].mxu0 %v1892
  %v1894 = vpop.f32.mrb[0].mxu0
  %v1895 = vadd.f32 %v1718, %v1894
  %v1896 = vpop.f32.mrb[0].mxu0
  %1897 = vmatprep.mubr.f32.mxu0 0.0
  %v1898 = vand.u32 %v627, 4294901760
  %1899 = vmatmul.mubr.f32.gmra.mrb[0].mxu0 %v1898
  %v1900 = vpop.f32.mrb[0].mxu0
  %v1901 = vadd.f32 %v1724, %v1900
  %v1902 = vpop.f32.mrb[0].mxu0
  %1903 = vmatprep.mubr.f32.mxu0 0.0
  %v1904 = vand.u32 %v628, 4294901760
  %1905 = vmatmul.mubr.f32.gmra.mrb[0].mxu0 %v1904
  %v1906 = vpop.f32.mrb[0].mxu0
  %v1907 = vadd.f32 %v1730, %v1906
  %v1908 = vpop.f32.mrb[0].mxu0
  %1909 = vmatprep.mubr.f32.mxu0 0.0
  %v1910 = vand.u32 %v629, 4294901760
  %1911 = vmatmul.mubr.f32.gmra.mrb[0].mxu0 %v1910
  %v1912 = vpop.f32.mrb[0].mxu0
  %v1913 = vadd.f32 %v1736, %v1912
  %v1914 = vpop.f32.mrb[0].mxu0
  %1915 = vdwg.mxu0
  %s1916 = smul.u32 0, 4
  %s1917 = sld [smem:[#allocation3 + %s1916]]
  %s1918 = scalar_lea.vmem %s2, %s1917
  %vm1919 = vcmask 105472
  %1920 = vst.msk [vmem:[%s1918] sm:$0xff] %vm1919, %v1823
  %1921 = vst.msk [vmem:[%s1918 + $0x8] sm:$0xff] %vm1919, %v1829
  %1922 = vst.msk [vmem:[%s1918 + $0x10] sm:$0xff] %vm1919, %v1835
  %1923 = vst.msk [vmem:[%s1918 + $0x18] sm:$0xff] %vm1919, %v1841
  %1924 = vst.msk [vmem:[%s1918 + $0x20] sm:$0xff] %vm1919, %v1847
  %1925 = vst.msk [vmem:[%s1918 + $0x28] sm:$0xff] %vm1919, %v1853
  %1926 = vst.msk [vmem:[%s1918 + $0x30] sm:$0xff] %vm1919, %v1859
  %1927 = vst.msk [vmem:[%s1918 + $0x38] sm:$0xff] %vm1919, %v1865
  %1928 = vst.msk [vmem:[%s1918 + $0x40] sm:$0xff] %vm1919, %v1871
  %1929 = vst.msk [vmem:[%s1918 + $0x48] sm:$0xff] %vm1919, %v1877
  %1930 = vst.msk [vmem:[%s1918 + $0x50] sm:$0xff] %vm1919, %v1883
  %1931 = vst.msk [vmem:[%s1918 + $0x58] sm:$0xff] %vm1919, %v1889
  %1932 = vst.msk [vmem:[%s1918 + $0x60] sm:$0xff] %vm1919, %v1895
  %1933 = vst.msk [vmem:[%s1918 + $0x68] sm:$0xff] %vm1919, %v1901
  %1934 = vst.msk [vmem:[%s1918 + $0x70] sm:$0xff] %vm1919, %v1907
  %1935 = vst.msk [vmem:[%s1918 + $0x78] sm:$0xff] %vm1919, %v1913
  %v1936 = vld [vmem:[%s1 + $0x80] sm:$0xff]
  %v1937 = vld [vmem:[%s1 + $0x88] sm:$0xff]
  %v1938 = vld [vmem:[%s1 + $0x90] sm:$0xff]
  %v1939 = vld [vmem:[%s1 + $0x98] sm:$0xff]
  %v1940 = vld [vmem:[%s1 + $0xa0] sm:$0xff]
  %v1941 = vld [vmem:[%s1 + $0xa8] sm:$0xff]
  %v1942 = vld [vmem:[%s1 + $0xb0] sm:$0xff]
  %v1943 = vld [vmem:[%s1 + $0xb8] sm:$0xff]
  %v1944 = vld [vmem:[%s1 + $0xc0] sm:$0xff]
  %v1945 = vld [vmem:[%s1 + $0xc8] sm:$0xff]
  %v1946 = vld [vmem:[%s1 + $0xd0] sm:$0xff]
  %v1947 = vld [vmem:[%s1 + $0xd8] sm:$0xff]
  %v1948 = vld [vmem:[%s1 + $0xe0] sm:$0xff]
  %v1949 = vld [vmem:[%s1 + $0xe8] sm:$0xff]
  %v1950 = vld [vmem:[%s1 + $0xf0] sm:$0xff]
  %v1951 = vld [vmem:[%s1 + $0xf8] sm:$0xff]
  %s1952 = sadd.s32 %s83, 128
  %v1953 = vstv %s1952
  %v1954 = vadd.s32 %v1953, %v18
  %v1955 = vadd.s32 %v1953, %v19
  %v1956 = vadd.s32 %v1953, %v20
  %v1957 = vadd.s32 %v1953, %v21
  %v1958 = vadd.s32 %v1953, %v22
  %v1959 = vadd.s32 %v1953, %v23
  %v1960 = vadd.s32 %v1953, %v24
  %v1961 = vadd.s32 %v1953, %v25
  %v1962 = vadd.s32 %v1953, %v26
  %v1963 = vadd.s32 %v1953, %v27
  %v1964 = vadd.s32 %v1953, %v28
  %v1965 = vadd.s32 %v1953, %v29
  %v1966 = vadd.s32 %v1953, %v30
  %v1967 = vadd.s32 %v1953, %v31
  %v1968 = vadd.s32 %v1953, %v32
  %v1969 = vadd.s32 %v1953, %v33
  %vm1970 = vcmp.gt.f32.partialorder %v1936, 0.5
  %vm1971 = vcmp.gt.f32.partialorder %v1937, 0.5
  %vm1972 = vcmp.gt.f32.partialorder %v1938, 0.5
  %vm1973 = vcmp.gt.f32.partialorder %v1939, 0.5
  %vm1974 = vcmp.gt.f32.partialorder %v1940, 0.5
  %vm1975 = vcmp.gt.f32.partialorder %v1941, 0.5
  %vm1976 = vcmp.gt.f32.partialorder %v1942, 0.5
  %vm1977 = vcmp.gt.f32.partialorder %v1943, 0.5
  %vm1978 = vcmp.gt.f32.partialorder %v1944, 0.5
  %vm1979 = vcmp.gt.f32.partialorder %v1945, 0.5
  %vm1980 = vcmp.gt.f32.partialorder %v1946, 0.5
  %vm1981 = vcmp.gt.f32.partialorder %v1947, 0.5
  %vm1982 = vcmp.gt.f32.partialorder %v1948, 0.5
  %vm1983 = vcmp.gt.f32.partialorder %v1949, 0.5
  %vm1984 = vcmp.gt.f32.partialorder %v1950, 0.5
  %vm1985 = vcmp.gt.f32.partialorder %v1951, 0.5
  %vm1986 = vcmp.lt.s32.totalorder %v1954, 64
  %vm1987 = vcmp.lt.s32.totalorder %v1955, 64
  %vm1988 = vcmp.lt.s32.totalorder %v1956, 64
  %vm1989 = vcmp.lt.s32.totalorder %v1957, 64
  %vm1990 = vcmp.lt.s32.totalorder %v1958, 64
  %vm1991 = vcmp.lt.s32.totalorder %v1959, 64
  %vm1992 = vcmp.lt.s32.totalorder %v1960, 64
  %vm1993 = vcmp.lt.s32.totalorder %v1961, 64
  %vm1994 = vcmp.lt.s32.totalorder %v1962, 64
  %vm1995 = vcmp.lt.s32.totalorder %v1963, 64
  %vm1996 = vcmp.lt.s32.totalorder %v1964, 64
  %vm1997 = vcmp.lt.s32.totalorder %v1965, 64
  %vm1998 = vcmp.lt.s32.totalorder %v1966, 64
  %vm1999 = vcmp.lt.s32.totalorder %v1967, 64
  %vm2000 = vcmp.lt.s32.totalorder %v1968, 64
  %vm2001 = vcmp.lt.s32.totalorder %v1969, 64
  %vm2002 = vmand %vm1970, %vm1986
  %vm2003 = vmand %vm1971, %vm1987
  %vm2004 = vmand %vm1972, %vm1988
  %vm2005 = vmand %vm1973, %vm1989
  %vm2006 = vmand %vm1974, %vm1990
  %vm2007 = vmand %vm1975, %vm1991
  %vm2008 = vmand %vm1976, %vm1992
  %vm2009 = vmand %vm1977, %vm1993
  %vm2010 = vmand %vm1978, %vm1994
  %vm2011 = vmand %vm1979, %vm1995
  %vm2012 = vmand %vm1980, %vm1996
  %vm2013 = vmand %vm1981, %vm1997
  %vm2014 = vmand %vm1982, %vm1998
  %vm2015 = vmand %vm1983, %vm1999
  %vm2016 = vmand %vm1984, %vm2000
  %vm2017 = vmand %vm1985, %vm2001
  %v2018 = vsel %vm2002, 1, 0
  %v2019 = vsel %vm2003, 1, 0
  %v2020 = vsel %vm2004, 1, 0
  %v2021 = vsel %vm2005, 1, 0
  %v2022 = vsel %vm2006, 1, 0
  %v2023 = vsel %vm2007, 1, 0
  %v2024 = vsel %vm2008, 1, 0
  %v2025 = vsel %vm2009, 1, 0
  %v2026 = vsel %vm2010, 1, 0
  %v2027 = vsel %vm2011, 1, 0
  %v2028 = vsel %vm2012, 1, 0
  %v2029 = vsel %vm2013, 1, 0
  %v2030 = vsel %vm2014, 1, 0
  %v2031 = vsel %vm2015, 1, 0
  %v2032 = vsel %vm2016, 1, 0
  %v2033 = vsel %vm2017, 1, 0
  %v2034 = vcvt.s32.f32 %v2018
  %v2035 = vcvt.s32.f32 %v2019
  %v2036 = vcvt.s32.f32 %v2020
  %v2037 = vcvt.s32.f32 %v2021
  %v2038 = vcvt.s32.f32 %v2022
  %v2039 = vcvt.s32.f32 %v2023
  %v2040 = vcvt.s32.f32 %v2024
  %v2041 = vcvt.s32.f32 %v2025
  %v2042 = vcvt.s32.f32 %v2026
  %v2043 = vcvt.s32.f32 %v2027
  %v2044 = vcvt.s32.f32 %v2028
  %v2045 = vcvt.s32.f32 %v2029
  %v2046 = vcvt.s32.f32 %v2030
  %v2047 = vcvt.s32.f32 %v2031
  %v2048 = vcvt.s32.f32 %v2032
  %v2049 = vcvt.s32.f32 %v2033
  %2066 = vrot.lane.b32.xlu0 %v2034, 120
  %v2067 = vpop.permute.xlu0 %2066
  %2068 = vrot.lane.b32.xlu0 %v2035, 120
  %v2069 = vpop.permute.xlu0 %2068
  %2070 = vrot.lane.b32.xlu0 %v2036, 120
  %v2071 = vpop.permute.xlu0 %2070
  %2072 = vrot.lane.b32.xlu0 %v2037, 120
  %v2073 = vpop.permute.xlu0 %2072
  %2074 = vrot.lane.b32.xlu0 %v2038, 120
  %v2075 = vpop.permute.xlu0 %2074
  %2076 = vrot.lane.b32.xlu0 %v2039, 120
  %v2077 = vpop.permute.xlu0 %2076
  %2078 = vrot.lane.b32.xlu0 %v2040, 120
  %v2079 = vpop.permute.xlu0 %2078
  %2080 = vrot.lane.b32.xlu0 %v2041, 120
  %v2081 = vpop.permute.xlu0 %2080
  %2082 = vrot.lane.b32.xlu0 %v2042, 120
  %v2083 = vpop.permute.xlu0 %2082
  %2084 = vrot.lane.b32.xlu0 %v2043, 120
  %v2085 = vpop.permute.xlu0 %2084
  %2086 = vrot.lane.b32.xlu0 %v2044, 120
  %v2087 = vpop.permute.xlu0 %2086
  %2088 = vrot.lane.b32.xlu0 %v2045, 120
  %v2089 = vpop.permute.xlu0 %2088
  %2090 = vrot.lane.b32.xlu0 %v2046, 120
  %v2091 = vpop.permute.xlu0 %2090
  %2092 = vrot.lane.b32.xlu0 %v2047, 120
  %v2093 = vpop.permute.xlu0 %2092
  %2094 = vrot.lane.b32.xlu0 %v2048, 120
  %v2095 = vpop.permute.xlu0 %2094
  %2096 = vrot.lane.b32.xlu0 %v2049, 120
  %v2097 = vpop.permute.xlu0 %2096
  %2114 = vmatprep.subr.mxu0 0.0
  %2115 = vmatpush1.msra.mxu0 %v2067
  %2116 = vmatprep.subr.mxu0 0.0
  %2117 = vmatpush1.msra.mxu0 %v2069
  %2118 = vmatprep.subr.mxu0 0.0
  %2119 = vmatpush1.msra.mxu0 %v2071
  %2120 = vmatprep.subr.mxu0 0.0
  %2121 = vmatpush1.msra.mxu0 %v2073
  %2122 = vmatprep.subr.mxu0 0.0
  %2123 = vmatpush1.msra.mxu0 %v2075
  %2124 = vmatprep.subr.mxu0 0.0
  %2125 = vmatpush1.msra.mxu0 %v2077
  %2126 = vmatprep.subr.mxu0 0.0
  %2127 = vmatpush1.msra.mxu0 %v2079
  %2128 = vmatprep.subr.mxu0 0.0
  %2129 = vmatpush1.msra.mxu0 %v2081
  %2130 = vmatprep.subr.mxu0 0.0
  %2131 = vmatpush1.msra.mxu0 %v2083
  %2132 = vmatprep.subr.mxu0 0.0
  %2133 = vmatpush1.msra.mxu0 %v2085
  %2134 = vmatprep.subr.mxu0 0.0
  %2135 = vmatpush1.msra.mxu0 %v2087
  %2136 = vmatprep.subr.mxu0 0.0
  %2137 = vmatpush1.msra.mxu0 %v2089
  %2138 = vmatprep.subr.mxu0 0.0
  %2139 = vmatpush1.msra.mxu0 %v2091
  %2140 = vmatprep.subr.mxu0 0.0
  %2141 = vmatpush1.msra.mxu0 %v2093
  %2142 = vmatprep.subr.mxu0 0.0
  %2143 = vmatpush1.msra.mxu0 %v2095
  %2144 = vmatprep.subr.mxu0 0.0
  %2145 = vmatpush1.msra.mxu0 %v2097
  %2146 = vmatprep.subr.mxu0 0.0
  %2147 = vmatpush1.msra.mxu0 0.0
  %2148 = vmatprep.subr.mxu0 0.0
  %2149 = vmatpush1.msra.mxu0 0.0
  %2150 = vmatprep.subr.mxu0 0.0
  %2151 = vmatpush1.msra.mxu0 0.0
  %2152 = vmatprep.subr.mxu0 0.0
  %2153 = vmatpush1.msra.mxu0 0.0
  %2154 = vmatprep.subr.mxu0 0.0
  %2155 = vmatpush1.msra.mxu0 0.0
  %2156 = vmatprep.subr.mxu0 0.0
  %2157 = vmatpush1.msra.mxu0 0.0
  %2158 = vmatprep.subr.mxu0 0.0
  %2159 = vmatpush1.msra.mxu0 0.0
  %2160 = vmatprep.subr.mxu0 0.0
  %2161 = vmatpush1.msra.mxu0 0.0
  %2162 = vmatprep.subr.mxu0 0.0
  %2163 = vmatpush1.msra.mxu0 0.0
  %2164 = vmatprep.subr.mxu0 0.0
  %2165 = vmatpush1.msra.mxu0 0.0
  %2166 = vmatprep.subr.mxu0 0.0
  %2167 = vmatpush1.msra.mxu0 0.0
  %2168 = vmatprep.subr.mxu0 0.0
  %2169 = vmatpush1.msra.mxu0 0.0
  %2170 = vmatprep.subr.mxu0 0.0
  %2171 = vmatpush1.msra.mxu0 0.0
  %2172 = vmatprep.subr.mxu0 0.0
  %2173 = vmatpush1.msra.mxu0 0.0
  %2174 = vmatprep.subr.mxu0 0.0
  %2175 = vmatpush1.msra.mxu0 0.0
  %2176 = vmatprep.subr.mxu0 0.0
  %2177 = vmatpush1.msra.mxu0 0.0
  %2178 = vmatprep.mubr.f32.mxu0 0.0
  %2179 = vmatmul.mubr.f32.gmra.mrb[0].mxu0 %v67
  %v2180 = vpop.f32.mrb[0].mxu0
  %v2181 = vadd.f32 0.0, %v2180
  %v2182 = vpop.f32.mrb[0].mxu0
  %2183 = vmatprep.mubr.f32.mxu0 0.0
  %2184 = vmatmul.mubr.f32.gmra.mrb[0].mxu0 %v68
  %v2185 = vpop.f32.mrb[0].mxu0
  %v2186 = vadd.f32 0.0, %v2185
  %v2187 = vpop.f32.mrb[0].mxu0
  %2188 = vmatprep.mubr.f32.mxu0 0.0
  %2189 = vmatmul.mubr.f32.gmra.mrb[0].mxu0 %v69
  %v2190 = vpop.f32.mrb[0].mxu0
  %v2191 = vadd.f32 0.0, %v2190
  %v2192 = vpop.f32.mrb[0].mxu0
  %2193 = vmatprep.mubr.f32.mxu0 0.0
  %2194 = vmatmul.mubr.f32.gmra.mrb[0].mxu0 %v70
  %v2195 = vpop.f32.mrb[0].mxu0
  %v2196 = vadd.f32 0.0, %v2195
  %v2197 = vpop.f32.mrb[0].mxu0
  %2198 = vmatprep.mubr.f32.mxu0 0.0
  %2199 = vmatmul.mubr.f32.gmra.mrb[0].mxu0 %v71
  %v2200 = vpop.f32.mrb[0].mxu0
  %v2201 = vadd.f32 0.0, %v2200
  %v2202 = vpop.f32.mrb[0].mxu0
  %2203 = vmatprep.mubr.f32.mxu0 0.0
  %2204 = vmatmul.mubr.f32.gmra.mrb[0].mxu0 %v72
  %v2205 = vpop.f32.mrb[0].mxu0
  %v2206 = vadd.f32 0.0, %v2205
  %v2207 = vpop.f32.mrb[0].mxu0
  %2208 = vmatprep.mubr.f32.mxu0 0.0
  %2209 = vmatmul.mubr.f32.gmra.mrb[0].mxu0 %v73
  %v2210 = vpop.f32.mrb[0].mxu0
  %v2211 = vadd.f32 0.0, %v2210
  %v2212 = vpop.f32.mrb[0].mxu0
  %2213 = vmatprep.mubr.f32.mxu0 0.0
  %2214 = vmatmul.mubr.f32.gmra.mrb[0].mxu0 %v74
  %v2215 = vpop.f32.mrb[0].mxu0
  %v2216 = vadd.f32 0.0, %v2215
  %v2217 = vpop.f32.mrb[0].mxu0
  %2218 = vmatprep.mubr.f32.mxu0 0.0
  %2219 = vmatmul.mubr.f32.gmra.mrb[0].mxu0 %v75
  %v2220 = vpop.f32.mrb[0].mxu0
  %v2221 = vadd.f32 0.0, %v2220
  %v2222 = vpop.f32.mrb[0].mxu0
  %2223 = vmatprep.mubr.f32.mxu0 0.0
  %2224 = vmatmul.mubr.f32.gmra.mrb[0].mxu0 %v76
  %v2225 = vpop.f32.mrb[0].mxu0
  %v2226 = vadd.f32 0.0, %v2225
  %v2227 = vpop.f32.mrb[0].mxu0
  %2228 = vmatprep.mubr.f32.mxu0 0.0
  %2229 = vmatmul.mubr.f32.gmra.mrb[0].mxu0 %v77
  %v2230 = vpop.f32.mrb[0].mxu0
  %v2231 = vadd.f32 0.0, %v2230
  %v2232 = vpop.f32.mrb[0].mxu0
  %2233 = vmatprep.mubr.f32.mxu0 0.0
  %2234 = vmatmul.mubr.f32.gmra.mrb[0].mxu0 %v78
  %v2235 = vpop.f32.mrb[0].mxu0
  %v2236 = vadd.f32 0.0, %v2235
  %v2237 = vpop.f32.mrb[0].mxu0
  %2238 = vmatprep.mubr.f32.mxu0 0.0
  %2239 = vmatmul.mubr.f32.gmra.mrb[0].mxu0 %v79
  %v2240 = vpop.f32.mrb[0].mxu0
  %v2241 = vadd.f32 0.0, %v2240
  %v2242 = vpop.f32.mrb[0].mxu0
  %2243 = vmatprep.mubr.f32.mxu0 0.0
  %2244 = vmatmul.mubr.f32.gmra.mrb[0].mxu0 %v80
  %v2245 = vpop.f32.mrb[0].mxu0
  %v2246 = vadd.f32 0.0, %v2245
  %v2247 = vpop.f32.mrb[0].mxu0
  %2248 = vmatprep.mubr.f32.mxu0 0.0
  %2249 = vmatmul.mubr.f32.gmra.mrb[0].mxu0 %v81
  %v2250 = vpop.f32.mrb[0].mxu0
  %v2251 = vadd.f32 0.0, %v2250
  %v2252 = vpop.f32.mrb[0].mxu0
  %2253 = vmatprep.mubr.f32.mxu0 0.0
  %2254 = vmatmul.mubr.f32.gmra.mrb[0].mxu0 %v82
  %v2255 = vpop.f32.mrb[0].mxu0
  %v2256 = vadd.f32 0.0, %v2255
  %v2257 = vpop.f32.mrb[0].mxu0
  %2258 = vdwg.mxu0
  %2260 = vset.pattern.permute.xlu0 0
  %2261 = vperm.xlu0 %2260, %v2181
  %v2262 = vpop.permute.xlu0 %2261
  %2265 = vset.pattern.permute.xlu0 0
  %2266 = vperm.xlu0 %2265, %v2186
  %v2267 = vpop.permute.xlu0 %2266
  %2270 = vset.pattern.permute.xlu0 0
  %2271 = vperm.xlu0 %2270, %v2191
  %v2272 = vpop.permute.xlu0 %2271
  %2275 = vset.pattern.permute.xlu0 0
  %2276 = vperm.xlu0 %2275, %v2196
  %v2277 = vpop.permute.xlu0 %2276
  %2280 = vset.pattern.permute.xlu0 0
  %2281 = vperm.xlu0 %2280, %v2201
  %v2282 = vpop.permute.xlu0 %2281
  %2285 = vset.pattern.permute.xlu0 0
  %2286 = vperm.xlu0 %2285, %v2206
  %v2287 = vpop.permute.xlu0 %2286
  %2290 = vset.pattern.permute.xlu0 0
  %2291 = vperm.xlu0 %2290, %v2211
  %v2292 = vpop.permute.xlu0 %2291
  %2295 = vset.pattern.permute.xlu0 0
  %2296 = vperm.xlu0 %2295, %v2216
  %v2297 = vpop.permute.xlu0 %2296
  %2300 = vset.pattern.permute.xlu0 0
  %2301 = vperm.xlu0 %2300, %v2221
  %v2302 = vpop.permute.xlu0 %2301
  %2305 = vset.pattern.permute.xlu0 0
  %2306 = vperm.xlu0 %2305, %v2226
  %v2307 = vpop.permute.xlu0 %2306
  %2310 = vset.pattern.permute.xlu0 0
  %2311 = vperm.xlu0 %2310, %v2231
  %v2312 = vpop.permute.xlu0 %2311
  %2315 = vset.pattern.permute.xlu0 0
  %2316 = vperm.xlu0 %2315, %v2236
  %v2317 = vpop.permute.xlu0 %2316
  %2320 = vset.pattern.permute.xlu0 0
  %2321 = vperm.xlu0 %2320, %v2241
  %v2322 = vpop.permute.xlu0 %2321
  %2325 = vset.pattern.permute.xlu0 0
  %2326 = vperm.xlu0 %2325, %v2246
  %v2327 = vpop.permute.xlu0 %2326
  %2330 = vset.pattern.permute.xlu0 0
  %2331 = vperm.xlu0 %2330, %v2251
  %v2332 = vpop.permute.xlu0 %2331
  %2335 = vset.pattern.permute.xlu0 0
  %2336 = vperm.xlu0 %2335, %v2256
  %v2337 = vpop.permute.xlu0 %2336
  %vm2339 = vcmp.eq.f32.partialorder %v34, %v2262
  %vm2340 = vcmp.eq.f32.partialorder %v34, %v2267
  %vm2341 = vcmp.eq.f32.partialorder %v34, %v2272
  %vm2342 = vcmp.eq.f32.partialorder %v34, %v2277
  %vm2343 = vcmp.eq.f32.partialorder %v34, %v2282
  %vm2344 = vcmp.eq.f32.partialorder %v34, %v2287
  %vm2345 = vcmp.eq.f32.partialorder %v34, %v2292
  %vm2346 = vcmp.eq.f32.partialorder %v34, %v2297
  %vm2347 = vcmp.eq.f32.partialorder %v34, %v2302
  %vm2348 = vcmp.eq.f32.partialorder %v34, %v2307
  %vm2349 = vcmp.eq.f32.partialorder %v34, %v2312
  %vm2350 = vcmp.eq.f32.partialorder %v34, %v2317
  %vm2351 = vcmp.eq.f32.partialorder %v34, %v2322
  %vm2352 = vcmp.eq.f32.partialorder %v34, %v2327
  %vm2353 = vcmp.eq.f32.partialorder %v34, %v2332
  %vm2354 = vcmp.eq.f32.partialorder %v34, %v2337
  %2355 = vset.pattern.permute.xlu0 8
  %2356 = vperm.xlu0 %2355, %v2018
  %v2357 = vpop.permute.xlu0 %2356
  %2358 = vset.pattern.permute.xlu0 8
  %2359 = vperm.xlu0 %2358, %v2019
  %v2360 = vpop.permute.xlu0 %2359
  %2361 = vset.pattern.permute.xlu0 8
  %2362 = vperm.xlu0 %2361, %v2020
  %v2363 = vpop.permute.xlu0 %2362
  %2364 = vset.pattern.permute.xlu0 8
  %2365 = vperm.xlu0 %2364, %v2021
  %v2366 = vpop.permute.xlu0 %2365
  %2367 = vset.pattern.permute.xlu0 8
  %2368 = vperm.xlu0 %2367, %v2022
  %v2369 = vpop.permute.xlu0 %2368
  %2370 = vset.pattern.permute.xlu0 8
  %2371 = vperm.xlu0 %2370, %v2023
  %v2372 = vpop.permute.xlu0 %2371
  %2373 = vset.pattern.permute.xlu0 8
  %2374 = vperm.xlu0 %2373, %v2024
  %v2375 = vpop.permute.xlu0 %2374
  %2376 = vset.pattern.permute.xlu0 8
  %2377 = vperm.xlu0 %2376, %v2025
  %v2378 = vpop.permute.xlu0 %2377
  %2379 = vset.pattern.permute.xlu0 8
  %2380 = vperm.xlu0 %2379, %v2026
  %v2381 = vpop.permute.xlu0 %2380
  %2382 = vset.pattern.permute.xlu0 8
  %2383 = vperm.xlu0 %2382, %v2027
  %v2384 = vpop.permute.xlu0 %2383
  %2385 = vset.pattern.permute.xlu0 8
  %2386 = vperm.xlu0 %2385, %v2028
  %v2387 = vpop.permute.xlu0 %2386
  %2388 = vset.pattern.permute.xlu0 8
  %2389 = vperm.xlu0 %2388, %v2029
  %v2390 = vpop.permute.xlu0 %2389
  %2391 = vset.pattern.permute.xlu0 8
  %2392 = vperm.xlu0 %2391, %v2030
  %v2393 = vpop.permute.xlu0 %2392
  %2394 = vset.pattern.permute.xlu0 8
  %2395 = vperm.xlu0 %2394, %v2031
  %v2396 = vpop.permute.xlu0 %2395
  %2397 = vset.pattern.permute.xlu0 8
  %2398 = vperm.xlu0 %2397, %v2032
  %v2399 = vpop.permute.xlu0 %2398
  %2400 = vset.pattern.permute.xlu0 8
  %2401 = vperm.xlu0 %2400, %v2033
  %v2402 = vpop.permute.xlu0 %2401
  %vm2403 = vcmp.eq.s32.totalorder %v2357, 1
  %vm2404 = vcmp.eq.s32.totalorder %v2360, 1
  %vm2405 = vcmp.eq.s32.totalorder %v2363, 1
  %vm2406 = vcmp.eq.s32.totalorder %v2366, 1
  %vm2407 = vcmp.eq.s32.totalorder %v2369, 1
  %vm2408 = vcmp.eq.s32.totalorder %v2372, 1
  %vm2409 = vcmp.eq.s32.totalorder %v2375, 1
  %vm2410 = vcmp.eq.s32.totalorder %v2378, 1
  %vm2411 = vcmp.eq.s32.totalorder %v2381, 1
  %vm2412 = vcmp.eq.s32.totalorder %v2384, 1
  %vm2413 = vcmp.eq.s32.totalorder %v2387, 1
  %vm2414 = vcmp.eq.s32.totalorder %v2390, 1
  %vm2415 = vcmp.eq.s32.totalorder %v2393, 1
  %vm2416 = vcmp.eq.s32.totalorder %v2396, 1
  %vm2417 = vcmp.eq.s32.totalorder %v2399, 1
  %vm2418 = vcmp.eq.s32.totalorder %v2402, 1
  %vm2419 = vmand %vm2339, %vm2403
  %vm2420 = vmand %vm2340, %vm2404
  %vm2421 = vmand %vm2341, %vm2405
  %vm2422 = vmand %vm2342, %vm2406
  %vm2423 = vmand %vm2343, %vm2407
  %vm2424 = vmand %vm2344, %vm2408
  %vm2425 = vmand %vm2345, %vm2409
  %vm2426 = vmand %vm2346, %vm2410
  %vm2427 = vmand %vm2347, %vm2411
  %vm2428 = vmand %vm2348, %vm2412
  %vm2429 = vmand %vm2349, %vm2413
  %vm2430 = vmand %vm2350, %vm2414
  %vm2431 = vmand %vm2351, %vm2415
  %vm2432 = vmand %vm2352, %vm2416
  %vm2433 = vmand %vm2353, %vm2417
  %vm2434 = vmand %vm2354, %vm2418
  %v2435 = vsel %vm2419, 1.0, 0.0
  %v2436 = vsel %vm2420, 1.0, 0.0
  %v2437 = vsel %vm2421, 1.0, 0.0
  %v2438 = vsel %vm2422, 1.0, 0.0
  %v2439 = vsel %vm2423, 1.0, 0.0
  %v2440 = vsel %vm2424, 1.0, 0.0
  %v2441 = vsel %vm2425, 1.0, 0.0
  %v2442 = vsel %vm2426, 1.0, 0.0
  %v2443 = vsel %vm2427, 1.0, 0.0
  %v2444 = vsel %vm2428, 1.0, 0.0
  %v2445 = vsel %vm2429, 1.0, 0.0
  %v2446 = vsel %vm2430, 1.0, 0.0
  %v2447 = vsel %vm2431, 1.0, 0.0
  %v2448 = vsel %vm2432, 1.0, 0.0
  %v2449 = vsel %vm2433, 1.0, 0.0
  %v2450 = vsel %vm2434, 1.0, 0.0
  %2451 = vxpose.xlu0.b32.start [1/16] %v2435, 128
  %2452 = vxpose.xlu0.b32.cont [2/16] %v2436, 128
  %2453 = vxpose.xlu0.b32.cont [3/16] %v2437, 128
  %2454 = vxpose.xlu0.b32.cont [4/16] %v2438, 128
  %2455 = vxpose.xlu0.b32.cont [5/16] %v2439, 128
  %2456 = vxpose.xlu0.b32.cont [6/16] %v2440, 128
  %2457 = vxpose.xlu0.b32.cont [7/16] %v2441, 128
  %2458 = vxpose.xlu0.b32.cont [8/16] %v2442, 128
  %2459 = vxpose.xlu0.b32.cont [9/16] %v2443, 128
  %2460 = vxpose.xlu0.b32.cont [10/16] %v2444, 128
  %2461 = vxpose.xlu0.b32.cont [11/16] %v2445, 128
  %2462 = vxpose.xlu0.b32.cont [12/16] %v2446, 128
  %2463 = vxpose.xlu0.b32.cont [13/16] %v2447, 128
  %2464 = vxpose.xlu0.b32.cont [14/16] %v2448, 128
  %2465 = vxpose.xlu0.b32.cont [15/16] %v2449, 128
  %2466 = vxpose.xlu0.b32.end [16/16] %v2450, 128
  %v2467 = vpop.trf.xlu0
  %v2468 = vpop.trf.xlu0
  %v2469 = vpop.trf.xlu0
  %v2470 = vpop.trf.xlu0
  %v2471 = vpop.trf.xlu0
  %v2472 = vpop.trf.xlu0
  %v2473 = vpop.trf.xlu0
  %v2474 = vpop.trf.xlu0
  %v2475 = vpop.trf.xlu0
  %v2476 = vpop.trf.xlu0
  %v2477 = vpop.trf.xlu0
  %v2478 = vpop.trf.xlu0
  %v2479 = vpop.trf.xlu0
  %v2480 = vpop.trf.xlu0
  %v2481 = vpop.trf.xlu0
  %v2482 = vpop.trf.xlu0
  %2483 = vmatprep.subr.mxu0 0.0
  %v2484 = vand.u32 %v1936, 4294901760
  %2485 = vmatpush1.msra.mxu0 %v2484
  %2486 = vmatprep.subr.mxu0 0.0
  %v2487 = vand.u32 %v1937, 4294901760
  %2488 = vmatpush1.msra.mxu0 %v2487
  %2489 = vmatprep.subr.mxu0 0.0
  %v2490 = vand.u32 %v1938, 4294901760
  %2491 = vmatpush1.msra.mxu0 %v2490
  %2492 = vmatprep.subr.mxu0 0.0
  %v2493 = vand.u32 %v1939, 4294901760
  %2494 = vmatpush1.msra.mxu0 %v2493
  %2495 = vmatprep.subr.mxu0 0.0
  %v2496 = vand.u32 %v1940, 4294901760
  %2497 = vmatpush1.msra.mxu0 %v2496
  %2498 = vmatprep.subr.mxu0 0.0
  %v2499 = vand.u32 %v1941, 4294901760
  %2500 = vmatpush1.msra.mxu0 %v2499
  %2501 = vmatprep.subr.mxu0 0.0
  %v2502 = vand.u32 %v1942, 4294901760
  %2503 = vmatpush1.msra.mxu0 %v2502
  %2504 = vmatprep.subr.mxu0 0.0
  %v2505 = vand.u32 %v1943, 4294901760
  %2506 = vmatpush1.msra.mxu0 %v2505
  %2507 = vmatprep.subr.mxu0 0.0
  %v2508 = vand.u32 %v1944, 4294901760
  %2509 = vmatpush1.msra.mxu0 %v2508
  %2510 = vmatprep.subr.mxu0 0.0
  %v2511 = vand.u32 %v1945, 4294901760
  %2512 = vmatpush1.msra.mxu0 %v2511
  %2513 = vmatprep.subr.mxu0 0.0
  %v2514 = vand.u32 %v1946, 4294901760
  %2515 = vmatpush1.msra.mxu0 %v2514
  %2516 = vmatprep.subr.mxu0 0.0
  %v2517 = vand.u32 %v1947, 4294901760
  %2518 = vmatpush1.msra.mxu0 %v2517
  %2519 = vmatprep.subr.mxu0 0.0
  %v2520 = vand.u32 %v1948, 4294901760
  %2521 = vmatpush1.msra.mxu0 %v2520
  %2522 = vmatprep.subr.mxu0 0.0
  %v2523 = vand.u32 %v1949, 4294901760
  %2524 = vmatpush1.msra.mxu0 %v2523
  %2525 = vmatprep.subr.mxu0 0.0
  %v2526 = vand.u32 %v1950, 4294901760
  %2527 = vmatpush1.msra.mxu0 %v2526
  %2528 = vmatprep.subr.mxu0 0.0
  %v2529 = vand.u32 %v1951, 4294901760
  %2530 = vmatpush1.msra.mxu0 %v2529
  %2531 = vmatprep.subr.mxu0 0.0
  %2532 = vmatpush1.msra.mxu0 0.0
  %2533 = vmatprep.subr.mxu0 0.0
  %2534 = vmatpush1.msra.mxu0 0.0
  %2535 = vmatprep.subr.mxu0 0.0
  %2536 = vmatpush1.msra.mxu0 0.0
  %2537 = vmatprep.subr.mxu0 0.0
  %2538 = vmatpush1.msra.mxu0 0.0
  %2539 = vmatprep.subr.mxu0 0.0
  %2540 = vmatpush1.msra.mxu0 0.0
  %2541 = vmatprep.subr.mxu0 0.0
  %2542 = vmatpush1.msra.mxu0 0.0
  %2543 = vmatprep.subr.mxu0 0.0
  %2544 = vmatpush1.msra.mxu0 0.0
  %2545 = vmatprep.subr.mxu0 0.0
  %2546 = vmatpush1.msra.mxu0 0.0
  %2547 = vmatprep.subr.mxu0 0.0
  %2548 = vmatpush1.msra.mxu0 0.0
  %2549 = vmatprep.subr.mxu0 0.0
  %2550 = vmatpush1.msra.mxu0 0.0
  %2551 = vmatprep.subr.mxu0 0.0
  %2552 = vmatpush1.msra.mxu0 0.0
  %2553 = vmatprep.subr.mxu0 0.0
  %2554 = vmatpush1.msra.mxu0 0.0
  %2555 = vmatprep.subr.mxu0 0.0
  %2556 = vmatpush1.msra.mxu0 0.0
  %2557 = vmatprep.subr.mxu0 0.0
  %2558 = vmatpush1.msra.mxu0 0.0
  %2559 = vmatprep.subr.mxu0 0.0
  %2560 = vmatpush1.msra.mxu0 0.0
  %2561 = vmatprep.subr.mxu0 0.0
  %2562 = vmatpush1.msra.mxu0 0.0
  %2563 = vmatprep.mubr.f32.mxu0 0.0
  %v2564 = vand.u32 %v2467, 4294901760
  %v2565 = vsub.f32 %v2467, %v2564
  %v2566 = vand.u32 %v2565, 4294901760
  %v2567 = vsub.f32 %v2565, %v2566
  %v2568 = vand.u32 %v2567, 4294901760
  %2569 = vmatmul.mubr.f32.gmra.mrb[0].mxu0 %v2568
  %v2570 = vpop.f32.mrb[0].mxu0
  %v2571 = vadd.f32 0.0, %v2570
  %v2572 = vpop.f32.mrb[0].mxu0
  %2573 = vmatprep.mubr.f32.mxu0 0.0
  %v2574 = vand.u32 %v2468, 4294901760
  %v2575 = vsub.f32 %v2468, %v2574
  %v2576 = vand.u32 %v2575, 4294901760
  %v2577 = vsub.f32 %v2575, %v2576
  %v2578 = vand.u32 %v2577, 4294901760
  %2579 = vmatmul.mubr.f32.gmra.mrb[0].mxu0 %v2578
  %v2580 = vpop.f32.mrb[0].mxu0
  %v2581 = vadd.f32 0.0, %v2580
  %v2582 = vpop.f32.mrb[0].mxu0
  %2583 = vmatprep.mubr.f32.mxu0 0.0
  %v2584 = vand.u32 %v2469, 4294901760
  %v2585 = vsub.f32 %v2469, %v2584
  %v2586 = vand.u32 %v2585, 4294901760
  %v2587 = vsub.f32 %v2585, %v2586
  %v2588 = vand.u32 %v2587, 4294901760
  %2589 = vmatmul.mubr.f32.gmra.mrb[0].mxu0 %v2588
  %v2590 = vpop.f32.mrb[0].mxu0
  %v2591 = vadd.f32 0.0, %v2590
  %v2592 = vpop.f32.mrb[0].mxu0
  %2593 = vmatprep.mubr.f32.mxu0 0.0
  %v2594 = vand.u32 %v2470, 4294901760
  %v2595 = vsub.f32 %v2470, %v2594
  %v2596 = vand.u32 %v2595, 4294901760
  %v2597 = vsub.f32 %v2595, %v2596
  %v2598 = vand.u32 %v2597, 4294901760
  %2599 = vmatmul.mubr.f32.gmra.mrb[0].mxu0 %v2598
  %v2600 = vpop.f32.mrb[0].mxu0
  %v2601 = vadd.f32 0.0, %v2600
  %v2602 = vpop.f32.mrb[0].mxu0
  %2603 = vmatprep.mubr.f32.mxu0 0.0
  %v2604 = vand.u32 %v2471, 4294901760
  %v2605 = vsub.f32 %v2471, %v2604
  %v2606 = vand.u32 %v2605, 4294901760
  %v2607 = vsub.f32 %v2605, %v2606
  %v2608 = vand.u32 %v2607, 4294901760
  %2609 = vmatmul.mubr.f32.gmra.mrb[0].mxu0 %v2608
  %v2610 = vpop.f32.mrb[0].mxu0
  %v2611 = vadd.f32 0.0, %v2610
  %v2612 = vpop.f32.mrb[0].mxu0
  %2613 = vmatprep.mubr.f32.mxu0 0.0
  %v2614 = vand.u32 %v2472, 4294901760
  %v2615 = vsub.f32 %v2472, %v2614
  %v2616 = vand.u32 %v2615, 4294901760
  %v2617 = vsub.f32 %v2615, %v2616
  %v2618 = vand.u32 %v2617, 4294901760
  %2619 = vmatmul.mubr.f32.gmra.mrb[0].mxu0 %v2618
  %v2620 = vpop.f32.mrb[0].mxu0
  %v2621 = vadd.f32 0.0, %v2620
  %v2622 = vpop.f32.mrb[0].mxu0
  %2623 = vmatprep.mubr.f32.mxu0 0.0
  %v2624 = vand.u32 %v2473, 4294901760
  %v2625 = vsub.f32 %v2473, %v2624
  %v2626 = vand.u32 %v2625, 4294901760
  %v2627 = vsub.f32 %v2625, %v2626
  %v2628 = vand.u32 %v2627, 4294901760
  %2629 = vmatmul.mubr.f32.gmra.mrb[0].mxu0 %v2628
  %v2630 = vpop.f32.mrb[0].mxu0
  %v2631 = vadd.f32 0.0, %v2630
  %v2632 = vpop.f32.mrb[0].mxu0
  %2633 = vmatprep.mubr.f32.mxu0 0.0
  %v2634 = vand.u32 %v2474, 4294901760
  %v2635 = vsub.f32 %v2474, %v2634
  %v2636 = vand.u32 %v2635, 4294901760
  %v2637 = vsub.f32 %v2635, %v2636
  %v2638 = vand.u32 %v2637, 4294901760
  %2639 = vmatmul.mubr.f32.gmra.mrb[0].mxu0 %v2638
  %v2640 = vpop.f32.mrb[0].mxu0
  %v2641 = vadd.f32 0.0, %v2640
  %v2642 = vpop.f32.mrb[0].mxu0
  %2643 = vmatprep.mubr.f32.mxu0 0.0
  %v2644 = vand.u32 %v2475, 4294901760
  %v2645 = vsub.f32 %v2475, %v2644
  %v2646 = vand.u32 %v2645, 4294901760
  %v2647 = vsub.f32 %v2645, %v2646
  %v2648 = vand.u32 %v2647, 4294901760
  %2649 = vmatmul.mubr.f32.gmra.mrb[0].mxu0 %v2648
  %v2650 = vpop.f32.mrb[0].mxu0
  %v2651 = vadd.f32 0.0, %v2650
  %v2652 = vpop.f32.mrb[0].mxu0
  %2653 = vmatprep.mubr.f32.mxu0 0.0
  %v2654 = vand.u32 %v2476, 4294901760
  %v2655 = vsub.f32 %v2476, %v2654
  %v2656 = vand.u32 %v2655, 4294901760
  %v2657 = vsub.f32 %v2655, %v2656
  %v2658 = vand.u32 %v2657, 4294901760
  %2659 = vmatmul.mubr.f32.gmra.mrb[0].mxu0 %v2658
  %v2660 = vpop.f32.mrb[0].mxu0
  %v2661 = vadd.f32 0.0, %v2660
  %v2662 = vpop.f32.mrb[0].mxu0
  %2663 = vmatprep.mubr.f32.mxu0 0.0
  %v2664 = vand.u32 %v2477, 4294901760
  %v2665 = vsub.f32 %v2477, %v2664
  %v2666 = vand.u32 %v2665, 4294901760
  %v2667 = vsub.f32 %v2665, %v2666
  %v2668 = vand.u32 %v2667, 4294901760
  %2669 = vmatmul.mubr.f32.gmra.mrb[0].mxu0 %v2668
  %v2670 = vpop.f32.mrb[0].mxu0
  %v2671 = vadd.f32 0.0, %v2670
  %v2672 = vpop.f32.mrb[0].mxu0
  %2673 = vmatprep.mubr.f32.mxu0 0.0
  %v2674 = vand.u32 %v2478, 4294901760
  %v2675 = vsub.f32 %v2478, %v2674
  %v2676 = vand.u32 %v2675, 4294901760
  %v2677 = vsub.f32 %v2675, %v2676
  %v2678 = vand.u32 %v2677, 4294901760
  %2679 = vmatmul.mubr.f32.gmra.mrb[0].mxu0 %v2678
  %v2680 = vpop.f32.mrb[0].mxu0
  %v2681 = vadd.f32 0.0, %v2680
  %v2682 = vpop.f32.mrb[0].mxu0
  %2683 = vmatprep.mubr.f32.mxu0 0.0
  %v2684 = vand.u32 %v2479, 4294901760
  %v2685 = vsub.f32 %v2479, %v2684
  %v2686 = vand.u32 %v2685, 4294901760
  %v2687 = vsub.f32 %v2685, %v2686
  %v2688 = vand.u32 %v2687, 4294901760
  %2689 = vmatmul.mubr.f32.gmra.mrb[0].mxu0 %v2688
  %v2690 = vpop.f32.mrb[0].mxu0
  %v2691 = vadd.f32 0.0, %v2690
  %v2692 = vpop.f32.mrb[0].mxu0
  %2693 = vmatprep.mubr.f32.mxu0 0.0
  %v2694 = vand.u32 %v2480, 4294901760
  %v2695 = vsub.f32 %v2480, %v2694
  %v2696 = vand.u32 %v2695, 4294901760
  %v2697 = vsub.f32 %v2695, %v2696
  %v2698 = vand.u32 %v2697, 4294901760
  %2699 = vmatmul.mubr.f32.gmra.mrb[0].mxu0 %v2698
  %v2700 = vpop.f32.mrb[0].mxu0
  %v2701 = vadd.f32 0.0, %v2700
  %v2702 = vpop.f32.mrb[0].mxu0
  %2703 = vmatprep.mubr.f32.mxu0 0.0
  %v2704 = vand.u32 %v2481, 4294901760
  %v2705 = vsub.f32 %v2481, %v2704
  %v2706 = vand.u32 %v2705, 4294901760
  %v2707 = vsub.f32 %v2705, %v2706
  %v2708 = vand.u32 %v2707, 4294901760
  %2709 = vmatmul.mubr.f32.gmra.mrb[0].mxu0 %v2708
  %v2710 = vpop.f32.mrb[0].mxu0
  %v2711 = vadd.f32 0.0, %v2710
  %v2712 = vpop.f32.mrb[0].mxu0
  %2713 = vmatprep.mubr.f32.mxu0 0.0
  %v2714 = vand.u32 %v2482, 4294901760
  %v2715 = vsub.f32 %v2482, %v2714
  %v2716 = vand.u32 %v2715, 4294901760
  %v2717 = vsub.f32 %v2715, %v2716
  %v2718 = vand.u32 %v2717, 4294901760
  %2719 = vmatmul.mubr.f32.gmra.mrb[0].mxu0 %v2718
  %v2720 = vpop.f32.mrb[0].mxu0
  %v2721 = vadd.f32 0.0, %v2720
  %v2722 = vpop.f32.mrb[0].mxu0
  %2723 = vdwg.mxu0
  %2724 = vmatprep.subr.mxu0 0.0
  %v2725 = vand.u32 %v1936, 4294901760
  %v2726 = vsub.f32 %v1936, %v2725
  %v2727 = vand.u32 %v2726, 4294901760
  %v2728 = vsub.f32 %v2726, %v2727
  %v2729 = vand.u32 %v2728, 4294901760
  %2730 = vmatpush1.msra.mxu0 %v2729
  %2731 = vmatprep.subr.mxu0 0.0
  %v2732 = vand.u32 %v1937, 4294901760
  %v2733 = vsub.f32 %v1937, %v2732
  %v2734 = vand.u32 %v2733, 4294901760
  %v2735 = vsub.f32 %v2733, %v2734
  %v2736 = vand.u32 %v2735, 4294901760
  %2737 = vmatpush1.msra.mxu0 %v2736
  %2738 = vmatprep.subr.mxu0 0.0
  %v2739 = vand.u32 %v1938, 4294901760
  %v2740 = vsub.f32 %v1938, %v2739
  %v2741 = vand.u32 %v2740, 4294901760
  %v2742 = vsub.f32 %v2740, %v2741
  %v2743 = vand.u32 %v2742, 4294901760
  %2744 = vmatpush1.msra.mxu0 %v2743
  %2745 = vmatprep.subr.mxu0 0.0
  %v2746 = vand.u32 %v1939, 4294901760
  %v2747 = vsub.f32 %v1939, %v2746
  %v2748 = vand.u32 %v2747, 4294901760
  %v2749 = vsub.f32 %v2747, %v2748
  %v2750 = vand.u32 %v2749, 4294901760
  %2751 = vmatpush1.msra.mxu0 %v2750
  %2752 = vmatprep.subr.mxu0 0.0
  %v2753 = vand.u32 %v1940, 4294901760
  %v2754 = vsub.f32 %v1940, %v2753
  %v2755 = vand.u32 %v2754, 4294901760
  %v2756 = vsub.f32 %v2754, %v2755
  %v2757 = vand.u32 %v2756, 4294901760
  %2758 = vmatpush1.msra.mxu0 %v2757
  %2759 = vmatprep.subr.mxu0 0.0
  %v2760 = vand.u32 %v1941, 4294901760
  %v2761 = vsub.f32 %v1941, %v2760
  %v2762 = vand.u32 %v2761, 4294901760
  %v2763 = vsub.f32 %v2761, %v2762
  %v2764 = vand.u32 %v2763, 4294901760
  %2765 = vmatpush1.msra.mxu0 %v2764
  %2766 = vmatprep.subr.mxu0 0.0
  %v2767 = vand.u32 %v1942, 4294901760
  %v2768 = vsub.f32 %v1942, %v2767
  %v2769 = vand.u32 %v2768, 4294901760
  %v2770 = vsub.f32 %v2768, %v2769
  %v2771 = vand.u32 %v2770, 4294901760
  %2772 = vmatpush1.msra.mxu0 %v2771
  %2773 = vmatprep.subr.mxu0 0.0
  %v2774 = vand.u32 %v1943, 4294901760
  %v2775 = vsub.f32 %v1943, %v2774
  %v2776 = vand.u32 %v2775, 4294901760
  %v2777 = vsub.f32 %v2775, %v2776
  %v2778 = vand.u32 %v2777, 4294901760
  %2779 = vmatpush1.msra.mxu0 %v2778
  %2780 = vmatprep.subr.mxu0 0.0
  %v2781 = vand.u32 %v1944, 4294901760
  %v2782 = vsub.f32 %v1944, %v2781
  %v2783 = vand.u32 %v2782, 4294901760
  %v2784 = vsub.f32 %v2782, %v2783
  %v2785 = vand.u32 %v2784, 4294901760
  %2786 = vmatpush1.msra.mxu0 %v2785
  %2787 = vmatprep.subr.mxu0 0.0
  %v2788 = vand.u32 %v1945, 4294901760
  %v2789 = vsub.f32 %v1945, %v2788
  %v2790 = vand.u32 %v2789, 4294901760
  %v2791 = vsub.f32 %v2789, %v2790
  %v2792 = vand.u32 %v2791, 4294901760
  %2793 = vmatpush1.msra.mxu0 %v2792
  %2794 = vmatprep.subr.mxu0 0.0
  %v2795 = vand.u32 %v1946, 4294901760
  %v2796 = vsub.f32 %v1946, %v2795
  %v2797 = vand.u32 %v2796, 4294901760
  %v2798 = vsub.f32 %v2796, %v2797
  %v2799 = vand.u32 %v2798, 4294901760
  %2800 = vmatpush1.msra.mxu0 %v2799
  %2801 = vmatprep.subr.mxu0 0.0
  %v2802 = vand.u32 %v1947, 4294901760
  %v2803 = vsub.f32 %v1947, %v2802
  %v2804 = vand.u32 %v2803, 4294901760
  %v2805 = vsub.f32 %v2803, %v2804
  %v2806 = vand.u32 %v2805, 4294901760
  %2807 = vmatpush1.msra.mxu0 %v2806
  %2808 = vmatprep.subr.mxu0 0.0
  %v2809 = vand.u32 %v1948, 4294901760
  %v2810 = vsub.f32 %v1948, %v2809
  %v2811 = vand.u32 %v2810, 4294901760
  %v2812 = vsub.f32 %v2810, %v2811
  %v2813 = vand.u32 %v2812, 4294901760
  %2814 = vmatpush1.msra.mxu0 %v2813
  %2815 = vmatprep.subr.mxu0 0.0
  %v2816 = vand.u32 %v1949, 4294901760
  %v2817 = vsub.f32 %v1949, %v2816
  %v2818 = vand.u32 %v2817, 4294901760
  %v2819 = vsub.f32 %v2817, %v2818
  %v2820 = vand.u32 %v2819, 4294901760
  %2821 = vmatpush1.msra.mxu0 %v2820
  %2822 = vmatprep.subr.mxu0 0.0
  %v2823 = vand.u32 %v1950, 4294901760
  %v2824 = vsub.f32 %v1950, %v2823
  %v2825 = vand.u32 %v2824, 4294901760
  %v2826 = vsub.f32 %v2824, %v2825
  %v2827 = vand.u32 %v2826, 4294901760
  %2828 = vmatpush1.msra.mxu0 %v2827
  %2829 = vmatprep.subr.mxu0 0.0
  %v2830 = vand.u32 %v1951, 4294901760
  %v2831 = vsub.f32 %v1951, %v2830
  %v2832 = vand.u32 %v2831, 4294901760
  %v2833 = vsub.f32 %v2831, %v2832
  %v2834 = vand.u32 %v2833, 4294901760
  %2835 = vmatpush1.msra.mxu0 %v2834
  %2836 = vmatprep.subr.mxu0 0.0
  %2837 = vmatpush1.msra.mxu0 0.0
  %2838 = vmatprep.subr.mxu0 0.0
  %2839 = vmatpush1.msra.mxu0 0.0
  %2840 = vmatprep.subr.mxu0 0.0
  %2841 = vmatpush1.msra.mxu0 0.0
  %2842 = vmatprep.subr.mxu0 0.0
  %2843 = vmatpush1.msra.mxu0 0.0
  %2844 = vmatprep.subr.mxu0 0.0
  %2845 = vmatpush1.msra.mxu0 0.0
  %2846 = vmatprep.subr.mxu0 0.0
  %2847 = vmatpush1.msra.mxu0 0.0
  %2848 = vmatprep.subr.mxu0 0.0
  %2849 = vmatpush1.msra.mxu0 0.0
  %2850 = vmatprep.subr.mxu0 0.0
  %2851 = vmatpush1.msra.mxu0 0.0
  %2852 = vmatprep.subr.mxu0 0.0
  %2853 = vmatpush1.msra.mxu0 0.0
  %2854 = vmatprep.subr.mxu0 0.0
  %2855 = vmatpush1.msra.mxu0 0.0
  %2856 = vmatprep.subr.mxu0 0.0
  %2857 = vmatpush1.msra.mxu0 0.0
  %2858 = vmatprep.subr.mxu0 0.0
  %2859 = vmatpush1.msra.mxu0 0.0
  %2860 = vmatprep.subr.mxu0 0.0
  %2861 = vmatpush1.msra.mxu0 0.0
  %2862 = vmatprep.subr.mxu0 0.0
  %2863 = vmatpush1.msra.mxu0 0.0
  %2864 = vmatprep.subr.mxu0 0.0
  %2865 = vmatpush1.msra.mxu0 0.0
  %2866 = vmatprep.subr.mxu0 0.0
  %2867 = vmatpush1.msra.mxu0 0.0
  %2868 = vmatprep.mubr.f32.mxu0 0.0
  %v2869 = vand.u32 %v2467, 4294901760
  %2870 = vmatmul.mubr.f32.gmra.mrb[0].mxu0 %v2869
  %v2871 = vpop.f32.mrb[0].mxu0
  %v2872 = vadd.f32 %v2571, %v2871
  %v2873 = vpop.f32.mrb[0].mxu0
  %2874 = vmatprep.mubr.f32.mxu0 0.0
  %v2875 = vand.u32 %v2468, 4294901760
  %2876 = vmatmul.mubr.f32.gmra.mrb[0].mxu0 %v2875
  %v2877 = vpop.f32.mrb[0].mxu0
  %v2878 = vadd.f32 %v2581, %v2877
  %v2879 = vpop.f32.mrb[0].mxu0
  %2880 = vmatprep.mubr.f32.mxu0 0.0
  %v2881 = vand.u32 %v2469, 4294901760
  %2882 = vmatmul.mubr.f32.gmra.mrb[0].mxu0 %v2881
  %v2883 = vpop.f32.mrb[0].mxu0
  %v2884 = vadd.f32 %v2591, %v2883
  %v2885 = vpop.f32.mrb[0].mxu0
  %2886 = vmatprep.mubr.f32.mxu0 0.0
  %v2887 = vand.u32 %v2470, 4294901760
  %2888 = vmatmul.mubr.f32.gmra.mrb[0].mxu0 %v2887
  %v2889 = vpop.f32.mrb[0].mxu0
  %v2890 = vadd.f32 %v2601, %v2889
  %v2891 = vpop.f32.mrb[0].mxu0
  %2892 = vmatprep.mubr.f32.mxu0 0.0
  %v2893 = vand.u32 %v2471, 4294901760
  %2894 = vmatmul.mubr.f32.gmra.mrb[0].mxu0 %v2893
  %v2895 = vpop.f32.mrb[0].mxu0
  %v2896 = vadd.f32 %v2611, %v2895
  %v2897 = vpop.f32.mrb[0].mxu0
  %2898 = vmatprep.mubr.f32.mxu0 0.0
  %v2899 = vand.u32 %v2472, 4294901760
  %2900 = vmatmul.mubr.f32.gmra.mrb[0].mxu0 %v2899
  %v2901 = vpop.f32.mrb[0].mxu0
  %v2902 = vadd.f32 %v2621, %v2901
  %v2903 = vpop.f32.mrb[0].mxu0
  %2904 = vmatprep.mubr.f32.mxu0 0.0
  %v2905 = vand.u32 %v2473, 4294901760
  %2906 = vmatmul.mubr.f32.gmra.mrb[0].mxu0 %v2905
  %v2907 = vpop.f32.mrb[0].mxu0
  %v2908 = vadd.f32 %v2631, %v2907
  %v2909 = vpop.f32.mrb[0].mxu0
  %2910 = vmatprep.mubr.f32.mxu0 0.0
  %v2911 = vand.u32 %v2474, 4294901760
  %2912 = vmatmul.mubr.f32.gmra.mrb[0].mxu0 %v2911
  %v2913 = vpop.f32.mrb[0].mxu0
  %v2914 = vadd.f32 %v2641, %v2913
  %v2915 = vpop.f32.mrb[0].mxu0
  %2916 = vmatprep.mubr.f32.mxu0 0.0
  %v2917 = vand.u32 %v2475, 4294901760
  %2918 = vmatmul.mubr.f32.gmra.mrb[0].mxu0 %v2917
  %v2919 = vpop.f32.mrb[0].mxu0
  %v2920 = vadd.f32 %v2651, %v2919
  %v2921 = vpop.f32.mrb[0].mxu0
  %2922 = vmatprep.mubr.f32.mxu0 0.0
  %v2923 = vand.u32 %v2476, 4294901760
  %2924 = vmatmul.mubr.f32.gmra.mrb[0].mxu0 %v2923
  %v2925 = vpop.f32.mrb[0].mxu0
  %v2926 = vadd.f32 %v2661, %v2925
  %v2927 = vpop.f32.mrb[0].mxu0
  %2928 = vmatprep.mubr.f32.mxu0 0.0
  %v2929 = vand.u32 %v2477, 4294901760
  %2930 = vmatmul.mubr.f32.gmra.mrb[0].mxu0 %v2929
  %v2931 = vpop.f32.mrb[0].mxu0
  %v2932 = vadd.f32 %v2671, %v2931
  %v2933 = vpop.f32.mrb[0].mxu0
  %2934 = vmatprep.mubr.f32.mxu0 0.0
  %v2935 = vand.u32 %v2478, 4294901760
  %2936 = vmatmul.mubr.f32.gmra.mrb[0].mxu0 %v2935
  %v2937 = vpop.f32.mrb[0].mxu0
  %v2938 = vadd.f32 %v2681, %v2937
  %v2939 = vpop.f32.mrb[0].mxu0
  %2940 = vmatprep.mubr.f32.mxu0 0.0
  %v2941 = vand.u32 %v2479, 4294901760
  %2942 = vmatmul.mubr.f32.gmra.mrb[0].mxu0 %v2941
  %v2943 = vpop.f32.mrb[0].mxu0
  %v2944 = vadd.f32 %v2691, %v2943
  %v2945 = vpop.f32.mrb[0].mxu0
  %2946 = vmatprep.mubr.f32.mxu0 0.0
  %v2947 = vand.u32 %v2480, 4294901760
  %2948 = vmatmul.mubr.f32.gmra.mrb[0].mxu0 %v2947
  %v2949 = vpop.f32.mrb[0].mxu0
  %v2950 = vadd.f32 %v2701, %v2949
  %v2951 = vpop.f32.mrb[0].mxu0
  %2952 = vmatprep.mubr.f32.mxu0 0.0
  %v2953 = vand.u32 %v2481, 4294901760
  %2954 = vmatmul.mubr.f32.gmra.mrb[0].mxu0 %v2953
  %v2955 = vpop.f32.mrb[0].mxu0
  %v2956 = vadd.f32 %v2711, %v2955
  %v2957 = vpop.f32.mrb[0].mxu0
  %2958 = vmatprep.mubr.f32.mxu0 0.0
  %v2959 = vand.u32 %v2482, 4294901760
  %2960 = vmatmul.mubr.f32.gmra.mrb[0].mxu0 %v2959
  %v2961 = vpop.f32.mrb[0].mxu0
  %v2962 = vadd.f32 %v2721, %v2961
  %v2963 = vpop.f32.mrb[0].mxu0
  %2964 = vdwg.mxu0
  %2965 = vmatprep.subr.mxu0 0.0
  %v2966 = vand.u32 %v1936, 4294901760
  %v2967 = vsub.f32 %v1936, %v2966
  %2968 = vmatpush1.msra.mxu0 %v2967
  %2969 = vmatprep.subr.mxu0 0.0
  %v2970 = vand.u32 %v1937, 4294901760
  %v2971 = vsub.f32 %v1937, %v2970
  %2972 = vmatpush1.msra.mxu0 %v2971
  %2973 = vmatprep.subr.mxu0 0.0
  %v2974 = vand.u32 %v1938, 4294901760
  %v2975 = vsub.f32 %v1938, %v2974
  %2976 = vmatpush1.msra.mxu0 %v2975
  %2977 = vmatprep.subr.mxu0 0.0
  %v2978 = vand.u32 %v1939, 4294901760
  %v2979 = vsub.f32 %v1939, %v2978
  %2980 = vmatpush1.msra.mxu0 %v2979
  %2981 = vmatprep.subr.mxu0 0.0
  %v2982 = vand.u32 %v1940, 4294901760
  %v2983 = vsub.f32 %v1940, %v2982
  %2984 = vmatpush1.msra.mxu0 %v2983
  %2985 = vmatprep.subr.mxu0 0.0
  %v2986 = vand.u32 %v1941, 4294901760
  %v2987 = vsub.f32 %v1941, %v2986
  %2988 = vmatpush1.msra.mxu0 %v2987
  %2989 = vmatprep.subr.mxu0 0.0
  %v2990 = vand.u32 %v1942, 4294901760
  %v2991 = vsub.f32 %v1942, %v2990
  %2992 = vmatpush1.msra.mxu0 %v2991
  %2993 = vmatprep.subr.mxu0 0.0
  %v2994 = vand.u32 %v1943, 4294901760
  %v2995 = vsub.f32 %v1943, %v2994
  %2996 = vmatpush1.msra.mxu0 %v2995
  %2997 = vmatprep.subr.mxu0 0.0
  %v2998 = vand.u32 %v1944, 4294901760
  %v2999 = vsub.f32 %v1944, %v2998
  %3000 = vmatpush1.msra.mxu0 %v2999
  %3001 = vmatprep.subr.mxu0 0.0
  %v3002 = vand.u32 %v1945, 4294901760
  %v3003 = vsub.f32 %v1945, %v3002
  %3004 = vmatpush1.msra.mxu0 %v3003
  %3005 = vmatprep.subr.mxu0 0.0
  %v3006 = vand.u32 %v1946, 4294901760
  %v3007 = vsub.f32 %v1946, %v3006
  %3008 = vmatpush1.msra.mxu0 %v3007
  %3009 = vmatprep.subr.mxu0 0.0
  %v3010 = vand.u32 %v1947, 4294901760
  %v3011 = vsub.f32 %v1947, %v3010
  %3012 = vmatpush1.msra.mxu0 %v3011
  %3013 = vmatprep.subr.mxu0 0.0
  %v3014 = vand.u32 %v1948, 4294901760
  %v3015 = vsub.f32 %v1948, %v3014
  %3016 = vmatpush1.msra.mxu0 %v3015
  %3017 = vmatprep.subr.mxu0 0.0
  %v3018 = vand.u32 %v1949, 4294901760
  %v3019 = vsub.f32 %v1949, %v3018
  %3020 = vmatpush1.msra.mxu0 %v3019
  %3021 = vmatprep.subr.mxu0 0.0
  %v3022 = vand.u32 %v1950, 4294901760
  %v3023 = vsub.f32 %v1950, %v3022
  %3024 = vmatpush1.msra.mxu0 %v3023
  %3025 = vmatprep.subr.mxu0 0.0
  %v3026 = vand.u32 %v1951, 4294901760
  %v3027 = vsub.f32 %v1951, %v3026
  %3028 = vmatpush1.msra.mxu0 %v3027
  %3029 = vmatprep.subr.mxu0 0.0
  %3030 = vmatpush1.msra.mxu0 0.0
  %3031 = vmatprep.subr.mxu0 0.0
  %3032 = vmatpush1.msra.mxu0 0.0
  %3033 = vmatprep.subr.mxu0 0.0
  %3034 = vmatpush1.msra.mxu0 0.0
  %3035 = vmatprep.subr.mxu0 0.0
  %3036 = vmatpush1.msra.mxu0 0.0
  %3037 = vmatprep.subr.mxu0 0.0
  %3038 = vmatpush1.msra.mxu0 0.0
  %3039 = vmatprep.subr.mxu0 0.0
  %3040 = vmatpush1.msra.mxu0 0.0
  %3041 = vmatprep.subr.mxu0 0.0
  %3042 = vmatpush1.msra.mxu0 0.0
  %3043 = vmatprep.subr.mxu0 0.0
  %3044 = vmatpush1.msra.mxu0 0.0
  %3045 = vmatprep.subr.mxu0 0.0
  %3046 = vmatpush1.msra.mxu0 0.0
  %3047 = vmatprep.subr.mxu0 0.0
  %3048 = vmatpush1.msra.mxu0 0.0
  %3049 = vmatprep.subr.mxu0 0.0
  %3050 = vmatpush1.msra.mxu0 0.0
  %3051 = vmatprep.subr.mxu0 0.0
  %3052 = vmatpush1.msra.mxu0 0.0
  %3053 = vmatprep.subr.mxu0 0.0
  %3054 = vmatpush1.msra.mxu0 0.0
  %3055 = vmatprep.subr.mxu0 0.0
  %3056 = vmatpush1.msra.mxu0 0.0
  %3057 = vmatprep.subr.mxu0 0.0
  %3058 = vmatpush1.msra.mxu0 0.0
  %3059 = vmatprep.subr.mxu0 0.0
  %3060 = vmatpush1.msra.mxu0 0.0
  %3061 = vmatprep.mubr.f32.mxu0 0.0
  %v3062 = vand.u32 %v2467, 4294901760
  %v3063 = vsub.f32 %v2467, %v3062
  %3064 = vmatmul.mubr.f32.gmra.mrb[0].mxu0 %v3063
  %v3065 = vpop.f32.mrb[0].mxu0
  %v3066 = vadd.f32 %v2872, %v3065
  %v3067 = vpop.f32.mrb[0].mxu0
  %3068 = vmatprep.mubr.f32.mxu0 0.0
  %v3069 = vand.u32 %v2468, 4294901760
  %v3070 = vsub.f32 %v2468, %v3069
  %3071 = vmatmul.mubr.f32.gmra.mrb[0].mxu0 %v3070
  %v3072 = vpop.f32.mrb[0].mxu0
  %v3073 = vadd.f32 %v2878, %v3072
  %v3074 = vpop.f32.mrb[0].mxu0
  %3075 = vmatprep.mubr.f32.mxu0 0.0
  %v3076 = vand.u32 %v2469, 4294901760
  %v3077 = vsub.f32 %v2469, %v3076
  %3078 = vmatmul.mubr.f32.gmra.mrb[0].mxu0 %v3077
  %v3079 = vpop.f32.mrb[0].mxu0
  %v3080 = vadd.f32 %v2884, %v3079
  %v3081 = vpop.f32.mrb[0].mxu0
  %3082 = vmatprep.mubr.f32.mxu0 0.0
  %v3083 = vand.u32 %v2470, 4294901760
  %v3084 = vsub.f32 %v2470, %v3083
  %3085 = vmatmul.mubr.f32.gmra.mrb[0].mxu0 %v3084
  %v3086 = vpop.f32.mrb[0].mxu0
  %v3087 = vadd.f32 %v2890, %v3086
  %v3088 = vpop.f32.mrb[0].mxu0
  %3089 = vmatprep.mubr.f32.mxu0 0.0
  %v3090 = vand.u32 %v2471, 4294901760
  %v3091 = vsub.f32 %v2471, %v3090
  %3092 = vmatmul.mubr.f32.gmra.mrb[0].mxu0 %v3091
  %v3093 = vpop.f32.mrb[0].mxu0
  %v3094 = vadd.f32 %v2896, %v3093
  %v3095 = vpop.f32.mrb[0].mxu0
  %3096 = vmatprep.mubr.f32.mxu0 0.0
  %v3097 = vand.u32 %v2472, 4294901760
  %v3098 = vsub.f32 %v2472, %v3097
  %3099 = vmatmul.mubr.f32.gmra.mrb[0].mxu0 %v3098
  %v3100 = vpop.f32.mrb[0].mxu0
  %v3101 = vadd.f32 %v2902, %v3100
  %v3102 = vpop.f32.mrb[0].mxu0
  %3103 = vmatprep.mubr.f32.mxu0 0.0
  %v3104 = vand.u32 %v2473, 4294901760
  %v3105 = vsub.f32 %v2473, %v3104
  %3106 = vmatmul.mubr.f32.gmra.mrb[0].mxu0 %v3105
  %v3107 = vpop.f32.mrb[0].mxu0
  %v3108 = vadd.f32 %v2908, %v3107
  %v3109 = vpop.f32.mrb[0].mxu0
  %3110 = vmatprep.mubr.f32.mxu0 0.0
  %v3111 = vand.u32 %v2474, 4294901760
  %v3112 = vsub.f32 %v2474, %v3111
  %3113 = vmatmul.mubr.f32.gmra.mrb[0].mxu0 %v3112
  %v3114 = vpop.f32.mrb[0].mxu0
  %v3115 = vadd.f32 %v2914, %v3114
  %v3116 = vpop.f32.mrb[0].mxu0
  %3117 = vmatprep.mubr.f32.mxu0 0.0
  %v3118 = vand.u32 %v2475, 4294901760
  %v3119 = vsub.f32 %v2475, %v3118
  %3120 = vmatmul.mubr.f32.gmra.mrb[0].mxu0 %v3119
  %v3121 = vpop.f32.mrb[0].mxu0
  %v3122 = vadd.f32 %v2920, %v3121
  %v3123 = vpop.f32.mrb[0].mxu0
  %3124 = vmatprep.mubr.f32.mxu0 0.0
  %v3125 = vand.u32 %v2476, 4294901760
  %v3126 = vsub.f32 %v2476, %v3125
  %3127 = vmatmul.mubr.f32.gmra.mrb[0].mxu0 %v3126
  %v3128 = vpop.f32.mrb[0].mxu0
  %v3129 = vadd.f32 %v2926, %v3128
  %v3130 = vpop.f32.mrb[0].mxu0
  %3131 = vmatprep.mubr.f32.mxu0 0.0
  %v3132 = vand.u32 %v2477, 4294901760
  %v3133 = vsub.f32 %v2477, %v3132
  %3134 = vmatmul.mubr.f32.gmra.mrb[0].mxu0 %v3133
  %v3135 = vpop.f32.mrb[0].mxu0
  %v3136 = vadd.f32 %v2932, %v3135
  %v3137 = vpop.f32.mrb[0].mxu0
  %3138 = vmatprep.mubr.f32.mxu0 0.0
  %v3139 = vand.u32 %v2478, 4294901760
  %v3140 = vsub.f32 %v2478, %v3139
  %3141 = vmatmul.mubr.f32.gmra.mrb[0].mxu0 %v3140
  %v3142 = vpop.f32.mrb[0].mxu0
  %v3143 = vadd.f32 %v2938, %v3142
  %v3144 = vpop.f32.mrb[0].mxu0
  %3145 = vmatprep.mubr.f32.mxu0 0.0
  %v3146 = vand.u32 %v2479, 4294901760
  %v3147 = vsub.f32 %v2479, %v3146
  %3148 = vmatmul.mubr.f32.gmra.mrb[0].mxu0 %v3147
  %v3149 = vpop.f32.mrb[0].mxu0
  %v3150 = vadd.f32 %v2944, %v3149
  %v3151 = vpop.f32.mrb[0].mxu0
  %3152 = vmatprep.mubr.f32.mxu0 0.0
  %v3153 = vand.u32 %v2480, 4294901760
  %v3154 = vsub.f32 %v2480, %v3153
  %3155 = vmatmul.mubr.f32.gmra.mrb[0].mxu0 %v3154
  %v3156 = vpop.f32.mrb[0].mxu0
  %v3157 = vadd.f32 %v2950, %v3156
  %v3158 = vpop.f32.mrb[0].mxu0
  %3159 = vmatprep.mubr.f32.mxu0 0.0
  %v3160 = vand.u32 %v2481, 4294901760
  %v3161 = vsub.f32 %v2481, %v3160
  %3162 = vmatmul.mubr.f32.gmra.mrb[0].mxu0 %v3161
  %v3163 = vpop.f32.mrb[0].mxu0
  %v3164 = vadd.f32 %v2956, %v3163
  %v3165 = vpop.f32.mrb[0].mxu0
  %3166 = vmatprep.mubr.f32.mxu0 0.0
  %v3167 = vand.u32 %v2482, 4294901760
  %v3168 = vsub.f32 %v2482, %v3167
  %3169 = vmatmul.mubr.f32.gmra.mrb[0].mxu0 %v3168
  %v3170 = vpop.f32.mrb[0].mxu0
  %v3171 = vadd.f32 %v2962, %v3170
  %v3172 = vpop.f32.mrb[0].mxu0
  %3173 = vdwg.mxu0
  %3174 = vmatprep.subr.mxu0 0.0
  %v3175 = vand.u32 %v1936, 4294901760
  %3176 = vmatpush1.msra.mxu0 %v3175
  %3177 = vmatprep.subr.mxu0 0.0
  %v3178 = vand.u32 %v1937, 4294901760
  %3179 = vmatpush1.msra.mxu0 %v3178
  %3180 = vmatprep.subr.mxu0 0.0
  %v3181 = vand.u32 %v1938, 4294901760
  %3182 = vmatpush1.msra.mxu0 %v3181
  %3183 = vmatprep.subr.mxu0 0.0
  %v3184 = vand.u32 %v1939, 4294901760
  %3185 = vmatpush1.msra.mxu0 %v3184
  %3186 = vmatprep.subr.mxu0 0.0
  %v3187 = vand.u32 %v1940, 4294901760
  %3188 = vmatpush1.msra.mxu0 %v3187
  %3189 = vmatprep.subr.mxu0 0.0
  %v3190 = vand.u32 %v1941, 4294901760
  %3191 = vmatpush1.msra.mxu0 %v3190
  %3192 = vmatprep.subr.mxu0 0.0
  %v3193 = vand.u32 %v1942, 4294901760
  %3194 = vmatpush1.msra.mxu0 %v3193
  %3195 = vmatprep.subr.mxu0 0.0
  %v3196 = vand.u32 %v1943, 4294901760
  %3197 = vmatpush1.msra.mxu0 %v3196
  %3198 = vmatprep.subr.mxu0 0.0
  %v3199 = vand.u32 %v1944, 4294901760
  %3200 = vmatpush1.msra.mxu0 %v3199
  %3201 = vmatprep.subr.mxu0 0.0
  %v3202 = vand.u32 %v1945, 4294901760
  %3203 = vmatpush1.msra.mxu0 %v3202
  %3204 = vmatprep.subr.mxu0 0.0
  %v3205 = vand.u32 %v1946, 4294901760
  %3206 = vmatpush1.msra.mxu0 %v3205
  %3207 = vmatprep.subr.mxu0 0.0
  %v3208 = vand.u32 %v1947, 4294901760
  %3209 = vmatpush1.msra.mxu0 %v3208
  %3210 = vmatprep.subr.mxu0 0.0
  %v3211 = vand.u32 %v1948, 4294901760
  %3212 = vmatpush1.msra.mxu0 %v3211
  %3213 = vmatprep.subr.mxu0 0.0
  %v3214 = vand.u32 %v1949, 4294901760
  %3215 = vmatpush1.msra.mxu0 %v3214
  %3216 = vmatprep.subr.mxu0 0.0
  %v3217 = vand.u32 %v1950, 4294901760
  %3218 = vmatpush1.msra.mxu0 %v3217
  %3219 = vmatprep.subr.mxu0 0.0
  %v3220 = vand.u32 %v1951, 4294901760
  %3221 = vmatpush1.msra.mxu0 %v3220
  %3222 = vmatprep.subr.mxu0 0.0
  %3223 = vmatpush1.msra.mxu0 0.0
  %3224 = vmatprep.subr.mxu0 0.0
  %3225 = vmatpush1.msra.mxu0 0.0
  %3226 = vmatprep.subr.mxu0 0.0
  %3227 = vmatpush1.msra.mxu0 0.0
  %3228 = vmatprep.subr.mxu0 0.0
  %3229 = vmatpush1.msra.mxu0 0.0
  %3230 = vmatprep.subr.mxu0 0.0
  %3231 = vmatpush1.msra.mxu0 0.0
  %3232 = vmatprep.subr.mxu0 0.0
  %3233 = vmatpush1.msra.mxu0 0.0
  %3234 = vmatprep.subr.mxu0 0.0
  %3235 = vmatpush1.msra.mxu0 0.0
  %3236 = vmatprep.subr.mxu0 0.0
  %3237 = vmatpush1.msra.mxu0 0.0
  %3238 = vmatprep.subr.mxu0 0.0
  %3239 = vmatpush1.msra.mxu0 0.0
  %3240 = vmatprep.subr.mxu0 0.0
  %3241 = vmatpush1.msra.mxu0 0.0
  %3242 = vmatprep.subr.mxu0 0.0
  %3243 = vmatpush1.msra.mxu0 0.0
  %3244 = vmatprep.subr.mxu0 0.0
  %3245 = vmatpush1.msra.mxu0 0.0
  %3246 = vmatprep.subr.mxu0 0.0
  %3247 = vmatpush1.msra.mxu0 0.0
  %3248 = vmatprep.subr.mxu0 0.0
  %3249 = vmatpush1.msra.mxu0 0.0
  %3250 = vmatprep.subr.mxu0 0.0
  %3251 = vmatpush1.msra.mxu0 0.0
  %3252 = vmatprep.subr.mxu0 0.0
  %3253 = vmatpush1.msra.mxu0 0.0
  %3254 = vmatprep.mubr.f32.mxu0 0.0
  %v3255 = vand.u32 %v2467, 4294901760
  %v3256 = vsub.f32 %v2467, %v3255
  %v3257 = vand.u32 %v3256, 4294901760
  %3258 = vmatmul.mubr.f32.gmra.mrb[0].mxu0 %v3257
  %v3259 = vpop.f32.mrb[0].mxu0
  %v3260 = vadd.f32 %v3066, %v3259
  %v3261 = vpop.f32.mrb[0].mxu0
  %3262 = vmatprep.mubr.f32.mxu0 0.0
  %v3263 = vand.u32 %v2468, 4294901760
  %v3264 = vsub.f32 %v2468, %v3263
  %v3265 = vand.u32 %v3264, 4294901760
  %3266 = vmatmul.mubr.f32.gmra.mrb[0].mxu0 %v3265
  %v3267 = vpop.f32.mrb[0].mxu0
  %v3268 = vadd.f32 %v3073, %v3267
  %v3269 = vpop.f32.mrb[0].mxu0
  %3270 = vmatprep.mubr.f32.mxu0 0.0
  %v3271 = vand.u32 %v2469, 4294901760
  %v3272 = vsub.f32 %v2469, %v3271
  %v3273 = vand.u32 %v3272, 4294901760
  %3274 = vmatmul.mubr.f32.gmra.mrb[0].mxu0 %v3273
  %v3275 = vpop.f32.mrb[0].mxu0
  %v3276 = vadd.f32 %v3080, %v3275
  %v3277 = vpop.f32.mrb[0].mxu0
  %3278 = vmatprep.mubr.f32.mxu0 0.0
  %v3279 = vand.u32 %v2470, 4294901760
  %v3280 = vsub.f32 %v2470, %v3279
  %v3281 = vand.u32 %v3280, 4294901760
  %3282 = vmatmul.mubr.f32.gmra.mrb[0].mxu0 %v3281
  %v3283 = vpop.f32.mrb[0].mxu0
  %v3284 = vadd.f32 %v3087, %v3283
  %v3285 = vpop.f32.mrb[0].mxu0
  %3286 = vmatprep.mubr.f32.mxu0 0.0
  %v3287 = vand.u32 %v2471, 4294901760
  %v3288 = vsub.f32 %v2471, %v3287
  %v3289 = vand.u32 %v3288, 4294901760
  %3290 = vmatmul.mubr.f32.gmra.mrb[0].mxu0 %v3289
  %v3291 = vpop.f32.mrb[0].mxu0
  %v3292 = vadd.f32 %v3094, %v3291
  %v3293 = vpop.f32.mrb[0].mxu0
  %3294 = vmatprep.mubr.f32.mxu0 0.0
  %v3295 = vand.u32 %v2472, 4294901760
  %v3296 = vsub.f32 %v2472, %v3295
  %v3297 = vand.u32 %v3296, 4294901760
  %3298 = vmatmul.mubr.f32.gmra.mrb[0].mxu0 %v3297
  %v3299 = vpop.f32.mrb[0].mxu0
  %v3300 = vadd.f32 %v3101, %v3299
  %v3301 = vpop.f32.mrb[0].mxu0
  %3302 = vmatprep.mubr.f32.mxu0 0.0
  %v3303 = vand.u32 %v2473, 4294901760
  %v3304 = vsub.f32 %v2473, %v3303
  %v3305 = vand.u32 %v3304, 4294901760
  %3306 = vmatmul.mubr.f32.gmra.mrb[0].mxu0 %v3305
  %v3307 = vpop.f32.mrb[0].mxu0
  %v3308 = vadd.f32 %v3108, %v3307
  %v3309 = vpop.f32.mrb[0].mxu0
  %3310 = vmatprep.mubr.f32.mxu0 0.0
  %v3311 = vand.u32 %v2474, 4294901760
  %v3312 = vsub.f32 %v2474, %v3311
  %v3313 = vand.u32 %v3312, 4294901760
  %3314 = vmatmul.mubr.f32.gmra.mrb[0].mxu0 %v3313
  %v3315 = vpop.f32.mrb[0].mxu0
  %v3316 = vadd.f32 %v3115, %v3315
  %v3317 = vpop.f32.mrb[0].mxu0
  %3318 = vmatprep.mubr.f32.mxu0 0.0
  %v3319 = vand.u32 %v2475, 4294901760
  %v3320 = vsub.f32 %v2475, %v3319
  %v3321 = vand.u32 %v3320, 4294901760
  %3322 = vmatmul.mubr.f32.gmra.mrb[0].mxu0 %v3321
  %v3323 = vpop.f32.mrb[0].mxu0
  %v3324 = vadd.f32 %v3122, %v3323
  %v3325 = vpop.f32.mrb[0].mxu0
  %3326 = vmatprep.mubr.f32.mxu0 0.0
  %v3327 = vand.u32 %v2476, 4294901760
  %v3328 = vsub.f32 %v2476, %v3327
  %v3329 = vand.u32 %v3328, 4294901760
  %3330 = vmatmul.mubr.f32.gmra.mrb[0].mxu0 %v3329
  %v3331 = vpop.f32.mrb[0].mxu0
  %v3332 = vadd.f32 %v3129, %v3331
  %v3333 = vpop.f32.mrb[0].mxu0
  %3334 = vmatprep.mubr.f32.mxu0 0.0
  %v3335 = vand.u32 %v2477, 4294901760
  %v3336 = vsub.f32 %v2477, %v3335
  %v3337 = vand.u32 %v3336, 4294901760
  %3338 = vmatmul.mubr.f32.gmra.mrb[0].mxu0 %v3337
  %v3339 = vpop.f32.mrb[0].mxu0
  %v3340 = vadd.f32 %v3136, %v3339
  %v3341 = vpop.f32.mrb[0].mxu0
  %3342 = vmatprep.mubr.f32.mxu0 0.0
  %v3343 = vand.u32 %v2478, 4294901760
  %v3344 = vsub.f32 %v2478, %v3343
  %v3345 = vand.u32 %v3344, 4294901760
  %3346 = vmatmul.mubr.f32.gmra.mrb[0].mxu0 %v3345
  %v3347 = vpop.f32.mrb[0].mxu0
  %v3348 = vadd.f32 %v3143, %v3347
  %v3349 = vpop.f32.mrb[0].mxu0
  %3350 = vmatprep.mubr.f32.mxu0 0.0
  %v3351 = vand.u32 %v2479, 4294901760
  %v3352 = vsub.f32 %v2479, %v3351
  %v3353 = vand.u32 %v3352, 4294901760
  %3354 = vmatmul.mubr.f32.gmra.mrb[0].mxu0 %v3353
  %v3355 = vpop.f32.mrb[0].mxu0
  %v3356 = vadd.f32 %v3150, %v3355
  %v3357 = vpop.f32.mrb[0].mxu0
  %3358 = vmatprep.mubr.f32.mxu0 0.0
  %v3359 = vand.u32 %v2480, 4294901760
  %v3360 = vsub.f32 %v2480, %v3359
  %v3361 = vand.u32 %v3360, 4294901760
  %3362 = vmatmul.mubr.f32.gmra.mrb[0].mxu0 %v3361
  %v3363 = vpop.f32.mrb[0].mxu0
  %v3364 = vadd.f32 %v3157, %v3363
  %v3365 = vpop.f32.mrb[0].mxu0
  %3366 = vmatprep.mubr.f32.mxu0 0.0
  %v3367 = vand.u32 %v2481, 4294901760
  %v3368 = vsub.f32 %v2481, %v3367
  %v3369 = vand.u32 %v3368, 4294901760
  %3370 = vmatmul.mubr.f32.gmra.mrb[0].mxu0 %v3369
  %v3371 = vpop.f32.mrb[0].mxu0
  %v3372 = vadd.f32 %v3164, %v3371
  %v3373 = vpop.f32.mrb[0].mxu0
  %3374 = vmatprep.mubr.f32.mxu0 0.0
  %v3375 = vand.u32 %v2482, 4294901760
  %v3376 = vsub.f32 %v2482, %v3375
  %v3377 = vand.u32 %v3376, 4294901760
  %3378 = vmatmul.mubr.f32.gmra.mrb[0].mxu0 %v3377
  %v3379 = vpop.f32.mrb[0].mxu0
  %v3380 = vadd.f32 %v3171, %v3379
  %v3381 = vpop.f32.mrb[0].mxu0
  %3382 = vdwg.mxu0
  %3383 = vmatprep.subr.mxu0 0.0
  %v3384 = vand.u32 %v1936, 4294901760
  %v3385 = vsub.f32 %v1936, %v3384
  %v3386 = vand.u32 %v3385, 4294901760
  %3387 = vmatpush1.msra.mxu0 %v3386
  %3388 = vmatprep.subr.mxu0 0.0
  %v3389 = vand.u32 %v1937, 4294901760
  %v3390 = vsub.f32 %v1937, %v3389
  %v3391 = vand.u32 %v3390, 4294901760
  %3392 = vmatpush1.msra.mxu0 %v3391
  %3393 = vmatprep.subr.mxu0 0.0
  %v3394 = vand.u32 %v1938, 4294901760
  %v3395 = vsub.f32 %v1938, %v3394
  %v3396 = vand.u32 %v3395, 4294901760
  %3397 = vmatpush1.msra.mxu0 %v3396
  %3398 = vmatprep.subr.mxu0 0.0
  %v3399 = vand.u32 %v1939, 4294901760
  %v3400 = vsub.f32 %v1939, %v3399
  %v3401 = vand.u32 %v3400, 4294901760
  %3402 = vmatpush1.msra.mxu0 %v3401
  %3403 = vmatprep.subr.mxu0 0.0
  %v3404 = vand.u32 %v1940, 4294901760
  %v3405 = vsub.f32 %v1940, %v3404
  %v3406 = vand.u32 %v3405, 4294901760
  %3407 = vmatpush1.msra.mxu0 %v3406
  %3408 = vmatprep.subr.mxu0 0.0
  %v3409 = vand.u32 %v1941, 4294901760
  %v3410 = vsub.f32 %v1941, %v3409
  %v3411 = vand.u32 %v3410, 4294901760
  %3412 = vmatpush1.msra.mxu0 %v3411
  %3413 = vmatprep.subr.mxu0 0.0
  %v3414 = vand.u32 %v1942, 4294901760
  %v3415 = vsub.f32 %v1942, %v3414
  %v3416 = vand.u32 %v3415, 4294901760
  %3417 = vmatpush1.msra.mxu0 %v3416
  %3418 = vmatprep.subr.mxu0 0.0
  %v3419 = vand.u32 %v1943, 4294901760
  %v3420 = vsub.f32 %v1943, %v3419
  %v3421 = vand.u32 %v3420, 4294901760
  %3422 = vmatpush1.msra.mxu0 %v3421
  %3423 = vmatprep.subr.mxu0 0.0
  %v3424 = vand.u32 %v1944, 4294901760
  %v3425 = vsub.f32 %v1944, %v3424
  %v3426 = vand.u32 %v3425, 4294901760
  %3427 = vmatpush1.msra.mxu0 %v3426
  %3428 = vmatprep.subr.mxu0 0.0
  %v3429 = vand.u32 %v1945, 4294901760
  %v3430 = vsub.f32 %v1945, %v3429
  %v3431 = vand.u32 %v3430, 4294901760
  %3432 = vmatpush1.msra.mxu0 %v3431
  %3433 = vmatprep.subr.mxu0 0.0
  %v3434 = vand.u32 %v1946, 4294901760
  %v3435 = vsub.f32 %v1946, %v3434
  %v3436 = vand.u32 %v3435, 4294901760
  %3437 = vmatpush1.msra.mxu0 %v3436
  %3438 = vmatprep.subr.mxu0 0.0
  %v3439 = vand.u32 %v1947, 4294901760
  %v3440 = vsub.f32 %v1947, %v3439
  %v3441 = vand.u32 %v3440, 4294901760
  %3442 = vmatpush1.msra.mxu0 %v3441
  %3443 = vmatprep.subr.mxu0 0.0
  %v3444 = vand.u32 %v1948, 4294901760
  %v3445 = vsub.f32 %v1948, %v3444
  %v3446 = vand.u32 %v3445, 4294901760
  %3447 = vmatpush1.msra.mxu0 %v3446
  %3448 = vmatprep.subr.mxu0 0.0
  %v3449 = vand.u32 %v1949, 4294901760
  %v3450 = vsub.f32 %v1949, %v3449
  %v3451 = vand.u32 %v3450, 4294901760
  %3452 = vmatpush1.msra.mxu0 %v3451
  %3453 = vmatprep.subr.mxu0 0.0
  %v3454 = vand.u32 %v1950, 4294901760
  %v3455 = vsub.f32 %v1950, %v3454
  %v3456 = vand.u32 %v3455, 4294901760
  %3457 = vmatpush1.msra.mxu0 %v3456
  %3458 = vmatprep.subr.mxu0 0.0
  %v3459 = vand.u32 %v1951, 4294901760
  %v3460 = vsub.f32 %v1951, %v3459
  %v3461 = vand.u32 %v3460, 4294901760
  %3462 = vmatpush1.msra.mxu0 %v3461
  %3463 = vmatprep.subr.mxu0 0.0
  %3464 = vmatpush1.msra.mxu0 0.0
  %3465 = vmatprep.subr.mxu0 0.0
  %3466 = vmatpush1.msra.mxu0 0.0
  %3467 = vmatprep.subr.mxu0 0.0
  %3468 = vmatpush1.msra.mxu0 0.0
  %3469 = vmatprep.subr.mxu0 0.0
  %3470 = vmatpush1.msra.mxu0 0.0
  %3471 = vmatprep.subr.mxu0 0.0
  %3472 = vmatpush1.msra.mxu0 0.0
  %3473 = vmatprep.subr.mxu0 0.0
  %3474 = vmatpush1.msra.mxu0 0.0
  %3475 = vmatprep.subr.mxu0 0.0
  %3476 = vmatpush1.msra.mxu0 0.0
  %3477 = vmatprep.subr.mxu0 0.0
  %3478 = vmatpush1.msra.mxu0 0.0
  %3479 = vmatprep.subr.mxu0 0.0
  %3480 = vmatpush1.msra.mxu0 0.0
  %3481 = vmatprep.subr.mxu0 0.0
  %3482 = vmatpush1.msra.mxu0 0.0
  %3483 = vmatprep.subr.mxu0 0.0
  %3484 = vmatpush1.msra.mxu0 0.0
  %3485 = vmatprep.subr.mxu0 0.0
  %3486 = vmatpush1.msra.mxu0 0.0
  %3487 = vmatprep.subr.mxu0 0.0
  %3488 = vmatpush1.msra.mxu0 0.0
  %3489 = vmatprep.subr.mxu0 0.0
  %3490 = vmatpush1.msra.mxu0 0.0
  %3491 = vmatprep.subr.mxu0 0.0
  %3492 = vmatpush1.msra.mxu0 0.0
  %3493 = vmatprep.subr.mxu0 0.0
  %3494 = vmatpush1.msra.mxu0 0.0
  %3495 = vmatprep.mubr.f32.mxu0 0.0
  %v3496 = vand.u32 %v2467, 4294901760
  %3497 = vmatmul.mubr.f32.gmra.mrb[0].mxu0 %v3496
  %v3498 = vpop.f32.mrb[0].mxu0
  %v3499 = vadd.f32 %v3260, %v3498
  %v3500 = vpop.f32.mrb[0].mxu0
  %3501 = vmatprep.mubr.f32.mxu0 0.0
  %v3502 = vand.u32 %v2468, 4294901760
  %3503 = vmatmul.mubr.f32.gmra.mrb[0].mxu0 %v3502
  %v3504 = vpop.f32.mrb[0].mxu0
  %v3505 = vadd.f32 %v3268, %v3504
  %v3506 = vpop.f32.mrb[0].mxu0
  %3507 = vmatprep.mubr.f32.mxu0 0.0
  %v3508 = vand.u32 %v2469, 4294901760
  %3509 = vmatmul.mubr.f32.gmra.mrb[0].mxu0 %v3508
  %v3510 = vpop.f32.mrb[0].mxu0
  %v3511 = vadd.f32 %v3276, %v3510
  %v3512 = vpop.f32.mrb[0].mxu0
  %3513 = vmatprep.mubr.f32.mxu0 0.0
  %v3514 = vand.u32 %v2470, 4294901760
  %3515 = vmatmul.mubr.f32.gmra.mrb[0].mxu0 %v3514
  %v3516 = vpop.f32.mrb[0].mxu0
  %v3517 = vadd.f32 %v3284, %v3516
  %v3518 = vpop.f32.mrb[0].mxu0
  %3519 = vmatprep.mubr.f32.mxu0 0.0
  %v3520 = vand.u32 %v2471, 4294901760
  %3521 = vmatmul.mubr.f32.gmra.mrb[0].mxu0 %v3520
  %v3522 = vpop.f32.mrb[0].mxu0
  %v3523 = vadd.f32 %v3292, %v3522
  %v3524 = vpop.f32.mrb[0].mxu0
  %3525 = vmatprep.mubr.f32.mxu0 0.0
  %v3526 = vand.u32 %v2472, 4294901760
  %3527 = vmatmul.mubr.f32.gmra.mrb[0].mxu0 %v3526
  %v3528 = vpop.f32.mrb[0].mxu0
  %v3529 = vadd.f32 %v3300, %v3528
  %v3530 = vpop.f32.mrb[0].mxu0
  %3531 = vmatprep.mubr.f32.mxu0 0.0
  %v3532 = vand.u32 %v2473, 4294901760
  %3533 = vmatmul.mubr.f32.gmra.mrb[0].mxu0 %v3532
  %v3534 = vpop.f32.mrb[0].mxu0
  %v3535 = vadd.f32 %v3308, %v3534
  %v3536 = vpop.f32.mrb[0].mxu0
  %3537 = vmatprep.mubr.f32.mxu0 0.0
  %v3538 = vand.u32 %v2474, 4294901760
  %3539 = vmatmul.mubr.f32.gmra.mrb[0].mxu0 %v3538
  %v3540 = vpop.f32.mrb[0].mxu0
  %v3541 = vadd.f32 %v3316, %v3540
  %v3542 = vpop.f32.mrb[0].mxu0
  %3543 = vmatprep.mubr.f32.mxu0 0.0
  %v3544 = vand.u32 %v2475, 4294901760
  %3545 = vmatmul.mubr.f32.gmra.mrb[0].mxu0 %v3544
  %v3546 = vpop.f32.mrb[0].mxu0
  %v3547 = vadd.f32 %v3324, %v3546
  %v3548 = vpop.f32.mrb[0].mxu0
  %3549 = vmatprep.mubr.f32.mxu0 0.0
  %v3550 = vand.u32 %v2476, 4294901760
  %3551 = vmatmul.mubr.f32.gmra.mrb[0].mxu0 %v3550
  %v3552 = vpop.f32.mrb[0].mxu0
  %v3553 = vadd.f32 %v3332, %v3552
  %v3554 = vpop.f32.mrb[0].mxu0
  %3555 = vmatprep.mubr.f32.mxu0 0.0
  %v3556 = vand.u32 %v2477, 4294901760
  %3557 = vmatmul.mubr.f32.gmra.mrb[0].mxu0 %v3556
  %v3558 = vpop.f32.mrb[0].mxu0
  %v3559 = vadd.f32 %v3340, %v3558
  %v3560 = vpop.f32.mrb[0].mxu0
  %3561 = vmatprep.mubr.f32.mxu0 0.0
  %v3562 = vand.u32 %v2478, 4294901760
  %3563 = vmatmul.mubr.f32.gmra.mrb[0].mxu0 %v3562
  %v3564 = vpop.f32.mrb[0].mxu0
  %v3565 = vadd.f32 %v3348, %v3564
  %v3566 = vpop.f32.mrb[0].mxu0
  %3567 = vmatprep.mubr.f32.mxu0 0.0
  %v3568 = vand.u32 %v2479, 4294901760
  %3569 = vmatmul.mubr.f32.gmra.mrb[0].mxu0 %v3568
  %v3570 = vpop.f32.mrb[0].mxu0
  %v3571 = vadd.f32 %v3356, %v3570
  %v3572 = vpop.f32.mrb[0].mxu0
  %3573 = vmatprep.mubr.f32.mxu0 0.0
  %v3574 = vand.u32 %v2480, 4294901760
  %3575 = vmatmul.mubr.f32.gmra.mrb[0].mxu0 %v3574
  %v3576 = vpop.f32.mrb[0].mxu0
  %v3577 = vadd.f32 %v3364, %v3576
  %v3578 = vpop.f32.mrb[0].mxu0
  %3579 = vmatprep.mubr.f32.mxu0 0.0
  %v3580 = vand.u32 %v2481, 4294901760
  %3581 = vmatmul.mubr.f32.gmra.mrb[0].mxu0 %v3580
  %v3582 = vpop.f32.mrb[0].mxu0
  %v3583 = vadd.f32 %v3372, %v3582
  %v3584 = vpop.f32.mrb[0].mxu0
  %3585 = vmatprep.mubr.f32.mxu0 0.0
  %v3586 = vand.u32 %v2482, 4294901760
  %3587 = vmatmul.mubr.f32.gmra.mrb[0].mxu0 %v3586
  %v3588 = vpop.f32.mrb[0].mxu0
  %v3589 = vadd.f32 %v3380, %v3588
  %v3590 = vpop.f32.mrb[0].mxu0
  %3591 = vdwg.mxu0
  %3592 = vmatprep.subr.mxu0 0.0
  %v3593 = vand.u32 %v1936, 4294901760
  %3594 = vmatpush1.msra.mxu0 %v3593
  %3595 = vmatprep.subr.mxu0 0.0
  %v3596 = vand.u32 %v1937, 4294901760
  %3597 = vmatpush1.msra.mxu0 %v3596
  %3598 = vmatprep.subr.mxu0 0.0
  %v3599 = vand.u32 %v1938, 4294901760
  %3600 = vmatpush1.msra.mxu0 %v3599
  %3601 = vmatprep.subr.mxu0 0.0
  %v3602 = vand.u32 %v1939, 4294901760
  %3603 = vmatpush1.msra.mxu0 %v3602
  %3604 = vmatprep.subr.mxu0 0.0
  %v3605 = vand.u32 %v1940, 4294901760
  %3606 = vmatpush1.msra.mxu0 %v3605
  %3607 = vmatprep.subr.mxu0 0.0
  %v3608 = vand.u32 %v1941, 4294901760
  %3609 = vmatpush1.msra.mxu0 %v3608
  %3610 = vmatprep.subr.mxu0 0.0
  %v3611 = vand.u32 %v1942, 4294901760
  %3612 = vmatpush1.msra.mxu0 %v3611
  %3613 = vmatprep.subr.mxu0 0.0
  %v3614 = vand.u32 %v1943, 4294901760
  %3615 = vmatpush1.msra.mxu0 %v3614
  %3616 = vmatprep.subr.mxu0 0.0
  %v3617 = vand.u32 %v1944, 4294901760
  %3618 = vmatpush1.msra.mxu0 %v3617
  %3619 = vmatprep.subr.mxu0 0.0
  %v3620 = vand.u32 %v1945, 4294901760
  %3621 = vmatpush1.msra.mxu0 %v3620
  %3622 = vmatprep.subr.mxu0 0.0
  %v3623 = vand.u32 %v1946, 4294901760
  %3624 = vmatpush1.msra.mxu0 %v3623
  %3625 = vmatprep.subr.mxu0 0.0
  %v3626 = vand.u32 %v1947, 4294901760
  %3627 = vmatpush1.msra.mxu0 %v3626
  %3628 = vmatprep.subr.mxu0 0.0
  %v3629 = vand.u32 %v1948, 4294901760
  %3630 = vmatpush1.msra.mxu0 %v3629
  %3631 = vmatprep.subr.mxu0 0.0
  %v3632 = vand.u32 %v1949, 4294901760
  %3633 = vmatpush1.msra.mxu0 %v3632
  %3634 = vmatprep.subr.mxu0 0.0
  %v3635 = vand.u32 %v1950, 4294901760
  %3636 = vmatpush1.msra.mxu0 %v3635
  %3637 = vmatprep.subr.mxu0 0.0
  %v3638 = vand.u32 %v1951, 4294901760
  %3639 = vmatpush1.msra.mxu0 %v3638
  %3640 = vmatprep.subr.mxu0 0.0
  %3641 = vmatpush1.msra.mxu0 0.0
  %3642 = vmatprep.subr.mxu0 0.0
  %3643 = vmatpush1.msra.mxu0 0.0
  %3644 = vmatprep.subr.mxu0 0.0
  %3645 = vmatpush1.msra.mxu0 0.0
  %3646 = vmatprep.subr.mxu0 0.0
  %3647 = vmatpush1.msra.mxu0 0.0
  %3648 = vmatprep.subr.mxu0 0.0
  %3649 = vmatpush1.msra.mxu0 0.0
  %3650 = vmatprep.subr.mxu0 0.0
  %3651 = vmatpush1.msra.mxu0 0.0
  %3652 = vmatprep.subr.mxu0 0.0
  %3653 = vmatpush1.msra.mxu0 0.0
  %3654 = vmatprep.subr.mxu0 0.0
  %3655 = vmatpush1.msra.mxu0 0.0
  %3656 = vmatprep.subr.mxu0 0.0
  %3657 = vmatpush1.msra.mxu0 0.0
  %3658 = vmatprep.subr.mxu0 0.0
  %3659 = vmatpush1.msra.mxu0 0.0
  %3660 = vmatprep.subr.mxu0 0.0
  %3661 = vmatpush1.msra.mxu0 0.0
  %3662 = vmatprep.subr.mxu0 0.0
  %3663 = vmatpush1.msra.mxu0 0.0
  %3664 = vmatprep.subr.mxu0 0.0
  %3665 = vmatpush1.msra.mxu0 0.0
  %3666 = vmatprep.subr.mxu0 0.0
  %3667 = vmatpush1.msra.mxu0 0.0
  %3668 = vmatprep.subr.mxu0 0.0
  %3669 = vmatpush1.msra.mxu0 0.0
  %3670 = vmatprep.subr.mxu0 0.0
  %3671 = vmatpush1.msra.mxu0 0.0
  %3672 = vmatprep.mubr.f32.mxu0 0.0
  %v3673 = vand.u32 %v2467, 4294901760
  %3674 = vmatmul.mubr.f32.gmra.mrb[0].mxu0 %v3673
  %v3675 = vpop.f32.mrb[0].mxu0
  %v3676 = vadd.f32 %v3499, %v3675
  %v3677 = vpop.f32.mrb[0].mxu0
  %3678 = vmatprep.mubr.f32.mxu0 0.0
  %v3679 = vand.u32 %v2468, 4294901760
  %3680 = vmatmul.mubr.f32.gmra.mrb[0].mxu0 %v3679
  %v3681 = vpop.f32.mrb[0].mxu0
  %v3682 = vadd.f32 %v3505, %v3681
  %v3683 = vpop.f32.mrb[0].mxu0
  %3684 = vmatprep.mubr.f32.mxu0 0.0
  %v3685 = vand.u32 %v2469, 4294901760
  %3686 = vmatmul.mubr.f32.gmra.mrb[0].mxu0 %v3685
  %v3687 = vpop.f32.mrb[0].mxu0
  %v3688 = vadd.f32 %v3511, %v3687
  %v3689 = vpop.f32.mrb[0].mxu0
  %3690 = vmatprep.mubr.f32.mxu0 0.0
  %v3691 = vand.u32 %v2470, 4294901760
  %3692 = vmatmul.mubr.f32.gmra.mrb[0].mxu0 %v3691
  %v3693 = vpop.f32.mrb[0].mxu0
  %v3694 = vadd.f32 %v3517, %v3693
  %v3695 = vpop.f32.mrb[0].mxu0
  %3696 = vmatprep.mubr.f32.mxu0 0.0
  %v3697 = vand.u32 %v2471, 4294901760
  %3698 = vmatmul.mubr.f32.gmra.mrb[0].mxu0 %v3697
  %v3699 = vpop.f32.mrb[0].mxu0
  %v3700 = vadd.f32 %v3523, %v3699
  %v3701 = vpop.f32.mrb[0].mxu0
  %3702 = vmatprep.mubr.f32.mxu0 0.0
  %v3703 = vand.u32 %v2472, 4294901760
  %3704 = vmatmul.mubr.f32.gmra.mrb[0].mxu0 %v3703
  %v3705 = vpop.f32.mrb[0].mxu0
  %v3706 = vadd.f32 %v3529, %v3705
  %v3707 = vpop.f32.mrb[0].mxu0
  %3708 = vmatprep.mubr.f32.mxu0 0.0
  %v3709 = vand.u32 %v2473, 4294901760
  %3710 = vmatmul.mubr.f32.gmra.mrb[0].mxu0 %v3709
  %v3711 = vpop.f32.mrb[0].mxu0
  %v3712 = vadd.f32 %v3535, %v3711
  %v3713 = vpop.f32.mrb[0].mxu0
  %3714 = vmatprep.mubr.f32.mxu0 0.0
  %v3715 = vand.u32 %v2474, 4294901760
  %3716 = vmatmul.mubr.f32.gmra.mrb[0].mxu0 %v3715
  %v3717 = vpop.f32.mrb[0].mxu0
  %v3718 = vadd.f32 %v3541, %v3717
  %v3719 = vpop.f32.mrb[0].mxu0
  %3720 = vmatprep.mubr.f32.mxu0 0.0
  %v3721 = vand.u32 %v2475, 4294901760
  %3722 = vmatmul.mubr.f32.gmra.mrb[0].mxu0 %v3721
  %v3723 = vpop.f32.mrb[0].mxu0
  %v3724 = vadd.f32 %v3547, %v3723
  %v3725 = vpop.f32.mrb[0].mxu0
  %3726 = vmatprep.mubr.f32.mxu0 0.0
  %v3727 = vand.u32 %v2476, 4294901760
  %3728 = vmatmul.mubr.f32.gmra.mrb[0].mxu0 %v3727
  %v3729 = vpop.f32.mrb[0].mxu0
  %v3730 = vadd.f32 %v3553, %v3729
  %v3731 = vpop.f32.mrb[0].mxu0
  %3732 = vmatprep.mubr.f32.mxu0 0.0
  %v3733 = vand.u32 %v2477, 4294901760
  %3734 = vmatmul.mubr.f32.gmra.mrb[0].mxu0 %v3733
  %v3735 = vpop.f32.mrb[0].mxu0
  %v3736 = vadd.f32 %v3559, %v3735
  %v3737 = vpop.f32.mrb[0].mxu0
  %3738 = vmatprep.mubr.f32.mxu0 0.0
  %v3739 = vand.u32 %v2478, 4294901760
  %3740 = vmatmul.mubr.f32.gmra.mrb[0].mxu0 %v3739
  %v3741 = vpop.f32.mrb[0].mxu0
  %v3742 = vadd.f32 %v3565, %v3741
  %v3743 = vpop.f32.mrb[0].mxu0
  %3744 = vmatprep.mubr.f32.mxu0 0.0
  %v3745 = vand.u32 %v2479, 4294901760
  %3746 = vmatmul.mubr.f32.gmra.mrb[0].mxu0 %v3745
  %v3747 = vpop.f32.mrb[0].mxu0
  %v3748 = vadd.f32 %v3571, %v3747
  %v3749 = vpop.f32.mrb[0].mxu0
  %3750 = vmatprep.mubr.f32.mxu0 0.0
  %v3751 = vand.u32 %v2480, 4294901760
  %3752 = vmatmul.mubr.f32.gmra.mrb[0].mxu0 %v3751
  %v3753 = vpop.f32.mrb[0].mxu0
  %v3754 = vadd.f32 %v3577, %v3753
  %v3755 = vpop.f32.mrb[0].mxu0
  %3756 = vmatprep.mubr.f32.mxu0 0.0
  %v3757 = vand.u32 %v2481, 4294901760
  %3758 = vmatmul.mubr.f32.gmra.mrb[0].mxu0 %v3757
  %v3759 = vpop.f32.mrb[0].mxu0
  %v3760 = vadd.f32 %v3583, %v3759
  %v3761 = vpop.f32.mrb[0].mxu0
  %3762 = vmatprep.mubr.f32.mxu0 0.0
  %v3763 = vand.u32 %v2482, 4294901760
  %3764 = vmatmul.mubr.f32.gmra.mrb[0].mxu0 %v3763
  %v3765 = vpop.f32.mrb[0].mxu0
  %v3766 = vadd.f32 %v3589, %v3765
  %v3767 = vpop.f32.mrb[0].mxu0
  %3768 = vdwg.mxu0
  %s3769 = sadd.s32 %s1916, 1
  %s3770 = sld [smem:[#allocation3 + %s3769]]
  %s3771 = scalar_lea.vmem %s2, %s3770
  %3772 = vst.msk [vmem:[%s3771] sm:$0xff] %vm1919, %v3676
  %3773 = vst.msk [vmem:[%s3771 + $0x8] sm:$0xff] %vm1919, %v3682
  %3774 = vst.msk [vmem:[%s3771 + $0x10] sm:$0xff] %vm1919, %v3688
  %3775 = vst.msk [vmem:[%s3771 + $0x18] sm:$0xff] %vm1919, %v3694
  %3776 = vst.msk [vmem:[%s3771 + $0x20] sm:$0xff] %vm1919, %v3700
  %3777 = vst.msk [vmem:[%s3771 + $0x28] sm:$0xff] %vm1919, %v3706
  %3778 = vst.msk [vmem:[%s3771 + $0x30] sm:$0xff] %vm1919, %v3712
  %3779 = vst.msk [vmem:[%s3771 + $0x38] sm:$0xff] %vm1919, %v3718
  %3780 = vst.msk [vmem:[%s3771 + $0x40] sm:$0xff] %vm1919, %v3724
  %3781 = vst.msk [vmem:[%s3771 + $0x48] sm:$0xff] %vm1919, %v3730
  %3782 = vst.msk [vmem:[%s3771 + $0x50] sm:$0xff] %vm1919, %v3736
  %3783 = vst.msk [vmem:[%s3771 + $0x58] sm:$0xff] %vm1919, %v3742
  %3784 = vst.msk [vmem:[%s3771 + $0x60] sm:$0xff] %vm1919, %v3748
  %3785 = vst.msk [vmem:[%s3771 + $0x68] sm:$0xff] %vm1919, %v3754
  %3786 = vst.msk [vmem:[%s3771 + $0x70] sm:$0xff] %vm1919, %v3760
  %3787 = vst.msk [vmem:[%s3771 + $0x78] sm:$0xff] %vm1919, %v3766
  %v3788 = vld [vmem:[%s1 + $0x100] sm:$0xff]
  %v3789 = vld [vmem:[%s1 + $0x108] sm:$0xff]
  %v3790 = vld [vmem:[%s1 + $0x110] sm:$0xff]
  %v3791 = vld [vmem:[%s1 + $0x118] sm:$0xff]
  %v3792 = vld [vmem:[%s1 + $0x120] sm:$0xff]
  %v3793 = vld [vmem:[%s1 + $0x128] sm:$0xff]
  %v3794 = vld [vmem:[%s1 + $0x130] sm:$0xff]
  %v3795 = vld [vmem:[%s1 + $0x138] sm:$0xff]
  %v3796 = vld [vmem:[%s1 + $0x140] sm:$0xff]
  %v3797 = vld [vmem:[%s1 + $0x148] sm:$0xff]
  %v3798 = vld [vmem:[%s1 + $0x150] sm:$0xff]
  %v3799 = vld [vmem:[%s1 + $0x158] sm:$0xff]
  %v3800 = vld [vmem:[%s1 + $0x160] sm:$0xff]
  %v3801 = vld [vmem:[%s1 + $0x168] sm:$0xff]
  %v3802 = vld [vmem:[%s1 + $0x170] sm:$0xff]
  %v3803 = vld [vmem:[%s1 + $0x178] sm:$0xff]
  %s3804 = sadd.s32 %s83, 256
  %v3805 = vstv %s3804
  %v3806 = vadd.s32 %v3805, %v18
  %v3807 = vadd.s32 %v3805, %v19
  %v3808 = vadd.s32 %v3805, %v20
  %v3809 = vadd.s32 %v3805, %v21
  %v3810 = vadd.s32 %v3805, %v22
  %v3811 = vadd.s32 %v3805, %v23
  %v3812 = vadd.s32 %v3805, %v24
  %v3813 = vadd.s32 %v3805, %v25
  %v3814 = vadd.s32 %v3805, %v26
  %v3815 = vadd.s32 %v3805, %v27
  %v3816 = vadd.s32 %v3805, %v28
  %v3817 = vadd.s32 %v3805, %v29
  %v3818 = vadd.s32 %v3805, %v30
  %v3819 = vadd.s32 %v3805, %v31
  %v3820 = vadd.s32 %v3805, %v32
  %v3821 = vadd.s32 %v3805, %v33
  %vm3822 = vcmp.gt.f32.partialorder %v3788, 0.5
  %vm3823 = vcmp.gt.f32.partialorder %v3789, 0.5
  %vm3824 = vcmp.gt.f32.partialorder %v3790, 0.5
  %vm3825 = vcmp.gt.f32.partialorder %v3791, 0.5
  %vm3826 = vcmp.gt.f32.partialorder %v3792, 0.5
  %vm3827 = vcmp.gt.f32.partialorder %v3793, 0.5
  %vm3828 = vcmp.gt.f32.partialorder %v3794, 0.5
  %vm3829 = vcmp.gt.f32.partialorder %v3795, 0.5
  %vm3830 = vcmp.gt.f32.partialorder %v3796, 0.5
  %vm3831 = vcmp.gt.f32.partialorder %v3797, 0.5
  %vm3832 = vcmp.gt.f32.partialorder %v3798, 0.5
  %vm3833 = vcmp.gt.f32.partialorder %v3799, 0.5
  %vm3834 = vcmp.gt.f32.partialorder %v3800, 0.5
  %vm3835 = vcmp.gt.f32.partialorder %v3801, 0.5
  %vm3836 = vcmp.gt.f32.partialorder %v3802, 0.5
  %vm3837 = vcmp.gt.f32.partialorder %v3803, 0.5
  %vm3838 = vcmp.lt.s32.totalorder %v3806, 64
  %vm3839 = vcmp.lt.s32.totalorder %v3807, 64
  %vm3840 = vcmp.lt.s32.totalorder %v3808, 64
  %vm3841 = vcmp.lt.s32.totalorder %v3809, 64
  %vm3842 = vcmp.lt.s32.totalorder %v3810, 64
  %vm3843 = vcmp.lt.s32.totalorder %v3811, 64
  %vm3844 = vcmp.lt.s32.totalorder %v3812, 64
  %vm3845 = vcmp.lt.s32.totalorder %v3813, 64
  %vm3846 = vcmp.lt.s32.totalorder %v3814, 64
  %vm3847 = vcmp.lt.s32.totalorder %v3815, 64
  %vm3848 = vcmp.lt.s32.totalorder %v3816, 64
  %vm3849 = vcmp.lt.s32.totalorder %v3817, 64
  %vm3850 = vcmp.lt.s32.totalorder %v3818, 64
  %vm3851 = vcmp.lt.s32.totalorder %v3819, 64
  %vm3852 = vcmp.lt.s32.totalorder %v3820, 64
  %vm3853 = vcmp.lt.s32.totalorder %v3821, 64
  %vm3854 = vmand %vm3822, %vm3838
  %vm3855 = vmand %vm3823, %vm3839
  %vm3856 = vmand %vm3824, %vm3840
  %vm3857 = vmand %vm3825, %vm3841
  %vm3858 = vmand %vm3826, %vm3842
  %vm3859 = vmand %vm3827, %vm3843
  %vm3860 = vmand %vm3828, %vm3844
  %vm3861 = vmand %vm3829, %vm3845
  %vm3862 = vmand %vm3830, %vm3846
  %vm3863 = vmand %vm3831, %vm3847
  %vm3864 = vmand %vm3832, %vm3848
  %vm3865 = vmand %vm3833, %vm3849
  %vm3866 = vmand %vm3834, %vm3850
  %vm3867 = vmand %vm3835, %vm3851
  %vm3868 = vmand %vm3836, %vm3852
  %vm3869 = vmand %vm3837, %vm3853
  %v3870 = vsel %vm3854, 1, 0
  %v3871 = vsel %vm3855, 1, 0
  %v3872 = vsel %vm3856, 1, 0
  %v3873 = vsel %vm3857, 1, 0
  %v3874 = vsel %vm3858, 1, 0
  %v3875 = vsel %vm3859, 1, 0
  %v3876 = vsel %vm3860, 1, 0
  %v3877 = vsel %vm3861, 1, 0
  %v3878 = vsel %vm3862, 1, 0
  %v3879 = vsel %vm3863, 1, 0
  %v3880 = vsel %vm3864, 1, 0
  %v3881 = vsel %vm3865, 1, 0
  %v3882 = vsel %vm3866, 1, 0
  %v3883 = vsel %vm3867, 1, 0
  %v3884 = vsel %vm3868, 1, 0
  %v3885 = vsel %vm3869, 1, 0
  %v3886 = vcvt.s32.f32 %v3870
  %v3887 = vcvt.s32.f32 %v3871
  %v3888 = vcvt.s32.f32 %v3872
  %v3889 = vcvt.s32.f32 %v3873
  %v3890 = vcvt.s32.f32 %v3874
  %v3891 = vcvt.s32.f32 %v3875
  %v3892 = vcvt.s32.f32 %v3876
  %v3893 = vcvt.s32.f32 %v3877
  %v3894 = vcvt.s32.f32 %v3878
  %v3895 = vcvt.s32.f32 %v3879
  %v3896 = vcvt.s32.f32 %v3880
  %v3897 = vcvt.s32.f32 %v3881
  %v3898 = vcvt.s32.f32 %v3882
  %v3899 = vcvt.s32.f32 %v3883
  %v3900 = vcvt.s32.f32 %v3884
  %v3901 = vcvt.s32.f32 %v3885
  %3918 = vrot.lane.b32.xlu0 %v3886, 120
  %v3919 = vpop.permute.xlu0 %3918
  %3920 = vrot.lane.b32.xlu0 %v3887, 120
  %v3921 = vpop.permute.xlu0 %3920
  %3922 = vrot.lane.b32.xlu0 %v3888, 120
  %v3923 = vpop.permute.xlu0 %3922
  %3924 = vrot.lane.b32.xlu0 %v3889, 120
  %v3925 = vpop.permute.xlu0 %3924
  %3926 = vrot.lane.b32.xlu0 %v3890, 120
  %v3927 = vpop.permute.xlu0 %3926
  %3928 = vrot.lane.b32.xlu0 %v3891, 120
  %v3929 = vpop.permute.xlu0 %3928
  %3930 = vrot.lane.b32.xlu0 %v3892, 120
  %v3931 = vpop.permute.xlu0 %3930
  %3932 = vrot.lane.b32.xlu0 %v3893, 120
  %v3933 = vpop.permute.xlu0 %3932
  %3934 = vrot.lane.b32.xlu0 %v3894, 120
  %v3935 = vpop.permute.xlu0 %3934
  %3936 = vrot.lane.b32.xlu0 %v3895, 120
  %v3937 = vpop.permute.xlu0 %3936
  %3938 = vrot.lane.b32.xlu0 %v3896, 120
  %v3939 = vpop.permute.xlu0 %3938
  %3940 = vrot.lane.b32.xlu0 %v3897, 120
  %v3941 = vpop.permute.xlu0 %3940
  %3942 = vrot.lane.b32.xlu0 %v3898, 120
  %v3943 = vpop.permute.xlu0 %3942
  %3944 = vrot.lane.b32.xlu0 %v3899, 120
  %v3945 = vpop.permute.xlu0 %3944
  %3946 = vrot.lane.b32.xlu0 %v3900, 120
  %v3947 = vpop.permute.xlu0 %3946
  %3948 = vrot.lane.b32.xlu0 %v3901, 120
  %v3949 = vpop.permute.xlu0 %3948
  %3966 = vmatprep.subr.mxu0 0.0
  %3967 = vmatpush1.msra.mxu0 %v3919
  %3968 = vmatprep.subr.mxu0 0.0
  %3969 = vmatpush1.msra.mxu0 %v3921
  %3970 = vmatprep.subr.mxu0 0.0
  %3971 = vmatpush1.msra.mxu0 %v3923
  %3972 = vmatprep.subr.mxu0 0.0
  %3973 = vmatpush1.msra.mxu0 %v3925
  %3974 = vmatprep.subr.mxu0 0.0
  %3975 = vmatpush1.msra.mxu0 %v3927
  %3976 = vmatprep.subr.mxu0 0.0
  %3977 = vmatpush1.msra.mxu0 %v3929
  %3978 = vmatprep.subr.mxu0 0.0
  %3979 = vmatpush1.msra.mxu0 %v3931
  %3980 = vmatprep.subr.mxu0 0.0
  %3981 = vmatpush1.msra.mxu0 %v3933
  %3982 = vmatprep.subr.mxu0 0.0
  %3983 = vmatpush1.msra.mxu0 %v3935
  %3984 = vmatprep.subr.mxu0 0.0
  %3985 = vmatpush1.msra.mxu0 %v3937
  %3986 = vmatprep.subr.mxu0 0.0
  %3987 = vmatpush1.msra.mxu0 %v3939
  %3988 = vmatprep.subr.mxu0 0.0
  %3989 = vmatpush1.msra.mxu0 %v3941
  %3990 = vmatprep.subr.mxu0 0.0
  %3991 = vmatpush1.msra.mxu0 %v3943
  %3992 = vmatprep.subr.mxu0 0.0
  %3993 = vmatpush1.msra.mxu0 %v3945
  %3994 = vmatprep.subr.mxu0 0.0
  %3995 = vmatpush1.msra.mxu0 %v3947
  %3996 = vmatprep.subr.mxu0 0.0
  %3997 = vmatpush1.msra.mxu0 %v3949
  %3998 = vmatprep.subr.mxu0 0.0
  %3999 = vmatpush1.msra.mxu0 0.0
  %4000 = vmatprep.subr.mxu0 0.0
  %4001 = vmatpush1.msra.mxu0 0.0
  %4002 = vmatprep.subr.mxu0 0.0
  %4003 = vmatpush1.msra.mxu0 0.0
  %4004 = vmatprep.subr.mxu0 0.0
  %4005 = vmatpush1.msra.mxu0 0.0
  %4006 = vmatprep.subr.mxu0 0.0
  %4007 = vmatpush1.msra.mxu0 0.0
  %4008 = vmatprep.subr.mxu0 0.0
  %4009 = vmatpush1.msra.mxu0 0.0
  %4010 = vmatprep.subr.mxu0 0.0
  %4011 = vmatpush1.msra.mxu0 0.0
  %4012 = vmatprep.subr.mxu0 0.0
  %4013 = vmatpush1.msra.mxu0 0.0
  %4014 = vmatprep.subr.mxu0 0.0
  %4015 = vmatpush1.msra.mxu0 0.0
  %4016 = vmatprep.subr.mxu0 0.0
  %4017 = vmatpush1.msra.mxu0 0.0
  %4018 = vmatprep.subr.mxu0 0.0
  %4019 = vmatpush1.msra.mxu0 0.0
  %4020 = vmatprep.subr.mxu0 0.0
  %4021 = vmatpush1.msra.mxu0 0.0
  %4022 = vmatprep.subr.mxu0 0.0
  %4023 = vmatpush1.msra.mxu0 0.0
  %4024 = vmatprep.subr.mxu0 0.0
  %4025 = vmatpush1.msra.mxu0 0.0
  %4026 = vmatprep.subr.mxu0 0.0
  %4027 = vmatpush1.msra.mxu0 0.0
  %4028 = vmatprep.subr.mxu0 0.0
  %4029 = vmatpush1.msra.mxu0 0.0
  %4030 = vmatprep.mubr.f32.mxu0 0.0
  %4031 = vmatmul.mubr.f32.gmra.mrb[0].mxu0 %v67
  %v4032 = vpop.f32.mrb[0].mxu0
  %v4033 = vadd.f32 0.0, %v4032
  %v4034 = vpop.f32.mrb[0].mxu0
  %4035 = vmatprep.mubr.f32.mxu0 0.0
  %4036 = vmatmul.mubr.f32.gmra.mrb[0].mxu0 %v68
  %v4037 = vpop.f32.mrb[0].mxu0
  %v4038 = vadd.f32 0.0, %v4037
  %v4039 = vpop.f32.mrb[0].mxu0
  %4040 = vmatprep.mubr.f32.mxu0 0.0
  %4041 = vmatmul.mubr.f32.gmra.mrb[0].mxu0 %v69
  %v4042 = vpop.f32.mrb[0].mxu0
  %v4043 = vadd.f32 0.0, %v4042
  %v4044 = vpop.f32.mrb[0].mxu0
  %4045 = vmatprep.mubr.f32.mxu0 0.0
  %4046 = vmatmul.mubr.f32.gmra.mrb[0].mxu0 %v70
  %v4047 = vpop.f32.mrb[0].mxu0
  %v4048 = vadd.f32 0.0, %v4047
  %v4049 = vpop.f32.mrb[0].mxu0
  %4050 = vmatprep.mubr.f32.mxu0 0.0
  %4051 = vmatmul.mubr.f32.gmra.mrb[0].mxu0 %v71
  %v4052 = vpop.f32.mrb[0].mxu0
  %v4053 = vadd.f32 0.0, %v4052
  %v4054 = vpop.f32.mrb[0].mxu0
  %4055 = vmatprep.mubr.f32.mxu0 0.0
  %4056 = vmatmul.mubr.f32.gmra.mrb[0].mxu0 %v72
  %v4057 = vpop.f32.mrb[0].mxu0
  %v4058 = vadd.f32 0.0, %v4057
  %v4059 = vpop.f32.mrb[0].mxu0
  %4060 = vmatprep.mubr.f32.mxu0 0.0
  %4061 = vmatmul.mubr.f32.gmra.mrb[0].mxu0 %v73
  %v4062 = vpop.f32.mrb[0].mxu0
  %v4063 = vadd.f32 0.0, %v4062
  %v4064 = vpop.f32.mrb[0].mxu0
  %4065 = vmatprep.mubr.f32.mxu0 0.0
  %4066 = vmatmul.mubr.f32.gmra.mrb[0].mxu0 %v74
  %v4067 = vpop.f32.mrb[0].mxu0
  %v4068 = vadd.f32 0.0, %v4067
  %v4069 = vpop.f32.mrb[0].mxu0
  %4070 = vmatprep.mubr.f32.mxu0 0.0
  %4071 = vmatmul.mubr.f32.gmra.mrb[0].mxu0 %v75
  %v4072 = vpop.f32.mrb[0].mxu0
  %v4073 = vadd.f32 0.0, %v4072
  %v4074 = vpop.f32.mrb[0].mxu0
  %4075 = vmatprep.mubr.f32.mxu0 0.0
  %4076 = vmatmul.mubr.f32.gmra.mrb[0].mxu0 %v76
  %v4077 = vpop.f32.mrb[0].mxu0
  %v4078 = vadd.f32 0.0, %v4077
  %v4079 = vpop.f32.mrb[0].mxu0
  %4080 = vmatprep.mubr.f32.mxu0 0.0
  %4081 = vmatmul.mubr.f32.gmra.mrb[0].mxu0 %v77
  %v4082 = vpop.f32.mrb[0].mxu0
  %v4083 = vadd.f32 0.0, %v4082
  %v4084 = vpop.f32.mrb[0].mxu0
  %4085 = vmatprep.mubr.f32.mxu0 0.0
  %4086 = vmatmul.mubr.f32.gmra.mrb[0].mxu0 %v78
  %v4087 = vpop.f32.mrb[0].mxu0
  %v4088 = vadd.f32 0.0, %v4087
  %v4089 = vpop.f32.mrb[0].mxu0
  %4090 = vmatprep.mubr.f32.mxu0 0.0
  %4091 = vmatmul.mubr.f32.gmra.mrb[0].mxu0 %v79
  %v4092 = vpop.f32.mrb[0].mxu0
  %v4093 = vadd.f32 0.0, %v4092
  %v4094 = vpop.f32.mrb[0].mxu0
  %4095 = vmatprep.mubr.f32.mxu0 0.0
  %4096 = vmatmul.mubr.f32.gmra.mrb[0].mxu0 %v80
  %v4097 = vpop.f32.mrb[0].mxu0
  %v4098 = vadd.f32 0.0, %v4097
  %v4099 = vpop.f32.mrb[0].mxu0
  %4100 = vmatprep.mubr.f32.mxu0 0.0
  %4101 = vmatmul.mubr.f32.gmra.mrb[0].mxu0 %v81
  %v4102 = vpop.f32.mrb[0].mxu0
  %v4103 = vadd.f32 0.0, %v4102
  %v4104 = vpop.f32.mrb[0].mxu0
  %4105 = vmatprep.mubr.f32.mxu0 0.0
  %4106 = vmatmul.mubr.f32.gmra.mrb[0].mxu0 %v82
  %v4107 = vpop.f32.mrb[0].mxu0
  %v4108 = vadd.f32 0.0, %v4107
  %v4109 = vpop.f32.mrb[0].mxu0
  %4110 = vdwg.mxu0
  %4112 = vset.pattern.permute.xlu0 0
  %4113 = vperm.xlu0 %4112, %v4033
  %v4114 = vpop.permute.xlu0 %4113
  %4117 = vset.pattern.permute.xlu0 0
  %4118 = vperm.xlu0 %4117, %v4038
  %v4119 = vpop.permute.xlu0 %4118
  %4122 = vset.pattern.permute.xlu0 0
  %4123 = vperm.xlu0 %4122, %v4043
  %v4124 = vpop.permute.xlu0 %4123
  %4127 = vset.pattern.permute.xlu0 0
  %4128 = vperm.xlu0 %4127, %v4048
  %v4129 = vpop.permute.xlu0 %4128
  %4132 = vset.pattern.permute.xlu0 0
  %4133 = vperm.xlu0 %4132, %v4053
  %v4134 = vpop.permute.xlu0 %4133
  %4137 = vset.pattern.permute.xlu0 0
  %4138 = vperm.xlu0 %4137, %v4058
  %v4139 = vpop.permute.xlu0 %4138
  %4142 = vset.pattern.permute.xlu0 0
  %4143 = vperm.xlu0 %4142, %v4063
  %v4144 = vpop.permute.xlu0 %4143
  %4147 = vset.pattern.permute.xlu0 0
  %4148 = vperm.xlu0 %4147, %v4068
  %v4149 = vpop.permute.xlu0 %4148
  %4152 = vset.pattern.permute.xlu0 0
  %4153 = vperm.xlu0 %4152, %v4073
  %v4154 = vpop.permute.xlu0 %4153
  %4157 = vset.pattern.permute.xlu0 0
  %4158 = vperm.xlu0 %4157, %v4078
  %v4159 = vpop.permute.xlu0 %4158
  %4162 = vset.pattern.permute.xlu0 0
  %4163 = vperm.xlu0 %4162, %v4083
  %v4164 = vpop.permute.xlu0 %4163
  %4167 = vset.pattern.permute.xlu0 0
  %4168 = vperm.xlu0 %4167, %v4088
  %v4169 = vpop.permute.xlu0 %4168
  %4172 = vset.pattern.permute.xlu0 0
  %4173 = vperm.xlu0 %4172, %v4093
  %v4174 = vpop.permute.xlu0 %4173
  %4177 = vset.pattern.permute.xlu0 0
  %4178 = vperm.xlu0 %4177, %v4098
  %v4179 = vpop.permute.xlu0 %4178
  %4182 = vset.pattern.permute.xlu0 0
  %4183 = vperm.xlu0 %4182, %v4103
  %v4184 = vpop.permute.xlu0 %4183
  %4187 = vset.pattern.permute.xlu0 0
  %4188 = vperm.xlu0 %4187, %v4108
  %v4189 = vpop.permute.xlu0 %4188
  %vm4191 = vcmp.eq.f32.partialorder %v34, %v4114
  %vm4192 = vcmp.eq.f32.partialorder %v34, %v4119
  %vm4193 = vcmp.eq.f32.partialorder %v34, %v4124
  %vm4194 = vcmp.eq.f32.partialorder %v34, %v4129
  %vm4195 = vcmp.eq.f32.partialorder %v34, %v4134
  %vm4196 = vcmp.eq.f32.partialorder %v34, %v4139
  %vm4197 = vcmp.eq.f32.partialorder %v34, %v4144
  %vm4198 = vcmp.eq.f32.partialorder %v34, %v4149
  %vm4199 = vcmp.eq.f32.partialorder %v34, %v4154
  %vm4200 = vcmp.eq.f32.partialorder %v34, %v4159
  %vm4201 = vcmp.eq.f32.partialorder %v34, %v4164
  %vm4202 = vcmp.eq.f32.partialorder %v34, %v4169
  %vm4203 = vcmp.eq.f32.partialorder %v34, %v4174
  %vm4204 = vcmp.eq.f32.partialorder %v34, %v4179
  %vm4205 = vcmp.eq.f32.partialorder %v34, %v4184
  %vm4206 = vcmp.eq.f32.partialorder %v34, %v4189
  %4207 = vset.pattern.permute.xlu0 8
  %4208 = vperm.xlu0 %4207, %v3870
  %v4209 = vpop.permute.xlu0 %4208
  %4210 = vset.pattern.permute.xlu0 8
  %4211 = vperm.xlu0 %4210, %v3871
  %v4212 = vpop.permute.xlu0 %4211
  %4213 = vset.pattern.permute.xlu0 8
  %4214 = vperm.xlu0 %4213, %v3872
  %v4215 = vpop.permute.xlu0 %4214
  %4216 = vset.pattern.permute.xlu0 8
  %4217 = vperm.xlu0 %4216, %v3873
  %v4218 = vpop.permute.xlu0 %4217
  %4219 = vset.pattern.permute.xlu0 8
  %4220 = vperm.xlu0 %4219, %v3874
  %v4221 = vpop.permute.xlu0 %4220
  %4222 = vset.pattern.permute.xlu0 8
  %4223 = vperm.xlu0 %4222, %v3875
  %v4224 = vpop.permute.xlu0 %4223
  %4225 = vset.pattern.permute.xlu0 8
  %4226 = vperm.xlu0 %4225, %v3876
  %v4227 = vpop.permute.xlu0 %4226
  %4228 = vset.pattern.permute.xlu0 8
  %4229 = vperm.xlu0 %4228, %v3877
  %v4230 = vpop.permute.xlu0 %4229
  %4231 = vset.pattern.permute.xlu0 8
  %4232 = vperm.xlu0 %4231, %v3878
  %v4233 = vpop.permute.xlu0 %4232
  %4234 = vset.pattern.permute.xlu0 8
  %4235 = vperm.xlu0 %4234, %v3879
  %v4236 = vpop.permute.xlu0 %4235
  %4237 = vset.pattern.permute.xlu0 8
  %4238 = vperm.xlu0 %4237, %v3880
  %v4239 = vpop.permute.xlu0 %4238
  %4240 = vset.pattern.permute.xlu0 8
  %4241 = vperm.xlu0 %4240, %v3881
  %v4242 = vpop.permute.xlu0 %4241
  %4243 = vset.pattern.permute.xlu0 8
  %4244 = vperm.xlu0 %4243, %v3882
  %v4245 = vpop.permute.xlu0 %4244
  %4246 = vset.pattern.permute.xlu0 8
  %4247 = vperm.xlu0 %4246, %v3883
  %v4248 = vpop.permute.xlu0 %4247
  %4249 = vset.pattern.permute.xlu0 8
  %4250 = vperm.xlu0 %4249, %v3884
  %v4251 = vpop.permute.xlu0 %4250
  %4252 = vset.pattern.permute.xlu0 8
  %4253 = vperm.xlu0 %4252, %v3885
  %v4254 = vpop.permute.xlu0 %4253
  %vm4255 = vcmp.eq.s32.totalorder %v4209, 1
  %vm4256 = vcmp.eq.s32.totalorder %v4212, 1
  %vm4257 = vcmp.eq.s32.totalorder %v4215, 1
  %vm4258 = vcmp.eq.s32.totalorder %v4218, 1
  %vm4259 = vcmp.eq.s32.totalorder %v4221, 1
  %vm4260 = vcmp.eq.s32.totalorder %v4224, 1
  %vm4261 = vcmp.eq.s32.totalorder %v4227, 1
  %vm4262 = vcmp.eq.s32.totalorder %v4230, 1
  %vm4263 = vcmp.eq.s32.totalorder %v4233, 1
  %vm4264 = vcmp.eq.s32.totalorder %v4236, 1
  %vm4265 = vcmp.eq.s32.totalorder %v4239, 1
  %vm4266 = vcmp.eq.s32.totalorder %v4242, 1
  %vm4267 = vcmp.eq.s32.totalorder %v4245, 1
  %vm4268 = vcmp.eq.s32.totalorder %v4248, 1
  %vm4269 = vcmp.eq.s32.totalorder %v4251, 1
  %vm4270 = vcmp.eq.s32.totalorder %v4254, 1
  %vm4271 = vmand %vm4191, %vm4255
  %vm4272 = vmand %vm4192, %vm4256
  %vm4273 = vmand %vm4193, %vm4257
  %vm4274 = vmand %vm4194, %vm4258
  %vm4275 = vmand %vm4195, %vm4259
  %vm4276 = vmand %vm4196, %vm4260
  %vm4277 = vmand %vm4197, %vm4261
  %vm4278 = vmand %vm4198, %vm4262
  %vm4279 = vmand %vm4199, %vm4263
  %vm4280 = vmand %vm4200, %vm4264
  %vm4281 = vmand %vm4201, %vm4265
  %vm4282 = vmand %vm4202, %vm4266
  %vm4283 = vmand %vm4203, %vm4267
  %vm4284 = vmand %vm4204, %vm4268
  %vm4285 = vmand %vm4205, %vm4269
  %vm4286 = vmand %vm4206, %vm4270
  %v4287 = vsel %vm4271, 1.0, 0.0
  %v4288 = vsel %vm4272, 1.0, 0.0
  %v4289 = vsel %vm4273, 1.0, 0.0
  %v4290 = vsel %vm4274, 1.0, 0.0
  %v4291 = vsel %vm4275, 1.0, 0.0
  %v4292 = vsel %vm4276, 1.0, 0.0
  %v4293 = vsel %vm4277, 1.0, 0.0
  %v4294 = vsel %vm4278, 1.0, 0.0
  %v4295 = vsel %vm4279, 1.0, 0.0
  %v4296 = vsel %vm4280, 1.0, 0.0
  %v4297 = vsel %vm4281, 1.0, 0.0
  %v4298 = vsel %vm4282, 1.0, 0.0
  %v4299 = vsel %vm4283, 1.0, 0.0
  %v4300 = vsel %vm4284, 1.0, 0.0
  %v4301 = vsel %vm4285, 1.0, 0.0
  %v4302 = vsel %vm4286, 1.0, 0.0
  %4303 = vxpose.xlu0.b32.start [1/16] %v4287, 128
  %4304 = vxpose.xlu0.b32.cont [2/16] %v4288, 128
  %4305 = vxpose.xlu0.b32.cont [3/16] %v4289, 128
  %4306 = vxpose.xlu0.b32.cont [4/16] %v4290, 128
  %4307 = vxpose.xlu0.b32.cont [5/16] %v4291, 128
  %4308 = vxpose.xlu0.b32.cont [6/16] %v4292, 128
  %4309 = vxpose.xlu0.b32.cont [7/16] %v4293, 128
  %4310 = vxpose.xlu0.b32.cont [8/16] %v4294, 128
  %4311 = vxpose.xlu0.b32.cont [9/16] %v4295, 128
  %4312 = vxpose.xlu0.b32.cont [10/16] %v4296, 128
  %4313 = vxpose.xlu0.b32.cont [11/16] %v4297, 128
  %4314 = vxpose.xlu0.b32.cont [12/16] %v4298, 128
  %4315 = vxpose.xlu0.b32.cont [13/16] %v4299, 128
  %4316 = vxpose.xlu0.b32.cont [14/16] %v4300, 128
  %4317 = vxpose.xlu0.b32.cont [15/16] %v4301, 128
  %4318 = vxpose.xlu0.b32.end [16/16] %v4302, 128
  %v4319 = vpop.trf.xlu0
  %v4320 = vpop.trf.xlu0
  %v4321 = vpop.trf.xlu0
  %v4322 = vpop.trf.xlu0
  %v4323 = vpop.trf.xlu0
  %v4324 = vpop.trf.xlu0
  %v4325 = vpop.trf.xlu0
  %v4326 = vpop.trf.xlu0
  %v4327 = vpop.trf.xlu0
  %v4328 = vpop.trf.xlu0
  %v4329 = vpop.trf.xlu0
  %v4330 = vpop.trf.xlu0
  %v4331 = vpop.trf.xlu0
  %v4332 = vpop.trf.xlu0
  %v4333 = vpop.trf.xlu0
  %v4334 = vpop.trf.xlu0
  %4335 = vmatprep.subr.mxu0 0.0
  %v4336 = vand.u32 %v3788, 4294901760
  %4337 = vmatpush1.msra.mxu0 %v4336
  %4338 = vmatprep.subr.mxu0 0.0
  %v4339 = vand.u32 %v3789, 4294901760
  %4340 = vmatpush1.msra.mxu0 %v4339
  %4341 = vmatprep.subr.mxu0 0.0
  %v4342 = vand.u32 %v3790, 4294901760
  %4343 = vmatpush1.msra.mxu0 %v4342
  %4344 = vmatprep.subr.mxu0 0.0
  %v4345 = vand.u32 %v3791, 4294901760
  %4346 = vmatpush1.msra.mxu0 %v4345
  %4347 = vmatprep.subr.mxu0 0.0
  %v4348 = vand.u32 %v3792, 4294901760
  %4349 = vmatpush1.msra.mxu0 %v4348
  %4350 = vmatprep.subr.mxu0 0.0
  %v4351 = vand.u32 %v3793, 4294901760
  %4352 = vmatpush1.msra.mxu0 %v4351
  %4353 = vmatprep.subr.mxu0 0.0
  %v4354 = vand.u32 %v3794, 4294901760
  %4355 = vmatpush1.msra.mxu0 %v4354
  %4356 = vmatprep.subr.mxu0 0.0
  %v4357 = vand.u32 %v3795, 4294901760
  %4358 = vmatpush1.msra.mxu0 %v4357
  %4359 = vmatprep.subr.mxu0 0.0
  %v4360 = vand.u32 %v3796, 4294901760
  %4361 = vmatpush1.msra.mxu0 %v4360
  %4362 = vmatprep.subr.mxu0 0.0
  %v4363 = vand.u32 %v3797, 4294901760
  %4364 = vmatpush1.msra.mxu0 %v4363
  %4365 = vmatprep.subr.mxu0 0.0
  %v4366 = vand.u32 %v3798, 4294901760
  %4367 = vmatpush1.msra.mxu0 %v4366
  %4368 = vmatprep.subr.mxu0 0.0
  %v4369 = vand.u32 %v3799, 4294901760
  %4370 = vmatpush1.msra.mxu0 %v4369
  %4371 = vmatprep.subr.mxu0 0.0
  %v4372 = vand.u32 %v3800, 4294901760
  %4373 = vmatpush1.msra.mxu0 %v4372
  %4374 = vmatprep.subr.mxu0 0.0
  %v4375 = vand.u32 %v3801, 4294901760
  %4376 = vmatpush1.msra.mxu0 %v4375
  %4377 = vmatprep.subr.mxu0 0.0
  %v4378 = vand.u32 %v3802, 4294901760
  %4379 = vmatpush1.msra.mxu0 %v4378
  %4380 = vmatprep.subr.mxu0 0.0
  %v4381 = vand.u32 %v3803, 4294901760
  %4382 = vmatpush1.msra.mxu0 %v4381
  %4383 = vmatprep.subr.mxu0 0.0
  %4384 = vmatpush1.msra.mxu0 0.0
  %4385 = vmatprep.subr.mxu0 0.0
  %4386 = vmatpush1.msra.mxu0 0.0
  %4387 = vmatprep.subr.mxu0 0.0
  %4388 = vmatpush1.msra.mxu0 0.0
  %4389 = vmatprep.subr.mxu0 0.0
  %4390 = vmatpush1.msra.mxu0 0.0
  %4391 = vmatprep.subr.mxu0 0.0
  %4392 = vmatpush1.msra.mxu0 0.0
  %4393 = vmatprep.subr.mxu0 0.0
  %4394 = vmatpush1.msra.mxu0 0.0
  %4395 = vmatprep.subr.mxu0 0.0
  %4396 = vmatpush1.msra.mxu0 0.0
  %4397 = vmatprep.subr.mxu0 0.0
  %4398 = vmatpush1.msra.mxu0 0.0
  %4399 = vmatprep.subr.mxu0 0.0
  %4400 = vmatpush1.msra.mxu0 0.0
  %4401 = vmatprep.subr.mxu0 0.0
  %4402 = vmatpush1.msra.mxu0 0.0
  %4403 = vmatprep.subr.mxu0 0.0
  %4404 = vmatpush1.msra.mxu0 0.0
  %4405 = vmatprep.subr.mxu0 0.0
  %4406 = vmatpush1.msra.mxu0 0.0
  %4407 = vmatprep.subr.mxu0 0.0
  %4408 = vmatpush1.msra.mxu0 0.0
  %4409 = vmatprep.subr.mxu0 0.0
  %4410 = vmatpush1.msra.mxu0 0.0
  %4411 = vmatprep.subr.mxu0 0.0
  %4412 = vmatpush1.msra.mxu0 0.0
  %4413 = vmatprep.subr.mxu0 0.0
  %4414 = vmatpush1.msra.mxu0 0.0
  %4415 = vmatprep.mubr.f32.mxu0 0.0
  %v4416 = vand.u32 %v4319, 4294901760
  %v4417 = vsub.f32 %v4319, %v4416
  %v4418 = vand.u32 %v4417, 4294901760
  %v4419 = vsub.f32 %v4417, %v4418
  %v4420 = vand.u32 %v4419, 4294901760
  %4421 = vmatmul.mubr.f32.gmra.mrb[0].mxu0 %v4420
  %v4422 = vpop.f32.mrb[0].mxu0
  %v4423 = vadd.f32 0.0, %v4422
  %v4424 = vpop.f32.mrb[0].mxu0
  %4425 = vmatprep.mubr.f32.mxu0 0.0
  %v4426 = vand.u32 %v4320, 4294901760
  %v4427 = vsub.f32 %v4320, %v4426
  %v4428 = vand.u32 %v4427, 4294901760
  %v4429 = vsub.f32 %v4427, %v4428
  %v4430 = vand.u32 %v4429, 4294901760
  %4431 = vmatmul.mubr.f32.gmra.mrb[0].mxu0 %v4430
  %v4432 = vpop.f32.mrb[0].mxu0
  %v4433 = vadd.f32 0.0, %v4432
  %v4434 = vpop.f32.mrb[0].mxu0
  %4435 = vmatprep.mubr.f32.mxu0 0.0
  %v4436 = vand.u32 %v4321, 4294901760
  %v4437 = vsub.f32 %v4321, %v4436
  %v4438 = vand.u32 %v4437, 4294901760
  %v4439 = vsub.f32 %v4437, %v4438
  %v4440 = vand.u32 %v4439, 4294901760
  %4441 = vmatmul.mubr.f32.gmra.mrb[0].mxu0 %v4440
  %v4442 = vpop.f32.mrb[0].mxu0
  %v4443 = vadd.f32 0.0, %v4442
  %v4444 = vpop.f32.mrb[0].mxu0
  %4445 = vmatprep.mubr.f32.mxu0 0.0
  %v4446 = vand.u32 %v4322, 4294901760
  %v4447 = vsub.f32 %v4322, %v4446
  %v4448 = vand.u32 %v4447, 4294901760
  %v4449 = vsub.f32 %v4447, %v4448
  %v4450 = vand.u32 %v4449, 4294901760
  %4451 = vmatmul.mubr.f32.gmra.mrb[0].mxu0 %v4450
  %v4452 = vpop.f32.mrb[0].mxu0
  %v4453 = vadd.f32 0.0, %v4452
  %v4454 = vpop.f32.mrb[0].mxu0
  %4455 = vmatprep.mubr.f32.mxu0 0.0
  %v4456 = vand.u32 %v4323, 4294901760
  %v4457 = vsub.f32 %v4323, %v4456
  %v4458 = vand.u32 %v4457, 4294901760
  %v4459 = vsub.f32 %v4457, %v4458
  %v4460 = vand.u32 %v4459, 4294901760
  %4461 = vmatmul.mubr.f32.gmra.mrb[0].mxu0 %v4460
  %v4462 = vpop.f32.mrb[0].mxu0
  %v4463 = vadd.f32 0.0, %v4462
  %v4464 = vpop.f32.mrb[0].mxu0
  %4465 = vmatprep.mubr.f32.mxu0 0.0
  %v4466 = vand.u32 %v4324, 4294901760
  %v4467 = vsub.f32 %v4324, %v4466
  %v4468 = vand.u32 %v4467, 4294901760
  %v4469 = vsub.f32 %v4467, %v4468
  %v4470 = vand.u32 %v4469, 4294901760
  %4471 = vmatmul.mubr.f32.gmra.mrb[0].mxu0 %v4470
  %v4472 = vpop.f32.mrb[0].mxu0
  %v4473 = vadd.f32 0.0, %v4472
  %v4474 = vpop.f32.mrb[0].mxu0
  %4475 = vmatprep.mubr.f32.mxu0 0.0
  %v4476 = vand.u32 %v4325, 4294901760
  %v4477 = vsub.f32 %v4325, %v4476
  %v4478 = vand.u32 %v4477, 4294901760
  %v4479 = vsub.f32 %v4477, %v4478
  %v4480 = vand.u32 %v4479, 4294901760
  %4481 = vmatmul.mubr.f32.gmra.mrb[0].mxu0 %v4480
  %v4482 = vpop.f32.mrb[0].mxu0
  %v4483 = vadd.f32 0.0, %v4482
  %v4484 = vpop.f32.mrb[0].mxu0
  %4485 = vmatprep.mubr.f32.mxu0 0.0
  %v4486 = vand.u32 %v4326, 4294901760
  %v4487 = vsub.f32 %v4326, %v4486
  %v4488 = vand.u32 %v4487, 4294901760
  %v4489 = vsub.f32 %v4487, %v4488
  %v4490 = vand.u32 %v4489, 4294901760
  %4491 = vmatmul.mubr.f32.gmra.mrb[0].mxu0 %v4490
  %v4492 = vpop.f32.mrb[0].mxu0
  %v4493 = vadd.f32 0.0, %v4492
  %v4494 = vpop.f32.mrb[0].mxu0
  %4495 = vmatprep.mubr.f32.mxu0 0.0
  %v4496 = vand.u32 %v4327, 4294901760
  %v4497 = vsub.f32 %v4327, %v4496
  %v4498 = vand.u32 %v4497, 4294901760
  %v4499 = vsub.f32 %v4497, %v4498
  %v4500 = vand.u32 %v4499, 4294901760
  %4501 = vmatmul.mubr.f32.gmra.mrb[0].mxu0 %v4500
  %v4502 = vpop.f32.mrb[0].mxu0
  %v4503 = vadd.f32 0.0, %v4502
  %v4504 = vpop.f32.mrb[0].mxu0
  %4505 = vmatprep.mubr.f32.mxu0 0.0
  %v4506 = vand.u32 %v4328, 4294901760
  %v4507 = vsub.f32 %v4328, %v4506
  %v4508 = vand.u32 %v4507, 4294901760
  %v4509 = vsub.f32 %v4507, %v4508
  %v4510 = vand.u32 %v4509, 4294901760
  %4511 = vmatmul.mubr.f32.gmra.mrb[0].mxu0 %v4510
  %v4512 = vpop.f32.mrb[0].mxu0
  %v4513 = vadd.f32 0.0, %v4512
  %v4514 = vpop.f32.mrb[0].mxu0
  %4515 = vmatprep.mubr.f32.mxu0 0.0
  %v4516 = vand.u32 %v4329, 4294901760
  %v4517 = vsub.f32 %v4329, %v4516
  %v4518 = vand.u32 %v4517, 4294901760
  %v4519 = vsub.f32 %v4517, %v4518
  %v4520 = vand.u32 %v4519, 4294901760
  %4521 = vmatmul.mubr.f32.gmra.mrb[0].mxu0 %v4520
  %v4522 = vpop.f32.mrb[0].mxu0
  %v4523 = vadd.f32 0.0, %v4522
  %v4524 = vpop.f32.mrb[0].mxu0
  %4525 = vmatprep.mubr.f32.mxu0 0.0
  %v4526 = vand.u32 %v4330, 4294901760
  %v4527 = vsub.f32 %v4330, %v4526
  %v4528 = vand.u32 %v4527, 4294901760
  %v4529 = vsub.f32 %v4527, %v4528
  %v4530 = vand.u32 %v4529, 4294901760
  %4531 = vmatmul.mubr.f32.gmra.mrb[0].mxu0 %v4530
  %v4532 = vpop.f32.mrb[0].mxu0
  %v4533 = vadd.f32 0.0, %v4532
  %v4534 = vpop.f32.mrb[0].mxu0
  %4535 = vmatprep.mubr.f32.mxu0 0.0
  %v4536 = vand.u32 %v4331, 4294901760
  %v4537 = vsub.f32 %v4331, %v4536
  %v4538 = vand.u32 %v4537, 4294901760
  %v4539 = vsub.f32 %v4537, %v4538
  %v4540 = vand.u32 %v4539, 4294901760
  %4541 = vmatmul.mubr.f32.gmra.mrb[0].mxu0 %v4540
  %v4542 = vpop.f32.mrb[0].mxu0
  %v4543 = vadd.f32 0.0, %v4542
  %v4544 = vpop.f32.mrb[0].mxu0
  %4545 = vmatprep.mubr.f32.mxu0 0.0
  %v4546 = vand.u32 %v4332, 4294901760
  %v4547 = vsub.f32 %v4332, %v4546
  %v4548 = vand.u32 %v4547, 4294901760
  %v4549 = vsub.f32 %v4547, %v4548
  %v4550 = vand.u32 %v4549, 4294901760
  %4551 = vmatmul.mubr.f32.gmra.mrb[0].mxu0 %v4550
  %v4552 = vpop.f32.mrb[0].mxu0
  %v4553 = vadd.f32 0.0, %v4552
  %v4554 = vpop.f32.mrb[0].mxu0
  %4555 = vmatprep.mubr.f32.mxu0 0.0
  %v4556 = vand.u32 %v4333, 4294901760
  %v4557 = vsub.f32 %v4333, %v4556
  %v4558 = vand.u32 %v4557, 4294901760
  %v4559 = vsub.f32 %v4557, %v4558
  %v4560 = vand.u32 %v4559, 4294901760
  %4561 = vmatmul.mubr.f32.gmra.mrb[0].mxu0 %v4560
  %v4562 = vpop.f32.mrb[0].mxu0
  %v4563 = vadd.f32 0.0, %v4562
  %v4564 = vpop.f32.mrb[0].mxu0
  %4565 = vmatprep.mubr.f32.mxu0 0.0
  %v4566 = vand.u32 %v4334, 4294901760
  %v4567 = vsub.f32 %v4334, %v4566
  %v4568 = vand.u32 %v4567, 4294901760
  %v4569 = vsub.f32 %v4567, %v4568
  %v4570 = vand.u32 %v4569, 4294901760
  %4571 = vmatmul.mubr.f32.gmra.mrb[0].mxu0 %v4570
  %v4572 = vpop.f32.mrb[0].mxu0
  %v4573 = vadd.f32 0.0, %v4572
  %v4574 = vpop.f32.mrb[0].mxu0
  %4575 = vdwg.mxu0
  %4576 = vmatprep.subr.mxu0 0.0
  %v4577 = vand.u32 %v3788, 4294901760
  %v4578 = vsub.f32 %v3788, %v4577
  %v4579 = vand.u32 %v4578, 4294901760
  %v4580 = vsub.f32 %v4578, %v4579
  %v4581 = vand.u32 %v4580, 4294901760
  %4582 = vmatpush1.msra.mxu0 %v4581
  %4583 = vmatprep.subr.mxu0 0.0
  %v4584 = vand.u32 %v3789, 4294901760
  %v4585 = vsub.f32 %v3789, %v4584
  %v4586 = vand.u32 %v4585, 4294901760
  %v4587 = vsub.f32 %v4585, %v4586
  %v4588 = vand.u32 %v4587, 4294901760
  %4589 = vmatpush1.msra.mxu0 %v4588
  %4590 = vmatprep.subr.mxu0 0.0
  %v4591 = vand.u32 %v3790, 4294901760
  %v4592 = vsub.f32 %v3790, %v4591
  %v4593 = vand.u32 %v4592, 4294901760
  %v4594 = vsub.f32 %v4592, %v4593
  %v4595 = vand.u32 %v4594, 4294901760
  %4596 = vmatpush1.msra.mxu0 %v4595
  %4597 = vmatprep.subr.mxu0 0.0
  %v4598 = vand.u32 %v3791, 4294901760
  %v4599 = vsub.f32 %v3791, %v4598
  %v4600 = vand.u32 %v4599, 4294901760
  %v4601 = vsub.f32 %v4599, %v4600
  %v4602 = vand.u32 %v4601, 4294901760
  %4603 = vmatpush1.msra.mxu0 %v4602
  %4604 = vmatprep.subr.mxu0 0.0
  %v4605 = vand.u32 %v3792, 4294901760
  %v4606 = vsub.f32 %v3792, %v4605
  %v4607 = vand.u32 %v4606, 4294901760
  %v4608 = vsub.f32 %v4606, %v4607
  %v4609 = vand.u32 %v4608, 4294901760
  %4610 = vmatpush1.msra.mxu0 %v4609
  %4611 = vmatprep.subr.mxu0 0.0
  %v4612 = vand.u32 %v3793, 4294901760
  %v4613 = vsub.f32 %v3793, %v4612
  %v4614 = vand.u32 %v4613, 4294901760
  %v4615 = vsub.f32 %v4613, %v4614
  %v4616 = vand.u32 %v4615, 4294901760
  %4617 = vmatpush1.msra.mxu0 %v4616
  %4618 = vmatprep.subr.mxu0 0.0
  %v4619 = vand.u32 %v3794, 4294901760
  %v4620 = vsub.f32 %v3794, %v4619
  %v4621 = vand.u32 %v4620, 4294901760
  %v4622 = vsub.f32 %v4620, %v4621
  %v4623 = vand.u32 %v4622, 4294901760
  %4624 = vmatpush1.msra.mxu0 %v4623
  %4625 = vmatprep.subr.mxu0 0.0
  %v4626 = vand.u32 %v3795, 4294901760
  %v4627 = vsub.f32 %v3795, %v4626
  %v4628 = vand.u32 %v4627, 4294901760
  %v4629 = vsub.f32 %v4627, %v4628
  %v4630 = vand.u32 %v4629, 4294901760
  %4631 = vmatpush1.msra.mxu0 %v4630
  %4632 = vmatprep.subr.mxu0 0.0
  %v4633 = vand.u32 %v3796, 4294901760
  %v4634 = vsub.f32 %v3796, %v4633
  %v4635 = vand.u32 %v4634, 4294901760
  %v4636 = vsub.f32 %v4634, %v4635
  %v4637 = vand.u32 %v4636, 4294901760
  %4638 = vmatpush1.msra.mxu0 %v4637
  %4639 = vmatprep.subr.mxu0 0.0
  %v4640 = vand.u32 %v3797, 4294901760
  %v4641 = vsub.f32 %v3797, %v4640
  %v4642 = vand.u32 %v4641, 4294901760
  %v4643 = vsub.f32 %v4641, %v4642
  %v4644 = vand.u32 %v4643, 4294901760
  %4645 = vmatpush1.msra.mxu0 %v4644
  %4646 = vmatprep.subr.mxu0 0.0
  %v4647 = vand.u32 %v3798, 4294901760
  %v4648 = vsub.f32 %v3798, %v4647
  %v4649 = vand.u32 %v4648, 4294901760
  %v4650 = vsub.f32 %v4648, %v4649
  %v4651 = vand.u32 %v4650, 4294901760
  %4652 = vmatpush1.msra.mxu0 %v4651
  %4653 = vmatprep.subr.mxu0 0.0
  %v4654 = vand.u32 %v3799, 4294901760
  %v4655 = vsub.f32 %v3799, %v4654
  %v4656 = vand.u32 %v4655, 4294901760
  %v4657 = vsub.f32 %v4655, %v4656
  %v4658 = vand.u32 %v4657, 4294901760
  %4659 = vmatpush1.msra.mxu0 %v4658
  %4660 = vmatprep.subr.mxu0 0.0
  %v4661 = vand.u32 %v3800, 4294901760
  %v4662 = vsub.f32 %v3800, %v4661
  %v4663 = vand.u32 %v4662, 4294901760
  %v4664 = vsub.f32 %v4662, %v4663
  %v4665 = vand.u32 %v4664, 4294901760
  %4666 = vmatpush1.msra.mxu0 %v4665
  %4667 = vmatprep.subr.mxu0 0.0
  %v4668 = vand.u32 %v3801, 4294901760
  %v4669 = vsub.f32 %v3801, %v4668
  %v4670 = vand.u32 %v4669, 4294901760
  %v4671 = vsub.f32 %v4669, %v4670
  %v4672 = vand.u32 %v4671, 4294901760
  %4673 = vmatpush1.msra.mxu0 %v4672
  %4674 = vmatprep.subr.mxu0 0.0
  %v4675 = vand.u32 %v3802, 4294901760
  %v4676 = vsub.f32 %v3802, %v4675
  %v4677 = vand.u32 %v4676, 4294901760
  %v4678 = vsub.f32 %v4676, %v4677
  %v4679 = vand.u32 %v4678, 4294901760
  %4680 = vmatpush1.msra.mxu0 %v4679
  %4681 = vmatprep.subr.mxu0 0.0
  %v4682 = vand.u32 %v3803, 4294901760
  %v4683 = vsub.f32 %v3803, %v4682
  %v4684 = vand.u32 %v4683, 4294901760
  %v4685 = vsub.f32 %v4683, %v4684
  %v4686 = vand.u32 %v4685, 4294901760
  %4687 = vmatpush1.msra.mxu0 %v4686
  %4688 = vmatprep.subr.mxu0 0.0
  %4689 = vmatpush1.msra.mxu0 0.0
  %4690 = vmatprep.subr.mxu0 0.0
  %4691 = vmatpush1.msra.mxu0 0.0
  %4692 = vmatprep.subr.mxu0 0.0
  %4693 = vmatpush1.msra.mxu0 0.0
  %4694 = vmatprep.subr.mxu0 0.0
  %4695 = vmatpush1.msra.mxu0 0.0
  %4696 = vmatprep.subr.mxu0 0.0
  %4697 = vmatpush1.msra.mxu0 0.0
  %4698 = vmatprep.subr.mxu0 0.0
  %4699 = vmatpush1.msra.mxu0 0.0
  %4700 = vmatprep.subr.mxu0 0.0
  %4701 = vmatpush1.msra.mxu0 0.0
  %4702 = vmatprep.subr.mxu0 0.0
  %4703 = vmatpush1.msra.mxu0 0.0
  %4704 = vmatprep.subr.mxu0 0.0
  %4705 = vmatpush1.msra.mxu0 0.0
  %4706 = vmatprep.subr.mxu0 0.0
  %4707 = vmatpush1.msra.mxu0 0.0
  %4708 = vmatprep.subr.mxu0 0.0
  %4709 = vmatpush1.msra.mxu0 0.0
  %4710 = vmatprep.subr.mxu0 0.0
  %4711 = vmatpush1.msra.mxu0 0.0
  %4712 = vmatprep.subr.mxu0 0.0
  %4713 = vmatpush1.msra.mxu0 0.0
  %4714 = vmatprep.subr.mxu0 0.0
  %4715 = vmatpush1.msra.mxu0 0.0
  %4716 = vmatprep.subr.mxu0 0.0
  %4717 = vmatpush1.msra.mxu0 0.0
  %4718 = vmatprep.subr.mxu0 0.0
  %4719 = vmatpush1.msra.mxu0 0.0
  %4720 = vmatprep.mubr.f32.mxu0 0.0
  %v4721 = vand.u32 %v4319, 4294901760
  %4722 = vmatmul.mubr.f32.gmra.mrb[0].mxu0 %v4721
  %v4723 = vpop.f32.mrb[0].mxu0
  %v4724 = vadd.f32 %v4423, %v4723
  %v4725 = vpop.f32.mrb[0].mxu0
  %4726 = vmatprep.mubr.f32.mxu0 0.0
  %v4727 = vand.u32 %v4320, 4294901760
  %4728 = vmatmul.mubr.f32.gmra.mrb[0].mxu0 %v4727
  %v4729 = vpop.f32.mrb[0].mxu0
  %v4730 = vadd.f32 %v4433, %v4729
  %v4731 = vpop.f32.mrb[0].mxu0
  %4732 = vmatprep.mubr.f32.mxu0 0.0
  %v4733 = vand.u32 %v4321, 4294901760
  %4734 = vmatmul.mubr.f32.gmra.mrb[0].mxu0 %v4733
  %v4735 = vpop.f32.mrb[0].mxu0
  %v4736 = vadd.f32 %v4443, %v4735
  %v4737 = vpop.f32.mrb[0].mxu0
  %4738 = vmatprep.mubr.f32.mxu0 0.0
  %v4739 = vand.u32 %v4322, 4294901760
  %4740 = vmatmul.mubr.f32.gmra.mrb[0].mxu0 %v4739
  %v4741 = vpop.f32.mrb[0].mxu0
  %v4742 = vadd.f32 %v4453, %v4741
  %v4743 = vpop.f32.mrb[0].mxu0
  %4744 = vmatprep.mubr.f32.mxu0 0.0
  %v4745 = vand.u32 %v4323, 4294901760
  %4746 = vmatmul.mubr.f32.gmra.mrb[0].mxu0 %v4745
  %v4747 = vpop.f32.mrb[0].mxu0
  %v4748 = vadd.f32 %v4463, %v4747
  %v4749 = vpop.f32.mrb[0].mxu0
  %4750 = vmatprep.mubr.f32.mxu0 0.0
  %v4751 = vand.u32 %v4324, 4294901760
  %4752 = vmatmul.mubr.f32.gmra.mrb[0].mxu0 %v4751
  %v4753 = vpop.f32.mrb[0].mxu0
  %v4754 = vadd.f32 %v4473, %v4753
  %v4755 = vpop.f32.mrb[0].mxu0
  %4756 = vmatprep.mubr.f32.mxu0 0.0
  %v4757 = vand.u32 %v4325, 4294901760
  %4758 = vmatmul.mubr.f32.gmra.mrb[0].mxu0 %v4757
  %v4759 = vpop.f32.mrb[0].mxu0
  %v4760 = vadd.f32 %v4483, %v4759
  %v4761 = vpop.f32.mrb[0].mxu0
  %4762 = vmatprep.mubr.f32.mxu0 0.0
  %v4763 = vand.u32 %v4326, 4294901760
  %4764 = vmatmul.mubr.f32.gmra.mrb[0].mxu0 %v4763
  %v4765 = vpop.f32.mrb[0].mxu0
  %v4766 = vadd.f32 %v4493, %v4765
  %v4767 = vpop.f32.mrb[0].mxu0
  %4768 = vmatprep.mubr.f32.mxu0 0.0
  %v4769 = vand.u32 %v4327, 4294901760
  %4770 = vmatmul.mubr.f32.gmra.mrb[0].mxu0 %v4769
  %v4771 = vpop.f32.mrb[0].mxu0
  %v4772 = vadd.f32 %v4503, %v4771
  %v4773 = vpop.f32.mrb[0].mxu0
  %4774 = vmatprep.mubr.f32.mxu0 0.0
  %v4775 = vand.u32 %v4328, 4294901760
  %4776 = vmatmul.mubr.f32.gmra.mrb[0].mxu0 %v4775
  %v4777 = vpop.f32.mrb[0].mxu0
  %v4778 = vadd.f32 %v4513, %v4777
  %v4779 = vpop.f32.mrb[0].mxu0
  %4780 = vmatprep.mubr.f32.mxu0 0.0
  %v4781 = vand.u32 %v4329, 4294901760
  %4782 = vmatmul.mubr.f32.gmra.mrb[0].mxu0 %v4781
  %v4783 = vpop.f32.mrb[0].mxu0
  %v4784 = vadd.f32 %v4523, %v4783
  %v4785 = vpop.f32.mrb[0].mxu0
  %4786 = vmatprep.mubr.f32.mxu0 0.0
  %v4787 = vand.u32 %v4330, 4294901760
  %4788 = vmatmul.mubr.f32.gmra.mrb[0].mxu0 %v4787
  %v4789 = vpop.f32.mrb[0].mxu0
  %v4790 = vadd.f32 %v4533, %v4789
  %v4791 = vpop.f32.mrb[0].mxu0
  %4792 = vmatprep.mubr.f32.mxu0 0.0
  %v4793 = vand.u32 %v4331, 4294901760
  %4794 = vmatmul.mubr.f32.gmra.mrb[0].mxu0 %v4793
  %v4795 = vpop.f32.mrb[0].mxu0
  %v4796 = vadd.f32 %v4543, %v4795
  %v4797 = vpop.f32.mrb[0].mxu0
  %4798 = vmatprep.mubr.f32.mxu0 0.0
  %v4799 = vand.u32 %v4332, 4294901760
  %4800 = vmatmul.mubr.f32.gmra.mrb[0].mxu0 %v4799
  %v4801 = vpop.f32.mrb[0].mxu0
  %v4802 = vadd.f32 %v4553, %v4801
  %v4803 = vpop.f32.mrb[0].mxu0
  %4804 = vmatprep.mubr.f32.mxu0 0.0
  %v4805 = vand.u32 %v4333, 4294901760
  %4806 = vmatmul.mubr.f32.gmra.mrb[0].mxu0 %v4805
  %v4807 = vpop.f32.mrb[0].mxu0
  %v4808 = vadd.f32 %v4563, %v4807
  %v4809 = vpop.f32.mrb[0].mxu0
  %4810 = vmatprep.mubr.f32.mxu0 0.0
  %v4811 = vand.u32 %v4334, 4294901760
  %4812 = vmatmul.mubr.f32.gmra.mrb[0].mxu0 %v4811
  %v4813 = vpop.f32.mrb[0].mxu0
  %v4814 = vadd.f32 %v4573, %v4813
  %v4815 = vpop.f32.mrb[0].mxu0
  %4816 = vdwg.mxu0
  %4817 = vmatprep.subr.mxu0 0.0
  %v4818 = vand.u32 %v3788, 4294901760
  %v4819 = vsub.f32 %v3788, %v4818
  %4820 = vmatpush1.msra.mxu0 %v4819
  %4821 = vmatprep.subr.mxu0 0.0
  %v4822 = vand.u32 %v3789, 4294901760
  %v4823 = vsub.f32 %v3789, %v4822
  %4824 = vmatpush1.msra.mxu0 %v4823
  %4825 = vmatprep.subr.mxu0 0.0
  %v4826 = vand.u32 %v3790, 4294901760
  %v4827 = vsub.f32 %v3790, %v4826
  %4828 = vmatpush1.msra.mxu0 %v4827
  %4829 = vmatprep.subr.mxu0 0.0
  %v4830 = vand.u32 %v3791, 4294901760
  %v4831 = vsub.f32 %v3791, %v4830
  %4832 = vmatpush1.msra.mxu0 %v4831
  %4833 = vmatprep.subr.mxu0 0.0
  %v4834 = vand.u32 %v3792, 4294901760
  %v4835 = vsub.f32 %v3792, %v4834
  %4836 = vmatpush1.msra.mxu0 %v4835
  %4837 = vmatprep.subr.mxu0 0.0
  %v4838 = vand.u32 %v3793, 4294901760
  %v4839 = vsub.f32 %v3793, %v4838
  %4840 = vmatpush1.msra.mxu0 %v4839
  %4841 = vmatprep.subr.mxu0 0.0
  %v4842 = vand.u32 %v3794, 4294901760
  %v4843 = vsub.f32 %v3794, %v4842
  %4844 = vmatpush1.msra.mxu0 %v4843
  %4845 = vmatprep.subr.mxu0 0.0
  %v4846 = vand.u32 %v3795, 4294901760
  %v4847 = vsub.f32 %v3795, %v4846
  %4848 = vmatpush1.msra.mxu0 %v4847
  %4849 = vmatprep.subr.mxu0 0.0
  %v4850 = vand.u32 %v3796, 4294901760
  %v4851 = vsub.f32 %v3796, %v4850
  %4852 = vmatpush1.msra.mxu0 %v4851
  %4853 = vmatprep.subr.mxu0 0.0
  %v4854 = vand.u32 %v3797, 4294901760
  %v4855 = vsub.f32 %v3797, %v4854
  %4856 = vmatpush1.msra.mxu0 %v4855
  %4857 = vmatprep.subr.mxu0 0.0
  %v4858 = vand.u32 %v3798, 4294901760
  %v4859 = vsub.f32 %v3798, %v4858
  %4860 = vmatpush1.msra.mxu0 %v4859
  %4861 = vmatprep.subr.mxu0 0.0
  %v4862 = vand.u32 %v3799, 4294901760
  %v4863 = vsub.f32 %v3799, %v4862
  %4864 = vmatpush1.msra.mxu0 %v4863
  %4865 = vmatprep.subr.mxu0 0.0
  %v4866 = vand.u32 %v3800, 4294901760
  %v4867 = vsub.f32 %v3800, %v4866
  %4868 = vmatpush1.msra.mxu0 %v4867
  %4869 = vmatprep.subr.mxu0 0.0
  %v4870 = vand.u32 %v3801, 4294901760
  %v4871 = vsub.f32 %v3801, %v4870
  %4872 = vmatpush1.msra.mxu0 %v4871
  %4873 = vmatprep.subr.mxu0 0.0
  %v4874 = vand.u32 %v3802, 4294901760
  %v4875 = vsub.f32 %v3802, %v4874
  %4876 = vmatpush1.msra.mxu0 %v4875
  %4877 = vmatprep.subr.mxu0 0.0
  %v4878 = vand.u32 %v3803, 4294901760
  %v4879 = vsub.f32 %v3803, %v4878
  %4880 = vmatpush1.msra.mxu0 %v4879
  %4881 = vmatprep.subr.mxu0 0.0
  %4882 = vmatpush1.msra.mxu0 0.0
  %4883 = vmatprep.subr.mxu0 0.0
  %4884 = vmatpush1.msra.mxu0 0.0
  %4885 = vmatprep.subr.mxu0 0.0
  %4886 = vmatpush1.msra.mxu0 0.0
  %4887 = vmatprep.subr.mxu0 0.0
  %4888 = vmatpush1.msra.mxu0 0.0
  %4889 = vmatprep.subr.mxu0 0.0
  %4890 = vmatpush1.msra.mxu0 0.0
  %4891 = vmatprep.subr.mxu0 0.0
  %4892 = vmatpush1.msra.mxu0 0.0
  %4893 = vmatprep.subr.mxu0 0.0
  %4894 = vmatpush1.msra.mxu0 0.0
  %4895 = vmatprep.subr.mxu0 0.0
  %4896 = vmatpush1.msra.mxu0 0.0
  %4897 = vmatprep.subr.mxu0 0.0
  %4898 = vmatpush1.msra.mxu0 0.0
  %4899 = vmatprep.subr.mxu0 0.0
  %4900 = vmatpush1.msra.mxu0 0.0
  %4901 = vmatprep.subr.mxu0 0.0
  %4902 = vmatpush1.msra.mxu0 0.0
  %4903 = vmatprep.subr.mxu0 0.0
  %4904 = vmatpush1.msra.mxu0 0.0
  %4905 = vmatprep.subr.mxu0 0.0
  %4906 = vmatpush1.msra.mxu0 0.0
  %4907 = vmatprep.subr.mxu0 0.0
  %4908 = vmatpush1.msra.mxu0 0.0
  %4909 = vmatprep.subr.mxu0 0.0
  %4910 = vmatpush1.msra.mxu0 0.0
  %4911 = vmatprep.subr.mxu0 0.0
  %4912 = vmatpush1.msra.mxu0 0.0
  %4913 = vmatprep.mubr.f32.mxu0 0.0
  %v4914 = vand.u32 %v4319, 4294901760
  %v4915 = vsub.f32 %v4319, %v4914
  %4916 = vmatmul.mubr.f32.gmra.mrb[0].mxu0 %v4915
  %v4917 = vpop.f32.mrb[0].mxu0
  %v4918 = vadd.f32 %v4724, %v4917
  %v4919 = vpop.f32.mrb[0].mxu0
  %4920 = vmatprep.mubr.f32.mxu0 0.0
  %v4921 = vand.u32 %v4320, 4294901760
  %v4922 = vsub.f32 %v4320, %v4921
  %4923 = vmatmul.mubr.f32.gmra.mrb[0].mxu0 %v4922
  %v4924 = vpop.f32.mrb[0].mxu0
  %v4925 = vadd.f32 %v4730, %v4924
  %v4926 = vpop.f32.mrb[0].mxu0
  %4927 = vmatprep.mubr.f32.mxu0 0.0
  %v4928 = vand.u32 %v4321, 4294901760
  %v4929 = vsub.f32 %v4321, %v4928
  %4930 = vmatmul.mubr.f32.gmra.mrb[0].mxu0 %v4929
  %v4931 = vpop.f32.mrb[0].mxu0
  %v4932 = vadd.f32 %v4736, %v4931
  %v4933 = vpop.f32.mrb[0].mxu0
  %4934 = vmatprep.mubr.f32.mxu0 0.0
  %v4935 = vand.u32 %v4322, 4294901760
  %v4936 = vsub.f32 %v4322, %v4935
  %4937 = vmatmul.mubr.f32.gmra.mrb[0].mxu0 %v4936
  %v4938 = vpop.f32.mrb[0].mxu0
  %v4939 = vadd.f32 %v4742, %v4938
  %v4940 = vpop.f32.mrb[0].mxu0
  %4941 = vmatprep.mubr.f32.mxu0 0.0
  %v4942 = vand.u32 %v4323, 4294901760
  %v4943 = vsub.f32 %v4323, %v4942
  %4944 = vmatmul.mubr.f32.gmra.mrb[0].mxu0 %v4943
  %v4945 = vpop.f32.mrb[0].mxu0
  %v4946 = vadd.f32 %v4748, %v4945
  %v4947 = vpop.f32.mrb[0].mxu0
  %4948 = vmatprep.mubr.f32.mxu0 0.0
  %v4949 = vand.u32 %v4324, 4294901760
  %v4950 = vsub.f32 %v4324, %v4949
  %4951 = vmatmul.mubr.f32.gmra.mrb[0].mxu0 %v4950
  %v4952 = vpop.f32.mrb[0].mxu0
  %v4953 = vadd.f32 %v4754, %v4952
  %v4954 = vpop.f32.mrb[0].mxu0
  %4955 = vmatprep.mubr.f32.mxu0 0.0
  %v4956 = vand.u32 %v4325, 4294901760
  %v4957 = vsub.f32 %v4325, %v4956
  %4958 = vmatmul.mubr.f32.gmra.mrb[0].mxu0 %v4957
  %v4959 = vpop.f32.mrb[0].mxu0
  %v4960 = vadd.f32 %v4760, %v4959
  %v4961 = vpop.f32.mrb[0].mxu0
  %4962 = vmatprep.mubr.f32.mxu0 0.0
  %v4963 = vand.u32 %v4326, 4294901760
  %v4964 = vsub.f32 %v4326, %v4963
  %4965 = vmatmul.mubr.f32.gmra.mrb[0].mxu0 %v4964
  %v4966 = vpop.f32.mrb[0].mxu0
  %v4967 = vadd.f32 %v4766, %v4966
  %v4968 = vpop.f32.mrb[0].mxu0
  %4969 = vmatprep.mubr.f32.mxu0 0.0
  %v4970 = vand.u32 %v4327, 4294901760
  %v4971 = vsub.f32 %v4327, %v4970
  %4972 = vmatmul.mubr.f32.gmra.mrb[0].mxu0 %v4971
  %v4973 = vpop.f32.mrb[0].mxu0
  %v4974 = vadd.f32 %v4772, %v4973
  %v4975 = vpop.f32.mrb[0].mxu0
  %4976 = vmatprep.mubr.f32.mxu0 0.0
  %v4977 = vand.u32 %v4328, 4294901760
  %v4978 = vsub.f32 %v4328, %v4977
  %4979 = vmatmul.mubr.f32.gmra.mrb[0].mxu0 %v4978
  %v4980 = vpop.f32.mrb[0].mxu0
  %v4981 = vadd.f32 %v4778, %v4980
  %v4982 = vpop.f32.mrb[0].mxu0
  %4983 = vmatprep.mubr.f32.mxu0 0.0
  %v4984 = vand.u32 %v4329, 4294901760
  %v4985 = vsub.f32 %v4329, %v4984
  %4986 = vmatmul.mubr.f32.gmra.mrb[0].mxu0 %v4985
  %v4987 = vpop.f32.mrb[0].mxu0
  %v4988 = vadd.f32 %v4784, %v4987
  %v4989 = vpop.f32.mrb[0].mxu0
  %4990 = vmatprep.mubr.f32.mxu0 0.0
  %v4991 = vand.u32 %v4330, 4294901760
  %v4992 = vsub.f32 %v4330, %v4991
  %4993 = vmatmul.mubr.f32.gmra.mrb[0].mxu0 %v4992
  %v4994 = vpop.f32.mrb[0].mxu0
  %v4995 = vadd.f32 %v4790, %v4994
  %v4996 = vpop.f32.mrb[0].mxu0
  %4997 = vmatprep.mubr.f32.mxu0 0.0
  %v4998 = vand.u32 %v4331, 4294901760
  %v4999 = vsub.f32 %v4331, %v4998
  %5000 = vmatmul.mubr.f32.gmra.mrb[0].mxu0 %v4999
  %v5001 = vpop.f32.mrb[0].mxu0
  %v5002 = vadd.f32 %v4796, %v5001
  %v5003 = vpop.f32.mrb[0].mxu0
  %5004 = vmatprep.mubr.f32.mxu0 0.0
  %v5005 = vand.u32 %v4332, 4294901760
  %v5006 = vsub.f32 %v4332, %v5005
  %5007 = vmatmul.mubr.f32.gmra.mrb[0].mxu0 %v5006
  %v5008 = vpop.f32.mrb[0].mxu0
  %v5009 = vadd.f32 %v4802, %v5008
  %v5010 = vpop.f32.mrb[0].mxu0
  %5011 = vmatprep.mubr.f32.mxu0 0.0
  %v5012 = vand.u32 %v4333, 4294901760
  %v5013 = vsub.f32 %v4333, %v5012
  %5014 = vmatmul.mubr.f32.gmra.mrb[0].mxu0 %v5013
  %v5015 = vpop.f32.mrb[0].mxu0
  %v5016 = vadd.f32 %v4808, %v5015
  %v5017 = vpop.f32.mrb[0].mxu0
  %5018 = vmatprep.mubr.f32.mxu0 0.0
  %v5019 = vand.u32 %v4334, 4294901760
  %v5020 = vsub.f32 %v4334, %v5019
  %5021 = vmatmul.mubr.f32.gmra.mrb[0].mxu0 %v5020
  %v5022 = vpop.f32.mrb[0].mxu0
  %v5023 = vadd.f32 %v4814, %v5022
  %v5024 = vpop.f32.mrb[0].mxu0
  %5025 = vdwg.mxu0
  %5026 = vmatprep.subr.mxu0 0.0
  %v5027 = vand.u32 %v3788, 4294901760
  %5028 = vmatpush1.msra.mxu0 %v5027
  %5029 = vmatprep.subr.mxu0 0.0
  %v5030 = vand.u32 %v3789, 4294901760
  %5031 = vmatpush1.msra.mxu0 %v5030
  %5032 = vmatprep.subr.mxu0 0.0
  %v5033 = vand.u32 %v3790, 4294901760
  %5034 = vmatpush1.msra.mxu0 %v5033
  %5035 = vmatprep.subr.mxu0 0.0
  %v5036 = vand.u32 %v3791, 4294901760
  %5037 = vmatpush1.msra.mxu0 %v5036
  %5038 = vmatprep.subr.mxu0 0.0
  %v5039 = vand.u32 %v3792, 4294901760
  %5040 = vmatpush1.msra.mxu0 %v5039
  %5041 = vmatprep.subr.mxu0 0.0
  %v5042 = vand.u32 %v3793, 4294901760
  %5043 = vmatpush1.msra.mxu0 %v5042
  %5044 = vmatprep.subr.mxu0 0.0
  %v5045 = vand.u32 %v3794, 4294901760
  %5046 = vmatpush1.msra.mxu0 %v5045
  %5047 = vmatprep.subr.mxu0 0.0
  %v5048 = vand.u32 %v3795, 4294901760
  %5049 = vmatpush1.msra.mxu0 %v5048
  %5050 = vmatprep.subr.mxu0 0.0
  %v5051 = vand.u32 %v3796, 4294901760
  %5052 = vmatpush1.msra.mxu0 %v5051
  %5053 = vmatprep.subr.mxu0 0.0
  %v5054 = vand.u32 %v3797, 4294901760
  %5055 = vmatpush1.msra.mxu0 %v5054
  %5056 = vmatprep.subr.mxu0 0.0
  %v5057 = vand.u32 %v3798, 4294901760
  %5058 = vmatpush1.msra.mxu0 %v5057
  %5059 = vmatprep.subr.mxu0 0.0
  %v5060 = vand.u32 %v3799, 4294901760
  %5061 = vmatpush1.msra.mxu0 %v5060
  %5062 = vmatprep.subr.mxu0 0.0
  %v5063 = vand.u32 %v3800, 4294901760
  %5064 = vmatpush1.msra.mxu0 %v5063
  %5065 = vmatprep.subr.mxu0 0.0
  %v5066 = vand.u32 %v3801, 4294901760
  %5067 = vmatpush1.msra.mxu0 %v5066
  %5068 = vmatprep.subr.mxu0 0.0
  %v5069 = vand.u32 %v3802, 4294901760
  %5070 = vmatpush1.msra.mxu0 %v5069
  %5071 = vmatprep.subr.mxu0 0.0
  %v5072 = vand.u32 %v3803, 4294901760
  %5073 = vmatpush1.msra.mxu0 %v5072
  %5074 = vmatprep.subr.mxu0 0.0
  %5075 = vmatpush1.msra.mxu0 0.0
  %5076 = vmatprep.subr.mxu0 0.0
  %5077 = vmatpush1.msra.mxu0 0.0
  %5078 = vmatprep.subr.mxu0 0.0
  %5079 = vmatpush1.msra.mxu0 0.0
  %5080 = vmatprep.subr.mxu0 0.0
  %5081 = vmatpush1.msra.mxu0 0.0
  %5082 = vmatprep.subr.mxu0 0.0
  %5083 = vmatpush1.msra.mxu0 0.0
  %5084 = vmatprep.subr.mxu0 0.0
  %5085 = vmatpush1.msra.mxu0 0.0
  %5086 = vmatprep.subr.mxu0 0.0
  %5087 = vmatpush1.msra.mxu0 0.0
  %5088 = vmatprep.subr.mxu0 0.0
  %5089 = vmatpush1.msra.mxu0 0.0
  %5090 = vmatprep.subr.mxu0 0.0
  %5091 = vmatpush1.msra.mxu0 0.0
  %5092 = vmatprep.subr.mxu0 0.0
  %5093 = vmatpush1.msra.mxu0 0.0
  %5094 = vmatprep.subr.mxu0 0.0
  %5095 = vmatpush1.msra.mxu0 0.0
  %5096 = vmatprep.subr.mxu0 0.0
  %5097 = vmatpush1.msra.mxu0 0.0
  %5098 = vmatprep.subr.mxu0 0.0
  %5099 = vmatpush1.msra.mxu0 0.0
  %5100 = vmatprep.subr.mxu0 0.0
  %5101 = vmatpush1.msra.mxu0 0.0
  %5102 = vmatprep.subr.mxu0 0.0
  %5103 = vmatpush1.msra.mxu0 0.0
  %5104 = vmatprep.subr.mxu0 0.0
  %5105 = vmatpush1.msra.mxu0 0.0
  %5106 = vmatprep.mubr.f32.mxu0 0.0
  %v5107 = vand.u32 %v4319, 4294901760
  %v5108 = vsub.f32 %v4319, %v5107
  %v5109 = vand.u32 %v5108, 4294901760
  %5110 = vmatmul.mubr.f32.gmra.mrb[0].mxu0 %v5109
  %v5111 = vpop.f32.mrb[0].mxu0
  %v5112 = vadd.f32 %v4918, %v5111
  %v5113 = vpop.f32.mrb[0].mxu0
  %5114 = vmatprep.mubr.f32.mxu0 0.0
  %v5115 = vand.u32 %v4320, 4294901760
  %v5116 = vsub.f32 %v4320, %v5115
  %v5117 = vand.u32 %v5116, 4294901760
  %5118 = vmatmul.mubr.f32.gmra.mrb[0].mxu0 %v5117
  %v5119 = vpop.f32.mrb[0].mxu0
  %v5120 = vadd.f32 %v4925, %v5119
  %v5121 = vpop.f32.mrb[0].mxu0
  %5122 = vmatprep.mubr.f32.mxu0 0.0
  %v5123 = vand.u32 %v4321, 4294901760
  %v5124 = vsub.f32 %v4321, %v5123
  %v5125 = vand.u32 %v5124, 4294901760
  %5126 = vmatmul.mubr.f32.gmra.mrb[0].mxu0 %v5125
  %v5127 = vpop.f32.mrb[0].mxu0
  %v5128 = vadd.f32 %v4932, %v5127
  %v5129 = vpop.f32.mrb[0].mxu0
  %5130 = vmatprep.mubr.f32.mxu0 0.0
  %v5131 = vand.u32 %v4322, 4294901760
  %v5132 = vsub.f32 %v4322, %v5131
  %v5133 = vand.u32 %v5132, 4294901760
  %5134 = vmatmul.mubr.f32.gmra.mrb[0].mxu0 %v5133
  %v5135 = vpop.f32.mrb[0].mxu0
  %v5136 = vadd.f32 %v4939, %v5135
  %v5137 = vpop.f32.mrb[0].mxu0
  %5138 = vmatprep.mubr.f32.mxu0 0.0
  %v5139 = vand.u32 %v4323, 4294901760
  %v5140 = vsub.f32 %v4323, %v5139
  %v5141 = vand.u32 %v5140, 4294901760
  %5142 = vmatmul.mubr.f32.gmra.mrb[0].mxu0 %v5141
  %v5143 = vpop.f32.mrb[0].mxu0
  %v5144 = vadd.f32 %v4946, %v5143
  %v5145 = vpop.f32.mrb[0].mxu0
  %5146 = vmatprep.mubr.f32.mxu0 0.0
  %v5147 = vand.u32 %v4324, 4294901760
  %v5148 = vsub.f32 %v4324, %v5147
  %v5149 = vand.u32 %v5148, 4294901760
  %5150 = vmatmul.mubr.f32.gmra.mrb[0].mxu0 %v5149
  %v5151 = vpop.f32.mrb[0].mxu0
  %v5152 = vadd.f32 %v4953, %v5151
  %v5153 = vpop.f32.mrb[0].mxu0
  %5154 = vmatprep.mubr.f32.mxu0 0.0
  %v5155 = vand.u32 %v4325, 4294901760
  %v5156 = vsub.f32 %v4325, %v5155
  %v5157 = vand.u32 %v5156, 4294901760
  %5158 = vmatmul.mubr.f32.gmra.mrb[0].mxu0 %v5157
  %v5159 = vpop.f32.mrb[0].mxu0
  %v5160 = vadd.f32 %v4960, %v5159
  %v5161 = vpop.f32.mrb[0].mxu0
  %5162 = vmatprep.mubr.f32.mxu0 0.0
  %v5163 = vand.u32 %v4326, 4294901760
  %v5164 = vsub.f32 %v4326, %v5163
  %v5165 = vand.u32 %v5164, 4294901760
  %5166 = vmatmul.mubr.f32.gmra.mrb[0].mxu0 %v5165
  %v5167 = vpop.f32.mrb[0].mxu0
  %v5168 = vadd.f32 %v4967, %v5167
  %v5169 = vpop.f32.mrb[0].mxu0
  %5170 = vmatprep.mubr.f32.mxu0 0.0
  %v5171 = vand.u32 %v4327, 4294901760
  %v5172 = vsub.f32 %v4327, %v5171
  %v5173 = vand.u32 %v5172, 4294901760
  %5174 = vmatmul.mubr.f32.gmra.mrb[0].mxu0 %v5173
  %v5175 = vpop.f32.mrb[0].mxu0
  %v5176 = vadd.f32 %v4974, %v5175
  %v5177 = vpop.f32.mrb[0].mxu0
  %5178 = vmatprep.mubr.f32.mxu0 0.0
  %v5179 = vand.u32 %v4328, 4294901760
  %v5180 = vsub.f32 %v4328, %v5179
  %v5181 = vand.u32 %v5180, 4294901760
  %5182 = vmatmul.mubr.f32.gmra.mrb[0].mxu0 %v5181
  %v5183 = vpop.f32.mrb[0].mxu0
  %v5184 = vadd.f32 %v4981, %v5183
  %v5185 = vpop.f32.mrb[0].mxu0
  %5186 = vmatprep.mubr.f32.mxu0 0.0
  %v5187 = vand.u32 %v4329, 4294901760
  %v5188 = vsub.f32 %v4329, %v5187
  %v5189 = vand.u32 %v5188, 4294901760
  %5190 = vmatmul.mubr.f32.gmra.mrb[0].mxu0 %v5189
  %v5191 = vpop.f32.mrb[0].mxu0
  %v5192 = vadd.f32 %v4988, %v5191
  %v5193 = vpop.f32.mrb[0].mxu0
  %5194 = vmatprep.mubr.f32.mxu0 0.0
  %v5195 = vand.u32 %v4330, 4294901760
  %v5196 = vsub.f32 %v4330, %v5195
  %v5197 = vand.u32 %v5196, 4294901760
  %5198 = vmatmul.mubr.f32.gmra.mrb[0].mxu0 %v5197
  %v5199 = vpop.f32.mrb[0].mxu0
  %v5200 = vadd.f32 %v4995, %v5199
  %v5201 = vpop.f32.mrb[0].mxu0
  %5202 = vmatprep.mubr.f32.mxu0 0.0
  %v5203 = vand.u32 %v4331, 4294901760
  %v5204 = vsub.f32 %v4331, %v5203
  %v5205 = vand.u32 %v5204, 4294901760
  %5206 = vmatmul.mubr.f32.gmra.mrb[0].mxu0 %v5205
  %v5207 = vpop.f32.mrb[0].mxu0
  %v5208 = vadd.f32 %v5002, %v5207
  %v5209 = vpop.f32.mrb[0].mxu0
  %5210 = vmatprep.mubr.f32.mxu0 0.0
  %v5211 = vand.u32 %v4332, 4294901760
  %v5212 = vsub.f32 %v4332, %v5211
  %v5213 = vand.u32 %v5212, 4294901760
  %5214 = vmatmul.mubr.f32.gmra.mrb[0].mxu0 %v5213
  %v5215 = vpop.f32.mrb[0].mxu0
  %v5216 = vadd.f32 %v5009, %v5215
  %v5217 = vpop.f32.mrb[0].mxu0
  %5218 = vmatprep.mubr.f32.mxu0 0.0
  %v5219 = vand.u32 %v4333, 4294901760
  %v5220 = vsub.f32 %v4333, %v5219
  %v5221 = vand.u32 %v5220, 4294901760
  %5222 = vmatmul.mubr.f32.gmra.mrb[0].mxu0 %v5221
  %v5223 = vpop.f32.mrb[0].mxu0
  %v5224 = vadd.f32 %v5016, %v5223
  %v5225 = vpop.f32.mrb[0].mxu0
  %5226 = vmatprep.mubr.f32.mxu0 0.0
  %v5227 = vand.u32 %v4334, 4294901760
  %v5228 = vsub.f32 %v4334, %v5227
  %v5229 = vand.u32 %v5228, 4294901760
  %5230 = vmatmul.mubr.f32.gmra.mrb[0].mxu0 %v5229
  %v5231 = vpop.f32.mrb[0].mxu0
  %v5232 = vadd.f32 %v5023, %v5231
  %v5233 = vpop.f32.mrb[0].mxu0
  %5234 = vdwg.mxu0
  %5235 = vmatprep.subr.mxu0 0.0
  %v5236 = vand.u32 %v3788, 4294901760
  %v5237 = vsub.f32 %v3788, %v5236
  %v5238 = vand.u32 %v5237, 4294901760
  %5239 = vmatpush1.msra.mxu0 %v5238
  %5240 = vmatprep.subr.mxu0 0.0
  %v5241 = vand.u32 %v3789, 4294901760
  %v5242 = vsub.f32 %v3789, %v5241
  %v5243 = vand.u32 %v5242, 4294901760
  %5244 = vmatpush1.msra.mxu0 %v5243
  %5245 = vmatprep.subr.mxu0 0.0
  %v5246 = vand.u32 %v3790, 4294901760
  %v5247 = vsub.f32 %v3790, %v5246
  %v5248 = vand.u32 %v5247, 4294901760
  %5249 = vmatpush1.msra.mxu0 %v5248
  %5250 = vmatprep.subr.mxu0 0.0
  %v5251 = vand.u32 %v3791, 4294901760
  %v5252 = vsub.f32 %v3791, %v5251
  %v5253 = vand.u32 %v5252, 4294901760
  %5254 = vmatpush1.msra.mxu0 %v5253
  %5255 = vmatprep.subr.mxu0 0.0
  %v5256 = vand.u32 %v3792, 4294901760
  %v5257 = vsub.f32 %v3792, %v5256
  %v5258 = vand.u32 %v5257, 4294901760
  %5259 = vmatpush1.msra.mxu0 %v5258
  %5260 = vmatprep.subr.mxu0 0.0
  %v5261 = vand.u32 %v3793, 4294901760
  %v5262 = vsub.f32 %v3793, %v5261
  %v5263 = vand.u32 %v5262, 4294901760
  %5264 = vmatpush1.msra.mxu0 %v5263
  %5265 = vmatprep.subr.mxu0 0.0
  %v5266 = vand.u32 %v3794, 4294901760
  %v5267 = vsub.f32 %v3794, %v5266
  %v5268 = vand.u32 %v5267, 4294901760
  %5269 = vmatpush1.msra.mxu0 %v5268
  %5270 = vmatprep.subr.mxu0 0.0
  %v5271 = vand.u32 %v3795, 4294901760
  %v5272 = vsub.f32 %v3795, %v5271
  %v5273 = vand.u32 %v5272, 4294901760
  %5274 = vmatpush1.msra.mxu0 %v5273
  %5275 = vmatprep.subr.mxu0 0.0
  %v5276 = vand.u32 %v3796, 4294901760
  %v5277 = vsub.f32 %v3796, %v5276
  %v5278 = vand.u32 %v5277, 4294901760
  %5279 = vmatpush1.msra.mxu0 %v5278
  %5280 = vmatprep.subr.mxu0 0.0
  %v5281 = vand.u32 %v3797, 4294901760
  %v5282 = vsub.f32 %v3797, %v5281
  %v5283 = vand.u32 %v5282, 4294901760
  %5284 = vmatpush1.msra.mxu0 %v5283
  %5285 = vmatprep.subr.mxu0 0.0
  %v5286 = vand.u32 %v3798, 4294901760
  %v5287 = vsub.f32 %v3798, %v5286
  %v5288 = vand.u32 %v5287, 4294901760
  %5289 = vmatpush1.msra.mxu0 %v5288
  %5290 = vmatprep.subr.mxu0 0.0
  %v5291 = vand.u32 %v3799, 4294901760
  %v5292 = vsub.f32 %v3799, %v5291
  %v5293 = vand.u32 %v5292, 4294901760
  %5294 = vmatpush1.msra.mxu0 %v5293
  %5295 = vmatprep.subr.mxu0 0.0
  %v5296 = vand.u32 %v3800, 4294901760
  %v5297 = vsub.f32 %v3800, %v5296
  %v5298 = vand.u32 %v5297, 4294901760
  %5299 = vmatpush1.msra.mxu0 %v5298
  %5300 = vmatprep.subr.mxu0 0.0
  %v5301 = vand.u32 %v3801, 4294901760
  %v5302 = vsub.f32 %v3801, %v5301
  %v5303 = vand.u32 %v5302, 4294901760
  %5304 = vmatpush1.msra.mxu0 %v5303
  %5305 = vmatprep.subr.mxu0 0.0
  %v5306 = vand.u32 %v3802, 4294901760
  %v5307 = vsub.f32 %v3802, %v5306
  %v5308 = vand.u32 %v5307, 4294901760
  %5309 = vmatpush1.msra.mxu0 %v5308
  %5310 = vmatprep.subr.mxu0 0.0
  %v5311 = vand.u32 %v3803, 4294901760
  %v5312 = vsub.f32 %v3803, %v5311
  %v5313 = vand.u32 %v5312, 4294901760
  %5314 = vmatpush1.msra.mxu0 %v5313
  %5315 = vmatprep.subr.mxu0 0.0
  %5316 = vmatpush1.msra.mxu0 0.0
  %5317 = vmatprep.subr.mxu0 0.0
  %5318 = vmatpush1.msra.mxu0 0.0
  %5319 = vmatprep.subr.mxu0 0.0
  %5320 = vmatpush1.msra.mxu0 0.0
  %5321 = vmatprep.subr.mxu0 0.0
  %5322 = vmatpush1.msra.mxu0 0.0
  %5323 = vmatprep.subr.mxu0 0.0
  %5324 = vmatpush1.msra.mxu0 0.0
  %5325 = vmatprep.subr.mxu0 0.0
  %5326 = vmatpush1.msra.mxu0 0.0
  %5327 = vmatprep.subr.mxu0 0.0
  %5328 = vmatpush1.msra.mxu0 0.0
  %5329 = vmatprep.subr.mxu0 0.0
  %5330 = vmatpush1.msra.mxu0 0.0
  %5331 = vmatprep.subr.mxu0 0.0
  %5332 = vmatpush1.msra.mxu0 0.0
  %5333 = vmatprep.subr.mxu0 0.0
  %5334 = vmatpush1.msra.mxu0 0.0
  %5335 = vmatprep.subr.mxu0 0.0
  %5336 = vmatpush1.msra.mxu0 0.0
  %5337 = vmatprep.subr.mxu0 0.0
  %5338 = vmatpush1.msra.mxu0 0.0
  %5339 = vmatprep.subr.mxu0 0.0
  %5340 = vmatpush1.msra.mxu0 0.0
  %5341 = vmatprep.subr.mxu0 0.0
  %5342 = vmatpush1.msra.mxu0 0.0
  %5343 = vmatprep.subr.mxu0 0.0
  %5344 = vmatpush1.msra.mxu0 0.0
  %5345 = vmatprep.subr.mxu0 0.0
  %5346 = vmatpush1.msra.mxu0 0.0
  %5347 = vmatprep.mubr.f32.mxu0 0.0
  %v5348 = vand.u32 %v4319, 4294901760
  %5349 = vmatmul.mubr.f32.gmra.mrb[0].mxu0 %v5348
  %v5350 = vpop.f32.mrb[0].mxu0
  %v5351 = vadd.f32 %v5112, %v5350
  %v5352 = vpop.f32.mrb[0].mxu0
  %5353 = vmatprep.mubr.f32.mxu0 0.0
  %v5354 = vand.u32 %v4320, 4294901760
  %5355 = vmatmul.mubr.f32.gmra.mrb[0].mxu0 %v5354
  %v5356 = vpop.f32.mrb[0].mxu0
  %v5357 = vadd.f32 %v5120, %v5356
  %v5358 = vpop.f32.mrb[0].mxu0
  %5359 = vmatprep.mubr.f32.mxu0 0.0
  %v5360 = vand.u32 %v4321, 4294901760
  %5361 = vmatmul.mubr.f32.gmra.mrb[0].mxu0 %v5360
  %v5362 = vpop.f32.mrb[0].mxu0
  %v5363 = vadd.f32 %v5128, %v5362
  %v5364 = vpop.f32.mrb[0].mxu0
  %5365 = vmatprep.mubr.f32.mxu0 0.0
  %v5366 = vand.u32 %v4322, 4294901760
  %5367 = vmatmul.mubr.f32.gmra.mrb[0].mxu0 %v5366
  %v5368 = vpop.f32.mrb[0].mxu0
  %v5369 = vadd.f32 %v5136, %v5368
  %v5370 = vpop.f32.mrb[0].mxu0
  %5371 = vmatprep.mubr.f32.mxu0 0.0
  %v5372 = vand.u32 %v4323, 4294901760
  %5373 = vmatmul.mubr.f32.gmra.mrb[0].mxu0 %v5372
  %v5374 = vpop.f32.mrb[0].mxu0
  %v5375 = vadd.f32 %v5144, %v5374
  %v5376 = vpop.f32.mrb[0].mxu0
  %5377 = vmatprep.mubr.f32.mxu0 0.0
  %v5378 = vand.u32 %v4324, 4294901760
  %5379 = vmatmul.mubr.f32.gmra.mrb[0].mxu0 %v5378
  %v5380 = vpop.f32.mrb[0].mxu0
  %v5381 = vadd.f32 %v5152, %v5380
  %v5382 = vpop.f32.mrb[0].mxu0
  %5383 = vmatprep.mubr.f32.mxu0 0.0
  %v5384 = vand.u32 %v4325, 4294901760
  %5385 = vmatmul.mubr.f32.gmra.mrb[0].mxu0 %v5384
  %v5386 = vpop.f32.mrb[0].mxu0
  %v5387 = vadd.f32 %v5160, %v5386
  %v5388 = vpop.f32.mrb[0].mxu0
  %5389 = vmatprep.mubr.f32.mxu0 0.0
  %v5390 = vand.u32 %v4326, 4294901760
  %5391 = vmatmul.mubr.f32.gmra.mrb[0].mxu0 %v5390
  %v5392 = vpop.f32.mrb[0].mxu0
  %v5393 = vadd.f32 %v5168, %v5392
  %v5394 = vpop.f32.mrb[0].mxu0
  %5395 = vmatprep.mubr.f32.mxu0 0.0
  %v5396 = vand.u32 %v4327, 4294901760
  %5397 = vmatmul.mubr.f32.gmra.mrb[0].mxu0 %v5396
  %v5398 = vpop.f32.mrb[0].mxu0
  %v5399 = vadd.f32 %v5176, %v5398
  %v5400 = vpop.f32.mrb[0].mxu0
  %5401 = vmatprep.mubr.f32.mxu0 0.0
  %v5402 = vand.u32 %v4328, 4294901760
  %5403 = vmatmul.mubr.f32.gmra.mrb[0].mxu0 %v5402
  %v5404 = vpop.f32.mrb[0].mxu0
  %v5405 = vadd.f32 %v5184, %v5404
  %v5406 = vpop.f32.mrb[0].mxu0
  %5407 = vmatprep.mubr.f32.mxu0 0.0
  %v5408 = vand.u32 %v4329, 4294901760
  %5409 = vmatmul.mubr.f32.gmra.mrb[0].mxu0 %v5408
  %v5410 = vpop.f32.mrb[0].mxu0
  %v5411 = vadd.f32 %v5192, %v5410
  %v5412 = vpop.f32.mrb[0].mxu0
  %5413 = vmatprep.mubr.f32.mxu0 0.0
  %v5414 = vand.u32 %v4330, 4294901760
  %5415 = vmatmul.mubr.f32.gmra.mrb[0].mxu0 %v5414
  %v5416 = vpop.f32.mrb[0].mxu0
  %v5417 = vadd.f32 %v5200, %v5416
  %v5418 = vpop.f32.mrb[0].mxu0
  %5419 = vmatprep.mubr.f32.mxu0 0.0
  %v5420 = vand.u32 %v4331, 4294901760
  %5421 = vmatmul.mubr.f32.gmra.mrb[0].mxu0 %v5420
  %v5422 = vpop.f32.mrb[0].mxu0
  %v5423 = vadd.f32 %v5208, %v5422
  %v5424 = vpop.f32.mrb[0].mxu0
  %5425 = vmatprep.mubr.f32.mxu0 0.0
  %v5426 = vand.u32 %v4332, 4294901760
  %5427 = vmatmul.mubr.f32.gmra.mrb[0].mxu0 %v5426
  %v5428 = vpop.f32.mrb[0].mxu0
  %v5429 = vadd.f32 %v5216, %v5428
  %v5430 = vpop.f32.mrb[0].mxu0
  %5431 = vmatprep.mubr.f32.mxu0 0.0
  %v5432 = vand.u32 %v4333, 4294901760
  %5433 = vmatmul.mubr.f32.gmra.mrb[0].mxu0 %v5432
  %v5434 = vpop.f32.mrb[0].mxu0
  %v5435 = vadd.f32 %v5224, %v5434
  %v5436 = vpop.f32.mrb[0].mxu0
  %5437 = vmatprep.mubr.f32.mxu0 0.0
  %v5438 = vand.u32 %v4334, 4294901760
  %5439 = vmatmul.mubr.f32.gmra.mrb[0].mxu0 %v5438
  %v5440 = vpop.f32.mrb[0].mxu0
  %v5441 = vadd.f32 %v5232, %v5440
  %v5442 = vpop.f32.mrb[0].mxu0
  %5443 = vdwg.mxu0
  %5444 = vmatprep.subr.mxu0 0.0
  %v5445 = vand.u32 %v3788, 4294901760
  %5446 = vmatpush1.msra.mxu0 %v5445
  %5447 = vmatprep.subr.mxu0 0.0
  %v5448 = vand.u32 %v3789, 4294901760
  %5449 = vmatpush1.msra.mxu0 %v5448
  %5450 = vmatprep.subr.mxu0 0.0
  %v5451 = vand.u32 %v3790, 4294901760
  %5452 = vmatpush1.msra.mxu0 %v5451
  %5453 = vmatprep.subr.mxu0 0.0
  %v5454 = vand.u32 %v3791, 4294901760
  %5455 = vmatpush1.msra.mxu0 %v5454
  %5456 = vmatprep.subr.mxu0 0.0
  %v5457 = vand.u32 %v3792, 4294901760
  %5458 = vmatpush1.msra.mxu0 %v5457
  %5459 = vmatprep.subr.mxu0 0.0
  %v5460 = vand.u32 %v3793, 4294901760
  %5461 = vmatpush1.msra.mxu0 %v5460
  %5462 = vmatprep.subr.mxu0 0.0
  %v5463 = vand.u32 %v3794, 4294901760
  %5464 = vmatpush1.msra.mxu0 %v5463
  %5465 = vmatprep.subr.mxu0 0.0
  %v5466 = vand.u32 %v3795, 4294901760
  %5467 = vmatpush1.msra.mxu0 %v5466
  %5468 = vmatprep.subr.mxu0 0.0
  %v5469 = vand.u32 %v3796, 4294901760
  %5470 = vmatpush1.msra.mxu0 %v5469
  %5471 = vmatprep.subr.mxu0 0.0
  %v5472 = vand.u32 %v3797, 4294901760
  %5473 = vmatpush1.msra.mxu0 %v5472
  %5474 = vmatprep.subr.mxu0 0.0
  %v5475 = vand.u32 %v3798, 4294901760
  %5476 = vmatpush1.msra.mxu0 %v5475
  %5477 = vmatprep.subr.mxu0 0.0
  %v5478 = vand.u32 %v3799, 4294901760
  %5479 = vmatpush1.msra.mxu0 %v5478
  %5480 = vmatprep.subr.mxu0 0.0
  %v5481 = vand.u32 %v3800, 4294901760
  %5482 = vmatpush1.msra.mxu0 %v5481
  %5483 = vmatprep.subr.mxu0 0.0
  %v5484 = vand.u32 %v3801, 4294901760
  %5485 = vmatpush1.msra.mxu0 %v5484
  %5486 = vmatprep.subr.mxu0 0.0
  %v5487 = vand.u32 %v3802, 4294901760
  %5488 = vmatpush1.msra.mxu0 %v5487
  %5489 = vmatprep.subr.mxu0 0.0
  %v5490 = vand.u32 %v3803, 4294901760
  %5491 = vmatpush1.msra.mxu0 %v5490
  %5492 = vmatprep.subr.mxu0 0.0
  %5493 = vmatpush1.msra.mxu0 0.0
  %5494 = vmatprep.subr.mxu0 0.0
  %5495 = vmatpush1.msra.mxu0 0.0
  %5496 = vmatprep.subr.mxu0 0.0
  %5497 = vmatpush1.msra.mxu0 0.0
  %5498 = vmatprep.subr.mxu0 0.0
  %5499 = vmatpush1.msra.mxu0 0.0
  %5500 = vmatprep.subr.mxu0 0.0
  %5501 = vmatpush1.msra.mxu0 0.0
  %5502 = vmatprep.subr.mxu0 0.0
  %5503 = vmatpush1.msra.mxu0 0.0
  %5504 = vmatprep.subr.mxu0 0.0
  %5505 = vmatpush1.msra.mxu0 0.0
  %5506 = vmatprep.subr.mxu0 0.0
  %5507 = vmatpush1.msra.mxu0 0.0
  %5508 = vmatprep.subr.mxu0 0.0
  %5509 = vmatpush1.msra.mxu0 0.0
  %5510 = vmatprep.subr.mxu0 0.0
  %5511 = vmatpush1.msra.mxu0 0.0
  %5512 = vmatprep.subr.mxu0 0.0
  %5513 = vmatpush1.msra.mxu0 0.0
  %5514 = vmatprep.subr.mxu0 0.0
  %5515 = vmatpush1.msra.mxu0 0.0
  %5516 = vmatprep.subr.mxu0 0.0
  %5517 = vmatpush1.msra.mxu0 0.0
  %5518 = vmatprep.subr.mxu0 0.0
  %5519 = vmatpush1.msra.mxu0 0.0
  %5520 = vmatprep.subr.mxu0 0.0
  %5521 = vmatpush1.msra.mxu0 0.0
  %5522 = vmatprep.subr.mxu0 0.0
  %5523 = vmatpush1.msra.mxu0 0.0
  %5524 = vmatprep.mubr.f32.mxu0 0.0
  %v5525 = vand.u32 %v4319, 4294901760
  %5526 = vmatmul.mubr.f32.gmra.mrb[0].mxu0 %v5525
  %v5527 = vpop.f32.mrb[0].mxu0
  %v5528 = vadd.f32 %v5351, %v5527
  %v5529 = vpop.f32.mrb[0].mxu0
  %5530 = vmatprep.mubr.f32.mxu0 0.0
  %v5531 = vand.u32 %v4320, 4294901760
  %5532 = vmatmul.mubr.f32.gmra.mrb[0].mxu0 %v5531
  %v5533 = vpop.f32.mrb[0].mxu0
  %v5534 = vadd.f32 %v5357, %v5533
  %v5535 = vpop.f32.mrb[0].mxu0
  %5536 = vmatprep.mubr.f32.mxu0 0.0
  %v5537 = vand.u32 %v4321, 4294901760
  %5538 = vmatmul.mubr.f32.gmra.mrb[0].mxu0 %v5537
  %v5539 = vpop.f32.mrb[0].mxu0
  %v5540 = vadd.f32 %v5363, %v5539
  %v5541 = vpop.f32.mrb[0].mxu0
  %5542 = vmatprep.mubr.f32.mxu0 0.0
  %v5543 = vand.u32 %v4322, 4294901760
  %5544 = vmatmul.mubr.f32.gmra.mrb[0].mxu0 %v5543
  %v5545 = vpop.f32.mrb[0].mxu0
  %v5546 = vadd.f32 %v5369, %v5545
  %v5547 = vpop.f32.mrb[0].mxu0
  %5548 = vmatprep.mubr.f32.mxu0 0.0
  %v5549 = vand.u32 %v4323, 4294901760
  %5550 = vmatmul.mubr.f32.gmra.mrb[0].mxu0 %v5549
  %v5551 = vpop.f32.mrb[0].mxu0
  %v5552 = vadd.f32 %v5375, %v5551
  %v5553 = vpop.f32.mrb[0].mxu0
  %5554 = vmatprep.mubr.f32.mxu0 0.0
  %v5555 = vand.u32 %v4324, 4294901760
  %5556 = vmatmul.mubr.f32.gmra.mrb[0].mxu0 %v5555
  %v5557 = vpop.f32.mrb[0].mxu0
  %v5558 = vadd.f32 %v5381, %v5557
  %v5559 = vpop.f32.mrb[0].mxu0
  %5560 = vmatprep.mubr.f32.mxu0 0.0
  %v5561 = vand.u32 %v4325, 4294901760
  %5562 = vmatmul.mubr.f32.gmra.mrb[0].mxu0 %v5561
  %v5563 = vpop.f32.mrb[0].mxu0
  %v5564 = vadd.f32 %v5387, %v5563
  %v5565 = vpop.f32.mrb[0].mxu0
  %5566 = vmatprep.mubr.f32.mxu0 0.0
  %v5567 = vand.u32 %v4326, 4294901760
  %5568 = vmatmul.mubr.f32.gmra.mrb[0].mxu0 %v5567
  %v5569 = vpop.f32.mrb[0].mxu0
  %v5570 = vadd.f32 %v5393, %v5569
  %v5571 = vpop.f32.mrb[0].mxu0
  %5572 = vmatprep.mubr.f32.mxu0 0.0
  %v5573 = vand.u32 %v4327, 4294901760
  %5574 = vmatmul.mubr.f32.gmra.mrb[0].mxu0 %v5573
  %v5575 = vpop.f32.mrb[0].mxu0
  %v5576 = vadd.f32 %v5399, %v5575
  %v5577 = vpop.f32.mrb[0].mxu0
  %5578 = vmatprep.mubr.f32.mxu0 0.0
  %v5579 = vand.u32 %v4328, 4294901760
  %5580 = vmatmul.mubr.f32.gmra.mrb[0].mxu0 %v5579
  %v5581 = vpop.f32.mrb[0].mxu0
  %v5582 = vadd.f32 %v5405, %v5581
  %v5583 = vpop.f32.mrb[0].mxu0
  %5584 = vmatprep.mubr.f32.mxu0 0.0
  %v5585 = vand.u32 %v4329, 4294901760
  %5586 = vmatmul.mubr.f32.gmra.mrb[0].mxu0 %v5585
  %v5587 = vpop.f32.mrb[0].mxu0
  %v5588 = vadd.f32 %v5411, %v5587
  %v5589 = vpop.f32.mrb[0].mxu0
  %5590 = vmatprep.mubr.f32.mxu0 0.0
  %v5591 = vand.u32 %v4330, 4294901760
  %5592 = vmatmul.mubr.f32.gmra.mrb[0].mxu0 %v5591
  %v5593 = vpop.f32.mrb[0].mxu0
  %v5594 = vadd.f32 %v5417, %v5593
  %v5595 = vpop.f32.mrb[0].mxu0
  %5596 = vmatprep.mubr.f32.mxu0 0.0
  %v5597 = vand.u32 %v4331, 4294901760
  %5598 = vmatmul.mubr.f32.gmra.mrb[0].mxu0 %v5597
  %v5599 = vpop.f32.mrb[0].mxu0
  %v5600 = vadd.f32 %v5423, %v5599
  %v5601 = vpop.f32.mrb[0].mxu0
  %5602 = vmatprep.mubr.f32.mxu0 0.0
  %v5603 = vand.u32 %v4332, 4294901760
  %5604 = vmatmul.mubr.f32.gmra.mrb[0].mxu0 %v5603
  %v5605 = vpop.f32.mrb[0].mxu0
  %v5606 = vadd.f32 %v5429, %v5605
  %v5607 = vpop.f32.mrb[0].mxu0
  %5608 = vmatprep.mubr.f32.mxu0 0.0
  %v5609 = vand.u32 %v4333, 4294901760
  %5610 = vmatmul.mubr.f32.gmra.mrb[0].mxu0 %v5609
  %v5611 = vpop.f32.mrb[0].mxu0
  %v5612 = vadd.f32 %v5435, %v5611
  %v5613 = vpop.f32.mrb[0].mxu0
  %5614 = vmatprep.mubr.f32.mxu0 0.0
  %v5615 = vand.u32 %v4334, 4294901760
  %5616 = vmatmul.mubr.f32.gmra.mrb[0].mxu0 %v5615
  %v5617 = vpop.f32.mrb[0].mxu0
  %v5618 = vadd.f32 %v5441, %v5617
  %v5619 = vpop.f32.mrb[0].mxu0
  %5620 = vdwg.mxu0
  %s5621 = sadd.s32 %s1916, 2
  %s5622 = sld [smem:[#allocation3 + %s5621]]
  %s5623 = scalar_lea.vmem %s2, %s5622
  %5624 = vst.msk [vmem:[%s5623] sm:$0xff] %vm1919, %v5528
  %5625 = vst.msk [vmem:[%s5623 + $0x8] sm:$0xff] %vm1919, %v5534
  %5626 = vst.msk [vmem:[%s5623 + $0x10] sm:$0xff] %vm1919, %v5540
  %5627 = vst.msk [vmem:[%s5623 + $0x18] sm:$0xff] %vm1919, %v5546
  %5628 = vst.msk [vmem:[%s5623 + $0x20] sm:$0xff] %vm1919, %v5552
  %5629 = vst.msk [vmem:[%s5623 + $0x28] sm:$0xff] %vm1919, %v5558
  %5630 = vst.msk [vmem:[%s5623 + $0x30] sm:$0xff] %vm1919, %v5564
  %5631 = vst.msk [vmem:[%s5623 + $0x38] sm:$0xff] %vm1919, %v5570
  %5632 = vst.msk [vmem:[%s5623 + $0x40] sm:$0xff] %vm1919, %v5576
  %5633 = vst.msk [vmem:[%s5623 + $0x48] sm:$0xff] %vm1919, %v5582
  %5634 = vst.msk [vmem:[%s5623 + $0x50] sm:$0xff] %vm1919, %v5588
  %5635 = vst.msk [vmem:[%s5623 + $0x58] sm:$0xff] %vm1919, %v5594
  %5636 = vst.msk [vmem:[%s5623 + $0x60] sm:$0xff] %vm1919, %v5600
  %5637 = vst.msk [vmem:[%s5623 + $0x68] sm:$0xff] %vm1919, %v5606
  %5638 = vst.msk [vmem:[%s5623 + $0x70] sm:$0xff] %vm1919, %v5612
  %5639 = vst.msk [vmem:[%s5623 + $0x78] sm:$0xff] %vm1919, %v5618
  %v5640 = vld [vmem:[%s1 + $0x180] sm:$0xff]
  %v5641 = vld [vmem:[%s1 + $0x188] sm:$0xff]
  %v5642 = vld [vmem:[%s1 + $0x190] sm:$0xff]
  %v5643 = vld [vmem:[%s1 + $0x198] sm:$0xff]
  %v5644 = vld [vmem:[%s1 + $0x1a0] sm:$0xff]
  %v5645 = vld [vmem:[%s1 + $0x1a8] sm:$0xff]
  %v5646 = vld [vmem:[%s1 + $0x1b0] sm:$0xff]
  %v5647 = vld [vmem:[%s1 + $0x1b8] sm:$0xff]
  %v5648 = vld [vmem:[%s1 + $0x1c0] sm:$0xff]
  %v5649 = vld [vmem:[%s1 + $0x1c8] sm:$0xff]
  %v5650 = vld [vmem:[%s1 + $0x1d0] sm:$0xff]
  %v5651 = vld [vmem:[%s1 + $0x1d8] sm:$0xff]
  %v5652 = vld [vmem:[%s1 + $0x1e0] sm:$0xff]
  %v5653 = vld [vmem:[%s1 + $0x1e8] sm:$0xff]
  %v5654 = vld [vmem:[%s1 + $0x1f0] sm:$0xff]
  %v5655 = vld [vmem:[%s1 + $0x1f8] sm:$0xff]
  %s5656 = sadd.s32 %s83, 384
  %v5657 = vstv %s5656
  %v5658 = vadd.s32 %v5657, %v18
  %v5659 = vadd.s32 %v5657, %v19
  %v5660 = vadd.s32 %v5657, %v20
  %v5661 = vadd.s32 %v5657, %v21
  %v5662 = vadd.s32 %v5657, %v22
  %v5663 = vadd.s32 %v5657, %v23
  %v5664 = vadd.s32 %v5657, %v24
  %v5665 = vadd.s32 %v5657, %v25
  %v5666 = vadd.s32 %v5657, %v26
  %v5667 = vadd.s32 %v5657, %v27
  %v5668 = vadd.s32 %v5657, %v28
  %v5669 = vadd.s32 %v5657, %v29
  %v5670 = vadd.s32 %v5657, %v30
  %v5671 = vadd.s32 %v5657, %v31
  %v5672 = vadd.s32 %v5657, %v32
  %v5673 = vadd.s32 %v5657, %v33
  %vm5674 = vcmp.gt.f32.partialorder %v5640, 0.5
  %vm5675 = vcmp.gt.f32.partialorder %v5641, 0.5
  %vm5676 = vcmp.gt.f32.partialorder %v5642, 0.5
  %vm5677 = vcmp.gt.f32.partialorder %v5643, 0.5
  %vm5678 = vcmp.gt.f32.partialorder %v5644, 0.5
  %vm5679 = vcmp.gt.f32.partialorder %v5645, 0.5
  %vm5680 = vcmp.gt.f32.partialorder %v5646, 0.5
  %vm5681 = vcmp.gt.f32.partialorder %v5647, 0.5
  %vm5682 = vcmp.gt.f32.partialorder %v5648, 0.5
  %vm5683 = vcmp.gt.f32.partialorder %v5649, 0.5
  %vm5684 = vcmp.gt.f32.partialorder %v5650, 0.5
  %vm5685 = vcmp.gt.f32.partialorder %v5651, 0.5
  %vm5686 = vcmp.gt.f32.partialorder %v5652, 0.5
  %vm5687 = vcmp.gt.f32.partialorder %v5653, 0.5
  %vm5688 = vcmp.gt.f32.partialorder %v5654, 0.5
  %vm5689 = vcmp.gt.f32.partialorder %v5655, 0.5
  %vm5690 = vcmp.lt.s32.totalorder %v5658, 64
  %vm5691 = vcmp.lt.s32.totalorder %v5659, 64
  %vm5692 = vcmp.lt.s32.totalorder %v5660, 64
  %vm5693 = vcmp.lt.s32.totalorder %v5661, 64
  %vm5694 = vcmp.lt.s32.totalorder %v5662, 64
  %vm5695 = vcmp.lt.s32.totalorder %v5663, 64
  %vm5696 = vcmp.lt.s32.totalorder %v5664, 64
  %vm5697 = vcmp.lt.s32.totalorder %v5665, 64
  %vm5698 = vcmp.lt.s32.totalorder %v5666, 64
  %vm5699 = vcmp.lt.s32.totalorder %v5667, 64
  %vm5700 = vcmp.lt.s32.totalorder %v5668, 64
  %vm5701 = vcmp.lt.s32.totalorder %v5669, 64
  %vm5702 = vcmp.lt.s32.totalorder %v5670, 64
  %vm5703 = vcmp.lt.s32.totalorder %v5671, 64
  %vm5704 = vcmp.lt.s32.totalorder %v5672, 64
  %vm5705 = vcmp.lt.s32.totalorder %v5673, 64
  %vm5706 = vmand %vm5674, %vm5690
  %vm5707 = vmand %vm5675, %vm5691
  %vm5708 = vmand %vm5676, %vm5692
  %vm5709 = vmand %vm5677, %vm5693
  %vm5710 = vmand %vm5678, %vm5694
  %vm5711 = vmand %vm5679, %vm5695
  %vm5712 = vmand %vm5680, %vm5696
  %vm5713 = vmand %vm5681, %vm5697
  %vm5714 = vmand %vm5682, %vm5698
  %vm5715 = vmand %vm5683, %vm5699
  %vm5716 = vmand %vm5684, %vm5700
  %vm5717 = vmand %vm5685, %vm5701
  %vm5718 = vmand %vm5686, %vm5702
  %vm5719 = vmand %vm5687, %vm5703
  %vm5720 = vmand %vm5688, %vm5704
  %vm5721 = vmand %vm5689, %vm5705
  %v5722 = vsel %vm5706, 1, 0
  %v5723 = vsel %vm5707, 1, 0
  %v5724 = vsel %vm5708, 1, 0
  %v5725 = vsel %vm5709, 1, 0
  %v5726 = vsel %vm5710, 1, 0
  %v5727 = vsel %vm5711, 1, 0
  %v5728 = vsel %vm5712, 1, 0
  %v5729 = vsel %vm5713, 1, 0
  %v5730 = vsel %vm5714, 1, 0
  %v5731 = vsel %vm5715, 1, 0
  %v5732 = vsel %vm5716, 1, 0
  %v5733 = vsel %vm5717, 1, 0
  %v5734 = vsel %vm5718, 1, 0
  %v5735 = vsel %vm5719, 1, 0
  %v5736 = vsel %vm5720, 1, 0
  %v5737 = vsel %vm5721, 1, 0
  %v5738 = vcvt.s32.f32 %v5722
  %v5739 = vcvt.s32.f32 %v5723
  %v5740 = vcvt.s32.f32 %v5724
  %v5741 = vcvt.s32.f32 %v5725
  %v5742 = vcvt.s32.f32 %v5726
  %v5743 = vcvt.s32.f32 %v5727
  %v5744 = vcvt.s32.f32 %v5728
  %v5745 = vcvt.s32.f32 %v5729
  %v5746 = vcvt.s32.f32 %v5730
  %v5747 = vcvt.s32.f32 %v5731
  %v5748 = vcvt.s32.f32 %v5732
  %v5749 = vcvt.s32.f32 %v5733
  %v5750 = vcvt.s32.f32 %v5734
  %v5751 = vcvt.s32.f32 %v5735
  %v5752 = vcvt.s32.f32 %v5736
  %v5753 = vcvt.s32.f32 %v5737
  %5770 = vrot.lane.b32.xlu0 %v5738, 120
  %v5771 = vpop.permute.xlu0 %5770
  %5772 = vrot.lane.b32.xlu0 %v5739, 120
  %v5773 = vpop.permute.xlu0 %5772
  %5774 = vrot.lane.b32.xlu0 %v5740, 120
  %v5775 = vpop.permute.xlu0 %5774
  %5776 = vrot.lane.b32.xlu0 %v5741, 120
  %v5777 = vpop.permute.xlu0 %5776
  %5778 = vrot.lane.b32.xlu0 %v5742, 120
  %v5779 = vpop.permute.xlu0 %5778
  %5780 = vrot.lane.b32.xlu0 %v5743, 120
  %v5781 = vpop.permute.xlu0 %5780
  %5782 = vrot.lane.b32.xlu0 %v5744, 120
  %v5783 = vpop.permute.xlu0 %5782
  %5784 = vrot.lane.b32.xlu0 %v5745, 120
  %v5785 = vpop.permute.xlu0 %5784
  %5786 = vrot.lane.b32.xlu0 %v5746, 120
  %v5787 = vpop.permute.xlu0 %5786
  %5788 = vrot.lane.b32.xlu0 %v5747, 120
  %v5789 = vpop.permute.xlu0 %5788
  %5790 = vrot.lane.b32.xlu0 %v5748, 120
  %v5791 = vpop.permute.xlu0 %5790
  %5792 = vrot.lane.b32.xlu0 %v5749, 120
  %v5793 = vpop.permute.xlu0 %5792
  %5794 = vrot.lane.b32.xlu0 %v5750, 120
  %v5795 = vpop.permute.xlu0 %5794
  %5796 = vrot.lane.b32.xlu0 %v5751, 120
  %v5797 = vpop.permute.xlu0 %5796
  %5798 = vrot.lane.b32.xlu0 %v5752, 120
  %v5799 = vpop.permute.xlu0 %5798
  %5800 = vrot.lane.b32.xlu0 %v5753, 120
  %v5801 = vpop.permute.xlu0 %5800
  %5818 = vmatprep.subr.mxu0 0.0
  %5819 = vmatpush1.msra.mxu0 %v5771
  %5820 = vmatprep.subr.mxu0 0.0
  %5821 = vmatpush1.msra.mxu0 %v5773
  %5822 = vmatprep.subr.mxu0 0.0
  %5823 = vmatpush1.msra.mxu0 %v5775
  %5824 = vmatprep.subr.mxu0 0.0
  %5825 = vmatpush1.msra.mxu0 %v5777
  %5826 = vmatprep.subr.mxu0 0.0
  %5827 = vmatpush1.msra.mxu0 %v5779
  %5828 = vmatprep.subr.mxu0 0.0
  %5829 = vmatpush1.msra.mxu0 %v5781
  %5830 = vmatprep.subr.mxu0 0.0
  %5831 = vmatpush1.msra.mxu0 %v5783
  %5832 = vmatprep.subr.mxu0 0.0
  %5833 = vmatpush1.msra.mxu0 %v5785
  %5834 = vmatprep.subr.mxu0 0.0
  %5835 = vmatpush1.msra.mxu0 %v5787
  %5836 = vmatprep.subr.mxu0 0.0
  %5837 = vmatpush1.msra.mxu0 %v5789
  %5838 = vmatprep.subr.mxu0 0.0
  %5839 = vmatpush1.msra.mxu0 %v5791
  %5840 = vmatprep.subr.mxu0 0.0
  %5841 = vmatpush1.msra.mxu0 %v5793
  %5842 = vmatprep.subr.mxu0 0.0
  %5843 = vmatpush1.msra.mxu0 %v5795
  %5844 = vmatprep.subr.mxu0 0.0
  %5845 = vmatpush1.msra.mxu0 %v5797
  %5846 = vmatprep.subr.mxu0 0.0
  %5847 = vmatpush1.msra.mxu0 %v5799
  %5848 = vmatprep.subr.mxu0 0.0
  %5849 = vmatpush1.msra.mxu0 %v5801
  %5850 = vmatprep.subr.mxu0 0.0
  %5851 = vmatpush1.msra.mxu0 0.0
  %5852 = vmatprep.subr.mxu0 0.0
  %5853 = vmatpush1.msra.mxu0 0.0
  %5854 = vmatprep.subr.mxu0 0.0
  %5855 = vmatpush1.msra.mxu0 0.0
  %5856 = vmatprep.subr.mxu0 0.0
  %5857 = vmatpush1.msra.mxu0 0.0
  %5858 = vmatprep.subr.mxu0 0.0
  %5859 = vmatpush1.msra.mxu0 0.0
  %5860 = vmatprep.subr.mxu0 0.0
  %5861 = vmatpush1.msra.mxu0 0.0
  %5862 = vmatprep.subr.mxu0 0.0
  %5863 = vmatpush1.msra.mxu0 0.0
  %5864 = vmatprep.subr.mxu0 0.0
  %5865 = vmatpush1.msra.mxu0 0.0
  %5866 = vmatprep.subr.mxu0 0.0
  %5867 = vmatpush1.msra.mxu0 0.0
  %5868 = vmatprep.subr.mxu0 0.0
  %5869 = vmatpush1.msra.mxu0 0.0
  %5870 = vmatprep.subr.mxu0 0.0
  %5871 = vmatpush1.msra.mxu0 0.0
  %5872 = vmatprep.subr.mxu0 0.0
  %5873 = vmatpush1.msra.mxu0 0.0
  %5874 = vmatprep.subr.mxu0 0.0
  %5875 = vmatpush1.msra.mxu0 0.0
  %5876 = vmatprep.subr.mxu0 0.0
  %5877 = vmatpush1.msra.mxu0 0.0
  %5878 = vmatprep.subr.mxu0 0.0
  %5879 = vmatpush1.msra.mxu0 0.0
  %5880 = vmatprep.subr.mxu0 0.0
  %5881 = vmatpush1.msra.mxu0 0.0
  %5882 = vmatprep.mubr.f32.mxu0 0.0
  %5883 = vmatmul.mubr.f32.gmra.mrb[0].mxu0 %v67
  %v5884 = vpop.f32.mrb[0].mxu0
  %v5885 = vadd.f32 0.0, %v5884
  %v5886 = vpop.f32.mrb[0].mxu0
  %5887 = vmatprep.mubr.f32.mxu0 0.0
  %5888 = vmatmul.mubr.f32.gmra.mrb[0].mxu0 %v68
  %v5889 = vpop.f32.mrb[0].mxu0
  %v5890 = vadd.f32 0.0, %v5889
  %v5891 = vpop.f32.mrb[0].mxu0
  %5892 = vmatprep.mubr.f32.mxu0 0.0
  %5893 = vmatmul.mubr.f32.gmra.mrb[0].mxu0 %v69
  %v5894 = vpop.f32.mrb[0].mxu0
  %v5895 = vadd.f32 0.0, %v5894
  %v5896 = vpop.f32.mrb[0].mxu0
  %5897 = vmatprep.mubr.f32.mxu0 0.0
  %5898 = vmatmul.mubr.f32.gmra.mrb[0].mxu0 %v70
  %v5899 = vpop.f32.mrb[0].mxu0
  %v5900 = vadd.f32 0.0, %v5899
  %v5901 = vpop.f32.mrb[0].mxu0
  %5902 = vmatprep.mubr.f32.mxu0 0.0
  %5903 = vmatmul.mubr.f32.gmra.mrb[0].mxu0 %v71
  %v5904 = vpop.f32.mrb[0].mxu0
  %v5905 = vadd.f32 0.0, %v5904
  %v5906 = vpop.f32.mrb[0].mxu0
  %5907 = vmatprep.mubr.f32.mxu0 0.0
  %5908 = vmatmul.mubr.f32.gmra.mrb[0].mxu0 %v72
  %v5909 = vpop.f32.mrb[0].mxu0
  %v5910 = vadd.f32 0.0, %v5909
  %v5911 = vpop.f32.mrb[0].mxu0
  %5912 = vmatprep.mubr.f32.mxu0 0.0
  %5913 = vmatmul.mubr.f32.gmra.mrb[0].mxu0 %v73
  %v5914 = vpop.f32.mrb[0].mxu0
  %v5915 = vadd.f32 0.0, %v5914
  %v5916 = vpop.f32.mrb[0].mxu0
  %5917 = vmatprep.mubr.f32.mxu0 0.0
  %5918 = vmatmul.mubr.f32.gmra.mrb[0].mxu0 %v74
  %v5919 = vpop.f32.mrb[0].mxu0
  %v5920 = vadd.f32 0.0, %v5919
  %v5921 = vpop.f32.mrb[0].mxu0
  %5922 = vmatprep.mubr.f32.mxu0 0.0
  %5923 = vmatmul.mubr.f32.gmra.mrb[0].mxu0 %v75
  %v5924 = vpop.f32.mrb[0].mxu0
  %v5925 = vadd.f32 0.0, %v5924
  %v5926 = vpop.f32.mrb[0].mxu0
  %5927 = vmatprep.mubr.f32.mxu0 0.0
  %5928 = vmatmul.mubr.f32.gmra.mrb[0].mxu0 %v76
  %v5929 = vpop.f32.mrb[0].mxu0
  %v5930 = vadd.f32 0.0, %v5929
  %v5931 = vpop.f32.mrb[0].mxu0
  %5932 = vmatprep.mubr.f32.mxu0 0.0
  %5933 = vmatmul.mubr.f32.gmra.mrb[0].mxu0 %v77
  %v5934 = vpop.f32.mrb[0].mxu0
  %v5935 = vadd.f32 0.0, %v5934
  %v5936 = vpop.f32.mrb[0].mxu0
  %5937 = vmatprep.mubr.f32.mxu0 0.0
  %5938 = vmatmul.mubr.f32.gmra.mrb[0].mxu0 %v78
  %v5939 = vpop.f32.mrb[0].mxu0
  %v5940 = vadd.f32 0.0, %v5939
  %v5941 = vpop.f32.mrb[0].mxu0
  %5942 = vmatprep.mubr.f32.mxu0 0.0
  %5943 = vmatmul.mubr.f32.gmra.mrb[0].mxu0 %v79
  %v5944 = vpop.f32.mrb[0].mxu0
  %v5945 = vadd.f32 0.0, %v5944
  %v5946 = vpop.f32.mrb[0].mxu0
  %5947 = vmatprep.mubr.f32.mxu0 0.0
  %5948 = vmatmul.mubr.f32.gmra.mrb[0].mxu0 %v80
  %v5949 = vpop.f32.mrb[0].mxu0
  %v5950 = vadd.f32 0.0, %v5949
  %v5951 = vpop.f32.mrb[0].mxu0
  %5952 = vmatprep.mubr.f32.mxu0 0.0
  %5953 = vmatmul.mubr.f32.gmra.mrb[0].mxu0 %v81
  %v5954 = vpop.f32.mrb[0].mxu0
  %v5955 = vadd.f32 0.0, %v5954
  %v5956 = vpop.f32.mrb[0].mxu0
  %5957 = vmatprep.mubr.f32.mxu0 0.0
  %5958 = vmatmul.mubr.f32.gmra.mrb[0].mxu0 %v82
  %v5959 = vpop.f32.mrb[0].mxu0
  %v5960 = vadd.f32 0.0, %v5959
  %v5961 = vpop.f32.mrb[0].mxu0
  %5962 = vdwg.mxu0
  %5964 = vset.pattern.permute.xlu0 0
  %5965 = vperm.xlu0 %5964, %v5885
  %v5966 = vpop.permute.xlu0 %5965
  %5969 = vset.pattern.permute.xlu0 0
  %5970 = vperm.xlu0 %5969, %v5890
  %v5971 = vpop.permute.xlu0 %5970
  %5974 = vset.pattern.permute.xlu0 0
  %5975 = vperm.xlu0 %5974, %v5895
  %v5976 = vpop.permute.xlu0 %5975
  %5979 = vset.pattern.permute.xlu0 0
  %5980 = vperm.xlu0 %5979, %v5900
  %v5981 = vpop.permute.xlu0 %5980
  %5984 = vset.pattern.permute.xlu0 0
  %5985 = vperm.xlu0 %5984, %v5905
  %v5986 = vpop.permute.xlu0 %5985
  %5989 = vset.pattern.permute.xlu0 0
  %5990 = vperm.xlu0 %5989, %v5910
  %v5991 = vpop.permute.xlu0 %5990
  %5994 = vset.pattern.permute.xlu0 0
  %5995 = vperm.xlu0 %5994, %v5915
  %v5996 = vpop.permute.xlu0 %5995
  %5999 = vset.pattern.permute.xlu0 0
  %6000 = vperm.xlu0 %5999, %v5920
  %v6001 = vpop.permute.xlu0 %6000
  %6004 = vset.pattern.permute.xlu0 0
  %6005 = vperm.xlu0 %6004, %v5925
  %v6006 = vpop.permute.xlu0 %6005
  %6009 = vset.pattern.permute.xlu0 0
  %6010 = vperm.xlu0 %6009, %v5930
  %v6011 = vpop.permute.xlu0 %6010
  %6014 = vset.pattern.permute.xlu0 0
  %6015 = vperm.xlu0 %6014, %v5935
  %v6016 = vpop.permute.xlu0 %6015
  %6019 = vset.pattern.permute.xlu0 0
  %6020 = vperm.xlu0 %6019, %v5940
  %v6021 = vpop.permute.xlu0 %6020
  %6024 = vset.pattern.permute.xlu0 0
  %6025 = vperm.xlu0 %6024, %v5945
  %v6026 = vpop.permute.xlu0 %6025
  %6029 = vset.pattern.permute.xlu0 0
  %6030 = vperm.xlu0 %6029, %v5950
  %v6031 = vpop.permute.xlu0 %6030
  %6034 = vset.pattern.permute.xlu0 0
  %6035 = vperm.xlu0 %6034, %v5955
  %v6036 = vpop.permute.xlu0 %6035
  %6039 = vset.pattern.permute.xlu0 0
  %6040 = vperm.xlu0 %6039, %v5960
  %v6041 = vpop.permute.xlu0 %6040
  %vm6043 = vcmp.eq.f32.partialorder %v34, %v5966
  %vm6044 = vcmp.eq.f32.partialorder %v34, %v5971
  %vm6045 = vcmp.eq.f32.partialorder %v34, %v5976
  %vm6046 = vcmp.eq.f32.partialorder %v34, %v5981
  %vm6047 = vcmp.eq.f32.partialorder %v34, %v5986
  %vm6048 = vcmp.eq.f32.partialorder %v34, %v5991
  %vm6049 = vcmp.eq.f32.partialorder %v34, %v5996
  %vm6050 = vcmp.eq.f32.partialorder %v34, %v6001
  %vm6051 = vcmp.eq.f32.partialorder %v34, %v6006
  %vm6052 = vcmp.eq.f32.partialorder %v34, %v6011
  %vm6053 = vcmp.eq.f32.partialorder %v34, %v6016
  %vm6054 = vcmp.eq.f32.partialorder %v34, %v6021
  %vm6055 = vcmp.eq.f32.partialorder %v34, %v6026
  %vm6056 = vcmp.eq.f32.partialorder %v34, %v6031
  %vm6057 = vcmp.eq.f32.partialorder %v34, %v6036
  %vm6058 = vcmp.eq.f32.partialorder %v34, %v6041
  %6059 = vset.pattern.permute.xlu0 8
  %6060 = vperm.xlu0 %6059, %v5722
  %v6061 = vpop.permute.xlu0 %6060
  %6062 = vset.pattern.permute.xlu0 8
  %6063 = vperm.xlu0 %6062, %v5723
  %v6064 = vpop.permute.xlu0 %6063
  %6065 = vset.pattern.permute.xlu0 8
  %6066 = vperm.xlu0 %6065, %v5724
  %v6067 = vpop.permute.xlu0 %6066
  %6068 = vset.pattern.permute.xlu0 8
  %6069 = vperm.xlu0 %6068, %v5725
  %v6070 = vpop.permute.xlu0 %6069
  %6071 = vset.pattern.permute.xlu0 8
  %6072 = vperm.xlu0 %6071, %v5726
  %v6073 = vpop.permute.xlu0 %6072
  %6074 = vset.pattern.permute.xlu0 8
  %6075 = vperm.xlu0 %6074, %v5727
  %v6076 = vpop.permute.xlu0 %6075
  %6077 = vset.pattern.permute.xlu0 8
  %6078 = vperm.xlu0 %6077, %v5728
  %v6079 = vpop.permute.xlu0 %6078
  %6080 = vset.pattern.permute.xlu0 8
  %6081 = vperm.xlu0 %6080, %v5729
  %v6082 = vpop.permute.xlu0 %6081
  %6083 = vset.pattern.permute.xlu0 8
  %6084 = vperm.xlu0 %6083, %v5730
  %v6085 = vpop.permute.xlu0 %6084
  %6086 = vset.pattern.permute.xlu0 8
  %6087 = vperm.xlu0 %6086, %v5731
  %v6088 = vpop.permute.xlu0 %6087
  %6089 = vset.pattern.permute.xlu0 8
  %6090 = vperm.xlu0 %6089, %v5732
  %v6091 = vpop.permute.xlu0 %6090
  %6092 = vset.pattern.permute.xlu0 8
  %6093 = vperm.xlu0 %6092, %v5733
  %v6094 = vpop.permute.xlu0 %6093
  %6095 = vset.pattern.permute.xlu0 8
  %6096 = vperm.xlu0 %6095, %v5734
  %v6097 = vpop.permute.xlu0 %6096
  %6098 = vset.pattern.permute.xlu0 8
  %6099 = vperm.xlu0 %6098, %v5735
  %v6100 = vpop.permute.xlu0 %6099
  %6101 = vset.pattern.permute.xlu0 8
  %6102 = vperm.xlu0 %6101, %v5736
  %v6103 = vpop.permute.xlu0 %6102
  %6104 = vset.pattern.permute.xlu0 8
  %6105 = vperm.xlu0 %6104, %v5737
  %v6106 = vpop.permute.xlu0 %6105
  %vm6107 = vcmp.eq.s32.totalorder %v6061, 1
  %vm6108 = vcmp.eq.s32.totalorder %v6064, 1
  %vm6109 = vcmp.eq.s32.totalorder %v6067, 1
  %vm6110 = vcmp.eq.s32.totalorder %v6070, 1
  %vm6111 = vcmp.eq.s32.totalorder %v6073, 1
  %vm6112 = vcmp.eq.s32.totalorder %v6076, 1
  %vm6113 = vcmp.eq.s32.totalorder %v6079, 1
  %vm6114 = vcmp.eq.s32.totalorder %v6082, 1
  %vm6115 = vcmp.eq.s32.totalorder %v6085, 1
  %vm6116 = vcmp.eq.s32.totalorder %v6088, 1
  %vm6117 = vcmp.eq.s32.totalorder %v6091, 1
  %vm6118 = vcmp.eq.s32.totalorder %v6094, 1
  %vm6119 = vcmp.eq.s32.totalorder %v6097, 1
  %vm6120 = vcmp.eq.s32.totalorder %v6100, 1
  %vm6121 = vcmp.eq.s32.totalorder %v6103, 1
  %vm6122 = vcmp.eq.s32.totalorder %v6106, 1
  %vm6123 = vmand %vm6043, %vm6107
  %vm6124 = vmand %vm6044, %vm6108
  %vm6125 = vmand %vm6045, %vm6109
  %vm6126 = vmand %vm6046, %vm6110
  %vm6127 = vmand %vm6047, %vm6111
  %vm6128 = vmand %vm6048, %vm6112
  %vm6129 = vmand %vm6049, %vm6113
  %vm6130 = vmand %vm6050, %vm6114
  %vm6131 = vmand %vm6051, %vm6115
  %vm6132 = vmand %vm6052, %vm6116
  %vm6133 = vmand %vm6053, %vm6117
  %vm6134 = vmand %vm6054, %vm6118
  %vm6135 = vmand %vm6055, %vm6119
  %vm6136 = vmand %vm6056, %vm6120
  %vm6137 = vmand %vm6057, %vm6121
  %vm6138 = vmand %vm6058, %vm6122
  %v6139 = vsel %vm6123, 1.0, 0.0
  %v6140 = vsel %vm6124, 1.0, 0.0
  %v6141 = vsel %vm6125, 1.0, 0.0
  %v6142 = vsel %vm6126, 1.0, 0.0
  %v6143 = vsel %vm6127, 1.0, 0.0
  %v6144 = vsel %vm6128, 1.0, 0.0
  %v6145 = vsel %vm6129, 1.0, 0.0
  %v6146 = vsel %vm6130, 1.0, 0.0
  %v6147 = vsel %vm6131, 1.0, 0.0
  %v6148 = vsel %vm6132, 1.0, 0.0
  %v6149 = vsel %vm6133, 1.0, 0.0
  %v6150 = vsel %vm6134, 1.0, 0.0
  %v6151 = vsel %vm6135, 1.0, 0.0
  %v6152 = vsel %vm6136, 1.0, 0.0
  %v6153 = vsel %vm6137, 1.0, 0.0
  %v6154 = vsel %vm6138, 1.0, 0.0
  %6155 = vxpose.xlu0.b32.start [1/16] %v6139, 128
  %6156 = vxpose.xlu0.b32.cont [2/16] %v6140, 128
  %6157 = vxpose.xlu0.b32.cont [3/16] %v6141, 128
  %6158 = vxpose.xlu0.b32.cont [4/16] %v6142, 128
  %6159 = vxpose.xlu0.b32.cont [5/16] %v6143, 128
  %6160 = vxpose.xlu0.b32.cont [6/16] %v6144, 128
  %6161 = vxpose.xlu0.b32.cont [7/16] %v6145, 128
  %6162 = vxpose.xlu0.b32.cont [8/16] %v6146, 128
  %6163 = vxpose.xlu0.b32.cont [9/16] %v6147, 128
  %6164 = vxpose.xlu0.b32.cont [10/16] %v6148, 128
  %6165 = vxpose.xlu0.b32.cont [11/16] %v6149, 128
  %6166 = vxpose.xlu0.b32.cont [12/16] %v6150, 128
  %6167 = vxpose.xlu0.b32.cont [13/16] %v6151, 128
  %6168 = vxpose.xlu0.b32.cont [14/16] %v6152, 128
  %6169 = vxpose.xlu0.b32.cont [15/16] %v6153, 128
  %6170 = vxpose.xlu0.b32.end [16/16] %v6154, 128
  %v6171 = vpop.trf.xlu0
  %v6172 = vpop.trf.xlu0
  %v6173 = vpop.trf.xlu0
  %v6174 = vpop.trf.xlu0
  %v6175 = vpop.trf.xlu0
  %v6176 = vpop.trf.xlu0
  %v6177 = vpop.trf.xlu0
  %v6178 = vpop.trf.xlu0
  %v6179 = vpop.trf.xlu0
  %v6180 = vpop.trf.xlu0
  %v6181 = vpop.trf.xlu0
  %v6182 = vpop.trf.xlu0
  %v6183 = vpop.trf.xlu0
  %v6184 = vpop.trf.xlu0
  %v6185 = vpop.trf.xlu0
  %v6186 = vpop.trf.xlu0
  %6187 = vmatprep.subr.mxu0 0.0
  %v6188 = vand.u32 %v5640, 4294901760
  %6189 = vmatpush1.msra.mxu0 %v6188
  %6190 = vmatprep.subr.mxu0 0.0
  %v6191 = vand.u32 %v5641, 4294901760
  %6192 = vmatpush1.msra.mxu0 %v6191
  %6193 = vmatprep.subr.mxu0 0.0
  %v6194 = vand.u32 %v5642, 4294901760
  %6195 = vmatpush1.msra.mxu0 %v6194
  %6196 = vmatprep.subr.mxu0 0.0
  %v6197 = vand.u32 %v5643, 4294901760
  %6198 = vmatpush1.msra.mxu0 %v6197
  %6199 = vmatprep.subr.mxu0 0.0
  %v6200 = vand.u32 %v5644, 4294901760
  %6201 = vmatpush1.msra.mxu0 %v6200
  %6202 = vmatprep.subr.mxu0 0.0
  %v6203 = vand.u32 %v5645, 4294901760
  %6204 = vmatpush1.msra.mxu0 %v6203
  %6205 = vmatprep.subr.mxu0 0.0
  %v6206 = vand.u32 %v5646, 4294901760
  %6207 = vmatpush1.msra.mxu0 %v6206
  %6208 = vmatprep.subr.mxu0 0.0
  %v6209 = vand.u32 %v5647, 4294901760
  %6210 = vmatpush1.msra.mxu0 %v6209
  %6211 = vmatprep.subr.mxu0 0.0
  %v6212 = vand.u32 %v5648, 4294901760
  %6213 = vmatpush1.msra.mxu0 %v6212
  %6214 = vmatprep.subr.mxu0 0.0
  %v6215 = vand.u32 %v5649, 4294901760
  %6216 = vmatpush1.msra.mxu0 %v6215
  %6217 = vmatprep.subr.mxu0 0.0
  %v6218 = vand.u32 %v5650, 4294901760
  %6219 = vmatpush1.msra.mxu0 %v6218
  %6220 = vmatprep.subr.mxu0 0.0
  %v6221 = vand.u32 %v5651, 4294901760
  %6222 = vmatpush1.msra.mxu0 %v6221
  %6223 = vmatprep.subr.mxu0 0.0
  %v6224 = vand.u32 %v5652, 4294901760
  %6225 = vmatpush1.msra.mxu0 %v6224
  %6226 = vmatprep.subr.mxu0 0.0
  %v6227 = vand.u32 %v5653, 4294901760
  %6228 = vmatpush1.msra.mxu0 %v6227
  %6229 = vmatprep.subr.mxu0 0.0
  %v6230 = vand.u32 %v5654, 4294901760
  %6231 = vmatpush1.msra.mxu0 %v6230
  %6232 = vmatprep.subr.mxu0 0.0
  %v6233 = vand.u32 %v5655, 4294901760
  %6234 = vmatpush1.msra.mxu0 %v6233
  %6235 = vmatprep.subr.mxu0 0.0
  %6236 = vmatpush1.msra.mxu0 0.0
  %6237 = vmatprep.subr.mxu0 0.0
  %6238 = vmatpush1.msra.mxu0 0.0
  %6239 = vmatprep.subr.mxu0 0.0
  %6240 = vmatpush1.msra.mxu0 0.0
  %6241 = vmatprep.subr.mxu0 0.0
  %6242 = vmatpush1.msra.mxu0 0.0
  %6243 = vmatprep.subr.mxu0 0.0
  %6244 = vmatpush1.msra.mxu0 0.0
  %6245 = vmatprep.subr.mxu0 0.0
  %6246 = vmatpush1.msra.mxu0 0.0
  %6247 = vmatprep.subr.mxu0 0.0
  %6248 = vmatpush1.msra.mxu0 0.0
  %6249 = vmatprep.subr.mxu0 0.0
  %6250 = vmatpush1.msra.mxu0 0.0
  %6251 = vmatprep.subr.mxu0 0.0
  %6252 = vmatpush1.msra.mxu0 0.0
  %6253 = vmatprep.subr.mxu0 0.0
  %6254 = vmatpush1.msra.mxu0 0.0
  %6255 = vmatprep.subr.mxu0 0.0
  %6256 = vmatpush1.msra.mxu0 0.0
  %6257 = vmatprep.subr.mxu0 0.0
  %6258 = vmatpush1.msra.mxu0 0.0
  %6259 = vmatprep.subr.mxu0 0.0
  %6260 = vmatpush1.msra.mxu0 0.0
  %6261 = vmatprep.subr.mxu0 0.0
  %6262 = vmatpush1.msra.mxu0 0.0
  %6263 = vmatprep.subr.mxu0 0.0
  %6264 = vmatpush1.msra.mxu0 0.0
  %6265 = vmatprep.subr.mxu0 0.0
  %6266 = vmatpush1.msra.mxu0 0.0
  %6267 = vmatprep.mubr.f32.mxu0 0.0
  %v6268 = vand.u32 %v6171, 4294901760
  %v6269 = vsub.f32 %v6171, %v6268
  %v6270 = vand.u32 %v6269, 4294901760
  %v6271 = vsub.f32 %v6269, %v6270
  %v6272 = vand.u32 %v6271, 4294901760
  %6273 = vmatmul.mubr.f32.gmra.mrb[0].mxu0 %v6272
  %v6274 = vpop.f32.mrb[0].mxu0
  %v6275 = vadd.f32 0.0, %v6274
  %v6276 = vpop.f32.mrb[0].mxu0
  %6277 = vmatprep.mubr.f32.mxu0 0.0
  %v6278 = vand.u32 %v6172, 4294901760
  %v6279 = vsub.f32 %v6172, %v6278
  %v6280 = vand.u32 %v6279, 4294901760
  %v6281 = vsub.f32 %v6279, %v6280
  %v6282 = vand.u32 %v6281, 4294901760
  %6283 = vmatmul.mubr.f32.gmra.mrb[0].mxu0 %v6282
  %v6284 = vpop.f32.mrb[0].mxu0
  %v6285 = vadd.f32 0.0, %v6284
  %v6286 = vpop.f32.mrb[0].mxu0
  %6287 = vmatprep.mubr.f32.mxu0 0.0
  %v6288 = vand.u32 %v6173, 4294901760
  %v6289 = vsub.f32 %v6173, %v6288
  %v6290 = vand.u32 %v6289, 4294901760
  %v6291 = vsub.f32 %v6289, %v6290
  %v6292 = vand.u32 %v6291, 4294901760
  %6293 = vmatmul.mubr.f32.gmra.mrb[0].mxu0 %v6292
  %v6294 = vpop.f32.mrb[0].mxu0
  %v6295 = vadd.f32 0.0, %v6294
  %v6296 = vpop.f32.mrb[0].mxu0
  %6297 = vmatprep.mubr.f32.mxu0 0.0
  %v6298 = vand.u32 %v6174, 4294901760
  %v6299 = vsub.f32 %v6174, %v6298
  %v6300 = vand.u32 %v6299, 4294901760
  %v6301 = vsub.f32 %v6299, %v6300
  %v6302 = vand.u32 %v6301, 4294901760
  %6303 = vmatmul.mubr.f32.gmra.mrb[0].mxu0 %v6302
  %v6304 = vpop.f32.mrb[0].mxu0
  %v6305 = vadd.f32 0.0, %v6304
  %v6306 = vpop.f32.mrb[0].mxu0
  %6307 = vmatprep.mubr.f32.mxu0 0.0
  %v6308 = vand.u32 %v6175, 4294901760
  %v6309 = vsub.f32 %v6175, %v6308
  %v6310 = vand.u32 %v6309, 4294901760
  %v6311 = vsub.f32 %v6309, %v6310
  %v6312 = vand.u32 %v6311, 4294901760
  %6313 = vmatmul.mubr.f32.gmra.mrb[0].mxu0 %v6312
  %v6314 = vpop.f32.mrb[0].mxu0
  %v6315 = vadd.f32 0.0, %v6314
  %v6316 = vpop.f32.mrb[0].mxu0
  %6317 = vmatprep.mubr.f32.mxu0 0.0
  %v6318 = vand.u32 %v6176, 4294901760
  %v6319 = vsub.f32 %v6176, %v6318
  %v6320 = vand.u32 %v6319, 4294901760
  %v6321 = vsub.f32 %v6319, %v6320
  %v6322 = vand.u32 %v6321, 4294901760
  %6323 = vmatmul.mubr.f32.gmra.mrb[0].mxu0 %v6322
  %v6324 = vpop.f32.mrb[0].mxu0
  %v6325 = vadd.f32 0.0, %v6324
  %v6326 = vpop.f32.mrb[0].mxu0
  %6327 = vmatprep.mubr.f32.mxu0 0.0
  %v6328 = vand.u32 %v6177, 4294901760
  %v6329 = vsub.f32 %v6177, %v6328
  %v6330 = vand.u32 %v6329, 4294901760
  %v6331 = vsub.f32 %v6329, %v6330
  %v6332 = vand.u32 %v6331, 4294901760
  %6333 = vmatmul.mubr.f32.gmra.mrb[0].mxu0 %v6332
  %v6334 = vpop.f32.mrb[0].mxu0
  %v6335 = vadd.f32 0.0, %v6334
  %v6336 = vpop.f32.mrb[0].mxu0
  %6337 = vmatprep.mubr.f32.mxu0 0.0
  %v6338 = vand.u32 %v6178, 4294901760
  %v6339 = vsub.f32 %v6178, %v6338
  %v6340 = vand.u32 %v6339, 4294901760
  %v6341 = vsub.f32 %v6339, %v6340
  %v6342 = vand.u32 %v6341, 4294901760
  %6343 = vmatmul.mubr.f32.gmra.mrb[0].mxu0 %v6342
  %v6344 = vpop.f32.mrb[0].mxu0
  %v6345 = vadd.f32 0.0, %v6344
  %v6346 = vpop.f32.mrb[0].mxu0
  %6347 = vmatprep.mubr.f32.mxu0 0.0
  %v6348 = vand.u32 %v6179, 4294901760
  %v6349 = vsub.f32 %v6179, %v6348
  %v6350 = vand.u32 %v6349, 4294901760
  %v6351 = vsub.f32 %v6349, %v6350
  %v6352 = vand.u32 %v6351, 4294901760
  %6353 = vmatmul.mubr.f32.gmra.mrb[0].mxu0 %v6352
  %v6354 = vpop.f32.mrb[0].mxu0
  %v6355 = vadd.f32 0.0, %v6354
  %v6356 = vpop.f32.mrb[0].mxu0
  %6357 = vmatprep.mubr.f32.mxu0 0.0
  %v6358 = vand.u32 %v6180, 4294901760
  %v6359 = vsub.f32 %v6180, %v6358
  %v6360 = vand.u32 %v6359, 4294901760
  %v6361 = vsub.f32 %v6359, %v6360
  %v6362 = vand.u32 %v6361, 4294901760
  %6363 = vmatmul.mubr.f32.gmra.mrb[0].mxu0 %v6362
  %v6364 = vpop.f32.mrb[0].mxu0
  %v6365 = vadd.f32 0.0, %v6364
  %v6366 = vpop.f32.mrb[0].mxu0
  %6367 = vmatprep.mubr.f32.mxu0 0.0
  %v6368 = vand.u32 %v6181, 4294901760
  %v6369 = vsub.f32 %v6181, %v6368
  %v6370 = vand.u32 %v6369, 4294901760
  %v6371 = vsub.f32 %v6369, %v6370
  %v6372 = vand.u32 %v6371, 4294901760
  %6373 = vmatmul.mubr.f32.gmra.mrb[0].mxu0 %v6372
  %v6374 = vpop.f32.mrb[0].mxu0
  %v6375 = vadd.f32 0.0, %v6374
  %v6376 = vpop.f32.mrb[0].mxu0
  %6377 = vmatprep.mubr.f32.mxu0 0.0
  %v6378 = vand.u32 %v6182, 4294901760
  %v6379 = vsub.f32 %v6182, %v6378
  %v6380 = vand.u32 %v6379, 4294901760
  %v6381 = vsub.f32 %v6379, %v6380
  %v6382 = vand.u32 %v6381, 4294901760
  %6383 = vmatmul.mubr.f32.gmra.mrb[0].mxu0 %v6382
  %v6384 = vpop.f32.mrb[0].mxu0
  %v6385 = vadd.f32 0.0, %v6384
  %v6386 = vpop.f32.mrb[0].mxu0
  %6387 = vmatprep.mubr.f32.mxu0 0.0
  %v6388 = vand.u32 %v6183, 4294901760
  %v6389 = vsub.f32 %v6183, %v6388
  %v6390 = vand.u32 %v6389, 4294901760
  %v6391 = vsub.f32 %v6389, %v6390
  %v6392 = vand.u32 %v6391, 4294901760
  %6393 = vmatmul.mubr.f32.gmra.mrb[0].mxu0 %v6392
  %v6394 = vpop.f32.mrb[0].mxu0
  %v6395 = vadd.f32 0.0, %v6394
  %v6396 = vpop.f32.mrb[0].mxu0
  %6397 = vmatprep.mubr.f32.mxu0 0.0
  %v6398 = vand.u32 %v6184, 4294901760
  %v6399 = vsub.f32 %v6184, %v6398
  %v6400 = vand.u32 %v6399, 4294901760
  %v6401 = vsub.f32 %v6399, %v6400
  %v6402 = vand.u32 %v6401, 4294901760
  %6403 = vmatmul.mubr.f32.gmra.mrb[0].mxu0 %v6402
  %v6404 = vpop.f32.mrb[0].mxu0
  %v6405 = vadd.f32 0.0, %v6404
  %v6406 = vpop.f32.mrb[0].mxu0
  %6407 = vmatprep.mubr.f32.mxu0 0.0
  %v6408 = vand.u32 %v6185, 4294901760
  %v6409 = vsub.f32 %v6185, %v6408
  %v6410 = vand.u32 %v6409, 4294901760
  %v6411 = vsub.f32 %v6409, %v6410
  %v6412 = vand.u32 %v6411, 4294901760
  %6413 = vmatmul.mubr.f32.gmra.mrb[0].mxu0 %v6412
  %v6414 = vpop.f32.mrb[0].mxu0
  %v6415 = vadd.f32 0.0, %v6414
  %v6416 = vpop.f32.mrb[0].mxu0
  %6417 = vmatprep.mubr.f32.mxu0 0.0
  %v6418 = vand.u32 %v6186, 4294901760
  %v6419 = vsub.f32 %v6186, %v6418
  %v6420 = vand.u32 %v6419, 4294901760
  %v6421 = vsub.f32 %v6419, %v6420
  %v6422 = vand.u32 %v6421, 4294901760
  %6423 = vmatmul.mubr.f32.gmra.mrb[0].mxu0 %v6422
  %v6424 = vpop.f32.mrb[0].mxu0
  %v6425 = vadd.f32 0.0, %v6424
  %v6426 = vpop.f32.mrb[0].mxu0
  %6427 = vdwg.mxu0
  %6428 = vmatprep.subr.mxu0 0.0
  %v6429 = vand.u32 %v5640, 4294901760
  %v6430 = vsub.f32 %v5640, %v6429
  %v6431 = vand.u32 %v6430, 4294901760
  %v6432 = vsub.f32 %v6430, %v6431
  %v6433 = vand.u32 %v6432, 4294901760
  %6434 = vmatpush1.msra.mxu0 %v6433
  %6435 = vmatprep.subr.mxu0 0.0
  %v6436 = vand.u32 %v5641, 4294901760
  %v6437 = vsub.f32 %v5641, %v6436
  %v6438 = vand.u32 %v6437, 4294901760
  %v6439 = vsub.f32 %v6437, %v6438
  %v6440 = vand.u32 %v6439, 4294901760
  %6441 = vmatpush1.msra.mxu0 %v6440
  %6442 = vmatprep.subr.mxu0 0.0
  %v6443 = vand.u32 %v5642, 4294901760
  %v6444 = vsub.f32 %v5642, %v6443
  %v6445 = vand.u32 %v6444, 4294901760
  %v6446 = vsub.f32 %v6444, %v6445
  %v6447 = vand.u32 %v6446, 4294901760
  %6448 = vmatpush1.msra.mxu0 %v6447
  %6449 = vmatprep.subr.mxu0 0.0
  %v6450 = vand.u32 %v5643, 4294901760
  %v6451 = vsub.f32 %v5643, %v6450
  %v6452 = vand.u32 %v6451, 4294901760
  %v6453 = vsub.f32 %v6451, %v6452
  %v6454 = vand.u32 %v6453, 4294901760
  %6455 = vmatpush1.msra.mxu0 %v6454
  %6456 = vmatprep.subr.mxu0 0.0
  %v6457 = vand.u32 %v5644, 4294901760
  %v6458 = vsub.f32 %v5644, %v6457
  %v6459 = vand.u32 %v6458, 4294901760
  %v6460 = vsub.f32 %v6458, %v6459
  %v6461 = vand.u32 %v6460, 4294901760
  %6462 = vmatpush1.msra.mxu0 %v6461
  %6463 = vmatprep.subr.mxu0 0.0
  %v6464 = vand.u32 %v5645, 4294901760
  %v6465 = vsub.f32 %v5645, %v6464
  %v6466 = vand.u32 %v6465, 4294901760
  %v6467 = vsub.f32 %v6465, %v6466
  %v6468 = vand.u32 %v6467, 4294901760
  %6469 = vmatpush1.msra.mxu0 %v6468
  %6470 = vmatprep.subr.mxu0 0.0
  %v6471 = vand.u32 %v5646, 4294901760
  %v6472 = vsub.f32 %v5646, %v6471
  %v6473 = vand.u32 %v6472, 4294901760
  %v6474 = vsub.f32 %v6472, %v6473
  %v6475 = vand.u32 %v6474, 4294901760
  %6476 = vmatpush1.msra.mxu0 %v6475
  %6477 = vmatprep.subr.mxu0 0.0
  %v6478 = vand.u32 %v5647, 4294901760
  %v6479 = vsub.f32 %v5647, %v6478
  %v6480 = vand.u32 %v6479, 4294901760
  %v6481 = vsub.f32 %v6479, %v6480
  %v6482 = vand.u32 %v6481, 4294901760
  %6483 = vmatpush1.msra.mxu0 %v6482
  %6484 = vmatprep.subr.mxu0 0.0
  %v6485 = vand.u32 %v5648, 4294901760
  %v6486 = vsub.f32 %v5648, %v6485
  %v6487 = vand.u32 %v6486, 4294901760
  %v6488 = vsub.f32 %v6486, %v6487
  %v6489 = vand.u32 %v6488, 4294901760
  %6490 = vmatpush1.msra.mxu0 %v6489
  %6491 = vmatprep.subr.mxu0 0.0
  %v6492 = vand.u32 %v5649, 4294901760
  %v6493 = vsub.f32 %v5649, %v6492
  %v6494 = vand.u32 %v6493, 4294901760
  %v6495 = vsub.f32 %v6493, %v6494
  %v6496 = vand.u32 %v6495, 4294901760
  %6497 = vmatpush1.msra.mxu0 %v6496
  %6498 = vmatprep.subr.mxu0 0.0
  %v6499 = vand.u32 %v5650, 4294901760
  %v6500 = vsub.f32 %v5650, %v6499
  %v6501 = vand.u32 %v6500, 4294901760
  %v6502 = vsub.f32 %v6500, %v6501
  %v6503 = vand.u32 %v6502, 4294901760
  %6504 = vmatpush1.msra.mxu0 %v6503
  %6505 = vmatprep.subr.mxu0 0.0
  %v6506 = vand.u32 %v5651, 4294901760
  %v6507 = vsub.f32 %v5651, %v6506
  %v6508 = vand.u32 %v6507, 4294901760
  %v6509 = vsub.f32 %v6507, %v6508
  %v6510 = vand.u32 %v6509, 4294901760
  %6511 = vmatpush1.msra.mxu0 %v6510
  %6512 = vmatprep.subr.mxu0 0.0
  %v6513 = vand.u32 %v5652, 4294901760
  %v6514 = vsub.f32 %v5652, %v6513
  %v6515 = vand.u32 %v6514, 4294901760
  %v6516 = vsub.f32 %v6514, %v6515
  %v6517 = vand.u32 %v6516, 4294901760
  %6518 = vmatpush1.msra.mxu0 %v6517
  %6519 = vmatprep.subr.mxu0 0.0
  %v6520 = vand.u32 %v5653, 4294901760
  %v6521 = vsub.f32 %v5653, %v6520
  %v6522 = vand.u32 %v6521, 4294901760
  %v6523 = vsub.f32 %v6521, %v6522
  %v6524 = vand.u32 %v6523, 4294901760
  %6525 = vmatpush1.msra.mxu0 %v6524
  %6526 = vmatprep.subr.mxu0 0.0
  %v6527 = vand.u32 %v5654, 4294901760
  %v6528 = vsub.f32 %v5654, %v6527
  %v6529 = vand.u32 %v6528, 4294901760
  %v6530 = vsub.f32 %v6528, %v6529
  %v6531 = vand.u32 %v6530, 4294901760
  %6532 = vmatpush1.msra.mxu0 %v6531
  %6533 = vmatprep.subr.mxu0 0.0
  %v6534 = vand.u32 %v5655, 4294901760
  %v6535 = vsub.f32 %v5655, %v6534
  %v6536 = vand.u32 %v6535, 4294901760
  %v6537 = vsub.f32 %v6535, %v6536
  %v6538 = vand.u32 %v6537, 4294901760
  %6539 = vmatpush1.msra.mxu0 %v6538
  %6540 = vmatprep.subr.mxu0 0.0
  %6541 = vmatpush1.msra.mxu0 0.0
  %6542 = vmatprep.subr.mxu0 0.0
  %6543 = vmatpush1.msra.mxu0 0.0
  %6544 = vmatprep.subr.mxu0 0.0
  %6545 = vmatpush1.msra.mxu0 0.0
  %6546 = vmatprep.subr.mxu0 0.0
  %6547 = vmatpush1.msra.mxu0 0.0
  %6548 = vmatprep.subr.mxu0 0.0
  %6549 = vmatpush1.msra.mxu0 0.0
  %6550 = vmatprep.subr.mxu0 0.0
  %6551 = vmatpush1.msra.mxu0 0.0
  %6552 = vmatprep.subr.mxu0 0.0
  %6553 = vmatpush1.msra.mxu0 0.0
  %6554 = vmatprep.subr.mxu0 0.0
  %6555 = vmatpush1.msra.mxu0 0.0
  %6556 = vmatprep.subr.mxu0 0.0
  %6557 = vmatpush1.msra.mxu0 0.0
  %6558 = vmatprep.subr.mxu0 0.0
  %6559 = vmatpush1.msra.mxu0 0.0
  %6560 = vmatprep.subr.mxu0 0.0
  %6561 = vmatpush1.msra.mxu0 0.0
  %6562 = vmatprep.subr.mxu0 0.0
  %6563 = vmatpush1.msra.mxu0 0.0
  %6564 = vmatprep.subr.mxu0 0.0
  %6565 = vmatpush1.msra.mxu0 0.0
  %6566 = vmatprep.subr.mxu0 0.0
  %6567 = vmatpush1.msra.mxu0 0.0
  %6568 = vmatprep.subr.mxu0 0.0
  %6569 = vmatpush1.msra.mxu0 0.0
  %6570 = vmatprep.subr.mxu0 0.0
  %6571 = vmatpush1.msra.mxu0 0.0
  %6572 = vmatprep.mubr.f32.mxu0 0.0
  %v6573 = vand.u32 %v6171, 4294901760
  %6574 = vmatmul.mubr.f32.gmra.mrb[0].mxu0 %v6573
  %v6575 = vpop.f32.mrb[0].mxu0
  %v6576 = vadd.f32 %v6275, %v6575
  %v6577 = vpop.f32.mrb[0].mxu0
  %6578 = vmatprep.mubr.f32.mxu0 0.0
  %v6579 = vand.u32 %v6172, 4294901760
  %6580 = vmatmul.mubr.f32.gmra.mrb[0].mxu0 %v6579
  %v6581 = vpop.f32.mrb[0].mxu0
  %v6582 = vadd.f32 %v6285, %v6581
  %v6583 = vpop.f32.mrb[0].mxu0
  %6584 = vmatprep.mubr.f32.mxu0 0.0
  %v6585 = vand.u32 %v6173, 4294901760
  %6586 = vmatmul.mubr.f32.gmra.mrb[0].mxu0 %v6585
  %v6587 = vpop.f32.mrb[0].mxu0
  %v6588 = vadd.f32 %v6295, %v6587
  %v6589 = vpop.f32.mrb[0].mxu0
  %6590 = vmatprep.mubr.f32.mxu0 0.0
  %v6591 = vand.u32 %v6174, 4294901760
  %6592 = vmatmul.mubr.f32.gmra.mrb[0].mxu0 %v6591
  %v6593 = vpop.f32.mrb[0].mxu0
  %v6594 = vadd.f32 %v6305, %v6593
  %v6595 = vpop.f32.mrb[0].mxu0
  %6596 = vmatprep.mubr.f32.mxu0 0.0
  %v6597 = vand.u32 %v6175, 4294901760
  %6598 = vmatmul.mubr.f32.gmra.mrb[0].mxu0 %v6597
  %v6599 = vpop.f32.mrb[0].mxu0
  %v6600 = vadd.f32 %v6315, %v6599
  %v6601 = vpop.f32.mrb[0].mxu0
  %6602 = vmatprep.mubr.f32.mxu0 0.0
  %v6603 = vand.u32 %v6176, 4294901760
  %6604 = vmatmul.mubr.f32.gmra.mrb[0].mxu0 %v6603
  %v6605 = vpop.f32.mrb[0].mxu0
  %v6606 = vadd.f32 %v6325, %v6605
  %v6607 = vpop.f32.mrb[0].mxu0
  %6608 = vmatprep.mubr.f32.mxu0 0.0
  %v6609 = vand.u32 %v6177, 4294901760
  %6610 = vmatmul.mubr.f32.gmra.mrb[0].mxu0 %v6609
  %v6611 = vpop.f32.mrb[0].mxu0
  %v6612 = vadd.f32 %v6335, %v6611
  %v6613 = vpop.f32.mrb[0].mxu0
  %6614 = vmatprep.mubr.f32.mxu0 0.0
  %v6615 = vand.u32 %v6178, 4294901760
  %6616 = vmatmul.mubr.f32.gmra.mrb[0].mxu0 %v6615
  %v6617 = vpop.f32.mrb[0].mxu0
  %v6618 = vadd.f32 %v6345, %v6617
  %v6619 = vpop.f32.mrb[0].mxu0
  %6620 = vmatprep.mubr.f32.mxu0 0.0
  %v6621 = vand.u32 %v6179, 4294901760
  %6622 = vmatmul.mubr.f32.gmra.mrb[0].mxu0 %v6621
  %v6623 = vpop.f32.mrb[0].mxu0
  %v6624 = vadd.f32 %v6355, %v6623
  %v6625 = vpop.f32.mrb[0].mxu0
  %6626 = vmatprep.mubr.f32.mxu0 0.0
  %v6627 = vand.u32 %v6180, 4294901760
  %6628 = vmatmul.mubr.f32.gmra.mrb[0].mxu0 %v6627
  %v6629 = vpop.f32.mrb[0].mxu0
  %v6630 = vadd.f32 %v6365, %v6629
  %v6631 = vpop.f32.mrb[0].mxu0
  %6632 = vmatprep.mubr.f32.mxu0 0.0
  %v6633 = vand.u32 %v6181, 4294901760
  %6634 = vmatmul.mubr.f32.gmra.mrb[0].mxu0 %v6633
  %v6635 = vpop.f32.mrb[0].mxu0
  %v6636 = vadd.f32 %v6375, %v6635
  %v6637 = vpop.f32.mrb[0].mxu0
  %6638 = vmatprep.mubr.f32.mxu0 0.0
  %v6639 = vand.u32 %v6182, 4294901760
  %6640 = vmatmul.mubr.f32.gmra.mrb[0].mxu0 %v6639
  %v6641 = vpop.f32.mrb[0].mxu0
  %v6642 = vadd.f32 %v6385, %v6641
  %v6643 = vpop.f32.mrb[0].mxu0
  %6644 = vmatprep.mubr.f32.mxu0 0.0
  %v6645 = vand.u32 %v6183, 4294901760
  %6646 = vmatmul.mubr.f32.gmra.mrb[0].mxu0 %v6645
  %v6647 = vpop.f32.mrb[0].mxu0
  %v6648 = vadd.f32 %v6395, %v6647
  %v6649 = vpop.f32.mrb[0].mxu0
  %6650 = vmatprep.mubr.f32.mxu0 0.0
  %v6651 = vand.u32 %v6184, 4294901760
  %6652 = vmatmul.mubr.f32.gmra.mrb[0].mxu0 %v6651
  %v6653 = vpop.f32.mrb[0].mxu0
  %v6654 = vadd.f32 %v6405, %v6653
  %v6655 = vpop.f32.mrb[0].mxu0
  %6656 = vmatprep.mubr.f32.mxu0 0.0
  %v6657 = vand.u32 %v6185, 4294901760
  %6658 = vmatmul.mubr.f32.gmra.mrb[0].mxu0 %v6657
  %v6659 = vpop.f32.mrb[0].mxu0
  %v6660 = vadd.f32 %v6415, %v6659
  %v6661 = vpop.f32.mrb[0].mxu0
  %6662 = vmatprep.mubr.f32.mxu0 0.0
  %v6663 = vand.u32 %v6186, 4294901760
  %6664 = vmatmul.mubr.f32.gmra.mrb[0].mxu0 %v6663
  %v6665 = vpop.f32.mrb[0].mxu0
  %v6666 = vadd.f32 %v6425, %v6665
  %v6667 = vpop.f32.mrb[0].mxu0
  %6668 = vdwg.mxu0
  %6669 = vmatprep.subr.mxu0 0.0
  %v6670 = vand.u32 %v5640, 4294901760
  %v6671 = vsub.f32 %v5640, %v6670
  %6672 = vmatpush1.msra.mxu0 %v6671
  %6673 = vmatprep.subr.mxu0 0.0
  %v6674 = vand.u32 %v5641, 4294901760
  %v6675 = vsub.f32 %v5641, %v6674
  %6676 = vmatpush1.msra.mxu0 %v6675
  %6677 = vmatprep.subr.mxu0 0.0
  %v6678 = vand.u32 %v5642, 4294901760
  %v6679 = vsub.f32 %v5642, %v6678
  %6680 = vmatpush1.msra.mxu0 %v6679
  %6681 = vmatprep.subr.mxu0 0.0
  %v6682 = vand.u32 %v5643, 4294901760
  %v6683 = vsub.f32 %v5643, %v6682
  %6684 = vmatpush1.msra.mxu0 %v6683
  %6685 = vmatprep.subr.mxu0 0.0
  %v6686 = vand.u32 %v5644, 4294901760
  %v6687 = vsub.f32 %v5644, %v6686
  %6688 = vmatpush1.msra.mxu0 %v6687
  %6689 = vmatprep.subr.mxu0 0.0
  %v6690 = vand.u32 %v5645, 4294901760
  %v6691 = vsub.f32 %v5645, %v6690
  %6692 = vmatpush1.msra.mxu0 %v6691
  %6693 = vmatprep.subr.mxu0 0.0
  %v6694 = vand.u32 %v5646, 4294901760
  %v6695 = vsub.f32 %v5646, %v6694
  %6696 = vmatpush1.msra.mxu0 %v6695
  %6697 = vmatprep.subr.mxu0 0.0
  %v6698 = vand.u32 %v5647, 4294901760
  %v6699 = vsub.f32 %v5647, %v6698
  %6700 = vmatpush1.msra.mxu0 %v6699
  %6701 = vmatprep.subr.mxu0 0.0
  %v6702 = vand.u32 %v5648, 4294901760
  %v6703 = vsub.f32 %v5648, %v6702
  %6704 = vmatpush1.msra.mxu0 %v6703
  %6705 = vmatprep.subr.mxu0 0.0
  %v6706 = vand.u32 %v5649, 4294901760
  %v6707 = vsub.f32 %v5649, %v6706
  %6708 = vmatpush1.msra.mxu0 %v6707
  %6709 = vmatprep.subr.mxu0 0.0
  %v6710 = vand.u32 %v5650, 4294901760
  %v6711 = vsub.f32 %v5650, %v6710
  %6712 = vmatpush1.msra.mxu0 %v6711
  %6713 = vmatprep.subr.mxu0 0.0
  %v6714 = vand.u32 %v5651, 4294901760
  %v6715 = vsub.f32 %v5651, %v6714
  %6716 = vmatpush1.msra.mxu0 %v6715
  %6717 = vmatprep.subr.mxu0 0.0
  %v6718 = vand.u32 %v5652, 4294901760
  %v6719 = vsub.f32 %v5652, %v6718
  %6720 = vmatpush1.msra.mxu0 %v6719
  %6721 = vmatprep.subr.mxu0 0.0
  %v6722 = vand.u32 %v5653, 4294901760
  %v6723 = vsub.f32 %v5653, %v6722
  %6724 = vmatpush1.msra.mxu0 %v6723
  %6725 = vmatprep.subr.mxu0 0.0
  %v6726 = vand.u32 %v5654, 4294901760
  %v6727 = vsub.f32 %v5654, %v6726
  %6728 = vmatpush1.msra.mxu0 %v6727
  %6729 = vmatprep.subr.mxu0 0.0
  %v6730 = vand.u32 %v5655, 4294901760
  %v6731 = vsub.f32 %v5655, %v6730
  %6732 = vmatpush1.msra.mxu0 %v6731
  %6733 = vmatprep.subr.mxu0 0.0
  %6734 = vmatpush1.msra.mxu0 0.0
  %6735 = vmatprep.subr.mxu0 0.0
  %6736 = vmatpush1.msra.mxu0 0.0
  %6737 = vmatprep.subr.mxu0 0.0
  %6738 = vmatpush1.msra.mxu0 0.0
  %6739 = vmatprep.subr.mxu0 0.0
  %6740 = vmatpush1.msra.mxu0 0.0
  %6741 = vmatprep.subr.mxu0 0.0
  %6742 = vmatpush1.msra.mxu0 0.0
  %6743 = vmatprep.subr.mxu0 0.0
  %6744 = vmatpush1.msra.mxu0 0.0
  %6745 = vmatprep.subr.mxu0 0.0
  %6746 = vmatpush1.msra.mxu0 0.0
  %6747 = vmatprep.subr.mxu0 0.0
  %6748 = vmatpush1.msra.mxu0 0.0
  %6749 = vmatprep.subr.mxu0 0.0
  %6750 = vmatpush1.msra.mxu0 0.0
  %6751 = vmatprep.subr.mxu0 0.0
  %6752 = vmatpush1.msra.mxu0 0.0
  %6753 = vmatprep.subr.mxu0 0.0
  %6754 = vmatpush1.msra.mxu0 0.0
  %6755 = vmatprep.subr.mxu0 0.0
  %6756 = vmatpush1.msra.mxu0 0.0
  %6757 = vmatprep.subr.mxu0 0.0
  %6758 = vmatpush1.msra.mxu0 0.0
  %6759 = vmatprep.subr.mxu0 0.0
  %6760 = vmatpush1.msra.mxu0 0.0
  %6761 = vmatprep.subr.mxu0 0.0
  %6762 = vmatpush1.msra.mxu0 0.0
  %6763 = vmatprep.subr.mxu0 0.0
  %6764 = vmatpush1.msra.mxu0 0.0
  %6765 = vmatprep.mubr.f32.mxu0 0.0
  %v6766 = vand.u32 %v6171, 4294901760
  %v6767 = vsub.f32 %v6171, %v6766
  %6768 = vmatmul.mubr.f32.gmra.mrb[0].mxu0 %v6767
  %v6769 = vpop.f32.mrb[0].mxu0
  %v6770 = vadd.f32 %v6576, %v6769
  %v6771 = vpop.f32.mrb[0].mxu0
  %6772 = vmatprep.mubr.f32.mxu0 0.0
  %v6773 = vand.u32 %v6172, 4294901760
  %v6774 = vsub.f32 %v6172, %v6773
  %6775 = vmatmul.mubr.f32.gmra.mrb[0].mxu0 %v6774
  %v6776 = vpop.f32.mrb[0].mxu0
  %v6777 = vadd.f32 %v6582, %v6776
  %v6778 = vpop.f32.mrb[0].mxu0
  %6779 = vmatprep.mubr.f32.mxu0 0.0
  %v6780 = vand.u32 %v6173, 4294901760
  %v6781 = vsub.f32 %v6173, %v6780
  %6782 = vmatmul.mubr.f32.gmra.mrb[0].mxu0 %v6781
  %v6783 = vpop.f32.mrb[0].mxu0
  %v6784 = vadd.f32 %v6588, %v6783
  %v6785 = vpop.f32.mrb[0].mxu0
  %6786 = vmatprep.mubr.f32.mxu0 0.0
  %v6787 = vand.u32 %v6174, 4294901760
  %v6788 = vsub.f32 %v6174, %v6787
  %6789 = vmatmul.mubr.f32.gmra.mrb[0].mxu0 %v6788
  %v6790 = vpop.f32.mrb[0].mxu0
  %v6791 = vadd.f32 %v6594, %v6790
  %v6792 = vpop.f32.mrb[0].mxu0
  %6793 = vmatprep.mubr.f32.mxu0 0.0
  %v6794 = vand.u32 %v6175, 4294901760
  %v6795 = vsub.f32 %v6175, %v6794
  %6796 = vmatmul.mubr.f32.gmra.mrb[0].mxu0 %v6795
  %v6797 = vpop.f32.mrb[0].mxu0
  %v6798 = vadd.f32 %v6600, %v6797
  %v6799 = vpop.f32.mrb[0].mxu0
  %6800 = vmatprep.mubr.f32.mxu0 0.0
  %v6801 = vand.u32 %v6176, 4294901760
  %v6802 = vsub.f32 %v6176, %v6801
  %6803 = vmatmul.mubr.f32.gmra.mrb[0].mxu0 %v6802
  %v6804 = vpop.f32.mrb[0].mxu0
  %v6805 = vadd.f32 %v6606, %v6804
  %v6806 = vpop.f32.mrb[0].mxu0
  %6807 = vmatprep.mubr.f32.mxu0 0.0
  %v6808 = vand.u32 %v6177, 4294901760
  %v6809 = vsub.f32 %v6177, %v6808
  %6810 = vmatmul.mubr.f32.gmra.mrb[0].mxu0 %v6809
  %v6811 = vpop.f32.mrb[0].mxu0
  %v6812 = vadd.f32 %v6612, %v6811
  %v6813 = vpop.f32.mrb[0].mxu0
  %6814 = vmatprep.mubr.f32.mxu0 0.0
  %v6815 = vand.u32 %v6178, 4294901760
  %v6816 = vsub.f32 %v6178, %v6815
  %6817 = vmatmul.mubr.f32.gmra.mrb[0].mxu0 %v6816
  %v6818 = vpop.f32.mrb[0].mxu0
  %v6819 = vadd.f32 %v6618, %v6818
  %v6820 = vpop.f32.mrb[0].mxu0
  %6821 = vmatprep.mubr.f32.mxu0 0.0
  %v6822 = vand.u32 %v6179, 4294901760
  %v6823 = vsub.f32 %v6179, %v6822
  %6824 = vmatmul.mubr.f32.gmra.mrb[0].mxu0 %v6823
  %v6825 = vpop.f32.mrb[0].mxu0
  %v6826 = vadd.f32 %v6624, %v6825
  %v6827 = vpop.f32.mrb[0].mxu0
  %6828 = vmatprep.mubr.f32.mxu0 0.0
  %v6829 = vand.u32 %v6180, 4294901760
  %v6830 = vsub.f32 %v6180, %v6829
  %6831 = vmatmul.mubr.f32.gmra.mrb[0].mxu0 %v6830
  %v6832 = vpop.f32.mrb[0].mxu0
  %v6833 = vadd.f32 %v6630, %v6832
  %v6834 = vpop.f32.mrb[0].mxu0
  %6835 = vmatprep.mubr.f32.mxu0 0.0
  %v6836 = vand.u32 %v6181, 4294901760
  %v6837 = vsub.f32 %v6181, %v6836
  %6838 = vmatmul.mubr.f32.gmra.mrb[0].mxu0 %v6837
  %v6839 = vpop.f32.mrb[0].mxu0
  %v6840 = vadd.f32 %v6636, %v6839
  %v6841 = vpop.f32.mrb[0].mxu0
  %6842 = vmatprep.mubr.f32.mxu0 0.0
  %v6843 = vand.u32 %v6182, 4294901760
  %v6844 = vsub.f32 %v6182, %v6843
  %6845 = vmatmul.mubr.f32.gmra.mrb[0].mxu0 %v6844
  %v6846 = vpop.f32.mrb[0].mxu0
  %v6847 = vadd.f32 %v6642, %v6846
  %v6848 = vpop.f32.mrb[0].mxu0
  %6849 = vmatprep.mubr.f32.mxu0 0.0
  %v6850 = vand.u32 %v6183, 4294901760
  %v6851 = vsub.f32 %v6183, %v6850
  %6852 = vmatmul.mubr.f32.gmra.mrb[0].mxu0 %v6851
  %v6853 = vpop.f32.mrb[0].mxu0
  %v6854 = vadd.f32 %v6648, %v6853
  %v6855 = vpop.f32.mrb[0].mxu0
  %6856 = vmatprep.mubr.f32.mxu0 0.0
  %v6857 = vand.u32 %v6184, 4294901760
  %v6858 = vsub.f32 %v6184, %v6857
  %6859 = vmatmul.mubr.f32.gmra.mrb[0].mxu0 %v6858
  %v6860 = vpop.f32.mrb[0].mxu0
  %v6861 = vadd.f32 %v6654, %v6860
  %v6862 = vpop.f32.mrb[0].mxu0
  %6863 = vmatprep.mubr.f32.mxu0 0.0
  %v6864 = vand.u32 %v6185, 4294901760
  %v6865 = vsub.f32 %v6185, %v6864
  %6866 = vmatmul.mubr.f32.gmra.mrb[0].mxu0 %v6865
  %v6867 = vpop.f32.mrb[0].mxu0
  %v6868 = vadd.f32 %v6660, %v6867
  %v6869 = vpop.f32.mrb[0].mxu0
  %6870 = vmatprep.mubr.f32.mxu0 0.0
  %v6871 = vand.u32 %v6186, 4294901760
  %v6872 = vsub.f32 %v6186, %v6871
  %6873 = vmatmul.mubr.f32.gmra.mrb[0].mxu0 %v6872
  %v6874 = vpop.f32.mrb[0].mxu0
  %v6875 = vadd.f32 %v6666, %v6874
  %v6876 = vpop.f32.mrb[0].mxu0
  %6877 = vdwg.mxu0
  %6878 = vmatprep.subr.mxu0 0.0
  %v6879 = vand.u32 %v5640, 4294901760
  %6880 = vmatpush1.msra.mxu0 %v6879
  %6881 = vmatprep.subr.mxu0 0.0
  %v6882 = vand.u32 %v5641, 4294901760
  %6883 = vmatpush1.msra.mxu0 %v6882
  %6884 = vmatprep.subr.mxu0 0.0
  %v6885 = vand.u32 %v5642, 4294901760
  %6886 = vmatpush1.msra.mxu0 %v6885
  %6887 = vmatprep.subr.mxu0 0.0
  %v6888 = vand.u32 %v5643, 4294901760
  %6889 = vmatpush1.msra.mxu0 %v6888
  %6890 = vmatprep.subr.mxu0 0.0
  %v6891 = vand.u32 %v5644, 4294901760
  %6892 = vmatpush1.msra.mxu0 %v6891
  %6893 = vmatprep.subr.mxu0 0.0
  %v6894 = vand.u32 %v5645, 4294901760
  %6895 = vmatpush1.msra.mxu0 %v6894
  %6896 = vmatprep.subr.mxu0 0.0
  %v6897 = vand.u32 %v5646, 4294901760
  %6898 = vmatpush1.msra.mxu0 %v6897
  %6899 = vmatprep.subr.mxu0 0.0
  %v6900 = vand.u32 %v5647, 4294901760
  %6901 = vmatpush1.msra.mxu0 %v6900
  %6902 = vmatprep.subr.mxu0 0.0
  %v6903 = vand.u32 %v5648, 4294901760
  %6904 = vmatpush1.msra.mxu0 %v6903
  %6905 = vmatprep.subr.mxu0 0.0
  %v6906 = vand.u32 %v5649, 4294901760
  %6907 = vmatpush1.msra.mxu0 %v6906
  %6908 = vmatprep.subr.mxu0 0.0
  %v6909 = vand.u32 %v5650, 4294901760
  %6910 = vmatpush1.msra.mxu0 %v6909
  %6911 = vmatprep.subr.mxu0 0.0
  %v6912 = vand.u32 %v5651, 4294901760
  %6913 = vmatpush1.msra.mxu0 %v6912
  %6914 = vmatprep.subr.mxu0 0.0
  %v6915 = vand.u32 %v5652, 4294901760
  %6916 = vmatpush1.msra.mxu0 %v6915
  %6917 = vmatprep.subr.mxu0 0.0
  %v6918 = vand.u32 %v5653, 4294901760
  %6919 = vmatpush1.msra.mxu0 %v6918
  %6920 = vmatprep.subr.mxu0 0.0
  %v6921 = vand.u32 %v5654, 4294901760
  %6922 = vmatpush1.msra.mxu0 %v6921
  %6923 = vmatprep.subr.mxu0 0.0
  %v6924 = vand.u32 %v5655, 4294901760
  %6925 = vmatpush1.msra.mxu0 %v6924
  %6926 = vmatprep.subr.mxu0 0.0
  %6927 = vmatpush1.msra.mxu0 0.0
  %6928 = vmatprep.subr.mxu0 0.0
  %6929 = vmatpush1.msra.mxu0 0.0
  %6930 = vmatprep.subr.mxu0 0.0
  %6931 = vmatpush1.msra.mxu0 0.0
  %6932 = vmatprep.subr.mxu0 0.0
  %6933 = vmatpush1.msra.mxu0 0.0
  %6934 = vmatprep.subr.mxu0 0.0
  %6935 = vmatpush1.msra.mxu0 0.0
  %6936 = vmatprep.subr.mxu0 0.0
  %6937 = vmatpush1.msra.mxu0 0.0
  %6938 = vmatprep.subr.mxu0 0.0
  %6939 = vmatpush1.msra.mxu0 0.0
  %6940 = vmatprep.subr.mxu0 0.0
  %6941 = vmatpush1.msra.mxu0 0.0
  %6942 = vmatprep.subr.mxu0 0.0
  %6943 = vmatpush1.msra.mxu0 0.0
  %6944 = vmatprep.subr.mxu0 0.0
  %6945 = vmatpush1.msra.mxu0 0.0
  %6946 = vmatprep.subr.mxu0 0.0
  %6947 = vmatpush1.msra.mxu0 0.0
  %6948 = vmatprep.subr.mxu0 0.0
  %6949 = vmatpush1.msra.mxu0 0.0
  %6950 = vmatprep.subr.mxu0 0.0
  %6951 = vmatpush1.msra.mxu0 0.0
  %6952 = vmatprep.subr.mxu0 0.0
  %6953 = vmatpush1.msra.mxu0 0.0
  %6954 = vmatprep.subr.mxu0 0.0
  %6955 = vmatpush1.msra.mxu0 0.0
  %6956 = vmatprep.subr.mxu0 0.0
  %6957 = vmatpush1.msra.mxu0 0.0
  %6958 = vmatprep.mubr.f32.mxu0 0.0
  %v6959 = vand.u32 %v6171, 4294901760
  %v6960 = vsub.f32 %v6171, %v6959
  %v6961 = vand.u32 %v6960, 4294901760
  %6962 = vmatmul.mubr.f32.gmra.mrb[0].mxu0 %v6961
  %v6963 = vpop.f32.mrb[0].mxu0
  %v6964 = vadd.f32 %v6770, %v6963
  %v6965 = vpop.f32.mrb[0].mxu0
  %6966 = vmatprep.mubr.f32.mxu0 0.0
  %v6967 = vand.u32 %v6172, 4294901760
  %v6968 = vsub.f32 %v6172, %v6967
  %v6969 = vand.u32 %v6968, 4294901760
  %6970 = vmatmul.mubr.f32.gmra.mrb[0].mxu0 %v6969
  %v6971 = vpop.f32.mrb[0].mxu0
  %v6972 = vadd.f32 %v6777, %v6971
  %v6973 = vpop.f32.mrb[0].mxu0
  %6974 = vmatprep.mubr.f32.mxu0 0.0
  %v6975 = vand.u32 %v6173, 4294901760
  %v6976 = vsub.f32 %v6173, %v6975
  %v6977 = vand.u32 %v6976, 4294901760
  %6978 = vmatmul.mubr.f32.gmra.mrb[0].mxu0 %v6977
  %v6979 = vpop.f32.mrb[0].mxu0
  %v6980 = vadd.f32 %v6784, %v6979
  %v6981 = vpop.f32.mrb[0].mxu0
  %6982 = vmatprep.mubr.f32.mxu0 0.0
  %v6983 = vand.u32 %v6174, 4294901760
  %v6984 = vsub.f32 %v6174, %v6983
  %v6985 = vand.u32 %v6984, 4294901760
  %6986 = vmatmul.mubr.f32.gmra.mrb[0].mxu0 %v6985
  %v6987 = vpop.f32.mrb[0].mxu0
  %v6988 = vadd.f32 %v6791, %v6987
  %v6989 = vpop.f32.mrb[0].mxu0
  %6990 = vmatprep.mubr.f32.mxu0 0.0
  %v6991 = vand.u32 %v6175, 4294901760
  %v6992 = vsub.f32 %v6175, %v6991
  %v6993 = vand.u32 %v6992, 4294901760
  %6994 = vmatmul.mubr.f32.gmra.mrb[0].mxu0 %v6993
  %v6995 = vpop.f32.mrb[0].mxu0
  %v6996 = vadd.f32 %v6798, %v6995
  %v6997 = vpop.f32.mrb[0].mxu0
  %6998 = vmatprep.mubr.f32.mxu0 0.0
  %v6999 = vand.u32 %v6176, 4294901760
  %v7000 = vsub.f32 %v6176, %v6999
  %v7001 = vand.u32 %v7000, 4294901760
  %7002 = vmatmul.mubr.f32.gmra.mrb[0].mxu0 %v7001
  %v7003 = vpop.f32.mrb[0].mxu0
  %v7004 = vadd.f32 %v6805, %v7003
  %v7005 = vpop.f32.mrb[0].mxu0
  %7006 = vmatprep.mubr.f32.mxu0 0.0
  %v7007 = vand.u32 %v6177, 4294901760
  %v7008 = vsub.f32 %v6177, %v7007
  %v7009 = vand.u32 %v7008, 4294901760
  %7010 = vmatmul.mubr.f32.gmra.mrb[0].mxu0 %v7009
  %v7011 = vpop.f32.mrb[0].mxu0
  %v7012 = vadd.f32 %v6812, %v7011
  %v7013 = vpop.f32.mrb[0].mxu0
  %7014 = vmatprep.mubr.f32.mxu0 0.0
  %v7015 = vand.u32 %v6178, 4294901760
  %v7016 = vsub.f32 %v6178, %v7015
  %v7017 = vand.u32 %v7016, 4294901760
  %7018 = vmatmul.mubr.f32.gmra.mrb[0].mxu0 %v7017
  %v7019 = vpop.f32.mrb[0].mxu0
  %v7020 = vadd.f32 %v6819, %v7019
  %v7021 = vpop.f32.mrb[0].mxu0
  %7022 = vmatprep.mubr.f32.mxu0 0.0
  %v7023 = vand.u32 %v6179, 4294901760
  %v7024 = vsub.f32 %v6179, %v7023
  %v7025 = vand.u32 %v7024, 4294901760
  %7026 = vmatmul.mubr.f32.gmra.mrb[0].mxu0 %v7025
  %v7027 = vpop.f32.mrb[0].mxu0
  %v7028 = vadd.f32 %v6826, %v7027
  %v7029 = vpop.f32.mrb[0].mxu0
  %7030 = vmatprep.mubr.f32.mxu0 0.0
  %v7031 = vand.u32 %v6180, 4294901760
  %v7032 = vsub.f32 %v6180, %v7031
  %v7033 = vand.u32 %v7032, 4294901760
  %7034 = vmatmul.mubr.f32.gmra.mrb[0].mxu0 %v7033
  %v7035 = vpop.f32.mrb[0].mxu0
  %v7036 = vadd.f32 %v6833, %v7035
  %v7037 = vpop.f32.mrb[0].mxu0
  %7038 = vmatprep.mubr.f32.mxu0 0.0
  %v7039 = vand.u32 %v6181, 4294901760
  %v7040 = vsub.f32 %v6181, %v7039
  %v7041 = vand.u32 %v7040, 4294901760
  %7042 = vmatmul.mubr.f32.gmra.mrb[0].mxu0 %v7041
  %v7043 = vpop.f32.mrb[0].mxu0
  %v7044 = vadd.f32 %v6840, %v7043
  %v7045 = vpop.f32.mrb[0].mxu0
  %7046 = vmatprep.mubr.f32.mxu0 0.0
  %v7047 = vand.u32 %v6182, 4294901760
  %v7048 = vsub.f32 %v6182, %v7047
  %v7049 = vand.u32 %v7048, 4294901760
  %7050 = vmatmul.mubr.f32.gmra.mrb[0].mxu0 %v7049
  %v7051 = vpop.f32.mrb[0].mxu0
  %v7052 = vadd.f32 %v6847, %v7051
  %v7053 = vpop.f32.mrb[0].mxu0
  %7054 = vmatprep.mubr.f32.mxu0 0.0
  %v7055 = vand.u32 %v6183, 4294901760
  %v7056 = vsub.f32 %v6183, %v7055
  %v7057 = vand.u32 %v7056, 4294901760
  %7058 = vmatmul.mubr.f32.gmra.mrb[0].mxu0 %v7057
  %v7059 = vpop.f32.mrb[0].mxu0
  %v7060 = vadd.f32 %v6854, %v7059
  %v7061 = vpop.f32.mrb[0].mxu0
  %7062 = vmatprep.mubr.f32.mxu0 0.0
  %v7063 = vand.u32 %v6184, 4294901760
  %v7064 = vsub.f32 %v6184, %v7063
  %v7065 = vand.u32 %v7064, 4294901760
  %7066 = vmatmul.mubr.f32.gmra.mrb[0].mxu0 %v7065
  %v7067 = vpop.f32.mrb[0].mxu0
  %v7068 = vadd.f32 %v6861, %v7067
  %v7069 = vpop.f32.mrb[0].mxu0
  %7070 = vmatprep.mubr.f32.mxu0 0.0
  %v7071 = vand.u32 %v6185, 4294901760
  %v7072 = vsub.f32 %v6185, %v7071
  %v7073 = vand.u32 %v7072, 4294901760
  %7074 = vmatmul.mubr.f32.gmra.mrb[0].mxu0 %v7073
  %v7075 = vpop.f32.mrb[0].mxu0
  %v7076 = vadd.f32 %v6868, %v7075
  %v7077 = vpop.f32.mrb[0].mxu0
  %7078 = vmatprep.mubr.f32.mxu0 0.0
  %v7079 = vand.u32 %v6186, 4294901760
  %v7080 = vsub.f32 %v6186, %v7079
  %v7081 = vand.u32 %v7080, 4294901760
  %7082 = vmatmul.mubr.f32.gmra.mrb[0].mxu0 %v7081
  %v7083 = vpop.f32.mrb[0].mxu0
  %v7084 = vadd.f32 %v6875, %v7083
  %v7085 = vpop.f32.mrb[0].mxu0
  %7086 = vdwg.mxu0
  %7087 = vmatprep.subr.mxu0 0.0
  %v7088 = vand.u32 %v5640, 4294901760
  %v7089 = vsub.f32 %v5640, %v7088
  %v7090 = vand.u32 %v7089, 4294901760
  %7091 = vmatpush1.msra.mxu0 %v7090
  %7092 = vmatprep.subr.mxu0 0.0
  %v7093 = vand.u32 %v5641, 4294901760
  %v7094 = vsub.f32 %v5641, %v7093
  %v7095 = vand.u32 %v7094, 4294901760
  %7096 = vmatpush1.msra.mxu0 %v7095
  %7097 = vmatprep.subr.mxu0 0.0
  %v7098 = vand.u32 %v5642, 4294901760
  %v7099 = vsub.f32 %v5642, %v7098
  %v7100 = vand.u32 %v7099, 4294901760
  %7101 = vmatpush1.msra.mxu0 %v7100
  %7102 = vmatprep.subr.mxu0 0.0
  %v7103 = vand.u32 %v5643, 4294901760
  %v7104 = vsub.f32 %v5643, %v7103
  %v7105 = vand.u32 %v7104, 4294901760
  %7106 = vmatpush1.msra.mxu0 %v7105
  %7107 = vmatprep.subr.mxu0 0.0
  %v7108 = vand.u32 %v5644, 4294901760
  %v7109 = vsub.f32 %v5644, %v7108
  %v7110 = vand.u32 %v7109, 4294901760
  %7111 = vmatpush1.msra.mxu0 %v7110
  %7112 = vmatprep.subr.mxu0 0.0
  %v7113 = vand.u32 %v5645, 4294901760
  %v7114 = vsub.f32 %v5645, %v7113
  %v7115 = vand.u32 %v7114, 4294901760
  %7116 = vmatpush1.msra.mxu0 %v7115
  %7117 = vmatprep.subr.mxu0 0.0
  %v7118 = vand.u32 %v5646, 4294901760
  %v7119 = vsub.f32 %v5646, %v7118
  %v7120 = vand.u32 %v7119, 4294901760
  %7121 = vmatpush1.msra.mxu0 %v7120
  %7122 = vmatprep.subr.mxu0 0.0
  %v7123 = vand.u32 %v5647, 4294901760
  %v7124 = vsub.f32 %v5647, %v7123
  %v7125 = vand.u32 %v7124, 4294901760
  %7126 = vmatpush1.msra.mxu0 %v7125
  %7127 = vmatprep.subr.mxu0 0.0
  %v7128 = vand.u32 %v5648, 4294901760
  %v7129 = vsub.f32 %v5648, %v7128
  %v7130 = vand.u32 %v7129, 4294901760
  %7131 = vmatpush1.msra.mxu0 %v7130
  %7132 = vmatprep.subr.mxu0 0.0
  %v7133 = vand.u32 %v5649, 4294901760
  %v7134 = vsub.f32 %v5649, %v7133
  %v7135 = vand.u32 %v7134, 4294901760
  %7136 = vmatpush1.msra.mxu0 %v7135
  %7137 = vmatprep.subr.mxu0 0.0
  %v7138 = vand.u32 %v5650, 4294901760
  %v7139 = vsub.f32 %v5650, %v7138
  %v7140 = vand.u32 %v7139, 4294901760
  %7141 = vmatpush1.msra.mxu0 %v7140
  %7142 = vmatprep.subr.mxu0 0.0
  %v7143 = vand.u32 %v5651, 4294901760
  %v7144 = vsub.f32 %v5651, %v7143
  %v7145 = vand.u32 %v7144, 4294901760
  %7146 = vmatpush1.msra.mxu0 %v7145
  %7147 = vmatprep.subr.mxu0 0.0
  %v7148 = vand.u32 %v5652, 4294901760
  %v7149 = vsub.f32 %v5652, %v7148
  %v7150 = vand.u32 %v7149, 4294901760
  %7151 = vmatpush1.msra.mxu0 %v7150
  %7152 = vmatprep.subr.mxu0 0.0
  %v7153 = vand.u32 %v5653, 4294901760
  %v7154 = vsub.f32 %v5653, %v7153
  %v7155 = vand.u32 %v7154, 4294901760
  %7156 = vmatpush1.msra.mxu0 %v7155
  %7157 = vmatprep.subr.mxu0 0.0
  %v7158 = vand.u32 %v5654, 4294901760
  %v7159 = vsub.f32 %v5654, %v7158
  %v7160 = vand.u32 %v7159, 4294901760
  %7161 = vmatpush1.msra.mxu0 %v7160
  %7162 = vmatprep.subr.mxu0 0.0
  %v7163 = vand.u32 %v5655, 4294901760
  %v7164 = vsub.f32 %v5655, %v7163
  %v7165 = vand.u32 %v7164, 4294901760
  %7166 = vmatpush1.msra.mxu0 %v7165
  %7167 = vmatprep.subr.mxu0 0.0
  %7168 = vmatpush1.msra.mxu0 0.0
  %7169 = vmatprep.subr.mxu0 0.0
  %7170 = vmatpush1.msra.mxu0 0.0
  %7171 = vmatprep.subr.mxu0 0.0
  %7172 = vmatpush1.msra.mxu0 0.0
  %7173 = vmatprep.subr.mxu0 0.0
  %7174 = vmatpush1.msra.mxu0 0.0
  %7175 = vmatprep.subr.mxu0 0.0
  %7176 = vmatpush1.msra.mxu0 0.0
  %7177 = vmatprep.subr.mxu0 0.0
  %7178 = vmatpush1.msra.mxu0 0.0
  %7179 = vmatprep.subr.mxu0 0.0
  %7180 = vmatpush1.msra.mxu0 0.0
  %7181 = vmatprep.subr.mxu0 0.0
  %7182 = vmatpush1.msra.mxu0 0.0
  %7183 = vmatprep.subr.mxu0 0.0
  %7184 = vmatpush1.msra.mxu0 0.0
  %7185 = vmatprep.subr.mxu0 0.0
  %7186 = vmatpush1.msra.mxu0 0.0
  %7187 = vmatprep.subr.mxu0 0.0
  %7188 = vmatpush1.msra.mxu0 0.0
  %7189 = vmatprep.subr.mxu0 0.0
  %7190 = vmatpush1.msra.mxu0 0.0
  %7191 = vmatprep.subr.mxu0 0.0
  %7192 = vmatpush1.msra.mxu0 0.0
  %7193 = vmatprep.subr.mxu0 0.0
  %7194 = vmatpush1.msra.mxu0 0.0
  %7195 = vmatprep.subr.mxu0 0.0
  %7196 = vmatpush1.msra.mxu0 0.0
  %7197 = vmatprep.subr.mxu0 0.0
  %7198 = vmatpush1.msra.mxu0 0.0
  %7199 = vmatprep.mubr.f32.mxu0 0.0
  %v7200 = vand.u32 %v6171, 4294901760
  %7201 = vmatmul.mubr.f32.gmra.mrb[0].mxu0 %v7200
  %v7202 = vpop.f32.mrb[0].mxu0
  %v7203 = vadd.f32 %v6964, %v7202
  %v7204 = vpop.f32.mrb[0].mxu0
  %7205 = vmatprep.mubr.f32.mxu0 0.0
  %v7206 = vand.u32 %v6172, 4294901760
  %7207 = vmatmul.mubr.f32.gmra.mrb[0].mxu0 %v7206
  %v7208 = vpop.f32.mrb[0].mxu0
  %v7209 = vadd.f32 %v6972, %v7208
  %v7210 = vpop.f32.mrb[0].mxu0
  %7211 = vmatprep.mubr.f32.mxu0 0.0
  %v7212 = vand.u32 %v6173, 4294901760
  %7213 = vmatmul.mubr.f32.gmra.mrb[0].mxu0 %v7212
  %v7214 = vpop.f32.mrb[0].mxu0
  %v7215 = vadd.f32 %v6980, %v7214
  %v7216 = vpop.f32.mrb[0].mxu0
  %7217 = vmatprep.mubr.f32.mxu0 0.0
  %v7218 = vand.u32 %v6174, 4294901760
  %7219 = vmatmul.mubr.f32.gmra.mrb[0].mxu0 %v7218
  %v7220 = vpop.f32.mrb[0].mxu0
  %v7221 = vadd.f32 %v6988, %v7220
  %v7222 = vpop.f32.mrb[0].mxu0
  %7223 = vmatprep.mubr.f32.mxu0 0.0
  %v7224 = vand.u32 %v6175, 4294901760
  %7225 = vmatmul.mubr.f32.gmra.mrb[0].mxu0 %v7224
  %v7226 = vpop.f32.mrb[0].mxu0
  %v7227 = vadd.f32 %v6996, %v7226
  %v7228 = vpop.f32.mrb[0].mxu0
  %7229 = vmatprep.mubr.f32.mxu0 0.0
  %v7230 = vand.u32 %v6176, 4294901760
  %7231 = vmatmul.mubr.f32.gmra.mrb[0].mxu0 %v7230
  %v7232 = vpop.f32.mrb[0].mxu0
  %v7233 = vadd.f32 %v7004, %v7232
  %v7234 = vpop.f32.mrb[0].mxu0
  %7235 = vmatprep.mubr.f32.mxu0 0.0
  %v7236 = vand.u32 %v6177, 4294901760
  %7237 = vmatmul.mubr.f32.gmra.mrb[0].mxu0 %v7236
  %v7238 = vpop.f32.mrb[0].mxu0
  %v7239 = vadd.f32 %v7012, %v7238
  %v7240 = vpop.f32.mrb[0].mxu0
  %7241 = vmatprep.mubr.f32.mxu0 0.0
  %v7242 = vand.u32 %v6178, 4294901760
  %7243 = vmatmul.mubr.f32.gmra.mrb[0].mxu0 %v7242
  %v7244 = vpop.f32.mrb[0].mxu0
  %v7245 = vadd.f32 %v7020, %v7244
  %v7246 = vpop.f32.mrb[0].mxu0
  %7247 = vmatprep.mubr.f32.mxu0 0.0
  %v7248 = vand.u32 %v6179, 4294901760
  %7249 = vmatmul.mubr.f32.gmra.mrb[0].mxu0 %v7248
  %v7250 = vpop.f32.mrb[0].mxu0
  %v7251 = vadd.f32 %v7028, %v7250
  %v7252 = vpop.f32.mrb[0].mxu0
  %7253 = vmatprep.mubr.f32.mxu0 0.0
  %v7254 = vand.u32 %v6180, 4294901760
  %7255 = vmatmul.mubr.f32.gmra.mrb[0].mxu0 %v7254
  %v7256 = vpop.f32.mrb[0].mxu0
  %v7257 = vadd.f32 %v7036, %v7256
  %v7258 = vpop.f32.mrb[0].mxu0
  %7259 = vmatprep.mubr.f32.mxu0 0.0
  %v7260 = vand.u32 %v6181, 4294901760
  %7261 = vmatmul.mubr.f32.gmra.mrb[0].mxu0 %v7260
  %v7262 = vpop.f32.mrb[0].mxu0
  %v7263 = vadd.f32 %v7044, %v7262
  %v7264 = vpop.f32.mrb[0].mxu0
  %7265 = vmatprep.mubr.f32.mxu0 0.0
  %v7266 = vand.u32 %v6182, 4294901760
  %7267 = vmatmul.mubr.f32.gmra.mrb[0].mxu0 %v7266
  %v7268 = vpop.f32.mrb[0].mxu0
  %v7269 = vadd.f32 %v7052, %v7268
  %v7270 = vpop.f32.mrb[0].mxu0
  %7271 = vmatprep.mubr.f32.mxu0 0.0
  %v7272 = vand.u32 %v6183, 4294901760
  %7273 = vmatmul.mubr.f32.gmra.mrb[0].mxu0 %v7272
  %v7274 = vpop.f32.mrb[0].mxu0
  %v7275 = vadd.f32 %v7060, %v7274
  %v7276 = vpop.f32.mrb[0].mxu0
  %7277 = vmatprep.mubr.f32.mxu0 0.0
  %v7278 = vand.u32 %v6184, 4294901760
  %7279 = vmatmul.mubr.f32.gmra.mrb[0].mxu0 %v7278
  %v7280 = vpop.f32.mrb[0].mxu0
  %v7281 = vadd.f32 %v7068, %v7280
  %v7282 = vpop.f32.mrb[0].mxu0
  %7283 = vmatprep.mubr.f32.mxu0 0.0
  %v7284 = vand.u32 %v6185, 4294901760
  %7285 = vmatmul.mubr.f32.gmra.mrb[0].mxu0 %v7284
  %v7286 = vpop.f32.mrb[0].mxu0
  %v7287 = vadd.f32 %v7076, %v7286
  %v7288 = vpop.f32.mrb[0].mxu0
  %7289 = vmatprep.mubr.f32.mxu0 0.0
  %v7290 = vand.u32 %v6186, 4294901760
  %7291 = vmatmul.mubr.f32.gmra.mrb[0].mxu0 %v7290
  %v7292 = vpop.f32.mrb[0].mxu0
  %v7293 = vadd.f32 %v7084, %v7292
  %v7294 = vpop.f32.mrb[0].mxu0
  %7295 = vdwg.mxu0
  %7296 = vmatprep.subr.mxu0 0.0
  %v7297 = vand.u32 %v5640, 4294901760
  %7298 = vmatpush1.msra.mxu0 %v7297
  %7299 = vmatprep.subr.mxu0 0.0
  %v7300 = vand.u32 %v5641, 4294901760
  %7301 = vmatpush1.msra.mxu0 %v7300
  %7302 = vmatprep.subr.mxu0 0.0
  %v7303 = vand.u32 %v5642, 4294901760
  %7304 = vmatpush1.msra.mxu0 %v7303
  %7305 = vmatprep.subr.mxu0 0.0
  %v7306 = vand.u32 %v5643, 4294901760
  %7307 = vmatpush1.msra.mxu0 %v7306
  %7308 = vmatprep.subr.mxu0 0.0
  %v7309 = vand.u32 %v5644, 4294901760
  %7310 = vmatpush1.msra.mxu0 %v7309
  %7311 = vmatprep.subr.mxu0 0.0
  %v7312 = vand.u32 %v5645, 4294901760
  %7313 = vmatpush1.msra.mxu0 %v7312
  %7314 = vmatprep.subr.mxu0 0.0
  %v7315 = vand.u32 %v5646, 4294901760
  %7316 = vmatpush1.msra.mxu0 %v7315
  %7317 = vmatprep.subr.mxu0 0.0
  %v7318 = vand.u32 %v5647, 4294901760
  %7319 = vmatpush1.msra.mxu0 %v7318
  %7320 = vmatprep.subr.mxu0 0.0
  %v7321 = vand.u32 %v5648, 4294901760
  %7322 = vmatpush1.msra.mxu0 %v7321
  %7323 = vmatprep.subr.mxu0 0.0
  %v7324 = vand.u32 %v5649, 4294901760
  %7325 = vmatpush1.msra.mxu0 %v7324
  %7326 = vmatprep.subr.mxu0 0.0
  %v7327 = vand.u32 %v5650, 4294901760
  %7328 = vmatpush1.msra.mxu0 %v7327
  %7329 = vmatprep.subr.mxu0 0.0
  %v7330 = vand.u32 %v5651, 4294901760
  %7331 = vmatpush1.msra.mxu0 %v7330
  %7332 = vmatprep.subr.mxu0 0.0
  %v7333 = vand.u32 %v5652, 4294901760
  %7334 = vmatpush1.msra.mxu0 %v7333
  %7335 = vmatprep.subr.mxu0 0.0
  %v7336 = vand.u32 %v5653, 4294901760
  %7337 = vmatpush1.msra.mxu0 %v7336
  %7338 = vmatprep.subr.mxu0 0.0
  %v7339 = vand.u32 %v5654, 4294901760
  %7340 = vmatpush1.msra.mxu0 %v7339
  %7341 = vmatprep.subr.mxu0 0.0
  %v7342 = vand.u32 %v5655, 4294901760
  %7343 = vmatpush1.msra.mxu0 %v7342
  %7344 = vmatprep.subr.mxu0 0.0
  %7345 = vmatpush1.msra.mxu0 0.0
  %7346 = vmatprep.subr.mxu0 0.0
  %7347 = vmatpush1.msra.mxu0 0.0
  %7348 = vmatprep.subr.mxu0 0.0
  %7349 = vmatpush1.msra.mxu0 0.0
  %7350 = vmatprep.subr.mxu0 0.0
  %7351 = vmatpush1.msra.mxu0 0.0
  %7352 = vmatprep.subr.mxu0 0.0
  %7353 = vmatpush1.msra.mxu0 0.0
  %7354 = vmatprep.subr.mxu0 0.0
  %7355 = vmatpush1.msra.mxu0 0.0
  %7356 = vmatprep.subr.mxu0 0.0
  %7357 = vmatpush1.msra.mxu0 0.0
  %7358 = vmatprep.subr.mxu0 0.0
  %7359 = vmatpush1.msra.mxu0 0.0
  %7360 = vmatprep.subr.mxu0 0.0
  %7361 = vmatpush1.msra.mxu0 0.0
  %7362 = vmatprep.subr.mxu0 0.0
  %7363 = vmatpush1.msra.mxu0 0.0
  %7364 = vmatprep.subr.mxu0 0.0
  %7365 = vmatpush1.msra.mxu0 0.0
  %7366 = vmatprep.subr.mxu0 0.0
  %7367 = vmatpush1.msra.mxu0 0.0
  %7368 = vmatprep.subr.mxu0 0.0
  %7369 = vmatpush1.msra.mxu0 0.0
  %7370 = vmatprep.subr.mxu0 0.0
  %7371 = vmatpush1.msra.mxu0 0.0
  %7372 = vmatprep.subr.mxu0 0.0
  %7373 = vmatpush1.msra.mxu0 0.0
  %7374 = vmatprep.subr.mxu0 0.0
  %7375 = vmatpush1.msra.mxu0 0.0
  %7376 = vmatprep.mubr.f32.mxu0 0.0
  %v7377 = vand.u32 %v6171, 4294901760
  %7378 = vmatmul.mubr.f32.gmra.mrb[0].mxu0 %v7377
  %v7379 = vpop.f32.mrb[0].mxu0
  %v7380 = vadd.f32 %v7203, %v7379
  %v7381 = vpop.f32.mrb[0].mxu0
  %7382 = vmatprep.mubr.f32.mxu0 0.0
  %v7383 = vand.u32 %v6172, 4294901760
  %7384 = vmatmul.mubr.f32.gmra.mrb[0].mxu0 %v7383
  %v7385 = vpop.f32.mrb[0].mxu0
  %v7386 = vadd.f32 %v7209, %v7385
  %v7387 = vpop.f32.mrb[0].mxu0
  %7388 = vmatprep.mubr.f32.mxu0 0.0
  %v7389 = vand.u32 %v6173, 4294901760
  %7390 = vmatmul.mubr.f32.gmra.mrb[0].mxu0 %v7389
  %v7391 = vpop.f32.mrb[0].mxu0
  %v7392 = vadd.f32 %v7215, %v7391
  %v7393 = vpop.f32.mrb[0].mxu0
  %7394 = vmatprep.mubr.f32.mxu0 0.0
  %v7395 = vand.u32 %v6174, 4294901760
  %7396 = vmatmul.mubr.f32.gmra.mrb[0].mxu0 %v7395
  %v7397 = vpop.f32.mrb[0].mxu0
  %v7398 = vadd.f32 %v7221, %v7397
  %v7399 = vpop.f32.mrb[0].mxu0
  %7400 = vmatprep.mubr.f32.mxu0 0.0
  %v7401 = vand.u32 %v6175, 4294901760
  %7402 = vmatmul.mubr.f32.gmra.mrb[0].mxu0 %v7401
  %v7403 = vpop.f32.mrb[0].mxu0
  %v7404 = vadd.f32 %v7227, %v7403
  %v7405 = vpop.f32.mrb[0].mxu0
  %7406 = vmatprep.mubr.f32.mxu0 0.0
  %v7407 = vand.u32 %v6176, 4294901760
  %7408 = vmatmul.mubr.f32.gmra.mrb[0].mxu0 %v7407
  %v7409 = vpop.f32.mrb[0].mxu0
  %v7410 = vadd.f32 %v7233, %v7409
  %v7411 = vpop.f32.mrb[0].mxu0
  %7412 = vmatprep.mubr.f32.mxu0 0.0
  %v7413 = vand.u32 %v6177, 4294901760
  %7414 = vmatmul.mubr.f32.gmra.mrb[0].mxu0 %v7413
  %v7415 = vpop.f32.mrb[0].mxu0
  %v7416 = vadd.f32 %v7239, %v7415
  %v7417 = vpop.f32.mrb[0].mxu0
  %7418 = vmatprep.mubr.f32.mxu0 0.0
  %v7419 = vand.u32 %v6178, 4294901760
  %7420 = vmatmul.mubr.f32.gmra.mrb[0].mxu0 %v7419
  %v7421 = vpop.f32.mrb[0].mxu0
  %v7422 = vadd.f32 %v7245, %v7421
  %v7423 = vpop.f32.mrb[0].mxu0
  %7424 = vmatprep.mubr.f32.mxu0 0.0
  %v7425 = vand.u32 %v6179, 4294901760
  %7426 = vmatmul.mubr.f32.gmra.mrb[0].mxu0 %v7425
  %v7427 = vpop.f32.mrb[0].mxu0
  %v7428 = vadd.f32 %v7251, %v7427
  %v7429 = vpop.f32.mrb[0].mxu0
  %7430 = vmatprep.mubr.f32.mxu0 0.0
  %v7431 = vand.u32 %v6180, 4294901760
  %7432 = vmatmul.mubr.f32.gmra.mrb[0].mxu0 %v7431
  %v7433 = vpop.f32.mrb[0].mxu0
  %v7434 = vadd.f32 %v7257, %v7433
  %v7435 = vpop.f32.mrb[0].mxu0
  %7436 = vmatprep.mubr.f32.mxu0 0.0
  %v7437 = vand.u32 %v6181, 4294901760
  %7438 = vmatmul.mubr.f32.gmra.mrb[0].mxu0 %v7437
  %v7439 = vpop.f32.mrb[0].mxu0
  %v7440 = vadd.f32 %v7263, %v7439
  %v7441 = vpop.f32.mrb[0].mxu0
  %7442 = vmatprep.mubr.f32.mxu0 0.0
  %v7443 = vand.u32 %v6182, 4294901760
  %7444 = vmatmul.mubr.f32.gmra.mrb[0].mxu0 %v7443
  %v7445 = vpop.f32.mrb[0].mxu0
  %v7446 = vadd.f32 %v7269, %v7445
  %v7447 = vpop.f32.mrb[0].mxu0
  %7448 = vmatprep.mubr.f32.mxu0 0.0
  %v7449 = vand.u32 %v6183, 4294901760
  %7450 = vmatmul.mubr.f32.gmra.mrb[0].mxu0 %v7449
  %v7451 = vpop.f32.mrb[0].mxu0
  %v7452 = vadd.f32 %v7275, %v7451
  %v7453 = vpop.f32.mrb[0].mxu0
  %7454 = vmatprep.mubr.f32.mxu0 0.0
  %v7455 = vand.u32 %v6184, 4294901760
  %7456 = vmatmul.mubr.f32.gmra.mrb[0].mxu0 %v7455
  %v7457 = vpop.f32.mrb[0].mxu0
  %v7458 = vadd.f32 %v7281, %v7457
  %v7459 = vpop.f32.mrb[0].mxu0
  %7460 = vmatprep.mubr.f32.mxu0 0.0
  %v7461 = vand.u32 %v6185, 4294901760
  %7462 = vmatmul.mubr.f32.gmra.mrb[0].mxu0 %v7461
  %v7463 = vpop.f32.mrb[0].mxu0
  %v7464 = vadd.f32 %v7287, %v7463
  %v7465 = vpop.f32.mrb[0].mxu0
  %7466 = vmatprep.mubr.f32.mxu0 0.0
  %v7467 = vand.u32 %v6186, 4294901760
  %7468 = vmatmul.mubr.f32.gmra.mrb[0].mxu0 %v7467
  %v7469 = vpop.f32.mrb[0].mxu0
  %v7470 = vadd.f32 %v7293, %v7469
  %v7471 = vpop.f32.mrb[0].mxu0
  %7472 = vdwg.mxu0
  %s7473 = sadd.s32 %s1916, 3
  %s7474 = sld [smem:[#allocation3 + %s7473]]
  %s7475 = scalar_lea.vmem %s2, %s7474
  %7476 = vst.msk [vmem:[%s7475] sm:$0xff] %vm1919, %v7380
  %7477 = vst.msk [vmem:[%s7475 + $0x8] sm:$0xff] %vm1919, %v7386
  %7478 = vst.msk [vmem:[%s7475 + $0x10] sm:$0xff] %vm1919, %v7392
  %7479 = vst.msk [vmem:[%s7475 + $0x18] sm:$0xff] %vm1919, %v7398
  %7480 = vst.msk [vmem:[%s7475 + $0x20] sm:$0xff] %vm1919, %v7404
  %7481 = vst.msk [vmem:[%s7475 + $0x28] sm:$0xff] %vm1919, %v7410
  %7482 = vst.msk [vmem:[%s7475 + $0x30] sm:$0xff] %vm1919, %v7416
  %7483 = vst.msk [vmem:[%s7475 + $0x38] sm:$0xff] %vm1919, %v7422
  %7484 = vst.msk [vmem:[%s7475 + $0x40] sm:$0xff] %vm1919, %v7428
  %7485 = vst.msk [vmem:[%s7475 + $0x48] sm:$0xff] %vm1919, %v7434
  %7486 = vst.msk [vmem:[%s7475 + $0x50] sm:$0xff] %vm1919, %v7440
  %7487 = vst.msk [vmem:[%s7475 + $0x58] sm:$0xff] %vm1919, %v7446
  %7488 = vst.msk [vmem:[%s7475 + $0x60] sm:$0xff] %vm1919, %v7452
  %7489 = vst.msk [vmem:[%s7475 + $0x68] sm:$0xff] %vm1919, %v7458
  %7490 = vst.msk [vmem:[%s7475 + $0x70] sm:$0xff] %vm1919, %v7464
  %7491 = vst.msk [vmem:[%s7475 + $0x78] sm:$0xff] %vm1919, %v7470
  // Predicated region
  $region6: #{ec_cut_refine_pallas.1} parent=0 // pred_check
    _
  $region7: #{ec_cut_refine_pallas.1} parent=0 // pred_check_branch
    %7493 = sbr.rel (0) target = $region9
  $region8: #{ec_cut_refine_pallas.1} parent=0 // pred_region
    _
  $region9: #{ec_cut_refine_pallas.1} parent=0 // pred_fallthru
    _
  // Predicated region
  $region10: #{ec_cut_refine_pallas.1} parent=0 // pred_check
    _
  $region11: #{ec_cut_refine_pallas.1} parent=0 // pred_check_branch
    %7495 = sbr.rel (0) target = $region13
  $region12: #{ec_cut_refine_pallas.1} parent=0 // pred_region
    _
  $region13: #{ec_cut_refine_pallas.1} parent=0 // pred_fallthru
    _

</llo_original>
